<compile_context>
chip_gen: v6e
topology: v6e:2x2x1
jax: 0.10.0
libtpu: 0.0.40
codegen_flags: <defaults>
</compile_context>

<pallas_src>
import jax
import jax.numpy as jnp
from jax.experimental import pallas as pl
from jax.experimental.pallas import tpu as pltpu


# ---------------------------------------------------------------------------
# Single fused kernel. No grid: every operand is tiny (<3 MiB total) and lives
# fully in VMEM for the single invocation; conv2 weights are DMA'd manually so
# their transfer hides under conv1 compute.
# ---------------------------------------------------------------------------
def _fused_kernel(x_ref, bf_ref,
                  w1a_ref, b1a_ref, w2a_hbm, b2a_ref,      # K=3 branch
                  w1b_ref, b1b_ref, w2b_hbm, b2b_ref,      # K=5 branch
                  d1w_ref, d1b_ref, bf1w_ref, bf1b_ref,
                  bf2w_ref, bf2b_ref, d2w_ref, d2b_ref,
                  o_ref,
                  w2a_vmem, w2b_vmem, sem):
    bf16 = jnp.bfloat16

    # --- Kick off the large conv2 weight DMAs immediately (overlap with conv1). ---
    cp_a = pltpu.make_async_copy(w2a_hbm, w2a_vmem, sem.at[0])
    cp_b = pltpu.make_async_copy(w2b_hbm, w2b_vmem, sem.at[1])
    cp_a.start()
    cp_b.start()

    x = x_ref[...].astype(bf16)            # (B, L, E) — cast once, before windowing
    B, L, E = x.shape

    def conv_branch(w1, b1, w2_vmem, b2, K, wait_w2):
        # w1: (pad, 512) bf16 (zero-padded contraction), b1: (1, 512) f32
        # w2_vmem: (K*512, 256) bf16 VMEM scratch ref,   b2: (1, 256) f32
        pad = w1.shape[0]
        L1 = L - K + 1                      # conv1 "valid" output length
        P = L1 // 3                         # MaxPool1d(3), floor semantics
        L2 = P - K + 1                      # conv2 "valid" output length

        # conv1: one im2col matmul, batch folded into M, lane-padded contraction.
        windows = [x[:, k:k + L1, :] for k in range(K)]
        if pad > K * E:
            windows.append(jnp.zeros((B, L1, pad - K * E), bf16))
        x_col = jnp.concatenate(windows, axis=2).reshape(B * L1, pad)
        h = jnp.dot(x_col, w1, preferred_element_type=jnp.float32) + b1
        h = jnp.maximum(h, 0.0)             # (B*L1, 512) f32

        # maxpool(3, stride 3): single reshape + reduce.
        pooled = jnp.max(
            h.reshape(B, L1, 512)[:, :3 * P, :].reshape(B, P, 3, 512),
            axis=2).astype(bf16)            # (B, P, 512)

        # conv2: K accumulating shifted dots (contraction 512 each, no im2col).
        wait_w2()                           # conv2 weights needed only now
        acc = jnp.zeros((B * L2, 256), jnp.float32)
        for k in range(K):
            win = pooled[:, k:k + L2, :].reshape(B * L2, 512)
            acc = acc + jnp.dot(win, w2_vmem[k * 512:(k + 1) * 512, :],
                                preferred_element_type=jnp.float32)
        h2 = jnp.maximum(acc + b2, 0.0)     # (B*L2, 256) f32

        # Global max over remaining time: one reshape + reduce.
        return jnp.max(h2.reshape(B, L2, 256), axis=1)   # (B, 256) f32

    # TODO(synk): on v7x the two branches could be split across the 2 TensorCores
    # (grid=(2,) parallel / pl.core_map); neutral on v5e/v6e so kept single-core.
    f3 = conv_branch(w1a_ref[...], b1a_ref[...], w2a_vmem, b2a_ref[...], 3, cp_a.wait)
    f5 = conv_branch(w1b_ref[...], b1b_ref[...], w2b_vmem, b2b_ref[...], 5, cp_b.wait)
    feat = jnp.concatenate([f3, f5], axis=1).astype(bf16)            # (B, 512)

    # Dropout(p=0.3) -> identity in eval mode.
    h = jnp.maximum(
        jnp.dot(feat, d1w_ref[...], preferred_element_type=jnp.float32)
        + d1b_ref[...], 0.0)                                         # (B, 64) f32
    bfh = jnp.maximum(
        jnp.dot(bf_ref[...].astype(bf16), bf1w_ref[...],
                preferred_element_type=jnp.float32) + bf1b_ref[...], 0.0)   # (B, 128)
    bfh = jnp.maximum(
        jnp.dot(bfh.astype(bf16), bf2w_ref[...],
                preferred_element_type=jnp.float32) + bf2b_ref[...], 0.0)   # (B, 64)
    # torch.cat((bf, x), dim=1): bf features first, then conv/dense1 features.
    z = jnp.concatenate([bfh, h], axis=1).astype(bf16)               # (B, 128)
    out = jnp.dot(z, d2w_ref[...], preferred_element_type=jnp.float32) + d2b_ref[...]
    o_ref[...] = out.astype(o_ref.dtype)                             # (B, 2)


# ---------------------------------------------------------------------------
# Wrapper: one embedding gather (XLA) + one fused pallas_call.
# ---------------------------------------------------------------------------
@jax.jit
def forward(tokens, bf, kp):
    # TODO(synk): the embedding gather could move in-kernel via scalar-prefetched
    # token ids + manual DMA; negligible at S=32, E=32 so it stays as XLA glue.
    # TODO(synk): for large batch, add a leading 'parallel' batch grid axis instead
    # of the fully-unrolled single invocation used here (B=2).
    x_emb = jnp.take(kp["embed"], tokens, axis=0)                    # (B, S, E) f32
    B = tokens.shape[0]

    vmem = pl.BlockSpec(memory_space=pltpu.MemorySpace.VMEM)
    hbm = pl.BlockSpec(memory_space=pl.ANY)          # conv2 weights: manual DMA
    in_specs = [vmem, vmem,                          # x_emb, bf
                vmem, vmem, hbm, vmem,               # K=3: w1, b1, w2(HBM), b2
                vmem, vmem, hbm, vmem,               # K=5: w1, b1, w2(HBM), b2
                vmem, vmem, vmem, vmem,              # d1w, d1b, bf1w, bf1b
                vmem, vmem, vmem, vmem]              # bf2w, bf2b, d2w, d2b

    return pl.pallas_call(
        _fused_kernel,
        out_shape=jax.ShapeDtypeStruct((B, 2), jnp.float32),
        in_specs=in_specs,
        out_specs=pl.BlockSpec(memory_space=pltpu.MemorySpace.VMEM),
        scratch_shapes=[
            pltpu.VMEM((3 * 512, 256), jnp.bfloat16),   # conv2 K=3 weights
            pltpu.VMEM((5 * 512, 256), jnp.bfloat16),   # conv2 K=5 weights
            pltpu.SemaphoreType.DMA((2,)),
        ],
    )(x_emb, bf,
      kp["w1_k3"], kp["b1_k3"], kp["w2_k3"], kp["b2_k3"],
      kp["w1_k5"], kp["b1_k5"], kp["w2_k5"], kp["b2_k5"],
      kp["d1w"], kp["d1b"], kp["bf1w"], kp["bf1b"],
      kp["bf2w"], kp["bf2b"], kp["d2w"], kp["d2b"])


# ---------------------------------------------------------------------------
# Parameter init (PyTorch-layout-equivalent, f32) + kernel-layout preparation
# (im2col-flattened, lane-padded, bf16 matmul weights, f32 biases).
# ---------------------------------------------------------------------------
def init_params(key, vocab_len, emb_dim, bf_dim):
    ks = jax.random.split(key, 16)
    s = 0.05

    def w(k, shape):
        return jax.random.normal(k, shape, jnp.float32) * s

    return {
        "embed": w(ks[0], (vocab_len, emb_dim)),
        "cnn1_k3_w": w(ks[1], (3, emb_dim, 512)),
        "cnn1_k3_b": w(ks[2], (1, 512)),
        "cnn2_k3_w": w(ks[3], (3, 512, 256)),
        "cnn2_k3_b": w(ks[4], (1, 256)),
        "cnn1_k5_w": w(ks[5], (5, emb_dim, 512)),
        "cnn1_k5_b": w(ks[6], (1, 512)),
        "cnn2_k5_w": w(ks[7], (5, 512, 256)),
        "cnn2_k5_b": w(ks[8], (1, 256)),
        "dense1_w": w(ks[9], (512, 64)),
        "dense1_b": w(ks[10], (1, 64)),
        "bf1_w": w(ks[11], (bf_dim, 128)),
        "bf1_b": w(ks[12], (1, 128)),
        "bf2_w": w(ks[13], (128, 64)),
        "bf2_b": w(ks[14], (1, 64)),
        "dense2_w": w(ks[15], (128, 2)),
        "dense2_b": jnp.zeros((1, 2), jnp.float32),
    }


def prepare_params(p):
    bf16 = jnp.bfloat16

    def lane_pad(n):  # round up to a multiple of 128 lanes
        return ((n + 127) // 128) * 128

    def flat(w, pad_to=None):
        # (K, Cin, Cout) -> (K*Cin, Cout); column order k*Cin + c matches im2col.
        K, Cin, Cout = w.shape
        wf = w.reshape(K * Cin, Cout)
        if pad_to is not None and pad_to > K * Cin:
            wf = jnp.pad(wf, ((0, pad_to - K * Cin), (0, 0)))
        return wf.astype(bf16)

    E = p["cnn1_k3_w"].shape[1]
    return {
        "embed": p["embed"],
        "w1_k3": flat(p["cnn1_k3_w"], lane_pad(3 * E)), "b1_k3": p["cnn1_k3_b"],
        "w2_k3": flat(p["cnn2_k3_w"]), "b2_k3": p["cnn2_k3_b"],
        "w1_k5": flat(p["cnn1_k5_w"], lane_pad(5 * E)), "b1_k5": p["cnn1_k5_b"],
        "w2_k5": flat(p["cnn2_k5_w"]), "b2_k5": p["cnn2_k5_b"],
        "d1w": p["dense1_w"].astype(bf16), "d1b": p["dense1_b"],
        "bf1w": p["bf1_w"].astype(bf16), "bf1b": p["bf1_b"],
        "bf2w": p["bf2_w"].astype(bf16), "bf2b": p["bf2_b"],
        "d2w": p["dense2_w"].astype(bf16), "d2b": p["dense2_b"],
    }


# ---------------------------------------------------------------------------
# Pure-JAX reference (same bf16-inputs / f32-accumulation mixed precision).
# ---------------------------------------------------------------------------
def reference_forward(tokens, bf, p):
    bf16 = jnp.bfloat16
    x = jnp.take(p["embed"], tokens, axis=0).astype(bf16)            # (B,S,E)

    def conv_group(x, w1, b1, w2, b2, K):
        B, L, _ = x.shape
        L1 = L - K + 1
        h = sum(jnp.einsum("ble,eo->blo", x[:, k:k + L1, :], w1[k].astype(bf16),
                           preferred_element_type=jnp.float32)
                for k in range(K)) + b1[None]
        h = jax.nn.relu(h)
        P = L1 // 3
        h = jnp.max(h[:, :3 * P, :].reshape(B, P, 3, -1), axis=2).astype(bf16)
        L2 = P - K + 1
        h2 = sum(jnp.einsum("blc,co->blo", h[:, k:k + L2, :], w2[k].astype(bf16),
                            preferred_element_type=jnp.float32)
                 for k in range(K)) + b2[None]
        h2 = jax.nn.relu(h2)
        return jnp.max(h2, axis=1)                                   # (B, 256)

    f3 = conv_group(x, p["cnn1_k3_w"], p["cnn1_k3_b"], p["cnn2_k3_w"], p["cnn2_k3_b"], 3)
    f5 = conv_group(x, p["cnn1_k5_w"], p["cnn1_k5_b"], p["cnn2_k5_w"], p["cnn2_k5_b"], 5)
    feat = jnp.concatenate([f3, f5], axis=1).astype(bf16)
    h = jax.nn.relu(jnp.dot(feat, p["dense1_w"].astype(bf16),
                            preferred_element_type=jnp.float32) + p["dense1_b"])
    bfh = jax.nn.relu(jnp.dot(bf.astype(bf16), p["bf1_w"].astype(bf16),
                              preferred_element_type=jnp.float32) + p["bf1_b"])
    bfh = jax.nn.relu(jnp.dot(bfh.astype(bf16), p["bf2_w"].astype(bf16),
                              preferred_element_type=jnp.float32) + p["bf2_b"])
    z = jnp.concatenate([bfh, h], axis=1).astype(bf16)
    return jnp.dot(z, p["dense2_w"].astype(bf16),
                   preferred_element_type=jnp.float32) + p["dense2_b"]


if __name__ == "__main__":
    B, S, VOCAB, EMB, BF_DIM = 2, 32, 50, 32, 16

    key = jax.random.PRNGKey(0)
    k_tok, k_bf, k_par = jax.random.split(key, 3)
    tokens = jax.random.randint(k_tok, (B, S), 0, VOCAB, dtype=jnp.int32)
    bf = jax.random.normal(k_bf, (B, BF_DIM), jnp.float32)
    params = init_params(k_par, VOCAB, EMB, BF_DIM)
    kparams = prepare_params(params)

    out = jax.block_until_ready(forward(tokens, bf, kparams))
    ref = jax.block_until_ready(reference_forward(tokens, bf, params))

    assert out.shape == (B, 2), out.shape
    assert jnp.allclose(out, ref, rtol=1e-2, atol=1e-3), (out, ref)

    print("KERNEL_OK")
</pallas_src>

<mosaic_0001>
module attributes {stable_mosaic.version = 11 : i64} {
  func.func @_fused_kernel(%arg0: memref<2x32x32xf32, #tpu.memory_space<vmem>>, %arg1: memref<2x16xf32, #tpu.memory_space<vmem>>, %arg2: memref<128x512xbf16, #tpu.memory_space<vmem>>, %arg3: memref<1x512xf32, #tpu.memory_space<vmem>>, %arg4: memref<1536x256xbf16, #tpu.memory_space<any>>, %arg5: memref<1x256xf32, #tpu.memory_space<vmem>>, %arg6: memref<256x512xbf16, #tpu.memory_space<vmem>>, %arg7: memref<1x512xf32, #tpu.memory_space<vmem>>, %arg8: memref<2560x256xbf16, #tpu.memory_space<any>>, %arg9: memref<1x256xf32, #tpu.memory_space<vmem>>, %arg10: memref<512x64xbf16, #tpu.memory_space<vmem>>, %arg11: memref<1x64xf32, #tpu.memory_space<vmem>>, %arg12: memref<16x128xbf16, #tpu.memory_space<vmem>>, %arg13: memref<1x128xf32, #tpu.memory_space<vmem>>, %arg14: memref<128x64xbf16, #tpu.memory_space<vmem>>, %arg15: memref<1x64xf32, #tpu.memory_space<vmem>>, %arg16: memref<128x2xbf16, #tpu.memory_space<vmem>>, %arg17: memref<1x2xf32, #tpu.memory_space<vmem>>, %arg18: memref<2x2xf32, #tpu.memory_space<vmem>>, %arg19: memref<1536x256xbf16, #tpu.memory_space<vmem>>, %arg20: memref<2560x256xbf16, #tpu.memory_space<vmem>>, %arg21: memref<2x!tpu.dma_semaphore, #tpu.memory_space<semaphore_mem>>) attributes {dimension_semantics = [], scalar_prefetch = 0 : i64, scratch_operands = 3 : i64, tpu.core_type = #tpu.core_type<tc>} {
    %c0_i32 = arith.constant 0 : i32
    %0 = tpu.memref_slice %arg21[%c0_i32] : memref<2x!tpu.dma_semaphore, #tpu.memory_space<semaphore_mem>> -> memref<1x!tpu.dma_semaphore, #tpu.memory_space<semaphore_mem>>
    %1 = tpu.memref_squeeze %0 : memref<1x!tpu.dma_semaphore, #tpu.memory_space<semaphore_mem>> -> memref<!tpu.dma_semaphore, #tpu.memory_space<semaphore_mem>>
    tpu.enqueue_dma source(%arg4 : memref<1536x256xbf16, #tpu.memory_space<any>>) target(%arg19 : memref<1536x256xbf16, #tpu.memory_space<vmem>>) target_semaphore(%1 : memref<!tpu.dma_semaphore, #tpu.memory_space<semaphore_mem>>)
    %c1_i32 = arith.constant 1 : i32
    %2 = tpu.memref_slice %arg21[%c1_i32] : memref<2x!tpu.dma_semaphore, #tpu.memory_space<semaphore_mem>> -> memref<1x!tpu.dma_semaphore, #tpu.memory_space<semaphore_mem>>
    %3 = tpu.memref_squeeze %2 : memref<1x!tpu.dma_semaphore, #tpu.memory_space<semaphore_mem>> -> memref<!tpu.dma_semaphore, #tpu.memory_space<semaphore_mem>>
    tpu.enqueue_dma source(%arg8 : memref<2560x256xbf16, #tpu.memory_space<any>>) target(%arg20 : memref<2560x256xbf16, #tpu.memory_space<vmem>>) target_semaphore(%3 : memref<!tpu.dma_semaphore, #tpu.memory_space<semaphore_mem>>)
    %c0 = arith.constant 0 : index
    %c0_0 = arith.constant 0 : index
    %c0_1 = arith.constant 0 : index
    %4 = vector.load %arg0[%c0, %c0_0, %c0_1] : memref<2x32x32xf32, #tpu.memory_space<vmem>>, vector<2x32x32xf32>
    %5 = arith.truncf %4 : vector<2x32x32xf32> to vector<2x32x32xbf16>
    %c0_2 = arith.constant 0 : index
    %c0_3 = arith.constant 0 : index
    %6 = vector.load %arg2[%c0_2, %c0_3] : memref<128x512xbf16, #tpu.memory_space<vmem>>, vector<128x512xbf16>
    %c0_4 = arith.constant 0 : index
    %c0_5 = arith.constant 0 : index
    %7 = vector.load %arg3[%c0_4, %c0_5] : memref<1x512xf32, #tpu.memory_space<vmem>>, vector<1x512xf32>
    %c0_6 = arith.constant 0 : index
    %c0_7 = arith.constant 0 : index
    %8 = vector.load %arg5[%c0_6, %c0_7] : memref<1x256xf32, #tpu.memory_space<vmem>>, vector<1x256xf32>
    %9 = vector.extract_strided_slice %5 {offsets = [0, 0, 0], sizes = [2, 30, 32], strides = [1, 1, 1]} : vector<2x32x32xbf16> to vector<2x30x32xbf16>
    %10 = vector.extract_strided_slice %5 {offsets = [0, 1, 0], sizes = [2, 30, 32], strides = [1, 1, 1]} : vector<2x32x32xbf16> to vector<2x30x32xbf16>
    %11 = vector.extract_strided_slice %5 {offsets = [0, 2, 0], sizes = [2, 30, 32], strides = [1, 1, 1]} : vector<2x32x32xbf16> to vector<2x30x32xbf16>
    %cst = arith.constant 0.000000e+00 : bf16
    %12 = vector.broadcast %cst : bf16 to vector<2x30x32xbf16>
    %13 = tpu.concatenate %9, %10, %11, %12 in 2 : vector<2x30x32xbf16>, vector<2x30x32xbf16>, vector<2x30x32xbf16>, vector<2x30x32xbf16> -> vector<2x30x128xbf16>
    %14 = vector.shape_cast %13 : vector<2x30x128xbf16> to vector<60x128xbf16>
    %cst_8 = arith.constant dense<0.000000e+00> : vector<60x512xf32>
    %15 = tpu.matmul %14, %6, %cst_8 {dimension_numbers = #tpu.dot_dimension_numbers<[1], [0], [0], [1], [0, 0, 1, 1], [], []>} : vector<60x128xbf16>, vector<128x512xbf16>, vector<60x512xf32> -> vector<60x512xf32>
    %16 = vector.broadcast %7 : vector<1x512xf32> to vector<60x512xf32>
    %17 = arith.addf %15, %16 : vector<60x512xf32>
    %cst_9 = arith.constant 0.000000e+00 : f32
    %18 = vector.broadcast %cst_9 : f32 to vector<60x512xf32>
    %19 = arith.maximumf %17, %18 : vector<60x512xf32>
    %20 = vector.shape_cast %19 : vector<60x512xf32> to vector<2x30x512xf32>
    %21 = vector.shape_cast %20 : vector<2x30x512xf32> to vector<2x10x3x512xf32>
    %cst_10 = arith.constant dense<0xFF800000> : vector<2x10x512xf32>
    %22 = vector.multi_reduction <maximumf>, %21, %cst_10 [2] : vector<2x10x3x512xf32> to vector<2x10x512xf32>
    %23 = arith.truncf %22 : vector<2x10x512xf32> to vector<2x10x512xbf16>
    %c0_i32_11 = arith.constant 0 : i32
    %24 = tpu.memref_slice %arg21[%c0_i32_11] : memref<2x!tpu.dma_semaphore, #tpu.memory_space<semaphore_mem>> -> memref<1x!tpu.dma_semaphore, #tpu.memory_space<semaphore_mem>>
    %25 = tpu.memref_squeeze %24 : memref<1x!tpu.dma_semaphore, #tpu.memory_space<semaphore_mem>> -> memref<!tpu.dma_semaphore, #tpu.memory_space<semaphore_mem>>
    tpu.wait_dma2 semaphore(%25 : memref<!tpu.dma_semaphore, #tpu.memory_space<semaphore_mem>>) src(%arg4 : memref<1536x256xbf16, #tpu.memory_space<any>>) dst(%arg19 : memref<1536x256xbf16, #tpu.memory_space<vmem>>)
    %cst_12 = arith.constant 0.000000e+00 : f32
    %26 = vector.broadcast %cst_12 : f32 to vector<16x256xf32>
    %27 = vector.extract_strided_slice %23 {offsets = [0, 0, 0], sizes = [2, 8, 512], strides = [1, 1, 1]} : vector<2x10x512xbf16> to vector<2x8x512xbf16>
    %28 = vector.shape_cast %27 : vector<2x8x512xbf16> to vector<16x512xbf16>
    %c0_13 = arith.constant 0 : index
    %c0_14 = arith.constant 0 : index
    %29 = vector.load %arg19[%c0_13, %c0_14] : memref<1536x256xbf16, #tpu.memory_space<vmem>>, vector<512x256xbf16>
    %cst_15 = arith.constant dense<0.000000e+00> : vector<16x256xf32>
    %30 = tpu.matmul %28, %29, %cst_15 {dimension_numbers = #tpu.dot_dimension_numbers<[1], [0], [0], [1], [0, 0, 1, 1], [], []>} : vector<16x512xbf16>, vector<512x256xbf16>, vector<16x256xf32> -> vector<16x256xf32>
    %31 = arith.addf %26, %30 : vector<16x256xf32>
    %32 = vector.extract_strided_slice %23 {offsets = [0, 1, 0], sizes = [2, 8, 512], strides = [1, 1, 1]} : vector<2x10x512xbf16> to vector<2x8x512xbf16>
    %33 = vector.shape_cast %32 : vector<2x8x512xbf16> to vector<16x512xbf16>
    %c512 = arith.constant 512 : index
    %c0_16 = arith.constant 0 : index
    %34 = vector.load %arg19[%c512, %c0_16] : memref<1536x256xbf16, #tpu.memory_space<vmem>>, vector<512x256xbf16>
    %cst_17 = arith.constant dense<0.000000e+00> : vector<16x256xf32>
    %35 = tpu.matmul %33, %34, %cst_17 {dimension_numbers = #tpu.dot_dimension_numbers<[1], [0], [0], [1], [0, 0, 1, 1], [], []>} : vector<16x512xbf16>, vector<512x256xbf16>, vector<16x256xf32> -> vector<16x256xf32>
    %36 = arith.addf %31, %35 : vector<16x256xf32>
    %37 = vector.extract_strided_slice %23 {offsets = [0, 2, 0], sizes = [2, 8, 512], strides = [1, 1, 1]} : vector<2x10x512xbf16> to vector<2x8x512xbf16>
    %38 = vector.shape_cast %37 : vector<2x8x512xbf16> to vector<16x512xbf16>
    %c1024 = arith.constant 1024 : index
    %c0_18 = arith.constant 0 : index
    %39 = vector.load %arg19[%c1024, %c0_18] : memref<1536x256xbf16, #tpu.memory_space<vmem>>, vector<512x256xbf16>
    %cst_19 = arith.constant dense<0.000000e+00> : vector<16x256xf32>
    %40 = tpu.matmul %38, %39, %cst_19 {dimension_numbers = #tpu.dot_dimension_numbers<[1], [0], [0], [1], [0, 0, 1, 1], [], []>} : vector<16x512xbf16>, vector<512x256xbf16>, vector<16x256xf32> -> vector<16x256xf32>
    %41 = arith.addf %36, %40 : vector<16x256xf32>
    %42 = vector.broadcast %8 : vector<1x256xf32> to vector<16x256xf32>
    %43 = arith.addf %41, %42 : vector<16x256xf32>
    %cst_20 = arith.constant 0.000000e+00 : f32
    %44 = vector.broadcast %cst_20 : f32 to vector<16x256xf32>
    %45 = arith.maximumf %43, %44 : vector<16x256xf32>
    %46 = vector.shape_cast %45 : vector<16x256xf32> to vector<2x8x256xf32>
    %cst_21 = arith.constant dense<0xFF800000> : vector<2x256xf32>
    %47 = vector.multi_reduction <maximumf>, %46, %cst_21 [1] : vector<2x8x256xf32> to vector<2x256xf32>
    %c0_22 = arith.constant 0 : index
    %c0_23 = arith.constant 0 : index
    %48 = vector.load %arg6[%c0_22, %c0_23] : memref<256x512xbf16, #tpu.memory_space<vmem>>, vector<256x512xbf16>
    %c0_24 = arith.constant 0 : index
    %c0_25 = arith.constant 0 : index
    %49 = vector.load %arg7[%c0_24, %c0_25] : memref<1x512xf32, #tpu.memory_space<vmem>>, vector<1x512xf32>
    %c0_26 = arith.constant 0 : index
    %c0_27 = arith.constant 0 : index
    %50 = vector.load %arg9[%c0_26, %c0_27] : memref<1x256xf32, #tpu.memory_space<vmem>>, vector<1x256xf32>
    %51 = vector.extract_strided_slice %5 {offsets = [0, 0, 0], sizes = [2, 28, 32], strides = [1, 1, 1]} : vector<2x32x32xbf16> to vector<2x28x32xbf16>
    %52 = vector.extract_strided_slice %5 {offsets = [0, 1, 0], sizes = [2, 28, 32], strides = [1, 1, 1]} : vector<2x32x32xbf16> to vector<2x28x32xbf16>
    %53 = vector.extract_strided_slice %5 {offsets = [0, 2, 0], sizes = [2, 28, 32], strides = [1, 1, 1]} : vector<2x32x32xbf16> to vector<2x28x32xbf16>
    %54 = vector.extract_strided_slice %5 {offsets = [0, 3, 0], sizes = [2, 28, 32], strides = [1, 1, 1]} : vector<2x32x32xbf16> to vector<2x28x32xbf16>
    %55 = vector.extract_strided_slice %5 {offsets = [0, 4, 0], sizes = [2, 28, 32], strides = [1, 1, 1]} : vector<2x32x32xbf16> to vector<2x28x32xbf16>
    %cst_28 = arith.constant 0.000000e+00 : bf16
    %56 = vector.broadcast %cst_28 : bf16 to vector<2x28x96xbf16>
    %57 = tpu.concatenate %51, %52, %53, %54, %55, %56 in 2 : vector<2x28x32xbf16>, vector<2x28x32xbf16>, vector<2x28x32xbf16>, vector<2x28x32xbf16>, vector<2x28x32xbf16>, vector<2x28x96xbf16> -> vector<2x28x256xbf16>
    %58 = vector.shape_cast %57 : vector<2x28x256xbf16> to vector<56x256xbf16>
    %cst_29 = arith.constant dense<0.000000e+00> : vector<56x512xf32>
    %59 = tpu.matmul %58, %48, %cst_29 {dimension_numbers = #tpu.dot_dimension_numbers<[1], [0], [0], [1], [0, 0, 1, 1], [], []>} : vector<56x256xbf16>, vector<256x512xbf16>, vector<56x512xf32> -> vector<56x512xf32>
    %60 = vector.broadcast %49 : vector<1x512xf32> to vector<56x512xf32>
    %61 = arith.addf %59, %60 : vector<56x512xf32>
    %cst_30 = arith.constant 0.000000e+00 : f32
    %62 = vector.broadcast %cst_30 : f32 to vector<56x512xf32>
    %63 = arith.maximumf %61, %62 : vector<56x512xf32>
    %64 = vector.shape_cast %63 : vector<56x512xf32> to vector<2x28x512xf32>
    %65 = vector.extract_strided_slice %64 {offsets = [0, 0, 0], sizes = [2, 27, 512], strides = [1, 1, 1]} : vector<2x28x512xf32> to vector<2x27x512xf32>
    %66 = vector.shape_cast %65 : vector<2x27x512xf32> to vector<2x9x3x512xf32>
    %cst_31 = arith.constant dense<0xFF800000> : vector<2x9x512xf32>
    %67 = vector.multi_reduction <maximumf>, %66, %cst_31 [2] : vector<2x9x3x512xf32> to vector<2x9x512xf32>
    %68 = arith.truncf %67 : vector<2x9x512xf32> to vector<2x9x512xbf16>
    %c1_i32_32 = arith.constant 1 : i32
    %69 = tpu.memref_slice %arg21[%c1_i32_32] : memref<2x!tpu.dma_semaphore, #tpu.memory_space<semaphore_mem>> -> memref<1x!tpu.dma_semaphore, #tpu.memory_space<semaphore_mem>>
    %70 = tpu.memref_squeeze %69 : memref<1x!tpu.dma_semaphore, #tpu.memory_space<semaphore_mem>> -> memref<!tpu.dma_semaphore, #tpu.memory_space<semaphore_mem>>
    tpu.wait_dma2 semaphore(%70 : memref<!tpu.dma_semaphore, #tpu.memory_space<semaphore_mem>>) src(%arg8 : memref<2560x256xbf16, #tpu.memory_space<any>>) dst(%arg20 : memref<2560x256xbf16, #tpu.memory_space<vmem>>)
    %cst_33 = arith.constant 0.000000e+00 : f32
    %71 = vector.broadcast %cst_33 : f32 to vector<10x256xf32>
    %72 = vector.extract_strided_slice %68 {offsets = [0, 0, 0], sizes = [2, 5, 512], strides = [1, 1, 1]} : vector<2x9x512xbf16> to vector<2x5x512xbf16>
    %73 = vector.shape_cast %72 : vector<2x5x512xbf16> to vector<10x512xbf16>
    %c0_34 = arith.constant 0 : index
    %c0_35 = arith.constant 0 : index
    %74 = vector.load %arg20[%c0_34, %c0_35] : memref<2560x256xbf16, #tpu.memory_space<vmem>>, vector<512x256xbf16>
    %cst_36 = arith.constant dense<0.000000e+00> : vector<10x256xf32>
    %75 = tpu.matmul %73, %74, %cst_36 {dimension_numbers = #tpu.dot_dimension_numbers<[1], [0], [0], [1], [0, 0, 1, 1], [], []>} : vector<10x512xbf16>, vector<512x256xbf16>, vector<10x256xf32> -> vector<10x256xf32>
    %76 = arith.addf %71, %75 : vector<10x256xf32>
    %77 = vector.extract_strided_slice %68 {offsets = [0, 1, 0], sizes = [2, 5, 512], strides = [1, 1, 1]} : vector<2x9x512xbf16> to vector<2x5x512xbf16>
    %78 = vector.shape_cast %77 : vector<2x5x512xbf16> to vector<10x512xbf16>
    %c512_37 = arith.constant 512 : index
    %c0_38 = arith.constant 0 : index
    %79 = vector.load %arg20[%c512_37, %c0_38] : memref<2560x256xbf16, #tpu.memory_space<vmem>>, vector<512x256xbf16>
    %cst_39 = arith.constant dense<0.000000e+00> : vector<10x256xf32>
    %80 = tpu.matmul %78, %79, %cst_39 {dimension_numbers = #tpu.dot_dimension_numbers<[1], [0], [0], [1], [0, 0, 1, 1], [], []>} : vector<10x512xbf16>, vector<512x256xbf16>, vector<10x256xf32> -> vector<10x256xf32>
    %81 = arith.addf %76, %80 : vector<10x256xf32>
    %82 = vector.extract_strided_slice %68 {offsets = [0, 2, 0], sizes = [2, 5, 512], strides = [1, 1, 1]} : vector<2x9x512xbf16> to vector<2x5x512xbf16>
    %83 = vector.shape_cast %82 : vector<2x5x512xbf16> to vector<10x512xbf16>
    %c1024_40 = arith.constant 1024 : index
    %c0_41 = arith.constant 0 : index
    %84 = vector.load %arg20[%c1024_40, %c0_41] : memref<2560x256xbf16, #tpu.memory_space<vmem>>, vector<512x256xbf16>
    %cst_42 = arith.constant dense<0.000000e+00> : vector<10x256xf32>
    %85 = tpu.matmul %83, %84, %cst_42 {dimension_numbers = #tpu.dot_dimension_numbers<[1], [0], [0], [1], [0, 0, 1, 1], [], []>} : vector<10x512xbf16>, vector<512x256xbf16>, vector<10x256xf32> -> vector<10x256xf32>
    %86 = arith.addf %81, %85 : vector<10x256xf32>
    %87 = vector.extract_strided_slice %68 {offsets = [0, 3, 0], sizes = [2, 5, 512], strides = [1, 1, 1]} : vector<2x9x512xbf16> to vector<2x5x512xbf16>
    %88 = vector.shape_cast %87 : vector<2x5x512xbf16> to vector<10x512xbf16>
    %c1536 = arith.constant 1536 : index
    %c0_43 = arith.constant 0 : index
    %89 = vector.load %arg20[%c1536, %c0_43] : memref<2560x256xbf16, #tpu.memory_space<vmem>>, vector<512x256xbf16>
    %cst_44 = arith.constant dense<0.000000e+00> : vector<10x256xf32>
    %90 = tpu.matmul %88, %89, %cst_44 {dimension_numbers = #tpu.dot_dimension_numbers<[1], [0], [0], [1], [0, 0, 1, 1], [], []>} : vector<10x512xbf16>, vector<512x256xbf16>, vector<10x256xf32> -> vector<10x256xf32>
    %91 = arith.addf %86, %90 : vector<10x256xf32>
    %92 = vector.extract_strided_slice %68 {offsets = [0, 4, 0], sizes = [2, 5, 512], strides = [1, 1, 1]} : vector<2x9x512xbf16> to vector<2x5x512xbf16>
    %93 = vector.shape_cast %92 : vector<2x5x512xbf16> to vector<10x512xbf16>
    %c2048 = arith.constant 2048 : index
    %c0_45 = arith.constant 0 : index
    %94 = vector.load %arg20[%c2048, %c0_45] : memref<2560x256xbf16, #tpu.memory_space<vmem>>, vector<512x256xbf16>
    %cst_46 = arith.constant dense<0.000000e+00> : vector<10x256xf32>
    %95 = tpu.matmul %93, %94, %cst_46 {dimension_numbers = #tpu.dot_dimension_numbers<[1], [0], [0], [1], [0, 0, 1, 1], [], []>} : vector<10x512xbf16>, vector<512x256xbf16>, vector<10x256xf32> -> vector<10x256xf32>
    %96 = arith.addf %91, %95 : vector<10x256xf32>
    %97 = vector.broadcast %50 : vector<1x256xf32> to vector<10x256xf32>
    %98 = arith.addf %96, %97 : vector<10x256xf32>
    %cst_47 = arith.constant 0.000000e+00 : f32
    %99 = vector.broadcast %cst_47 : f32 to vector<10x256xf32>
    %100 = arith.maximumf %98, %99 : vector<10x256xf32>
    %101 = vector.shape_cast %100 : vector<10x256xf32> to vector<2x5x256xf32>
    %cst_48 = arith.constant dense<0xFF800000> : vector<2x256xf32>
    %102 = vector.multi_reduction <maximumf>, %101, %cst_48 [1] : vector<2x5x256xf32> to vector<2x256xf32>
    %103 = tpu.concatenate %47, %102 in 1 : vector<2x256xf32>, vector<2x256xf32> -> vector<2x512xf32>
    %104 = arith.truncf %103 : vector<2x512xf32> to vector<2x512xbf16>
    %c0_49 = arith.constant 0 : index
    %c0_50 = arith.constant 0 : index
    %105 = vector.load %arg10[%c0_49, %c0_50] : memref<512x64xbf16, #tpu.memory_space<vmem>>, vector<512x64xbf16>
    %cst_51 = arith.constant dense<0.000000e+00> : vector<2x64xf32>
    %106 = tpu.matmul %104, %105, %cst_51 {dimension_numbers = #tpu.dot_dimension_numbers<[1], [0], [0], [1], [0, 0, 1, 1], [], []>} : vector<2x512xbf16>, vector<512x64xbf16>, vector<2x64xf32> -> vector<2x64xf32>
    %c0_52 = arith.constant 0 : index
    %c0_53 = arith.constant 0 : index
    %107 = vector.load %arg11[%c0_52, %c0_53] : memref<1x64xf32, #tpu.memory_space<vmem>>, vector<1x64xf32>
    %108 = vector.broadcast %107 : vector<1x64xf32> to vector<2x64xf32>
    %109 = arith.addf %106, %108 : vector<2x64xf32>
    %cst_54 = arith.constant 0.000000e+00 : f32
    %110 = vector.broadcast %cst_54 : f32 to vector<2x64xf32>
    %111 = arith.maximumf %109, %110 : vector<2x64xf32>
    %c0_55 = arith.constant 0 : index
    %c0_56 = arith.constant 0 : index
    %112 = vector.load %arg1[%c0_55, %c0_56] : memref<2x16xf32, #tpu.memory_space<vmem>>, vector<2x16xf32>
    %113 = arith.truncf %112 : vector<2x16xf32> to vector<2x16xbf16>
    %c0_57 = arith.constant 0 : index
    %c0_58 = arith.constant 0 : index
    %114 = vector.load %arg12[%c0_57, %c0_58] : memref<16x128xbf16, #tpu.memory_space<vmem>>, vector<16x128xbf16>
    %cst_59 = arith.constant dense<0.000000e+00> : vector<2x128xf32>
    %115 = tpu.matmul %113, %114, %cst_59 {dimension_numbers = #tpu.dot_dimension_numbers<[1], [0], [0], [1], [0, 0, 1, 1], [], []>} : vector<2x16xbf16>, vector<16x128xbf16>, vector<2x128xf32> -> vector<2x128xf32>
    %c0_60 = arith.constant 0 : index
    %c0_61 = arith.constant 0 : index
    %116 = vector.load %arg13[%c0_60, %c0_61] : memref<1x128xf32, #tpu.memory_space<vmem>>, vector<1x128xf32>
    %117 = vector.broadcast %116 : vector<1x128xf32> to vector<2x128xf32>
    %118 = arith.addf %115, %117 : vector<2x128xf32>
    %cst_62 = arith.constant 0.000000e+00 : f32
    %119 = vector.broadcast %cst_62 : f32 to vector<2x128xf32>
    %120 = arith.maximumf %118, %119 : vector<2x128xf32>
    %121 = arith.truncf %120 : vector<2x128xf32> to vector<2x128xbf16>
    %c0_63 = arith.constant 0 : index
    %c0_64 = arith.constant 0 : index
    %122 = vector.load %arg14[%c0_63, %c0_64] : memref<128x64xbf16, #tpu.memory_space<vmem>>, vector<128x64xbf16>
    %cst_65 = arith.constant dense<0.000000e+00> : vector<2x64xf32>
    %123 = tpu.matmul %121, %122, %cst_65 {dimension_numbers = #tpu.dot_dimension_numbers<[1], [0], [0], [1], [0, 0, 1, 1], [], []>} : vector<2x128xbf16>, vector<128x64xbf16>, vector<2x64xf32> -> vector<2x64xf32>
    %c0_66 = arith.constant 0 : index
    %c0_67 = arith.constant 0 : index
    %124 = vector.load %arg15[%c0_66, %c0_67] : memref<1x64xf32, #tpu.memory_space<vmem>>, vector<1x64xf32>
    %125 = vector.broadcast %124 : vector<1x64xf32> to vector<2x64xf32>
    %126 = arith.addf %123, %125 : vector<2x64xf32>
    %cst_68 = arith.constant 0.000000e+00 : f32
    %127 = vector.broadcast %cst_68 : f32 to vector<2x64xf32>
    %128 = arith.maximumf %126, %127 : vector<2x64xf32>
    %129 = tpu.concatenate %128, %111 in 1 : vector<2x64xf32>, vector<2x64xf32> -> vector<2x128xf32>
    %130 = arith.truncf %129 : vector<2x128xf32> to vector<2x128xbf16>
    %c0_69 = arith.constant 0 : index
    %c0_70 = arith.constant 0 : index
    %131 = vector.load %arg16[%c0_69, %c0_70] : memref<128x2xbf16, #tpu.memory_space<vmem>>, vector<128x2xbf16>
    %cst_71 = arith.constant dense<0.000000e+00> : vector<2x2xf32>
    %132 = tpu.matmul %130, %131, %cst_71 {dimension_numbers = #tpu.dot_dimension_numbers<[1], [0], [0], [1], [0, 0, 1, 1], [], []>} : vector<2x128xbf16>, vector<128x2xbf16>, vector<2x2xf32> -> vector<2x2xf32>
    %c0_72 = arith.constant 0 : index
    %c0_73 = arith.constant 0 : index
    %133 = vector.load %arg17[%c0_72, %c0_73] : memref<1x2xf32, #tpu.memory_space<vmem>>, vector<1x2xf32>
    %134 = vector.broadcast %133 : vector<1x2xf32> to vector<2x2xf32>
    %135 = arith.addf %132, %134 : vector<2x2xf32>
    %c0_74 = arith.constant 0 : index
    %c0_75 = arith.constant 0 : index
    %136 = vector.load %arg18[%c0_74, %c0_75] : memref<2x2xf32, #tpu.memory_space<vmem>>, vector<2x2xf32>
    tpu.vector_store %arg18[%c0_74, %c0_75], %135 {strides = array<i32>} : memref<2x2xf32, #tpu.memory_space<vmem>>, vector<2x2xf32>,
    return
  }
}

</mosaic_0001>

<llo_original>
// kernel: forward.1
$region0: #{forward.1}
  #allocation0 [shape = 'u32[]', space=smem, size = 0x4, offset = 0x4, fixed_abs, tag = 'smem constant byte address 0x4 - core index']
  #allocation1 [shape = 'u32[144,128]{1,0:T(1,128)}', space=vmem, size = 0x12000, scoped, tag = 'internal scratch']
  #allocation2 [shape = 'bf16[1536,256]{1,0:T(8,128)(2,1)}', space=vmem, size = 0xc0000, scoped, tag = 'scratch operand']
  #allocation3 [shape = 'bf16[2560,256]{1,0:T(8,128)(2,1)}', space=vmem, size = 0x140000, scoped, tag = 'scratch operand']
  #allocation4 [shape = 's32[2]{0}', space=sflag, size = 0x8, scoped, tag = 'scratch operand']
  #allocation26 [shape = 's32[]', space=sflag, size = 0x4, offset = 0, fixed_abs, tag = 'sflag constant byte address 0x0 - dummy sync flag']
  #allocation27 [shape = 's32[]', space=sflag, size = 0x4, offset = 0, fixed_abs, tag = 'sflag constant byte address 0x0 - dummy sync flag']
  #allocation28 [shape = 'u32[]', space=smem, size = 0x4, offset = 0x44, fixed_abs, tag = 'smem constant byte address 0x44 - assertion arg 0']
  #allocation29 [shape = 'u32[]', space=smem, size = 0x4, offset = 0x48, fixed_abs, tag = 'smem constant byte address 0x48 - assertion arg 1']
  #allocation30 [shape = 's32[]', space=sflag, size = 0x4, offset = 0, fixed_abs, tag = 'sflag constant byte address 0x0 - dummy sync flag']
  #allocation31 [shape = 's32[]', space=sflag, size = 0x4, offset = 0, fixed_abs, tag = 'sflag constant byte address 0x0 - dummy sync flag']
  %s0 = inlined_call_operand.vmem [shape: f32[2,32,32], index: 0, kind: input, shape index: {}]
  %s1 = inlined_call_operand.hbm [shape: f32[2,16], index: 1, kind: input, shape index: {}]
  %s2 = inlined_call_operand.hbm [shape: bf16[128,512], index: 2, kind: input, shape index: {}]
  %s3 = inlined_call_operand.hbm [shape: f32[1,512], index: 3, kind: input, shape index: {}]
  %s4 = inlined_call_operand.hbm [shape: bf16[1536,256], index: 4, kind: input, shape index: {}]
  %s5 = inlined_call_operand.hbm [shape: f32[1,256], index: 5, kind: input, shape index: {}]
  %s6 = inlined_call_operand.hbm [shape: bf16[256,512], index: 6, kind: input, shape index: {}]
  %s7 = inlined_call_operand.hbm [shape: f32[1,512], index: 7, kind: input, shape index: {}]
  %s8 = inlined_call_operand.hbm [shape: bf16[2560,256], index: 8, kind: input, shape index: {}]
  %s9 = inlined_call_operand.hbm [shape: f32[1,256], index: 9, kind: input, shape index: {}]
  %s10 = inlined_call_operand.vmem [shape: bf16[512,64], index: 10, kind: input, shape index: {}]
  %s11 = inlined_call_operand.hbm [shape: f32[1,64], index: 11, kind: input, shape index: {}]
  %s12 = inlined_call_operand.hbm [shape: bf16[16,128], index: 12, kind: input, shape index: {}]
  %s13 = inlined_call_operand.hbm [shape: f32[1,128], index: 13, kind: input, shape index: {}]
  %s14 = inlined_call_operand.vmem [shape: bf16[128,64], index: 14, kind: input, shape index: {}]
  %s15 = inlined_call_operand.hbm [shape: f32[1,64], index: 15, kind: input, shape index: {}]
  %s16 = inlined_call_operand.vmem [shape: bf16[128,2], index: 16, kind: input, shape index: {}]
  %s17 = inlined_call_operand.hbm [shape: f32[1,2], index: 17, kind: input, shape index: {}]
  %s18 = inlined_call_operand.hbm [shape: f32[2,2], index: 18, kind: output, shape index: {}]
  %s19 = sld [smem:[#allocation0]]
  $region130: #{forward.1} parent=0
    _
  %s21 = ssub.s32 1, %s19
  %s22 = scalar_select 0, %s21, %s19
  $region1: #{forward.1} parent=0
    #allocation5 [shape = 'u8[1024]{0}', space=vmem, size = 0x400, scoped, tag = 'input window, operand 1, single buffered']
    #allocation6 [shape = 's32[1]{0}', space=sflag, size = 0x4, scoped, tag = 'scoped memory for forward.1']
    #allocation7 [shape = 's32[1]{0}', space=sflag, size = 0x4, scoped, tag = 'scoped memory for forward.1']
    #allocation8 [shape = 'u8[131072]{0}', space=vmem, size = 0x20000, scoped, tag = 'input window, operand 2, single buffered']
    #allocation9 [shape = 's32[1]{0}', space=sflag, size = 0x4, scoped, tag = 'scoped memory for forward.1']
    #allocation10 [shape = 'u8[2048]{0}', space=vmem, size = 0x800, scoped, tag = 'input window, operand 3, single buffered']
    #allocation11 [shape = 'u8[1024]{0}', space=vmem, size = 0x400, scoped, tag = 'input window, operand 5, single buffered']
    #allocation12 [shape = 's32[1]{0}', space=sflag, size = 0x4, scoped, tag = 'scoped memory for forward.1']
    #allocation13 [shape = 'u8[262144]{0}', space=vmem, size = 0x40000, scoped, tag = 'input window, operand 6, single buffered']
    #allocation14 [shape = 'u8[2048]{0}', space=vmem, size = 0x800, scoped, tag = 'input window, operand 7, single buffered']
    #allocation15 [shape = 's32[1]{0}', space=sflag, size = 0x4, scoped, tag = 'scoped memory for forward.1']
    #allocation16 [shape = 'u8[1024]{0}', space=vmem, size = 0x400, scoped, tag = 'input window, operand 9, single buffered']
    #allocation17 [shape = 'u8[512]{0}', space=vmem, size = 0x400, scoped, tag = 'input window, operand 11, single buffered']
    #allocation18 [shape = 's32[1]{0}', space=sflag, size = 0x4, scoped, tag = 'scoped memory for forward.1']
    #allocation19 [shape = 'u8[4096]{0}', space=vmem, size = 0x1000, scoped, tag = 'input window, operand 12, single buffered']
    #allocation20 [shape = 'u8[512]{0}', space=vmem, size = 0x400, scoped, tag = 'input window, operand 13, single buffered']
    #allocation21 [shape = 's32[1]{0}', space=sflag, size = 0x4, scoped, tag = 'scoped memory for forward.1']
    #allocation22 [shape = 'u8[512]{0}', space=vmem, size = 0x400, scoped, tag = 'input window, operand 15, single buffered']
    #allocation23 [shape = 'u8[512]{0}', space=vmem, size = 0x400, scoped, tag = 'input window, operand 17, single buffered']
    #allocation24 [shape = 's32[1]{0}', space=sflag, size = 0x4, scoped, tag = 'scoped memory for forward.1']
    #allocation25 [shape = 'u8[1024]{0}', space=vmem, size = 0x400, scoped, tag = 'output window, operand 0, single buffered']
    %23 = vsyncpa [#allocation6], 0
    %24 = vsyncpa [#allocation9], 0
    %25 = vsyncpa [#allocation12], 0
    %26 = vsyncpa [#allocation15], 0
    %27 = vsyncpa [#allocation18], 0
    %28 = vsyncpa [#allocation21], 0
    %29 = vsyncpa [#allocation24], 0
    %30 = vsyncpa [#allocation7], 0
    // Predicated region
    $region2: #{forward.1} parent=1 // pred_check
      _
    $region3: #{forward.1} parent=1 // pred_check_branch
      %32 = sbr.rel (0) target = $region5
    $region4: #{forward.1} parent=1 // pred_region
      _
    $region5: #{forward.1} parent=1 // pred_fallthru
      _
    // Predicated region
    $region6: #{forward.1} parent=1 // pred_check
      _
    $region7: #{forward.1} parent=1 // pred_check_branch
      %34 = sbr.rel (0) target = $region9
    $region8: #{forward.1} parent=1 // pred_region
      %s36 = ssub.s32 32, 32
      %37 = vsyncadd [#allocation6], %s36
      %s39 = sshll.u32 [#allocation5], 4
      %s40 = int_to_ptr.vmem [resolvable:$true] %s39
      %42 = dma.hbm_to_vmem [thread:$0]  %s1, 32, %s40, [#allocation6]
    $region9: #{forward.1} parent=1 // pred_fallthru
      _
    // Predicated region
    $region10: #{forward.1} parent=1 // pred_check
      _
    $region11: #{forward.1} parent=1 // pred_check_branch
      %44 = sbr.rel (0) target = $region13
    $region12: #{forward.1} parent=1 // pred_region
      %s46 = ssub.s32 4096, 4096
      %47 = vsyncadd [#allocation9], %s46
      %s48 = sshll.u32 [#allocation8], 4
      %s49 = int_to_ptr.vmem [resolvable:$true] %s48
      %54 = dma.hbm_to_vmem [thread:$0]  %s2, 4096, %s49, [#allocation9], 256, 256, 16
    $region13: #{forward.1} parent=1 // pred_fallthru
      _
    // Predicated region
    $region14: #{forward.1} parent=1 // pred_check
      _
    $region15: #{forward.1} parent=1 // pred_check_branch
      %56 = sbr.rel (0) target = $region17
    $region16: #{forward.1} parent=1 // pred_region
      %s58 = ssub.s32 64, 64
      %59 = vsyncadd [#allocation9], %s58
      %s61 = sshll.u32 [#allocation10], 4
      %s62 = int_to_ptr.vmem [resolvable:$true] %s61
      %64 = dma.hbm_to_vmem [thread:$0]  %s3, 64, %s62, [#allocation9]
    $region17: #{forward.1} parent=1 // pred_fallthru
      _
    // Predicated region
    $region18: #{forward.1} parent=1 // pred_check
      _
    $region19: #{forward.1} parent=1 // pred_check_branch
      %66 = sbr.rel (0) target = $region21
    $region20: #{forward.1} parent=1 // pred_region
      %s68 = ssub.s32 32, 32
      %69 = vsyncadd [#allocation12], %s68
      %s71 = sshll.u32 [#allocation11], 4
      %s72 = int_to_ptr.vmem [resolvable:$true] %s71
      %74 = dma.hbm_to_vmem [thread:$0]  %s5, 32, %s72, [#allocation12]
    $region21: #{forward.1} parent=1 // pred_fallthru
      _
    // Predicated region
    $region22: #{forward.1} parent=1 // pred_check
      _
    $region23: #{forward.1} parent=1 // pred_check_branch
      %76 = sbr.rel (0) target = $region25
    $region24: #{forward.1} parent=1 // pred_region
      %s78 = ssub.s32 8192, 8192
      %79 = vsyncadd [#allocation12], %s78
      %s80 = sshll.u32 [#allocation13], 4
      %s81 = int_to_ptr.vmem [resolvable:$true] %s80
      %86 = dma.hbm_to_vmem [thread:$0]  %s6, 8192, %s81, [#allocation12], 256, 256, 16
    $region25: #{forward.1} parent=1 // pred_fallthru
      _
    // Predicated region
    $region26: #{forward.1} parent=1 // pred_check
      _
    $region27: #{forward.1} parent=1 // pred_check_branch
      %88 = sbr.rel (0) target = $region29
    $region28: #{forward.1} parent=1 // pred_region
      %s90 = ssub.s32 64, 64
      %91 = vsyncadd [#allocation15], %s90
      %s93 = sshll.u32 [#allocation14], 4
      %s94 = int_to_ptr.vmem [resolvable:$true] %s93
      %96 = dma.hbm_to_vmem [thread:$0]  %s7, 64, %s94, [#allocation15]
    $region29: #{forward.1} parent=1 // pred_fallthru
      _
    // Predicated region
    $region30: #{forward.1} parent=1 // pred_check
      _
    $region31: #{forward.1} parent=1 // pred_check_branch
      %98 = sbr.rel (0) target = $region33
    $region32: #{forward.1} parent=1 // pred_region
      %s100 = ssub.s32 32, 32
      %101 = vsyncadd [#allocation15], %s100
      %s103 = sshll.u32 [#allocation16], 4
      %s104 = int_to_ptr.vmem [resolvable:$true] %s103
      %106 = dma.hbm_to_vmem [thread:$0]  %s9, 32, %s104, [#allocation15]
    $region33: #{forward.1} parent=1 // pred_fallthru
      _
    // Predicated region
    $region34: #{forward.1} parent=1 // pred_check
      _
    $region35: #{forward.1} parent=1 // pred_check_branch
      %108 = sbr.rel (0) target = $region37
    $region36: #{forward.1} parent=1 // pred_region
      _
    $region37: #{forward.1} parent=1 // pred_fallthru
      _
    // Predicated region
    $region38: #{forward.1} parent=1 // pred_check
      _
    $region39: #{forward.1} parent=1 // pred_check_branch
      %110 = sbr.rel (0) target = $region41
    $region40: #{forward.1} parent=1 // pred_region
      %s112 = ssub.s32 16, 16
      %113 = vsyncadd [#allocation18], %s112
      %s115 = sshll.u32 [#allocation17], 4
      %s116 = int_to_ptr.vmem [resolvable:$true] %s115
      %118 = dma.hbm_to_vmem [thread:$0]  %s11, 16, %s116, [#allocation18]
    $region41: #{forward.1} parent=1 // pred_fallthru
      _
    // Predicated region
    $region42: #{forward.1} parent=1 // pred_check
      _
    $region43: #{forward.1} parent=1 // pred_check_branch
      %120 = sbr.rel (0) target = $region45
    $region44: #{forward.1} parent=1 // pred_region
      %s122 = ssub.s32 128, 128
      %123 = vsyncadd [#allocation18], %s122
      %s124 = sshll.u32 [#allocation19], 4
      %s125 = int_to_ptr.vmem [resolvable:$true] %s124
      %130 = dma.hbm_to_vmem [thread:$0]  %s12, 128, %s125, [#allocation18], 64, 64, 4
    $region45: #{forward.1} parent=1 // pred_fallthru
      _
    // Predicated region
    $region46: #{forward.1} parent=1 // pred_check
      _
    $region47: #{forward.1} parent=1 // pred_check_branch
      %132 = sbr.rel (0) target = $region49
    $region48: #{forward.1} parent=1 // pred_region
      %s134 = ssub.s32 16, 16
      %135 = vsyncadd [#allocation21], %s134
      %s137 = sshll.u32 [#allocation20], 4
      %s138 = int_to_ptr.vmem [resolvable:$true] %s137
      %140 = dma.hbm_to_vmem [thread:$0]  %s13, 16, %s138, [#allocation21]
    $region49: #{forward.1} parent=1 // pred_fallthru
      _
    // Predicated region
    $region50: #{forward.1} parent=1 // pred_check
      _
    $region51: #{forward.1} parent=1 // pred_check_branch
      %142 = sbr.rel (0) target = $region53
    $region52: #{forward.1} parent=1 // pred_region
      _
    $region53: #{forward.1} parent=1 // pred_fallthru
      _
    // Predicated region
    $region54: #{forward.1} parent=1 // pred_check
      _
    $region55: #{forward.1} parent=1 // pred_check_branch
      %144 = sbr.rel (0) target = $region57
    $region56: #{forward.1} parent=1 // pred_region
      %s146 = ssub.s32 16, 16
      %147 = vsyncadd [#allocation21], %s146
      %s149 = sshll.u32 [#allocation22], 4
      %s150 = int_to_ptr.vmem [resolvable:$true] %s149
      %152 = dma.hbm_to_vmem [thread:$0]  %s15, 16, %s150, [#allocation21]
    $region57: #{forward.1} parent=1 // pred_fallthru
      _
    // Predicated region
    $region58: #{forward.1} parent=1 // pred_check
      _
    $region59: #{forward.1} parent=1 // pred_check_branch
      %154 = sbr.rel (0) target = $region61
    $region60: #{forward.1} parent=1 // pred_region
      _
    $region61: #{forward.1} parent=1 // pred_fallthru
      _
    // Predicated region
    $region62: #{forward.1} parent=1 // pred_check
      _
    $region63: #{forward.1} parent=1 // pred_check_branch
      %156 = sbr.rel (0) target = $region65
    $region64: #{forward.1} parent=1 // pred_region
      %s158 = ssub.s32 16, 16
      %159 = vsyncadd [#allocation24], %s158
      %s161 = sshll.u32 [#allocation23], 4
      %s162 = int_to_ptr.vmem [resolvable:$true] %s161
      %164 = dma.hbm_to_vmem [thread:$0]  %s17, 16, %s162, [#allocation24]
    $region65: #{forward.1} parent=1 // pred_fallthru
      _
    // Predicated region
    $region66: #{forward.1} parent=1 // pred_check
      _
    $region67: #{forward.1} parent=1 // pred_check_branch
      %166 = sbr.rel (0) target = $region69
    $region68: #{forward.1} parent=1 // pred_region
      %167 = dma.done [#allocation6], 32
    $region69: #{forward.1} parent=1 // pred_fallthru
      _
    // Predicated region
    $region70: #{forward.1} parent=1 // pred_check
      _
    $region71: #{forward.1} parent=1 // pred_check_branch
      %169 = sbr.rel (0) target = $region73
    $region72: #{forward.1} parent=1 // pred_region
      %170 = dma.done [#allocation9], 4096
    $region73: #{forward.1} parent=1 // pred_fallthru
      _
    // Predicated region
    $region74: #{forward.1} parent=1 // pred_check
      _
    $region75: #{forward.1} parent=1 // pred_check_branch
      %172 = sbr.rel (0) target = $region77
    $region76: #{forward.1} parent=1 // pred_region
      %173 = dma.done [#allocation9], 64
    $region77: #{forward.1} parent=1 // pred_fallthru
      _
    // Predicated region
    $region78: #{forward.1} parent=1 // pred_check
      _
    $region79: #{forward.1} parent=1 // pred_check_branch
      %175 = sbr.rel (0) target = $region81
    $region80: #{forward.1} parent=1 // pred_region
      %176 = dma.done [#allocation12], 32
    $region81: #{forward.1} parent=1 // pred_fallthru
      _
    // Predicated region
    $region82: #{forward.1} parent=1 // pred_check
      _
    $region83: #{forward.1} parent=1 // pred_check_branch
      %178 = sbr.rel (0) target = $region85
    $region84: #{forward.1} parent=1 // pred_region
      %179 = dma.done [#allocation12], 8192
    $region85: #{forward.1} parent=1 // pred_fallthru
      _
    // Predicated region
    $region86: #{forward.1} parent=1 // pred_check
      _
    $region87: #{forward.1} parent=1 // pred_check_branch
      %181 = sbr.rel (0) target = $region89
    $region88: #{forward.1} parent=1 // pred_region
      %182 = dma.done [#allocation15], 64
    $region89: #{forward.1} parent=1 // pred_fallthru
      _
    // Predicated region
    $region90: #{forward.1} parent=1 // pred_check
      _
    $region91: #{forward.1} parent=1 // pred_check_branch
      %184 = sbr.rel (0) target = $region93
    $region92: #{forward.1} parent=1 // pred_region
      %185 = dma.done [#allocation15], 32
    $region93: #{forward.1} parent=1 // pred_fallthru
      _
    // Predicated region
    $region94: #{forward.1} parent=1 // pred_check
      _
    $region95: #{forward.1} parent=1 // pred_check_branch
      %187 = sbr.rel (0) target = $region97
    $region96: #{forward.1} parent=1 // pred_region
      %188 = dma.done [#allocation18], 16
    $region97: #{forward.1} parent=1 // pred_fallthru
      _
    // Predicated region
    $region98: #{forward.1} parent=1 // pred_check
      _
    $region99: #{forward.1} parent=1 // pred_check_branch
      %190 = sbr.rel (0) target = $region101
    $region100: #{forward.1} parent=1 // pred_region
      %191 = dma.done [#allocation18], 128
    $region101: #{forward.1} parent=1 // pred_fallthru
      _
    // Predicated region
    $region102: #{forward.1} parent=1 // pred_check
      _
    $region103: #{forward.1} parent=1 // pred_check_branch
      %193 = sbr.rel (0) target = $region105
    $region104: #{forward.1} parent=1 // pred_region
      %194 = dma.done [#allocation21], 16
    $region105: #{forward.1} parent=1 // pred_fallthru
      _
    // Predicated region
    $region106: #{forward.1} parent=1 // pred_check
      _
    $region107: #{forward.1} parent=1 // pred_check_branch
      %196 = sbr.rel (0) target = $region109
    $region108: #{forward.1} parent=1 // pred_region
      %197 = dma.done [#allocation21], 16
    $region109: #{forward.1} parent=1 // pred_fallthru
      _
    // Predicated region
    $region110: #{forward.1} parent=1 // pred_check
      _
    $region111: #{forward.1} parent=1 // pred_check_branch
      %199 = sbr.rel (0) target = $region113
    $region112: #{forward.1} parent=1 // pred_region
      %200 = dma.done [#allocation24], 16
    $region113: #{forward.1} parent=1 // pred_fallthru
      _
    // Predicated region
    $region114: #{forward.1} parent=1 // pred_check
      _
    $region115: #{forward.1} parent=1 // pred_check_branch
      %203 = sbr.rel target = $region117
    $region116: #{forward.1} parent=1 // pred_region
      %204 = sst [smem:[#allocation28]] [#allocation27]
      %205 = sst [smem:[#allocation29]] [#allocation26]
    $region117: #{forward.1} parent=1 // pred_fallthru
      _
    %207 = shalt.err (0)
    %s209 = sshll.u32 [#allocation2], 4
    %s210 = int_to_ptr.vmem [resolvable:$true] %s209
    %212 = dma.hbm_to_vmem [thread:$0]  %s4, 24576, %s210, [#allocation4]
    %s213 = scalar_lea.sflag [#allocation4], 1
    // Predicated region
    $region118: #{forward.1} parent=1 // pred_check
      _
    $region119: #{forward.1} parent=1 // pred_check_branch
      %215 = sbr.rel target = $region121
    $region120: #{forward.1} parent=1 // pred_region
      %216 = sst [smem:[#allocation28]] [#allocation31]
      %217 = sst [smem:[#allocation29]] [#allocation30]
    $region121: #{forward.1} parent=1 // pred_fallthru
      _
    %219 = shalt.err (0)
    %s221 = sshll.u32 [#allocation3], 4
    %s222 = int_to_ptr.vmem [resolvable:$true] %s221
    %224 = dma.hbm_to_vmem [thread:$0]  %s8, 40960, %s222, %s213
    %v225 = vld [vmem:[%s0] sm:$0xff]
    %v226 = vld [vmem:[%s0 + $0x8] sm:$0xff]
    %v227 = vld [vmem:[%s0 + $0x10] sm:$0xff]
    %v228 = vld [vmem:[%s0 + $0x18] sm:$0xff]
    %v229 = vld [vmem:[%s0 + $0x20] sm:$0xff]
    %v230 = vld [vmem:[%s0 + $0x28] sm:$0xff]
    %v231 = vld [vmem:[%s0 + $0x30] sm:$0xff]
    %v232 = vld [vmem:[%s0 + $0x38] sm:$0xff]
    %v233 = vpack.c.bf16 %v226, %v225
    %v234 = vpack.c.bf16 %v228, %v227
    %v235 = vpack.c.bf16 %v230, %v229
    %v236 = vpack.c.bf16 %v232, %v231
    %v237 = vld [vmem:[#allocation8] sm:$0xff]
    %v238 = vld [vmem:[#allocation8 + $0x8] sm:$0xff]
    %v239 = vld [vmem:[#allocation8 + $0x10] sm:$0xff]
    %v240 = vld [vmem:[#allocation8 + $0x18] sm:$0xff]
    %v241 = vld [vmem:[#allocation8 + $0x20] sm:$0xff]
    %v242 = vld [vmem:[#allocation8 + $0x28] sm:$0xff]
    %v243 = vld [vmem:[#allocation8 + $0x30] sm:$0xff]
    %v244 = vld [vmem:[#allocation8 + $0x38] sm:$0xff]
    %v245 = vld [vmem:[#allocation8 + $0x40] sm:$0xff]
    %v246 = vld [vmem:[#allocation8 + $0x48] sm:$0xff]
    %v247 = vld [vmem:[#allocation8 + $0x50] sm:$0xff]
    %v248 = vld [vmem:[#allocation8 + $0x58] sm:$0xff]
    %v249 = vld [vmem:[#allocation8 + $0x60] sm:$0xff]
    %v250 = vld [vmem:[#allocation8 + $0x68] sm:$0xff]
    %v251 = vld [vmem:[#allocation8 + $0x70] sm:$0xff]
    %v252 = vld [vmem:[#allocation8 + $0x78] sm:$0xff]
    %v253 = vld [vmem:[#allocation8 + $0x80] sm:$0xff]
    %v254 = vld [vmem:[#allocation8 + $0x88] sm:$0xff]
    %v255 = vld [vmem:[#allocation8 + $0x90] sm:$0xff]
    %v256 = vld [vmem:[#allocation8 + $0x98] sm:$0xff]
    %v257 = vld [vmem:[#allocation8 + $0xa0] sm:$0xff]
    %v258 = vld [vmem:[#allocation8 + $0xa8] sm:$0xff]
    %v259 = vld [vmem:[#allocation8 + $0xb0] sm:$0xff]
    %v260 = vld [vmem:[#allocation8 + $0xb8] sm:$0xff]
    %v261 = vld [vmem:[#allocation8 + $0xc0] sm:$0xff]
    %v262 = vld [vmem:[#allocation8 + $0xc8] sm:$0xff]
    %v263 = vld [vmem:[#allocation8 + $0xd0] sm:$0xff]
    %v264 = vld [vmem:[#allocation8 + $0xd8] sm:$0xff]
    %v265 = vld [vmem:[#allocation8 + $0xe0] sm:$0xff]
    %v266 = vld [vmem:[#allocation8 + $0xe8] sm:$0xff]
    %v267 = vld [vmem:[#allocation8 + $0xf0] sm:$0xff]
    %v268 = vld [vmem:[#allocation8 + $0xf8] sm:$0xff]
    %v269 = vld [vmem:[#allocation10] sm:$0xf]
    %v270 = vld [vmem:[#allocation11] sm:$0x3]
    %vm271 = vsmask.f32 7424
    %v273 = vshrl.u32 %v233, 16
    %v275 = vshll.u32 %v233, 16
    %v277 = vrot.slane %v275, 1
    %v278 = vor.u32 %v273, %v277
    %v280 = vshll.u32 %v234, 16
    %v282 = vrot.slane %v280, 1
    %v283 = vsel %vm271, %v278, %v282
    %v284 = vshrl.u32 %v234, 16
    %v286 = vor.u32 %v284, %v282
    %v288 = vshrl.u32 %v235, 16
    %v290 = vshll.u32 %v235, 16
    %v292 = vrot.slane %v290, 1
    %v293 = vor.u32 %v288, %v292
    %v295 = vshll.u32 %v236, 16
    %v297 = vrot.slane %v295, 1
    %v298 = vsel %vm271, %v293, %v297
    %v299 = vshrl.u32 %v236, 16
    %v301 = vor.u32 %v299, %v297
    %302 = vrot.lane.b32.xlu0 %v283, 32
    %v303 = vpop.permute.xlu0 %302
    %304 = vrot.lane.b32.xlu0 %v286, 32
    %v305 = vpop.permute.xlu0 %304
    %306 = vrot.lane.b32.xlu0 %v298, 32
    %v307 = vpop.permute.xlu0 %306
    %308 = vrot.lane.b32.xlu0 %v301, 32
    %v309 = vpop.permute.xlu0 %308
    %vm314 = vcmask 1046528
    %v315 = vrot.slane %v233, 1
    %v316 = vrot.slane %v234, 1
    %v317 = vsel %vm314, %v315, %v316
    %v318 = vrot.slane %v235, 1
    %v319 = vrot.slane %v236, 1
    %v320 = vsel %vm314, %v318, %v319
    %321 = vrot.lane.b32.xlu0 %v317, 64
    %v322 = vpop.permute.xlu0 %321
    %323 = vrot.lane.b32.xlu0 %v316, 64
    %v324 = vpop.permute.xlu0 %323
    %325 = vrot.lane.b32.xlu0 %v320, 64
    %v326 = vpop.permute.xlu0 %325
    %327 = vrot.lane.b32.xlu0 %v319, 64
    %v328 = vpop.permute.xlu0 %327
    %vm329 = vcmask 261120
    %v331 = vsel %vm329, %v233, %v303
    %v333 = vsel %vm329, %v234, %v305
    %v335 = vsel %vm329, %v235, %v307
    %v337 = vsel %vm329, %v236, %v309
    %vm338 = vcmask 523264
    %v340 = vsel %vm338, %v331, %v322
    %v342 = vsel %vm338, %v333, %v324
    %v344 = vsel %vm338, %v335, %v326
    %v346 = vsel %vm338, %v337, %v328
    %vm347 = vcmask 785408
    %v349 = vsel %vm347, %v340, 0
    %v350 = vsel %vm347, %v342, 0
    %v351 = vsel %vm347, %v344, 0
    %v352 = vsel %vm347, %v346, 0
    %v357 = vcombine.high %v349, %v349
    %v359 = vunpack.c.l.s4 1966171168
    %v360 = vunpack.c.0.s8 %v359
    %v361 = vlaneseq
    %v362 = vshrl.u32 %v361, 7
    %v363 = vsub.s32 %v360, %v362
    %v364 = vrot.slane %v349, %v363
    %v366 = vunpack.c.l.s4 1966171168
    %v367 = vunpack.c.0.s8 %v366
    %v368 = vlaneseq
    %v369 = vshrl.u32 %v368, 7
    %v370 = vsub.s32 %v367, %v369
    %v371 = vrot.slane %v357, %v370
    %v372 = vcombine.high %v364, %v364
    %v373 = vcombine.high %v371, %v371
    %v375 = vunpack.c.l.s4 1966171168
    %v376 = vunpack.c.0.s8 %v375
    %v377 = vlaneseq
    %v378 = vshrl.u32 %v377, 7
    %v379 = vsub.s32 %v376, %v378
    %v380 = vrot.slane %v364, %v379
    %v382 = vunpack.c.l.s4 1966171168
    %v383 = vunpack.c.0.s8 %v382
    %v384 = vlaneseq
    %v385 = vshrl.u32 %v384, 7
    %v386 = vsub.s32 %v383, %v385
    %v387 = vrot.slane %v371, %v386
    %v389 = vunpack.c.l.s4 1966171168
    %v390 = vunpack.c.0.s8 %v389
    %v391 = vlaneseq
    %v392 = vshrl.u32 %v391, 7
    %v393 = vsub.s32 %v390, %v392
    %v394 = vrot.slane %v372, %v393
    %v396 = vunpack.c.l.s4 1966171168
    %v397 = vunpack.c.0.s8 %v396
    %v398 = vlaneseq
    %v399 = vshrl.u32 %v398, 7
    %v400 = vsub.s32 %v397, %v399
    %v401 = vrot.slane %v373, %v400
    %v402 = vcombine.high %v380, %v380
    %v403 = vcombine.high %v387, %v387
    %v404 = vcombine.high %v394, %v394
    %v405 = vcombine.high %v401, %v401
    %v406 = vcombine.high %v350, %v350
    %v408 = vunpack.c.l.s4 1966171168
    %v409 = vunpack.c.0.s8 %v408
    %v410 = vlaneseq
    %v411 = vshrl.u32 %v410, 7
    %v412 = vsub.s32 %v409, %v411
    %v413 = vrot.slane %v350, %v412
    %v415 = vunpack.c.l.s4 1966171168
    %v416 = vunpack.c.0.s8 %v415
    %v417 = vlaneseq
    %v418 = vshrl.u32 %v417, 7
    %v419 = vsub.s32 %v416, %v418
    %v420 = vrot.slane %v406, %v419
    %v421 = vcombine.high %v413, %v413
    %v422 = vcombine.high %v420, %v420
    %v424 = vunpack.c.l.s4 1966171168
    %v425 = vunpack.c.0.s8 %v424
    %v426 = vlaneseq
    %v427 = vshrl.u32 %v426, 7
    %v428 = vsub.s32 %v425, %v427
    %v429 = vrot.slane %v413, %v428
    %v431 = vunpack.c.l.s4 1966171168
    %v432 = vunpack.c.0.s8 %v431
    %v433 = vlaneseq
    %v434 = vshrl.u32 %v433, 7
    %v435 = vsub.s32 %v432, %v434
    %v436 = vrot.slane %v420, %v435
    %v438 = vunpack.c.l.s4 1966171168
    %v439 = vunpack.c.0.s8 %v438
    %v440 = vlaneseq
    %v441 = vshrl.u32 %v440, 7
    %v442 = vsub.s32 %v439, %v441
    %v443 = vrot.slane %v421, %v442
    %v445 = vunpack.c.l.s4 1966171168
    %v446 = vunpack.c.0.s8 %v445
    %v447 = vlaneseq
    %v448 = vshrl.u32 %v447, 7
    %v449 = vsub.s32 %v446, %v448
    %v450 = vrot.slane %v422, %v449
    %v451 = vcombine.high %v429, %v429
    %v452 = vcombine.high %v436, %v436
    %v453 = vcombine.high %v443, %v443
    %v454 = vcombine.high %v351, %v351
    %v456 = vunpack.c.l.s4 1966171168
    %v457 = vunpack.c.0.s8 %v456
    %v458 = vlaneseq
    %v459 = vshrl.u32 %v458, 7
    %v460 = vsub.s32 %v457, %v459
    %v461 = vrot.slane %v351, %v460
    %v463 = vunpack.c.l.s4 1966171168
    %v464 = vunpack.c.0.s8 %v463
    %v465 = vlaneseq
    %v466 = vshrl.u32 %v465, 7
    %v467 = vsub.s32 %v464, %v466
    %v468 = vrot.slane %v454, %v467
    %v469 = vcombine.high %v461, %v461
    %v470 = vcombine.high %v468, %v468
    %v472 = vunpack.c.l.s4 1966171168
    %v473 = vunpack.c.0.s8 %v472
    %v474 = vlaneseq
    %v475 = vshrl.u32 %v474, 7
    %v476 = vsub.s32 %v473, %v475
    %v477 = vrot.slane %v461, %v476
    %v479 = vunpack.c.l.s4 1966171168
    %v480 = vunpack.c.0.s8 %v479
    %v481 = vlaneseq
    %v482 = vshrl.u32 %v481, 7
    %v483 = vsub.s32 %v480, %v482
    %v484 = vrot.slane %v468, %v483
    %v486 = vunpack.c.l.s4 1966171168
    %v487 = vunpack.c.0.s8 %v486
    %v488 = vlaneseq
    %v489 = vshrl.u32 %v488, 7
    %v490 = vsub.s32 %v487, %v489
    %v491 = vrot.slane %v469, %v490
    %v493 = vunpack.c.l.s4 1966171168
    %v494 = vunpack.c.0.s8 %v493
    %v495 = vlaneseq
    %v496 = vshrl.u32 %v495, 7
    %v497 = vsub.s32 %v494, %v496
    %v498 = vrot.slane %v470, %v497
    %v499 = vcombine.high %v477, %v477
    %v500 = vcombine.high %v484, %v484
    %v501 = vcombine.high %v491, %v491
    %v502 = vcombine.high %v498, %v498
    %v503 = vcombine.high %v352, %v352
    %v505 = vunpack.c.l.s4 1966171168
    %v506 = vunpack.c.0.s8 %v505
    %v507 = vlaneseq
    %v508 = vshrl.u32 %v507, 7
    %v509 = vsub.s32 %v506, %v508
    %v510 = vrot.slane %v352, %v509
    %v512 = vunpack.c.l.s4 1966171168
    %v513 = vunpack.c.0.s8 %v512
    %v514 = vlaneseq
    %v515 = vshrl.u32 %v514, 7
    %v516 = vsub.s32 %v513, %v515
    %v517 = vrot.slane %v503, %v516
    %v518 = vcombine.high %v510, %v510
    %v519 = vcombine.high %v517, %v517
    %v521 = vunpack.c.l.s4 1966171168
    %v522 = vunpack.c.0.s8 %v521
    %v523 = vlaneseq
    %v524 = vshrl.u32 %v523, 7
    %v525 = vsub.s32 %v522, %v524
    %v526 = vrot.slane %v510, %v525
    %v528 = vunpack.c.l.s4 1966171168
    %v529 = vunpack.c.0.s8 %v528
    %v530 = vlaneseq
    %v531 = vshrl.u32 %v530, 7
    %v532 = vsub.s32 %v529, %v531
    %v533 = vrot.slane %v517, %v532
    %v535 = vunpack.c.l.s4 1966171168
    %v536 = vunpack.c.0.s8 %v535
    %v537 = vlaneseq
    %v538 = vshrl.u32 %v537, 7
    %v539 = vsub.s32 %v536, %v538
    %v540 = vrot.slane %v518, %v539
    %v542 = vunpack.c.l.s4 1966171168
    %v543 = vunpack.c.0.s8 %v542
    %v544 = vlaneseq
    %v545 = vshrl.u32 %v544, 7
    %v546 = vsub.s32 %v543, %v545
    %v547 = vrot.slane %v519, %v546
    %v548 = vcombine.high %v526, %v526
    %v549 = vcombine.high %v533, %v533
    %v550 = vcombine.high %v540, %v540
    %v552 = vlaneseq
    %v553 = vshrl.u32 %v552, 7
    %v554 = vsub.s32 0, %v553
    %v555 = vrot.slane %v269, %v554
    %v556 = vlaneseq
    %v557 = vshrl.u32 %v556, 7
    %v558 = vsub.s32 1, %v557
    %v559 = vrot.slane %v269, %v558
    %v560 = vlaneseq
    %v561 = vshrl.u32 %v560, 7
    %v562 = vsub.s32 2, %v561
    %v563 = vrot.slane %v269, %v562
    %v564 = vlaneseq
    %v565 = vshrl.u32 %v564, 7
    %v566 = vsub.s32 3, %v565
    %v567 = vrot.slane %v269, %v566
    %v572 = vcombine.low %v380, %v394
    %v573 = vcombine.low %v402, %v404
    %v574 = vcombine.low %v387, %v401
    %v575 = vcombine.low %v403, %v405
    %v577 = vunpack.c.l.s4 1966171168
    %v578 = vunpack.c.0.s8 %v577
    %v579 = vlaneseq
    %v580 = vshrl.u32 %v579, 7
    %v581 = vsub.s32 %v578, %v580
    %v582 = vrot.slane %v572, %v581
    %v584 = vunpack.c.l.s4 1966171168
    %v585 = vunpack.c.0.s8 %v584
    %v586 = vlaneseq
    %v587 = vshrl.u32 %v586, 7
    %v588 = vsub.s32 %v585, %v587
    %v589 = vrot.slane %v573, %v588
    %v591 = vunpack.c.l.s4 1966171168
    %v592 = vunpack.c.0.s8 %v591
    %v593 = vlaneseq
    %v594 = vshrl.u32 %v593, 7
    %v595 = vsub.s32 %v592, %v594
    %v596 = vrot.slane %v574, %v595
    %v598 = vunpack.c.l.s4 1966171168
    %v599 = vunpack.c.0.s8 %v598
    %v600 = vlaneseq
    %v601 = vshrl.u32 %v600, 7
    %v602 = vsub.s32 %v599, %v601
    %v603 = vrot.slane %v575, %v602
    %v604 = vcombine.low %v582, %v589
    %v605 = vcombine.low %v596, %v603
    %v607 = vunpack.c.l.s4 1966171168
    %v608 = vunpack.c.0.s8 %v607
    %v609 = vlaneseq
    %v610 = vshrl.u32 %v609, 7
    %v611 = vsub.s32 %v608, %v610
    %v612 = vrot.slane %v604, %v611
    %v614 = vunpack.c.l.s4 1966171168
    %v615 = vunpack.c.0.s8 %v614
    %v616 = vlaneseq
    %v617 = vshrl.u32 %v616, 7
    %v618 = vsub.s32 %v615, %v617
    %v619 = vrot.slane %v605, %v618
    %v620 = vcombine.low %v612, %v619
    %v621 = vcombine.low %v429, %v443
    %v622 = vcombine.low %v451, %v453
    %v623 = vcombine.low %v436, %v450
    %v624 = vcombine.low %v452, %v477
    %v626 = vunpack.c.l.s4 1966171168
    %v627 = vunpack.c.0.s8 %v626
    %v628 = vlaneseq
    %v629 = vshrl.u32 %v628, 7
    %v630 = vsub.s32 %v627, %v629
    %v631 = vrot.slane %v621, %v630
    %v633 = vunpack.c.l.s4 1966171168
    %v634 = vunpack.c.0.s8 %v633
    %v635 = vlaneseq
    %v636 = vshrl.u32 %v635, 7
    %v637 = vsub.s32 %v634, %v636
    %v638 = vrot.slane %v622, %v637
    %v640 = vunpack.c.l.s4 1966171168
    %v641 = vunpack.c.0.s8 %v640
    %v642 = vlaneseq
    %v643 = vshrl.u32 %v642, 7
    %v644 = vsub.s32 %v641, %v643
    %v645 = vrot.slane %v623, %v644
    %v647 = vunpack.c.l.s4 1966171168
    %v648 = vunpack.c.0.s8 %v647
    %v649 = vlaneseq
    %v650 = vshrl.u32 %v649, 7
    %v651 = vsub.s32 %v648, %v650
    %v652 = vrot.slane %v624, %v651
    %v653 = vcombine.low %v631, %v638
    %v654 = vcombine.low %v645, %v652
    %v656 = vunpack.c.l.s4 1966171168
    %v657 = vunpack.c.0.s8 %v656
    %v658 = vlaneseq
    %v659 = vshrl.u32 %v658, 7
    %v660 = vsub.s32 %v657, %v659
    %v661 = vrot.slane %v653, %v660
    %v663 = vunpack.c.l.s4 1966171168
    %v664 = vunpack.c.0.s8 %v663
    %v665 = vlaneseq
    %v666 = vshrl.u32 %v665, 7
    %v667 = vsub.s32 %v664, %v666
    %v668 = vrot.slane %v654, %v667
    %v669 = vcombine.low %v661, %v668
    %v670 = vcombine.low %v491, %v499
    %v671 = vcombine.low %v501, %v484
    %v672 = vcombine.low %v498, %v500
    %v673 = vcombine.low %v502, %v526
    %v675 = vunpack.c.l.s4 1966171168
    %v676 = vunpack.c.0.s8 %v675
    %v677 = vlaneseq
    %v678 = vshrl.u32 %v677, 7
    %v679 = vsub.s32 %v676, %v678
    %v680 = vrot.slane %v670, %v679
    %v682 = vunpack.c.l.s4 1966171168
    %v683 = vunpack.c.0.s8 %v682
    %v684 = vlaneseq
    %v685 = vshrl.u32 %v684, 7
    %v686 = vsub.s32 %v683, %v685
    %v687 = vrot.slane %v671, %v686
    %v689 = vunpack.c.l.s4 1966171168
    %v690 = vunpack.c.0.s8 %v689
    %v691 = vlaneseq
    %v692 = vshrl.u32 %v691, 7
    %v693 = vsub.s32 %v690, %v692
    %v694 = vrot.slane %v672, %v693
    %v696 = vunpack.c.l.s4 1966171168
    %v697 = vunpack.c.0.s8 %v696
    %v698 = vlaneseq
    %v699 = vshrl.u32 %v698, 7
    %v700 = vsub.s32 %v697, %v699
    %v701 = vrot.slane %v673, %v700
    %v702 = vcombine.low %v680, %v687
    %v703 = vcombine.low %v694, %v701
    %v705 = vunpack.c.l.s4 1966171168
    %v706 = vunpack.c.0.s8 %v705
    %v707 = vlaneseq
    %v708 = vshrl.u32 %v707, 7
    %v709 = vsub.s32 %v706, %v708
    %v710 = vrot.slane %v702, %v709
    %v712 = vunpack.c.l.s4 1966171168
    %v713 = vunpack.c.0.s8 %v712
    %v714 = vlaneseq
    %v715 = vshrl.u32 %v714, 7
    %v716 = vsub.s32 %v713, %v715
    %v717 = vrot.slane %v703, %v716
    %v718 = vcombine.low %v710, %v717
    %v719 = vcombine.low %v540, %v548
    %v720 = vcombine.low %v550, %v533
    %v721 = vcombine.low %v547, %v549
    %v723 = vunpack.c.l.s4 1966171168
    %v724 = vunpack.c.0.s8 %v723
    %v725 = vlaneseq
    %v726 = vshrl.u32 %v725, 7
    %v727 = vsub.s32 %v724, %v726
    %v728 = vrot.slane %v719, %v727
    %v730 = vunpack.c.l.s4 1966171168
    %v731 = vunpack.c.0.s8 %v730
    %v732 = vlaneseq
    %v733 = vshrl.u32 %v732, 7
    %v734 = vsub.s32 %v731, %v733
    %v735 = vrot.slane %v720, %v734
    %v737 = vunpack.c.l.s4 1966171168
    %v738 = vunpack.c.0.s8 %v737
    %v739 = vlaneseq
    %v740 = vshrl.u32 %v739, 7
    %v741 = vsub.s32 %v738, %v740
    %v742 = vrot.slane %v721, %v741
    %v743 = vcombine.low %v728, %v735
    %v745 = vunpack.c.l.s4 1966171168
    %v746 = vunpack.c.0.s8 %v745
    %v747 = vlaneseq
    %v748 = vshrl.u32 %v747, 7
    %v749 = vsub.s32 %v746, %v748
    %v750 = vrot.slane %v743, %v749
    %v752 = vunpack.c.l.s4 1966171168
    %v753 = vunpack.c.0.s8 %v752
    %v754 = vlaneseq
    %v755 = vshrl.u32 %v754, 7
    %v756 = vsub.s32 %v753, %v755
    %v757 = vrot.slane %v742, %v756
    %v758 = vcombine.low %v750, %v757
    %v795 = vunpack.c.l.b16 %v237
    %v796 = vunpack.c.h.b16 %v237
    %v797 = vunpack.c.l.b16 %v238
    %v798 = vunpack.c.h.b16 %v238
    %v799 = vunpack.c.l.b16 %v239
    %v800 = vunpack.c.h.b16 %v239
    %v801 = vunpack.c.l.b16 %v240
    %v802 = vunpack.c.h.b16 %v240
    %v803 = vunpack.c.l.b16 %v241
    %v804 = vunpack.c.h.b16 %v241
    %v805 = vunpack.c.l.b16 %v242
    %v806 = vunpack.c.h.b16 %v242
    %v807 = vunpack.c.l.b16 %v243
    %v808 = vunpack.c.h.b16 %v243
    %v809 = vunpack.c.l.b16 %v244
    %v810 = vunpack.c.h.b16 %v244
    %v811 = vunpack.c.l.b16 %v245
    %v812 = vunpack.c.h.b16 %v245
    %v813 = vunpack.c.l.b16 %v246
    %v814 = vunpack.c.h.b16 %v246
    %v815 = vunpack.c.l.b16 %v247
    %v816 = vunpack.c.h.b16 %v247
    %v817 = vunpack.c.l.b16 %v248
    %v818 = vunpack.c.h.b16 %v248
    %v819 = vunpack.c.l.b16 %v249
    %v820 = vunpack.c.h.b16 %v249
    %v821 = vunpack.c.l.b16 %v250
    %v822 = vunpack.c.h.b16 %v250
    %v823 = vunpack.c.l.b16 %v251
    %v824 = vunpack.c.h.b16 %v251
    %v825 = vunpack.c.l.b16 %v252
    %v826 = vunpack.c.h.b16 %v252
    %v827 = vunpack.c.l.b16 %v253
    %v828 = vunpack.c.h.b16 %v253
    %v829 = vunpack.c.l.b16 %v254
    %v830 = vunpack.c.h.b16 %v254
    %v831 = vunpack.c.l.b16 %v255
    %v832 = vunpack.c.h.b16 %v255
    %v833 = vunpack.c.l.b16 %v256
    %v834 = vunpack.c.h.b16 %v256
    %v835 = vunpack.c.l.b16 %v257
    %v836 = vunpack.c.h.b16 %v257
    %v837 = vunpack.c.l.b16 %v258
    %v838 = vunpack.c.h.b16 %v258
    %v839 = vunpack.c.l.b16 %v259
    %v840 = vunpack.c.h.b16 %v259
    %v841 = vunpack.c.l.b16 %v260
    %v842 = vunpack.c.h.b16 %v260
    %v843 = vunpack.c.l.b16 %v261
    %v844 = vunpack.c.h.b16 %v261
    %v845 = vunpack.c.l.b16 %v262
    %v846 = vunpack.c.h.b16 %v262
    %v847 = vunpack.c.l.b16 %v263
    %v848 = vunpack.c.h.b16 %v263
    %v849 = vunpack.c.l.b16 %v264
    %v850 = vunpack.c.h.b16 %v264
    %v851 = vunpack.c.l.b16 %v265
    %v852 = vunpack.c.h.b16 %v265
    %v853 = vunpack.c.l.b16 %v266
    %v854 = vunpack.c.h.b16 %v266
    %v855 = vunpack.c.l.b16 %v267
    %v856 = vunpack.c.h.b16 %v267
    %v857 = vunpack.c.l.b16 %v268
    %v858 = vunpack.c.h.b16 %v268
    %v859 = vpack.c.b16 %v799, %v795
    %v860 = vpack.c.b16 %v800, %v796
    %v861 = vpack.c.b16 %v801, %v797
    %v862 = vpack.c.b16 %v802, %v798
    %v863 = vpack.c.b16 %v807, %v803
    %v864 = vpack.c.b16 %v808, %v804
    %v865 = vpack.c.b16 %v809, %v805
    %v866 = vpack.c.b16 %v810, %v806
    %v867 = vpack.c.b16 %v815, %v811
    %v868 = vpack.c.b16 %v816, %v812
    %v869 = vpack.c.b16 %v817, %v813
    %v870 = vpack.c.b16 %v818, %v814
    %v871 = vpack.c.b16 %v823, %v819
    %v872 = vpack.c.b16 %v824, %v820
    %v873 = vpack.c.b16 %v825, %v821
    %v874 = vpack.c.b16 %v826, %v822
    %v875 = vpack.c.b16 %v831, %v827
    %v876 = vpack.c.b16 %v832, %v828
    %v877 = vpack.c.b16 %v833, %v829
    %v878 = vpack.c.b16 %v834, %v830
    %v879 = vpack.c.b16 %v839, %v835
    %v880 = vpack.c.b16 %v840, %v836
    %v881 = vpack.c.b16 %v841, %v837
    %v882 = vpack.c.b16 %v842, %v838
    %v883 = vpack.c.b16 %v847, %v843
    %v884 = vpack.c.b16 %v848, %v844
    %v885 = vpack.c.b16 %v849, %v845
    %v886 = vpack.c.b16 %v850, %v846
    %v887 = vpack.c.b16 %v855, %v851
    %v888 = vpack.c.b16 %v856, %v852
    %v889 = vpack.c.b16 %v857, %v853
    %v890 = vpack.c.b16 %v858, %v854
    %923 = vmatprep.subr.bf16.mxu0 %v888
    %924 = vmatpush1.bf16.msra.mxu0 %v887
    %925 = vmatprep.subr.bf16.mxu0 %v884
    %926 = vmatpush1.bf16.msra.mxu0 %v883
    %927 = vmatprep.subr.bf16.mxu0 %v880
    %928 = vmatpush1.bf16.msra.mxu0 %v879
    %929 = vmatprep.subr.bf16.mxu0 %v876
    %930 = vmatpush1.bf16.msra.mxu0 %v875
    %931 = vmatprep.subr.bf16.mxu0 %v872
    %932 = vmatpush1.bf16.msra.mxu0 %v871
    %933 = vmatprep.subr.bf16.mxu0 %v868
    %934 = vmatpush1.bf16.msra.mxu0 %v867
    %935 = vmatprep.subr.bf16.mxu0 %v864
    %936 = vmatpush1.bf16.msra.mxu0 %v863
    %937 = vmatprep.subr.bf16.mxu0 %v860
    %938 = vmatpush1.bf16.msra.mxu0 %v859
    %939 = vmatprep.subr.bf16.mxu0 0
    %940 = vmatpush2.bf16.msra.mxu0 0
    %941 = vmatprep.subr.bf16.mxu0 0
    %942 = vmatpush2.bf16.msra.mxu0 0
    %943 = vmatprep.subr.bf16.mxu0 0
    %944 = vmatpush2.bf16.msra.mxu0 0
    %945 = vmatprep.subr.bf16.mxu0 0
    %946 = vmatpush2.bf16.msra.mxu0 0
    %947 = vmatprep.subr.bf16.mxu0 0
    %948 = vmatpush2.bf16.msra.mxu0 0
    %949 = vmatprep.subr.bf16.mxu0 0
    %950 = vmatpush2.bf16.msra.mxu0 0
    %951 = vmatprep.subr.bf16.mxu0 0
    %952 = vmatpush2.bf16.msra.mxu0 0
    %953 = vmatprep.subr.bf16.mxu0 0
    %954 = vmatpush2.bf16.msra.mxu0 0
    %955 = vmatprep.mubr.bf16.mxu0 0
    %956 = vmatmul.mubr.bf16.gmra.mxu0 %v620
    %v957 = vpop.f32.mrf.mxu0
    %v958 = vadd.f32 %v555, %v957
    %v959 = vpop.f32.mrf.mxu0
    %v960 = vadd.f32 %v559, %v959
    %v961 = vpop.f32.mrf.mxu0
    %v962 = vadd.f32 %v555, %v961
    %v963 = vpop.f32.mrf.mxu0
    %v964 = vadd.f32 %v559, %v963
    %965 = vmatprep.mubr.bf16.mxu0 0
    %966 = vmatmul.mubr.bf16.gmra.mxu0 %v669
    %v967 = vpop.f32.mrf.mxu0
    %v968 = vadd.f32 %v555, %v967
    %v969 = vpop.f32.mrf.mxu0
    %v970 = vadd.f32 %v559, %v969
    %v971 = vpop.f32.mrf.mxu0
    %v972 = vadd.f32 %v555, %v971
    %v973 = vpop.f32.mrf.mxu0
    %v974 = vadd.f32 %v559, %v973
    %975 = vmatprep.mubr.bf16.mxu0 0
    %976 = vmatmul.mubr.bf16.gmra.mxu0 %v718
    %v977 = vpop.f32.mrf.mxu0
    %v978 = vadd.f32 %v555, %v977
    %v979 = vpop.f32.mrf.mxu0
    %v980 = vadd.f32 %v559, %v979
    %v981 = vpop.f32.mrf.mxu0
    %v982 = vadd.f32 %v555, %v981
    %v983 = vpop.f32.mrf.mxu0
    %v984 = vadd.f32 %v559, %v983
    %985 = vmatprep.mubr.bf16.mxu0 0
    %986 = vmatmul.mubr.bf16.gmra.mxu0 %v758
    %v987 = vpop.f32.mrf.mxu0
    %v988 = vadd.f32 %v555, %v987
    %v989 = vpop.f32.mrf.mxu0
    %v990 = vadd.f32 %v559, %v989
    %v991 = vpop.f32.mrf.mxu0
    %v992 = vadd.f32 %v555, %v991
    %v993 = vpop.f32.mrf.mxu0
    %v994 = vadd.f32 %v559, %v993
    %995 = vdwg.mxu0
    %996 = vmatprep.subr.bf16.mxu0 %v890
    %997 = vmatpush1.bf16.msra.mxu0 %v889
    %998 = vmatprep.subr.bf16.mxu0 %v886
    %999 = vmatpush1.bf16.msra.mxu0 %v885
    %1000 = vmatprep.subr.bf16.mxu0 %v882
    %1001 = vmatpush1.bf16.msra.mxu0 %v881
    %1002 = vmatprep.subr.bf16.mxu0 %v878
    %1003 = vmatpush1.bf16.msra.mxu0 %v877
    %1004 = vmatprep.subr.bf16.mxu0 %v874
    %1005 = vmatpush1.bf16.msra.mxu0 %v873
    %1006 = vmatprep.subr.bf16.mxu0 %v870
    %1007 = vmatpush1.bf16.msra.mxu0 %v869
    %1008 = vmatprep.subr.bf16.mxu0 %v866
    %1009 = vmatpush1.bf16.msra.mxu0 %v865
    %1010 = vmatprep.subr.bf16.mxu0 %v862
    %1011 = vmatpush1.bf16.msra.mxu0 %v861
    %1012 = vmatprep.subr.bf16.mxu0 0
    %1013 = vmatpush2.bf16.msra.mxu0 0
    %1014 = vmatprep.subr.bf16.mxu0 0
    %1015 = vmatpush2.bf16.msra.mxu0 0
    %1016 = vmatprep.subr.bf16.mxu0 0
    %1017 = vmatpush2.bf16.msra.mxu0 0
    %1018 = vmatprep.subr.bf16.mxu0 0
    %1019 = vmatpush2.bf16.msra.mxu0 0
    %1020 = vmatprep.subr.bf16.mxu0 0
    %1021 = vmatpush2.bf16.msra.mxu0 0
    %1022 = vmatprep.subr.bf16.mxu0 0
    %1023 = vmatpush2.bf16.msra.mxu0 0
    %1024 = vmatprep.subr.bf16.mxu0 0
    %1025 = vmatpush2.bf16.msra.mxu0 0
    %1026 = vmatprep.subr.bf16.mxu0 0
    %1027 = vmatpush2.bf16.msra.mxu0 0
    %1028 = vmatprep.mubr.bf16.mxu0 0
    %1029 = vmatmul.mubr.bf16.gmra.mxu0 %v620
    %v1030 = vpop.f32.mrf.mxu0
    %v1031 = vadd.f32 %v563, %v1030
    %v1032 = vpop.f32.mrf.mxu0
    %v1033 = vadd.f32 %v567, %v1032
    %v1034 = vpop.f32.mrf.mxu0
    %v1035 = vadd.f32 %v563, %v1034
    %v1036 = vpop.f32.mrf.mxu0
    %v1037 = vadd.f32 %v567, %v1036
    %1038 = vmatprep.mubr.bf16.mxu0 0
    %1039 = vmatmul.mubr.bf16.gmra.mxu0 %v669
    %v1040 = vpop.f32.mrf.mxu0
    %v1041 = vadd.f32 %v563, %v1040
    %v1042 = vpop.f32.mrf.mxu0
    %v1043 = vadd.f32 %v567, %v1042
    %v1044 = vpop.f32.mrf.mxu0
    %v1045 = vadd.f32 %v563, %v1044
    %v1046 = vpop.f32.mrf.mxu0
    %v1047 = vadd.f32 %v567, %v1046
    %1048 = vmatprep.mubr.bf16.mxu0 0
    %1049 = vmatmul.mubr.bf16.gmra.mxu0 %v718
    %v1050 = vpop.f32.mrf.mxu0
    %v1051 = vadd.f32 %v563, %v1050
    %v1052 = vpop.f32.mrf.mxu0
    %v1053 = vadd.f32 %v567, %v1052
    %v1054 = vpop.f32.mrf.mxu0
    %v1055 = vadd.f32 %v563, %v1054
    %v1056 = vpop.f32.mrf.mxu0
    %v1057 = vadd.f32 %v567, %v1056
    %1058 = vmatprep.mubr.bf16.mxu0 0
    %1059 = vmatmul.mubr.bf16.gmra.mxu0 %v758
    %v1060 = vpop.f32.mrf.mxu0
    %v1061 = vadd.f32 %v563, %v1060
    %v1062 = vpop.f32.mrf.mxu0
    %v1063 = vadd.f32 %v567, %v1062
    %v1064 = vpop.f32.mrf.mxu0
    %v1065 = vadd.f32 %v563, %v1064
    %v1066 = vpop.f32.mrf.mxu0
    %v1067 = vadd.f32 %v567, %v1066
    %1068 = vdwg.mxu0
    %v1069 = vmax.f32 %v958, 0.0
    %v1070 = vmax.f32 %v960, 0.0
    %v1071 = vmax.f32 %v1031, 0.0
    %v1072 = vmax.f32 %v1033, 0.0
    %v1073 = vmax.f32 %v962, 0.0
    %v1074 = vmax.f32 %v964, 0.0
    %v1075 = vmax.f32 %v1035, 0.0
    %v1076 = vmax.f32 %v1037, 0.0
    %v1077 = vmax.f32 %v968, 0.0
    %v1078 = vmax.f32 %v970, 0.0
    %v1079 = vmax.f32 %v1041, 0.0
    %v1080 = vmax.f32 %v1043, 0.0
    %v1081 = vmax.f32 %v972, 0.0
    %v1082 = vmax.f32 %v974, 0.0
    %v1083 = vmax.f32 %v1045, 0.0
    %v1084 = vmax.f32 %v1047, 0.0
    %v1085 = vmax.f32 %v978, 0.0
    %v1086 = vmax.f32 %v980, 0.0
    %v1087 = vmax.f32 %v1051, 0.0
    %v1088 = vmax.f32 %v1053, 0.0
    %v1089 = vmax.f32 %v982, 0.0
    %v1090 = vmax.f32 %v984, 0.0
    %v1091 = vmax.f32 %v1055, 0.0
    %v1092 = vmax.f32 %v1057, 0.0
    %v1093 = vmax.f32 %v988, 0.0
    %v1094 = vmax.f32 %v990, 0.0
    %v1095 = vmax.f32 %v1061, 0.0
    %v1096 = vmax.f32 %v1063, 0.0
    %v1097 = vmax.f32 %v992, 0.0
    %v1098 = vmax.f32 %v994, 0.0
    %v1099 = vmax.f32 %v1065, 0.0
    %v1100 = vmax.f32 %v1067, 0.0
    %v1133 = vcombine.low %v1069, %v1070
    %v1134 = vcombine.high %v1069, %v1070
    %v1135 = vcombine.low %v1071, %v1072
    %v1136 = vcombine.high %v1071, %v1072
    %v1138 = vunpack.c.l.s4 1966171168
    %v1139 = vunpack.c.0.s8 %v1138
    %v1140 = vlaneseq
    %v1141 = vshrl.u32 %v1140, 7
    %v1142 = vsub.s32 %v1139, %v1141
    %v1143 = vrot.slane %v1133, %v1142
    %v1145 = vunpack.c.l.s4 1966171168
    %v1146 = vunpack.c.0.s8 %v1145
    %v1147 = vlaneseq
    %v1148 = vshrl.u32 %v1147, 7
    %v1149 = vsub.s32 %v1146, %v1148
    %v1150 = vrot.slane %v1134, %v1149
    %v1152 = vunpack.c.l.s4 1966171168
    %v1153 = vunpack.c.0.s8 %v1152
    %v1154 = vlaneseq
    %v1155 = vshrl.u32 %v1154, 7
    %v1156 = vsub.s32 %v1153, %v1155
    %v1157 = vrot.slane %v1135, %v1156
    %v1159 = vunpack.c.l.s4 1966171168
    %v1160 = vunpack.c.0.s8 %v1159
    %v1161 = vlaneseq
    %v1162 = vshrl.u32 %v1161, 7
    %v1163 = vsub.s32 %v1160, %v1162
    %v1164 = vrot.slane %v1136, %v1163
    %v1165 = vcombine.low %v1143, %v1157
    %v1166 = vcombine.high %v1143, %v1157
    %v1167 = vcombine.low %v1150, %v1164
    %v1168 = vcombine.high %v1150, %v1164
    %v1170 = vunpack.c.l.s4 1966171168
    %v1171 = vunpack.c.0.s8 %v1170
    %v1172 = vlaneseq
    %v1173 = vshrl.u32 %v1172, 7
    %v1174 = vsub.s32 %v1171, %v1173
    %v1175 = vrot.slane %v1165, %v1174
    %v1177 = vunpack.c.l.s4 1966171168
    %v1178 = vunpack.c.0.s8 %v1177
    %v1179 = vlaneseq
    %v1180 = vshrl.u32 %v1179, 7
    %v1181 = vsub.s32 %v1178, %v1180
    %v1182 = vrot.slane %v1167, %v1181
    %v1184 = vunpack.c.l.s4 1966171168
    %v1185 = vunpack.c.0.s8 %v1184
    %v1186 = vlaneseq
    %v1187 = vshrl.u32 %v1186, 7
    %v1188 = vsub.s32 %v1185, %v1187
    %v1189 = vrot.slane %v1166, %v1188
    %v1191 = vunpack.c.l.s4 1966171168
    %v1192 = vunpack.c.0.s8 %v1191
    %v1193 = vlaneseq
    %v1194 = vshrl.u32 %v1193, 7
    %v1195 = vsub.s32 %v1192, %v1194
    %v1196 = vrot.slane %v1168, %v1195
    %v1197 = vcombine.high %v1175, %v1175
    %v1198 = vcombine.high %v1182, %v1182
    %v1199 = vcombine.high %v1189, %v1189
    %v1200 = vcombine.high %v1196, %v1196
    %v1201 = vcombine.low %v1073, %v1074
    %v1202 = vcombine.high %v1073, %v1074
    %v1203 = vcombine.low %v1075, %v1076
    %v1204 = vcombine.high %v1075, %v1076
    %v1206 = vunpack.c.l.s4 1966171168
    %v1207 = vunpack.c.0.s8 %v1206
    %v1208 = vlaneseq
    %v1209 = vshrl.u32 %v1208, 7
    %v1210 = vsub.s32 %v1207, %v1209
    %v1211 = vrot.slane %v1201, %v1210
    %v1213 = vunpack.c.l.s4 1966171168
    %v1214 = vunpack.c.0.s8 %v1213
    %v1215 = vlaneseq
    %v1216 = vshrl.u32 %v1215, 7
    %v1217 = vsub.s32 %v1214, %v1216
    %v1218 = vrot.slane %v1202, %v1217
    %v1220 = vunpack.c.l.s4 1966171168
    %v1221 = vunpack.c.0.s8 %v1220
    %v1222 = vlaneseq
    %v1223 = vshrl.u32 %v1222, 7
    %v1224 = vsub.s32 %v1221, %v1223
    %v1225 = vrot.slane %v1203, %v1224
    %v1227 = vunpack.c.l.s4 1966171168
    %v1228 = vunpack.c.0.s8 %v1227
    %v1229 = vlaneseq
    %v1230 = vshrl.u32 %v1229, 7
    %v1231 = vsub.s32 %v1228, %v1230
    %v1232 = vrot.slane %v1204, %v1231
    %v1233 = vcombine.low %v1211, %v1225
    %v1234 = vcombine.high %v1211, %v1225
    %v1235 = vcombine.low %v1218, %v1232
    %v1236 = vcombine.high %v1218, %v1232
    %v1238 = vunpack.c.l.s4 1966171168
    %v1239 = vunpack.c.0.s8 %v1238
    %v1240 = vlaneseq
    %v1241 = vshrl.u32 %v1240, 7
    %v1242 = vsub.s32 %v1239, %v1241
    %v1243 = vrot.slane %v1233, %v1242
    %v1245 = vunpack.c.l.s4 1966171168
    %v1246 = vunpack.c.0.s8 %v1245
    %v1247 = vlaneseq
    %v1248 = vshrl.u32 %v1247, 7
    %v1249 = vsub.s32 %v1246, %v1248
    %v1250 = vrot.slane %v1235, %v1249
    %v1252 = vunpack.c.l.s4 1966171168
    %v1253 = vunpack.c.0.s8 %v1252
    %v1254 = vlaneseq
    %v1255 = vshrl.u32 %v1254, 7
    %v1256 = vsub.s32 %v1253, %v1255
    %v1257 = vrot.slane %v1234, %v1256
    %v1259 = vunpack.c.l.s4 1966171168
    %v1260 = vunpack.c.0.s8 %v1259
    %v1261 = vlaneseq
    %v1262 = vshrl.u32 %v1261, 7
    %v1263 = vsub.s32 %v1260, %v1262
    %v1264 = vrot.slane %v1236, %v1263
    %v1265 = vcombine.high %v1243, %v1243
    %v1266 = vcombine.high %v1250, %v1250
    %v1267 = vcombine.high %v1257, %v1257
    %v1268 = vcombine.high %v1264, %v1264
    %v1269 = vcombine.low %v1077, %v1078
    %v1270 = vcombine.high %v1077, %v1078
    %v1271 = vcombine.low %v1079, %v1080
    %v1272 = vcombine.high %v1079, %v1080
    %v1274 = vunpack.c.l.s4 1966171168
    %v1275 = vunpack.c.0.s8 %v1274
    %v1276 = vlaneseq
    %v1277 = vshrl.u32 %v1276, 7
    %v1278 = vsub.s32 %v1275, %v1277
    %v1279 = vrot.slane %v1269, %v1278
    %v1281 = vunpack.c.l.s4 1966171168
    %v1282 = vunpack.c.0.s8 %v1281
    %v1283 = vlaneseq
    %v1284 = vshrl.u32 %v1283, 7
    %v1285 = vsub.s32 %v1282, %v1284
    %v1286 = vrot.slane %v1270, %v1285
    %v1288 = vunpack.c.l.s4 1966171168
    %v1289 = vunpack.c.0.s8 %v1288
    %v1290 = vlaneseq
    %v1291 = vshrl.u32 %v1290, 7
    %v1292 = vsub.s32 %v1289, %v1291
    %v1293 = vrot.slane %v1271, %v1292
    %v1295 = vunpack.c.l.s4 1966171168
    %v1296 = vunpack.c.0.s8 %v1295
    %v1297 = vlaneseq
    %v1298 = vshrl.u32 %v1297, 7
    %v1299 = vsub.s32 %v1296, %v1298
    %v1300 = vrot.slane %v1272, %v1299
    %v1301 = vcombine.low %v1279, %v1293
    %v1302 = vcombine.high %v1279, %v1293
    %v1303 = vcombine.low %v1286, %v1300
    %v1304 = vcombine.high %v1286, %v1300
    %v1306 = vunpack.c.l.s4 1966171168
    %v1307 = vunpack.c.0.s8 %v1306
    %v1308 = vlaneseq
    %v1309 = vshrl.u32 %v1308, 7
    %v1310 = vsub.s32 %v1307, %v1309
    %v1311 = vrot.slane %v1301, %v1310
    %v1313 = vunpack.c.l.s4 1966171168
    %v1314 = vunpack.c.0.s8 %v1313
    %v1315 = vlaneseq
    %v1316 = vshrl.u32 %v1315, 7
    %v1317 = vsub.s32 %v1314, %v1316
    %v1318 = vrot.slane %v1303, %v1317
    %v1320 = vunpack.c.l.s4 1966171168
    %v1321 = vunpack.c.0.s8 %v1320
    %v1322 = vlaneseq
    %v1323 = vshrl.u32 %v1322, 7
    %v1324 = vsub.s32 %v1321, %v1323
    %v1325 = vrot.slane %v1302, %v1324
    %v1327 = vunpack.c.l.s4 1966171168
    %v1328 = vunpack.c.0.s8 %v1327
    %v1329 = vlaneseq
    %v1330 = vshrl.u32 %v1329, 7
    %v1331 = vsub.s32 %v1328, %v1330
    %v1332 = vrot.slane %v1304, %v1331
    %v1333 = vcombine.high %v1311, %v1311
    %v1334 = vcombine.high %v1318, %v1318
    %v1335 = vcombine.high %v1325, %v1325
    %v1336 = vcombine.high %v1332, %v1332
    %v1337 = vcombine.low %v1081, %v1082
    %v1338 = vcombine.high %v1081, %v1082
    %v1339 = vcombine.low %v1083, %v1084
    %v1340 = vcombine.high %v1083, %v1084
    %v1342 = vunpack.c.l.s4 1966171168
    %v1343 = vunpack.c.0.s8 %v1342
    %v1344 = vlaneseq
    %v1345 = vshrl.u32 %v1344, 7
    %v1346 = vsub.s32 %v1343, %v1345
    %v1347 = vrot.slane %v1337, %v1346
    %v1349 = vunpack.c.l.s4 1966171168
    %v1350 = vunpack.c.0.s8 %v1349
    %v1351 = vlaneseq
    %v1352 = vshrl.u32 %v1351, 7
    %v1353 = vsub.s32 %v1350, %v1352
    %v1354 = vrot.slane %v1338, %v1353
    %v1356 = vunpack.c.l.s4 1966171168
    %v1357 = vunpack.c.0.s8 %v1356
    %v1358 = vlaneseq
    %v1359 = vshrl.u32 %v1358, 7
    %v1360 = vsub.s32 %v1357, %v1359
    %v1361 = vrot.slane %v1339, %v1360
    %v1363 = vunpack.c.l.s4 1966171168
    %v1364 = vunpack.c.0.s8 %v1363
    %v1365 = vlaneseq
    %v1366 = vshrl.u32 %v1365, 7
    %v1367 = vsub.s32 %v1364, %v1366
    %v1368 = vrot.slane %v1340, %v1367
    %v1369 = vcombine.low %v1347, %v1361
    %v1370 = vcombine.high %v1347, %v1361
    %v1371 = vcombine.low %v1354, %v1368
    %v1372 = vcombine.high %v1354, %v1368
    %v1374 = vunpack.c.l.s4 1966171168
    %v1375 = vunpack.c.0.s8 %v1374
    %v1376 = vlaneseq
    %v1377 = vshrl.u32 %v1376, 7
    %v1378 = vsub.s32 %v1375, %v1377
    %v1379 = vrot.slane %v1369, %v1378
    %v1381 = vunpack.c.l.s4 1966171168
    %v1382 = vunpack.c.0.s8 %v1381
    %v1383 = vlaneseq
    %v1384 = vshrl.u32 %v1383, 7
    %v1385 = vsub.s32 %v1382, %v1384
    %v1386 = vrot.slane %v1371, %v1385
    %v1388 = vunpack.c.l.s4 1966171168
    %v1389 = vunpack.c.0.s8 %v1388
    %v1390 = vlaneseq
    %v1391 = vshrl.u32 %v1390, 7
    %v1392 = vsub.s32 %v1389, %v1391
    %v1393 = vrot.slane %v1370, %v1392
    %v1395 = vunpack.c.l.s4 1966171168
    %v1396 = vunpack.c.0.s8 %v1395
    %v1397 = vlaneseq
    %v1398 = vshrl.u32 %v1397, 7
    %v1399 = vsub.s32 %v1396, %v1398
    %v1400 = vrot.slane %v1372, %v1399
    %v1401 = vcombine.high %v1379, %v1379
    %v1402 = vcombine.high %v1386, %v1386
    %v1403 = vcombine.high %v1393, %v1393
    %v1404 = vcombine.high %v1400, %v1400
    %v1405 = vcombine.low %v1085, %v1086
    %v1406 = vcombine.high %v1085, %v1086
    %v1407 = vcombine.low %v1087, %v1088
    %v1408 = vcombine.high %v1087, %v1088
    %v1410 = vunpack.c.l.s4 1966171168
    %v1411 = vunpack.c.0.s8 %v1410
    %v1412 = vlaneseq
    %v1413 = vshrl.u32 %v1412, 7
    %v1414 = vsub.s32 %v1411, %v1413
    %v1415 = vrot.slane %v1405, %v1414
    %v1417 = vunpack.c.l.s4 1966171168
    %v1418 = vunpack.c.0.s8 %v1417
    %v1419 = vlaneseq
    %v1420 = vshrl.u32 %v1419, 7
    %v1421 = vsub.s32 %v1418, %v1420
    %v1422 = vrot.slane %v1406, %v1421
    %v1424 = vunpack.c.l.s4 1966171168
    %v1425 = vunpack.c.0.s8 %v1424
    %v1426 = vlaneseq
    %v1427 = vshrl.u32 %v1426, 7
    %v1428 = vsub.s32 %v1425, %v1427
    %v1429 = vrot.slane %v1407, %v1428
    %v1431 = vunpack.c.l.s4 1966171168
    %v1432 = vunpack.c.0.s8 %v1431
    %v1433 = vlaneseq
    %v1434 = vshrl.u32 %v1433, 7
    %v1435 = vsub.s32 %v1432, %v1434
    %v1436 = vrot.slane %v1408, %v1435
    %v1437 = vcombine.low %v1415, %v1429
    %v1438 = vcombine.high %v1415, %v1429
    %v1439 = vcombine.low %v1422, %v1436
    %v1440 = vcombine.high %v1422, %v1436
    %v1442 = vunpack.c.l.s4 1966171168
    %v1443 = vunpack.c.0.s8 %v1442
    %v1444 = vlaneseq
    %v1445 = vshrl.u32 %v1444, 7
    %v1446 = vsub.s32 %v1443, %v1445
    %v1447 = vrot.slane %v1437, %v1446
    %v1449 = vunpack.c.l.s4 1966171168
    %v1450 = vunpack.c.0.s8 %v1449
    %v1451 = vlaneseq
    %v1452 = vshrl.u32 %v1451, 7
    %v1453 = vsub.s32 %v1450, %v1452
    %v1454 = vrot.slane %v1439, %v1453
    %v1456 = vunpack.c.l.s4 1966171168
    %v1457 = vunpack.c.0.s8 %v1456
    %v1458 = vlaneseq
    %v1459 = vshrl.u32 %v1458, 7
    %v1460 = vsub.s32 %v1457, %v1459
    %v1461 = vrot.slane %v1438, %v1460
    %v1463 = vunpack.c.l.s4 1966171168
    %v1464 = vunpack.c.0.s8 %v1463
    %v1465 = vlaneseq
    %v1466 = vshrl.u32 %v1465, 7
    %v1467 = vsub.s32 %v1464, %v1466
    %v1468 = vrot.slane %v1440, %v1467
    %v1469 = vcombine.high %v1447, %v1447
    %v1470 = vcombine.high %v1454, %v1454
    %v1471 = vcombine.high %v1461, %v1461
    %v1472 = vcombine.high %v1468, %v1468
    %v1473 = vcombine.low %v1089, %v1090
    %v1474 = vcombine.high %v1089, %v1090
    %v1475 = vcombine.low %v1091, %v1092
    %v1476 = vcombine.high %v1091, %v1092
    %v1478 = vunpack.c.l.s4 1966171168
    %v1479 = vunpack.c.0.s8 %v1478
    %v1480 = vlaneseq
    %v1481 = vshrl.u32 %v1480, 7
    %v1482 = vsub.s32 %v1479, %v1481
    %v1483 = vrot.slane %v1473, %v1482
    %v1485 = vunpack.c.l.s4 1966171168
    %v1486 = vunpack.c.0.s8 %v1485
    %v1487 = vlaneseq
    %v1488 = vshrl.u32 %v1487, 7
    %v1489 = vsub.s32 %v1486, %v1488
    %v1490 = vrot.slane %v1474, %v1489
    %v1492 = vunpack.c.l.s4 1966171168
    %v1493 = vunpack.c.0.s8 %v1492
    %v1494 = vlaneseq
    %v1495 = vshrl.u32 %v1494, 7
    %v1496 = vsub.s32 %v1493, %v1495
    %v1497 = vrot.slane %v1475, %v1496
    %v1499 = vunpack.c.l.s4 1966171168
    %v1500 = vunpack.c.0.s8 %v1499
    %v1501 = vlaneseq
    %v1502 = vshrl.u32 %v1501, 7
    %v1503 = vsub.s32 %v1500, %v1502
    %v1504 = vrot.slane %v1476, %v1503
    %v1505 = vcombine.low %v1483, %v1497
    %v1506 = vcombine.high %v1483, %v1497
    %v1507 = vcombine.low %v1490, %v1504
    %v1508 = vcombine.high %v1490, %v1504
    %v1510 = vunpack.c.l.s4 1966171168
    %v1511 = vunpack.c.0.s8 %v1510
    %v1512 = vlaneseq
    %v1513 = vshrl.u32 %v1512, 7
    %v1514 = vsub.s32 %v1511, %v1513
    %v1515 = vrot.slane %v1505, %v1514
    %v1517 = vunpack.c.l.s4 1966171168
    %v1518 = vunpack.c.0.s8 %v1517
    %v1519 = vlaneseq
    %v1520 = vshrl.u32 %v1519, 7
    %v1521 = vsub.s32 %v1518, %v1520
    %v1522 = vrot.slane %v1507, %v1521
    %v1524 = vunpack.c.l.s4 1966171168
    %v1525 = vunpack.c.0.s8 %v1524
    %v1526 = vlaneseq
    %v1527 = vshrl.u32 %v1526, 7
    %v1528 = vsub.s32 %v1525, %v1527
    %v1529 = vrot.slane %v1506, %v1528
    %v1531 = vunpack.c.l.s4 1966171168
    %v1532 = vunpack.c.0.s8 %v1531
    %v1533 = vlaneseq
    %v1534 = vshrl.u32 %v1533, 7
    %v1535 = vsub.s32 %v1532, %v1534
    %v1536 = vrot.slane %v1508, %v1535
    %v1537 = vcombine.high %v1515, %v1515
    %v1538 = vcombine.high %v1522, %v1522
    %v1539 = vcombine.high %v1529, %v1529
    %v1540 = vcombine.high %v1536, %v1536
    %v1541 = vcombine.low %v1093, %v1094
    %v1542 = vcombine.high %v1093, %v1094
    %v1543 = vcombine.low %v1095, %v1096
    %v1544 = vcombine.high %v1095, %v1096
    %v1546 = vunpack.c.l.s4 1966171168
    %v1547 = vunpack.c.0.s8 %v1546
    %v1548 = vlaneseq
    %v1549 = vshrl.u32 %v1548, 7
    %v1550 = vsub.s32 %v1547, %v1549
    %v1551 = vrot.slane %v1541, %v1550
    %v1553 = vunpack.c.l.s4 1966171168
    %v1554 = vunpack.c.0.s8 %v1553
    %v1555 = vlaneseq
    %v1556 = vshrl.u32 %v1555, 7
    %v1557 = vsub.s32 %v1554, %v1556
    %v1558 = vrot.slane %v1542, %v1557
    %v1560 = vunpack.c.l.s4 1966171168
    %v1561 = vunpack.c.0.s8 %v1560
    %v1562 = vlaneseq
    %v1563 = vshrl.u32 %v1562, 7
    %v1564 = vsub.s32 %v1561, %v1563
    %v1565 = vrot.slane %v1543, %v1564
    %v1567 = vunpack.c.l.s4 1966171168
    %v1568 = vunpack.c.0.s8 %v1567
    %v1569 = vlaneseq
    %v1570 = vshrl.u32 %v1569, 7
    %v1571 = vsub.s32 %v1568, %v1570
    %v1572 = vrot.slane %v1544, %v1571
    %v1573 = vcombine.low %v1551, %v1565
    %v1574 = vcombine.high %v1551, %v1565
    %v1575 = vcombine.low %v1558, %v1572
    %v1576 = vcombine.high %v1558, %v1572
    %v1578 = vunpack.c.l.s4 1966171168
    %v1579 = vunpack.c.0.s8 %v1578
    %v1580 = vlaneseq
    %v1581 = vshrl.u32 %v1580, 7
    %v1582 = vsub.s32 %v1579, %v1581
    %v1583 = vrot.slane %v1573, %v1582
    %v1585 = vunpack.c.l.s4 1966171168
    %v1586 = vunpack.c.0.s8 %v1585
    %v1587 = vlaneseq
    %v1588 = vshrl.u32 %v1587, 7
    %v1589 = vsub.s32 %v1586, %v1588
    %v1590 = vrot.slane %v1575, %v1589
    %v1592 = vunpack.c.l.s4 1966171168
    %v1593 = vunpack.c.0.s8 %v1592
    %v1594 = vlaneseq
    %v1595 = vshrl.u32 %v1594, 7
    %v1596 = vsub.s32 %v1593, %v1595
    %v1597 = vrot.slane %v1574, %v1596
    %v1599 = vunpack.c.l.s4 1966171168
    %v1600 = vunpack.c.0.s8 %v1599
    %v1601 = vlaneseq
    %v1602 = vshrl.u32 %v1601, 7
    %v1603 = vsub.s32 %v1600, %v1602
    %v1604 = vrot.slane %v1576, %v1603
    %v1605 = vcombine.high %v1583, %v1583
    %v1606 = vcombine.high %v1590, %v1590
    %v1607 = vcombine.high %v1597, %v1597
    %v1608 = vcombine.high %v1604, %v1604
    %v1609 = vcombine.low %v1097, %v1098
    %v1610 = vcombine.low %v1099, %v1100
    %v1612 = vunpack.c.l.s4 1966171168
    %v1613 = vunpack.c.0.s8 %v1612
    %v1614 = vlaneseq
    %v1615 = vshrl.u32 %v1614, 7
    %v1616 = vsub.s32 %v1613, %v1615
    %v1617 = vrot.slane %v1609, %v1616
    %v1619 = vunpack.c.l.s4 1966171168
    %v1620 = vunpack.c.0.s8 %v1619
    %v1621 = vlaneseq
    %v1622 = vshrl.u32 %v1621, 7
    %v1623 = vsub.s32 %v1620, %v1622
    %v1624 = vrot.slane %v1610, %v1623
    %v1625 = vcombine.low %v1617, %v1624
    %v1626 = vcombine.high %v1617, %v1624
    %v1628 = vunpack.c.l.s4 1966171168
    %v1629 = vunpack.c.0.s8 %v1628
    %v1630 = vlaneseq
    %v1631 = vshrl.u32 %v1630, 7
    %v1632 = vsub.s32 %v1629, %v1631
    %v1633 = vrot.slane %v1625, %v1632
    %v1635 = vunpack.c.l.s4 1966171168
    %v1636 = vunpack.c.0.s8 %v1635
    %v1637 = vlaneseq
    %v1638 = vshrl.u32 %v1637, 7
    %v1639 = vsub.s32 %v1636, %v1638
    %v1640 = vrot.slane %v1626, %v1639
    %v1641 = vcombine.high %v1633, %v1633
    %v1642 = vcombine.high %v1640, %v1640
    %v1643 = vcombine.low %v1175, %v1189
    %v1645 = vunpack.c.l.s4 1966171168
    %v1646 = vunpack.c.0.s8 %v1645
    %v1647 = vlaneseq
    %v1648 = vshrl.u32 %v1647, 7
    %v1649 = vsub.s32 %v1646, %v1648
    %v1650 = vrot.slane %v1643, %v1649
    %v1652 = vunpack.c.l.s4 1966171168
    %v1653 = vunpack.c.0.s8 %v1652
    %v1654 = vlaneseq
    %v1655 = vshrl.u32 %v1654, 7
    %v1656 = vsub.s32 %v1653, %v1655
    %v1657 = vrot.slane %v1197, %v1656
    %v1658 = vcombine.low %v1650, %v1657
    %v1659 = vcombine.high %v1650, %v1657
    %v1661 = vunpack.c.l.s4 1966171168
    %v1662 = vunpack.c.0.s8 %v1661
    %v1663 = vlaneseq
    %v1664 = vshrl.u32 %v1663, 7
    %v1665 = vsub.s32 %v1662, %v1664
    %v1666 = vrot.slane %v1658, %v1665
    %v1668 = vunpack.c.l.s4 1966171168
    %v1669 = vunpack.c.0.s8 %v1668
    %v1670 = vlaneseq
    %v1671 = vshrl.u32 %v1670, 7
    %v1672 = vsub.s32 %v1669, %v1671
    %v1673 = vrot.slane %v1659, %v1672
    %v1674 = vcombine.high %v1666, %v1666
    %v1675 = vcombine.high %v1673, %v1673
    %v1676 = vcombine.low %v1199, %v1182
    %v1678 = vunpack.c.l.s4 1966171168
    %v1679 = vunpack.c.0.s8 %v1678
    %v1680 = vlaneseq
    %v1681 = vshrl.u32 %v1680, 7
    %v1682 = vsub.s32 %v1679, %v1681
    %v1683 = vrot.slane %v1676, %v1682
    %v1685 = vunpack.c.l.s4 1966171168
    %v1686 = vunpack.c.0.s8 %v1685
    %v1687 = vlaneseq
    %v1688 = vshrl.u32 %v1687, 7
    %v1689 = vsub.s32 %v1686, %v1688
    %v1690 = vrot.slane %v1196, %v1689
    %v1691 = vcombine.low %v1683, %v1690
    %v1692 = vcombine.high %v1683, %v1690
    %v1694 = vunpack.c.l.s4 1966171168
    %v1695 = vunpack.c.0.s8 %v1694
    %v1696 = vlaneseq
    %v1697 = vshrl.u32 %v1696, 7
    %v1698 = vsub.s32 %v1695, %v1697
    %v1699 = vrot.slane %v1691, %v1698
    %v1701 = vunpack.c.l.s4 1966171168
    %v1702 = vunpack.c.0.s8 %v1701
    %v1703 = vlaneseq
    %v1704 = vshrl.u32 %v1703, 7
    %v1705 = vsub.s32 %v1702, %v1704
    %v1706 = vrot.slane %v1692, %v1705
    %v1707 = vcombine.high %v1699, %v1699
    %v1708 = vcombine.high %v1706, %v1706
    %v1709 = vcombine.low %v1198, %v1200
    %v1711 = vunpack.c.l.s4 1966171168
    %v1712 = vunpack.c.0.s8 %v1711
    %v1713 = vlaneseq
    %v1714 = vshrl.u32 %v1713, 7
    %v1715 = vsub.s32 %v1712, %v1714
    %v1716 = vrot.slane %v1709, %v1715
    %v1718 = vunpack.c.l.s4 1966171168
    %v1719 = vunpack.c.0.s8 %v1718
    %v1720 = vlaneseq
    %v1721 = vshrl.u32 %v1720, 7
    %v1722 = vsub.s32 %v1719, %v1721
    %v1723 = vrot.slane %v1243, %v1722
    %v1724 = vcombine.low %v1716, %v1723
    %v1725 = vcombine.high %v1716, %v1723
    %v1727 = vunpack.c.l.s4 1966171168
    %v1728 = vunpack.c.0.s8 %v1727
    %v1729 = vlaneseq
    %v1730 = vshrl.u32 %v1729, 7
    %v1731 = vsub.s32 %v1728, %v1730
    %v1732 = vrot.slane %v1724, %v1731
    %v1734 = vunpack.c.l.s4 1966171168
    %v1735 = vunpack.c.0.s8 %v1734
    %v1736 = vlaneseq
    %v1737 = vshrl.u32 %v1736, 7
    %v1738 = vsub.s32 %v1735, %v1737
    %v1739 = vrot.slane %v1725, %v1738
    %v1740 = vcombine.high %v1732, %v1732
    %v1741 = vcombine.high %v1739, %v1739
    %v1742 = vcombine.low %v1257, %v1265
    %v1744 = vunpack.c.l.s4 1966171168
    %v1745 = vunpack.c.0.s8 %v1744
    %v1746 = vlaneseq
    %v1747 = vshrl.u32 %v1746, 7
    %v1748 = vsub.s32 %v1745, %v1747
    %v1749 = vrot.slane %v1742, %v1748
    %v1751 = vunpack.c.l.s4 1966171168
    %v1752 = vunpack.c.0.s8 %v1751
    %v1753 = vlaneseq
    %v1754 = vshrl.u32 %v1753, 7
    %v1755 = vsub.s32 %v1752, %v1754
    %v1756 = vrot.slane %v1267, %v1755
    %v1757 = vcombine.low %v1749, %v1756
    %v1758 = vcombine.high %v1749, %v1756
    %v1760 = vunpack.c.l.s4 1966171168
    %v1761 = vunpack.c.0.s8 %v1760
    %v1762 = vlaneseq
    %v1763 = vshrl.u32 %v1762, 7
    %v1764 = vsub.s32 %v1761, %v1763
    %v1765 = vrot.slane %v1757, %v1764
    %v1767 = vunpack.c.l.s4 1966171168
    %v1768 = vunpack.c.0.s8 %v1767
    %v1769 = vlaneseq
    %v1770 = vshrl.u32 %v1769, 7
    %v1771 = vsub.s32 %v1768, %v1770
    %v1772 = vrot.slane %v1758, %v1771
    %v1773 = vcombine.high %v1765, %v1765
    %v1774 = vcombine.high %v1772, %v1772
    %v1775 = vcombine.low %v1250, %v1264
    %v1777 = vunpack.c.l.s4 1966171168
    %v1778 = vunpack.c.0.s8 %v1777
    %v1779 = vlaneseq
    %v1780 = vshrl.u32 %v1779, 7
    %v1781 = vsub.s32 %v1778, %v1780
    %v1782 = vrot.slane %v1775, %v1781
    %v1784 = vunpack.c.l.s4 1966171168
    %v1785 = vunpack.c.0.s8 %v1784
    %v1786 = vlaneseq
    %v1787 = vshrl.u32 %v1786, 7
    %v1788 = vsub.s32 %v1785, %v1787
    %v1789 = vrot.slane %v1266, %v1788
    %v1790 = vcombine.low %v1782, %v1789
    %v1791 = vcombine.high %v1782, %v1789
    %v1793 = vunpack.c.l.s4 1966171168
    %v1794 = vunpack.c.0.s8 %v1793
    %v1795 = vlaneseq
    %v1796 = vshrl.u32 %v1795, 7
    %v1797 = vsub.s32 %v1794, %v1796
    %v1798 = vrot.slane %v1790, %v1797
    %v1800 = vunpack.c.l.s4 1966171168
    %v1801 = vunpack.c.0.s8 %v1800
    %v1802 = vlaneseq
    %v1803 = vshrl.u32 %v1802, 7
    %v1804 = vsub.s32 %v1801, %v1803
    %v1805 = vrot.slane %v1791, %v1804
    %v1806 = vcombine.high %v1798, %v1798
    %v1807 = vcombine.high %v1805, %v1805
    %v1808 = vcombine.low %v1268, %v1311
    %v1810 = vunpack.c.l.s4 1966171168
    %v1811 = vunpack.c.0.s8 %v1810
    %v1812 = vlaneseq
    %v1813 = vshrl.u32 %v1812, 7
    %v1814 = vsub.s32 %v1811, %v1813
    %v1815 = vrot.slane %v1808, %v1814
    %v1817 = vunpack.c.l.s4 1966171168
    %v1818 = vunpack.c.0.s8 %v1817
    %v1819 = vlaneseq
    %v1820 = vshrl.u32 %v1819, 7
    %v1821 = vsub.s32 %v1818, %v1820
    %v1822 = vrot.slane %v1325, %v1821
    %v1823 = vcombine.low %v1815, %v1822
    %v1824 = vcombine.high %v1815, %v1822
    %v1826 = vunpack.c.l.s4 1966171168
    %v1827 = vunpack.c.0.s8 %v1826
    %v1828 = vlaneseq
    %v1829 = vshrl.u32 %v1828, 7
    %v1830 = vsub.s32 %v1827, %v1829
    %v1831 = vrot.slane %v1823, %v1830
    %v1833 = vunpack.c.l.s4 1966171168
    %v1834 = vunpack.c.0.s8 %v1833
    %v1835 = vlaneseq
    %v1836 = vshrl.u32 %v1835, 7
    %v1837 = vsub.s32 %v1834, %v1836
    %v1838 = vrot.slane %v1824, %v1837
    %v1839 = vcombine.high %v1831, %v1831
    %v1840 = vcombine.high %v1838, %v1838
    %v1841 = vcombine.low %v1333, %v1335
    %v1843 = vunpack.c.l.s4 1966171168
    %v1844 = vunpack.c.0.s8 %v1843
    %v1845 = vlaneseq
    %v1846 = vshrl.u32 %v1845, 7
    %v1847 = vsub.s32 %v1844, %v1846
    %v1848 = vrot.slane %v1841, %v1847
    %v1850 = vunpack.c.l.s4 1966171168
    %v1851 = vunpack.c.0.s8 %v1850
    %v1852 = vlaneseq
    %v1853 = vshrl.u32 %v1852, 7
    %v1854 = vsub.s32 %v1851, %v1853
    %v1855 = vrot.slane %v1318, %v1854
    %v1856 = vcombine.low %v1848, %v1855
    %v1857 = vcombine.high %v1848, %v1855
    %v1859 = vunpack.c.l.s4 1966171168
    %v1860 = vunpack.c.0.s8 %v1859
    %v1861 = vlaneseq
    %v1862 = vshrl.u32 %v1861, 7
    %v1863 = vsub.s32 %v1860, %v1862
    %v1864 = vrot.slane %v1856, %v1863
    %v1866 = vunpack.c.l.s4 1966171168
    %v1867 = vunpack.c.0.s8 %v1866
    %v1868 = vlaneseq
    %v1869 = vshrl.u32 %v1868, 7
    %v1870 = vsub.s32 %v1867, %v1869
    %v1871 = vrot.slane %v1857, %v1870
    %v1872 = vcombine.high %v1864, %v1864
    %v1873 = vcombine.high %v1871, %v1871
    %v1874 = vcombine.low %v1332, %v1334
    %v1876 = vunpack.c.l.s4 1966171168
    %v1877 = vunpack.c.0.s8 %v1876
    %v1878 = vlaneseq
    %v1879 = vshrl.u32 %v1878, 7
    %v1880 = vsub.s32 %v1877, %v1879
    %v1881 = vrot.slane %v1874, %v1880
    %v1883 = vunpack.c.l.s4 1966171168
    %v1884 = vunpack.c.0.s8 %v1883
    %v1885 = vlaneseq
    %v1886 = vshrl.u32 %v1885, 7
    %v1887 = vsub.s32 %v1884, %v1886
    %v1888 = vrot.slane %v1336, %v1887
    %v1889 = vcombine.low %v1881, %v1888
    %v1890 = vcombine.high %v1881, %v1888
    %v1892 = vunpack.c.l.s4 1966171168
    %v1893 = vunpack.c.0.s8 %v1892
    %v1894 = vlaneseq
    %v1895 = vshrl.u32 %v1894, 7
    %v1896 = vsub.s32 %v1893, %v1895
    %v1897 = vrot.slane %v1889, %v1896
    %v1899 = vunpack.c.l.s4 1966171168
    %v1900 = vunpack.c.0.s8 %v1899
    %v1901 = vlaneseq
    %v1902 = vshrl.u32 %v1901, 7
    %v1903 = vsub.s32 %v1900, %v1902
    %v1904 = vrot.slane %v1890, %v1903
    %v1905 = vcombine.high %v1897, %v1897
    %v1906 = vcombine.high %v1904, %v1904
    %v1907 = vcombine.low %v1379, %v1393
    %v1909 = vunpack.c.l.s4 1966171168
    %v1910 = vunpack.c.0.s8 %v1909
    %v1911 = vlaneseq
    %v1912 = vshrl.u32 %v1911, 7
    %v1913 = vsub.s32 %v1910, %v1912
    %v1914 = vrot.slane %v1907, %v1913
    %v1916 = vunpack.c.l.s4 1966171168
    %v1917 = vunpack.c.0.s8 %v1916
    %v1918 = vlaneseq
    %v1919 = vshrl.u32 %v1918, 7
    %v1920 = vsub.s32 %v1917, %v1919
    %v1921 = vrot.slane %v1401, %v1920
    %v1922 = vcombine.low %v1914, %v1921
    %v1923 = vcombine.high %v1914, %v1921
    %v1925 = vunpack.c.l.s4 1966171168
    %v1926 = vunpack.c.0.s8 %v1925
    %v1927 = vlaneseq
    %v1928 = vshrl.u32 %v1927, 7
    %v1929 = vsub.s32 %v1926, %v1928
    %v1930 = vrot.slane %v1922, %v1929
    %v1932 = vunpack.c.l.s4 1966171168
    %v1933 = vunpack.c.0.s8 %v1932
    %v1934 = vlaneseq
    %v1935 = vshrl.u32 %v1934, 7
    %v1936 = vsub.s32 %v1933, %v1935
    %v1937 = vrot.slane %v1923, %v1936
    %v1938 = vcombine.high %v1930, %v1930
    %v1939 = vcombine.high %v1937, %v1937
    %v1940 = vcombine.low %v1403, %v1386
    %v1942 = vunpack.c.l.s4 1966171168
    %v1943 = vunpack.c.0.s8 %v1942
    %v1944 = vlaneseq
    %v1945 = vshrl.u32 %v1944, 7
    %v1946 = vsub.s32 %v1943, %v1945
    %v1947 = vrot.slane %v1940, %v1946
    %v1949 = vunpack.c.l.s4 1966171168
    %v1950 = vunpack.c.0.s8 %v1949
    %v1951 = vlaneseq
    %v1952 = vshrl.u32 %v1951, 7
    %v1953 = vsub.s32 %v1950, %v1952
    %v1954 = vrot.slane %v1400, %v1953
    %v1955 = vcombine.low %v1947, %v1954
    %v1956 = vcombine.high %v1947, %v1954
    %v1958 = vunpack.c.l.s4 1966171168
    %v1959 = vunpack.c.0.s8 %v1958
    %v1960 = vlaneseq
    %v1961 = vshrl.u32 %v1960, 7
    %v1962 = vsub.s32 %v1959, %v1961
    %v1963 = vrot.slane %v1955, %v1962
    %v1965 = vunpack.c.l.s4 1966171168
    %v1966 = vunpack.c.0.s8 %v1965
    %v1967 = vlaneseq
    %v1968 = vshrl.u32 %v1967, 7
    %v1969 = vsub.s32 %v1966, %v1968
    %v1970 = vrot.slane %v1956, %v1969
    %v1971 = vcombine.high %v1963, %v1963
    %v1972 = vcombine.high %v1970, %v1970
    %v1973 = vcombine.low %v1402, %v1404
    %v1975 = vunpack.c.l.s4 1966171168
    %v1976 = vunpack.c.0.s8 %v1975
    %v1977 = vlaneseq
    %v1978 = vshrl.u32 %v1977, 7
    %v1979 = vsub.s32 %v1976, %v1978
    %v1980 = vrot.slane %v1973, %v1979
    %v1982 = vunpack.c.l.s4 1966171168
    %v1983 = vunpack.c.0.s8 %v1982
    %v1984 = vlaneseq
    %v1985 = vshrl.u32 %v1984, 7
    %v1986 = vsub.s32 %v1983, %v1985
    %v1987 = vrot.slane %v1447, %v1986
    %v1988 = vcombine.low %v1980, %v1987
    %v1989 = vcombine.high %v1980, %v1987
    %v1991 = vunpack.c.l.s4 1966171168
    %v1992 = vunpack.c.0.s8 %v1991
    %v1993 = vlaneseq
    %v1994 = vshrl.u32 %v1993, 7
    %v1995 = vsub.s32 %v1992, %v1994
    %v1996 = vrot.slane %v1988, %v1995
    %v1998 = vunpack.c.l.s4 1966171168
    %v1999 = vunpack.c.0.s8 %v1998
    %v2000 = vlaneseq
    %v2001 = vshrl.u32 %v2000, 7
    %v2002 = vsub.s32 %v1999, %v2001
    %v2003 = vrot.slane %v1989, %v2002
    %v2004 = vcombine.high %v1996, %v1996
    %v2005 = vcombine.high %v2003, %v2003
    %v2006 = vcombine.low %v1461, %v1469
    %v2008 = vunpack.c.l.s4 1966171168
    %v2009 = vunpack.c.0.s8 %v2008
    %v2010 = vlaneseq
    %v2011 = vshrl.u32 %v2010, 7
    %v2012 = vsub.s32 %v2009, %v2011
    %v2013 = vrot.slane %v2006, %v2012
    %v2015 = vunpack.c.l.s4 1966171168
    %v2016 = vunpack.c.0.s8 %v2015
    %v2017 = vlaneseq
    %v2018 = vshrl.u32 %v2017, 7
    %v2019 = vsub.s32 %v2016, %v2018
    %v2020 = vrot.slane %v1471, %v2019
    %v2021 = vcombine.low %v2013, %v2020
    %v2022 = vcombine.high %v2013, %v2020
    %v2024 = vunpack.c.l.s4 1966171168
    %v2025 = vunpack.c.0.s8 %v2024
    %v2026 = vlaneseq
    %v2027 = vshrl.u32 %v2026, 7
    %v2028 = vsub.s32 %v2025, %v2027
    %v2029 = vrot.slane %v2021, %v2028
    %v2031 = vunpack.c.l.s4 1966171168
    %v2032 = vunpack.c.0.s8 %v2031
    %v2033 = vlaneseq
    %v2034 = vshrl.u32 %v2033, 7
    %v2035 = vsub.s32 %v2032, %v2034
    %v2036 = vrot.slane %v2022, %v2035
    %v2037 = vcombine.high %v2029, %v2029
    %v2038 = vcombine.high %v2036, %v2036
    %v2039 = vcombine.low %v1454, %v1468
    %v2041 = vunpack.c.l.s4 1966171168
    %v2042 = vunpack.c.0.s8 %v2041
    %v2043 = vlaneseq
    %v2044 = vshrl.u32 %v2043, 7
    %v2045 = vsub.s32 %v2042, %v2044
    %v2046 = vrot.slane %v2039, %v2045
    %v2048 = vunpack.c.l.s4 1966171168
    %v2049 = vunpack.c.0.s8 %v2048
    %v2050 = vlaneseq
    %v2051 = vshrl.u32 %v2050, 7
    %v2052 = vsub.s32 %v2049, %v2051
    %v2053 = vrot.slane %v1470, %v2052
    %v2054 = vcombine.low %v2046, %v2053
    %v2055 = vcombine.high %v2046, %v2053
    %v2057 = vunpack.c.l.s4 1966171168
    %v2058 = vunpack.c.0.s8 %v2057
    %v2059 = vlaneseq
    %v2060 = vshrl.u32 %v2059, 7
    %v2061 = vsub.s32 %v2058, %v2060
    %v2062 = vrot.slane %v2054, %v2061
    %v2064 = vunpack.c.l.s4 1966171168
    %v2065 = vunpack.c.0.s8 %v2064
    %v2066 = vlaneseq
    %v2067 = vshrl.u32 %v2066, 7
    %v2068 = vsub.s32 %v2065, %v2067
    %v2069 = vrot.slane %v2055, %v2068
    %v2070 = vcombine.high %v2062, %v2062
    %v2071 = vcombine.high %v2069, %v2069
    %v2072 = vcombine.low %v1472, %v1515
    %v2074 = vunpack.c.l.s4 1966171168
    %v2075 = vunpack.c.0.s8 %v2074
    %v2076 = vlaneseq
    %v2077 = vshrl.u32 %v2076, 7
    %v2078 = vsub.s32 %v2075, %v2077
    %v2079 = vrot.slane %v2072, %v2078
    %v2081 = vunpack.c.l.s4 1966171168
    %v2082 = vunpack.c.0.s8 %v2081
    %v2083 = vlaneseq
    %v2084 = vshrl.u32 %v2083, 7
    %v2085 = vsub.s32 %v2082, %v2084
    %v2086 = vrot.slane %v1529, %v2085
    %v2087 = vcombine.low %v2079, %v2086
    %v2088 = vcombine.high %v2079, %v2086
    %v2090 = vunpack.c.l.s4 1966171168
    %v2091 = vunpack.c.0.s8 %v2090
    %v2092 = vlaneseq
    %v2093 = vshrl.u32 %v2092, 7
    %v2094 = vsub.s32 %v2091, %v2093
    %v2095 = vrot.slane %v2087, %v2094
    %v2097 = vunpack.c.l.s4 1966171168
    %v2098 = vunpack.c.0.s8 %v2097
    %v2099 = vlaneseq
    %v2100 = vshrl.u32 %v2099, 7
    %v2101 = vsub.s32 %v2098, %v2100
    %v2102 = vrot.slane %v2088, %v2101
    %v2103 = vcombine.high %v2095, %v2095
    %v2104 = vcombine.high %v2102, %v2102
    %v2105 = vcombine.low %v1537, %v1539
    %v2107 = vunpack.c.l.s4 1966171168
    %v2108 = vunpack.c.0.s8 %v2107
    %v2109 = vlaneseq
    %v2110 = vshrl.u32 %v2109, 7
    %v2111 = vsub.s32 %v2108, %v2110
    %v2112 = vrot.slane %v2105, %v2111
    %v2114 = vunpack.c.l.s4 1966171168
    %v2115 = vunpack.c.0.s8 %v2114
    %v2116 = vlaneseq
    %v2117 = vshrl.u32 %v2116, 7
    %v2118 = vsub.s32 %v2115, %v2117
    %v2119 = vrot.slane %v1522, %v2118
    %v2120 = vcombine.low %v2112, %v2119
    %v2121 = vcombine.high %v2112, %v2119
    %v2123 = vunpack.c.l.s4 1966171168
    %v2124 = vunpack.c.0.s8 %v2123
    %v2125 = vlaneseq
    %v2126 = vshrl.u32 %v2125, 7
    %v2127 = vsub.s32 %v2124, %v2126
    %v2128 = vrot.slane %v2120, %v2127
    %v2130 = vunpack.c.l.s4 1966171168
    %v2131 = vunpack.c.0.s8 %v2130
    %v2132 = vlaneseq
    %v2133 = vshrl.u32 %v2132, 7
    %v2134 = vsub.s32 %v2131, %v2133
    %v2135 = vrot.slane %v2121, %v2134
    %v2136 = vcombine.high %v2128, %v2128
    %v2137 = vcombine.high %v2135, %v2135
    %v2138 = vcombine.low %v1536, %v1538
    %v2140 = vunpack.c.l.s4 1966171168
    %v2141 = vunpack.c.0.s8 %v2140
    %v2142 = vlaneseq
    %v2143 = vshrl.u32 %v2142, 7
    %v2144 = vsub.s32 %v2141, %v2143
    %v2145 = vrot.slane %v2138, %v2144
    %v2147 = vunpack.c.l.s4 1966171168
    %v2148 = vunpack.c.0.s8 %v2147
    %v2149 = vlaneseq
    %v2150 = vshrl.u32 %v2149, 7
    %v2151 = vsub.s32 %v2148, %v2150
    %v2152 = vrot.slane %v1540, %v2151
    %v2153 = vcombine.low %v2145, %v2152
    %v2154 = vcombine.high %v2145, %v2152
    %v2156 = vunpack.c.l.s4 1966171168
    %v2157 = vunpack.c.0.s8 %v2156
    %v2158 = vlaneseq
    %v2159 = vshrl.u32 %v2158, 7
    %v2160 = vsub.s32 %v2157, %v2159
    %v2161 = vrot.slane %v2153, %v2160
    %v2163 = vunpack.c.l.s4 1966171168
    %v2164 = vunpack.c.0.s8 %v2163
    %v2165 = vlaneseq
    %v2166 = vshrl.u32 %v2165, 7
    %v2167 = vsub.s32 %v2164, %v2166
    %v2168 = vrot.slane %v2154, %v2167
    %v2169 = vcombine.high %v2161, %v2161
    %v2170 = vcombine.high %v2168, %v2168
    %v2171 = vcombine.low %v1583, %v1597
    %v2173 = vunpack.c.l.s4 1966171168
    %v2174 = vunpack.c.0.s8 %v2173
    %v2175 = vlaneseq
    %v2176 = vshrl.u32 %v2175, 7
    %v2177 = vsub.s32 %v2174, %v2176
    %v2178 = vrot.slane %v2171, %v2177
    %v2180 = vunpack.c.l.s4 1966171168
    %v2181 = vunpack.c.0.s8 %v2180
    %v2182 = vlaneseq
    %v2183 = vshrl.u32 %v2182, 7
    %v2184 = vsub.s32 %v2181, %v2183
    %v2185 = vrot.slane %v1605, %v2184
    %v2186 = vcombine.low %v2178, %v2185
    %v2187 = vcombine.high %v2178, %v2185
    %v2189 = vunpack.c.l.s4 1966171168
    %v2190 = vunpack.c.0.s8 %v2189
    %v2191 = vlaneseq
    %v2192 = vshrl.u32 %v2191, 7
    %v2193 = vsub.s32 %v2190, %v2192
    %v2194 = vrot.slane %v2186, %v2193
    %v2196 = vunpack.c.l.s4 1966171168
    %v2197 = vunpack.c.0.s8 %v2196
    %v2198 = vlaneseq
    %v2199 = vshrl.u32 %v2198, 7
    %v2200 = vsub.s32 %v2197, %v2199
    %v2201 = vrot.slane %v2187, %v2200
    %v2202 = vcombine.high %v2194, %v2194
    %v2203 = vcombine.high %v2201, %v2201
    %v2204 = vcombine.low %v1607, %v1590
    %v2206 = vunpack.c.l.s4 1966171168
    %v2207 = vunpack.c.0.s8 %v2206
    %v2208 = vlaneseq
    %v2209 = vshrl.u32 %v2208, 7
    %v2210 = vsub.s32 %v2207, %v2209
    %v2211 = vrot.slane %v2204, %v2210
    %v2213 = vunpack.c.l.s4 1966171168
    %v2214 = vunpack.c.0.s8 %v2213
    %v2215 = vlaneseq
    %v2216 = vshrl.u32 %v2215, 7
    %v2217 = vsub.s32 %v2214, %v2216
    %v2218 = vrot.slane %v1604, %v2217
    %v2219 = vcombine.low %v2211, %v2218
    %v2220 = vcombine.high %v2211, %v2218
    %v2222 = vunpack.c.l.s4 1966171168
    %v2223 = vunpack.c.0.s8 %v2222
    %v2224 = vlaneseq
    %v2225 = vshrl.u32 %v2224, 7
    %v2226 = vsub.s32 %v2223, %v2225
    %v2227 = vrot.slane %v2219, %v2226
    %v2229 = vunpack.c.l.s4 1966171168
    %v2230 = vunpack.c.0.s8 %v2229
    %v2231 = vlaneseq
    %v2232 = vshrl.u32 %v2231, 7
    %v2233 = vsub.s32 %v2230, %v2232
    %v2234 = vrot.slane %v2220, %v2233
    %v2235 = vcombine.high %v2227, %v2227
    %v2236 = vcombine.high %v2234, %v2234
    %v2237 = vcombine.low %v1606, %v1608
    %v2239 = vunpack.c.l.s4 1966171168
    %v2240 = vunpack.c.0.s8 %v2239
    %v2241 = vlaneseq
    %v2242 = vshrl.u32 %v2241, 7
    %v2243 = vsub.s32 %v2240, %v2242
    %v2244 = vrot.slane %v2237, %v2243
    %v2246 = vunpack.c.l.s4 1966171168
    %v2247 = vunpack.c.0.s8 %v2246
    %v2248 = vlaneseq
    %v2249 = vshrl.u32 %v2248, 7
    %v2250 = vsub.s32 %v2247, %v2249
    %v2251 = vrot.slane %v1633, %v2250
    %v2252 = vcombine.low %v2244, %v2251
    %v2253 = vcombine.high %v2244, %v2251
    %v2255 = vunpack.c.l.s4 1966171168
    %v2256 = vunpack.c.0.s8 %v2255
    %v2257 = vlaneseq
    %v2258 = vshrl.u32 %v2257, 7
    %v2259 = vsub.s32 %v2256, %v2258
    %v2260 = vrot.slane %v2252, %v2259
    %v2262 = vunpack.c.l.s4 1966171168
    %v2263 = vunpack.c.0.s8 %v2262
    %v2264 = vlaneseq
    %v2265 = vshrl.u32 %v2264, 7
    %v2266 = vsub.s32 %v2263, %v2265
    %v2267 = vrot.slane %v2253, %v2266
    %v2268 = vcombine.high %v2260, %v2260
    %v2269 = vcombine.high %v2267, %v2267
    %v2270 = vcombine.low %v1640, %v1641
    %v2272 = vunpack.c.l.s4 1966171168
    %v2273 = vunpack.c.0.s8 %v2272
    %v2274 = vlaneseq
    %v2275 = vshrl.u32 %v2274, 7
    %v2276 = vsub.s32 %v2273, %v2275
    %v2277 = vrot.slane %v2270, %v2276
    %v2279 = vunpack.c.l.s4 1966171168
    %v2280 = vunpack.c.0.s8 %v2279
    %v2281 = vlaneseq
    %v2282 = vshrl.u32 %v2281, 7
    %v2283 = vsub.s32 %v2280, %v2282
    %v2284 = vrot.slane %v1642, %v2283
    %v2285 = vcombine.low %v2277, %v2284
    %v2286 = vcombine.high %v2277, %v2284
    %v2288 = vunpack.c.l.s4 1966171168
    %v2289 = vunpack.c.0.s8 %v2288
    %v2290 = vlaneseq
    %v2291 = vshrl.u32 %v2290, 7
    %v2292 = vsub.s32 %v2289, %v2291
    %v2293 = vrot.slane %v2285, %v2292
    %v2295 = vunpack.c.l.s4 1966171168
    %v2296 = vunpack.c.0.s8 %v2295
    %v2297 = vlaneseq
    %v2298 = vshrl.u32 %v2297, 7
    %v2299 = vsub.s32 %v2296, %v2298
    %v2300 = vrot.slane %v2286, %v2299
    %v2301 = vcombine.high %v2293, %v2293
    %v2302 = vcombine.high %v2300, %v2300
    %vm2383 = vcmask 1042432
    %v2384 = vsel %vm2383, %v1666, -inf
    %v2385 = vrot.slane %v2384, 4
    %v2386 = vmax.f32 %v2384, %v2385
    %v2387 = vrot.slane %v2386, 2
    %v2388 = vmax.f32 %v2386, %v2387
    %v2389 = vrot.slane %v2388, 1
    %v2390 = vmax.f32 %v2388, %v2389
    %v2391 = vsel %vm2383, %v1673, -inf
    %v2392 = vrot.slane %v2391, 4
    %v2393 = vmax.f32 %v2391, %v2392
    %v2394 = vrot.slane %v2393, 2
    %v2395 = vmax.f32 %v2393, %v2394
    %v2396 = vrot.slane %v2395, 1
    %v2397 = vmax.f32 %v2395, %v2396
    %v2398 = vsel %vm2383, %v1674, -inf
    %v2399 = vrot.slane %v2398, 4
    %v2400 = vmax.f32 %v2398, %v2399
    %v2401 = vrot.slane %v2400, 2
    %v2402 = vmax.f32 %v2400, %v2401
    %v2403 = vrot.slane %v2402, 1
    %v2404 = vmax.f32 %v2402, %v2403
    %v2405 = vsel %vm2383, %v1675, -inf
    %v2406 = vrot.slane %v2405, 4
    %v2407 = vmax.f32 %v2405, %v2406
    %v2408 = vrot.slane %v2407, 2
    %v2409 = vmax.f32 %v2407, %v2408
    %v2410 = vrot.slane %v2409, 1
    %v2411 = vmax.f32 %v2409, %v2410
    %v2412 = vsel %vm2383, %v1699, -inf
    %v2413 = vrot.slane %v2412, 4
    %v2414 = vmax.f32 %v2412, %v2413
    %v2415 = vrot.slane %v2414, 2
    %v2416 = vmax.f32 %v2414, %v2415
    %v2417 = vrot.slane %v2416, 1
    %v2418 = vmax.f32 %v2416, %v2417
    %v2419 = vsel %vm2383, %v1706, -inf
    %v2420 = vrot.slane %v2419, 4
    %v2421 = vmax.f32 %v2419, %v2420
    %v2422 = vrot.slane %v2421, 2
    %v2423 = vmax.f32 %v2421, %v2422
    %v2424 = vrot.slane %v2423, 1
    %v2425 = vmax.f32 %v2423, %v2424
    %v2426 = vsel %vm2383, %v1707, -inf
    %v2427 = vrot.slane %v2426, 4
    %v2428 = vmax.f32 %v2426, %v2427
    %v2429 = vrot.slane %v2428, 2
    %v2430 = vmax.f32 %v2428, %v2429
    %v2431 = vrot.slane %v2430, 1
    %v2432 = vmax.f32 %v2430, %v2431
    %v2433 = vsel %vm2383, %v1708, -inf
    %v2434 = vrot.slane %v2433, 4
    %v2435 = vmax.f32 %v2433, %v2434
    %v2436 = vrot.slane %v2435, 2
    %v2437 = vmax.f32 %v2435, %v2436
    %v2438 = vrot.slane %v2437, 1
    %v2439 = vmax.f32 %v2437, %v2438
    %v2440 = vsel %vm2383, %v1732, -inf
    %v2441 = vrot.slane %v2440, 4
    %v2442 = vmax.f32 %v2440, %v2441
    %v2443 = vrot.slane %v2442, 2
    %v2444 = vmax.f32 %v2442, %v2443
    %v2445 = vrot.slane %v2444, 1
    %v2446 = vmax.f32 %v2444, %v2445
    %v2447 = vsel %vm2383, %v1739, -inf
    %v2448 = vrot.slane %v2447, 4
    %v2449 = vmax.f32 %v2447, %v2448
    %v2450 = vrot.slane %v2449, 2
    %v2451 = vmax.f32 %v2449, %v2450
    %v2452 = vrot.slane %v2451, 1
    %v2453 = vmax.f32 %v2451, %v2452
    %v2454 = vsel %vm2383, %v1740, -inf
    %v2455 = vrot.slane %v2454, 4
    %v2456 = vmax.f32 %v2454, %v2455
    %v2457 = vrot.slane %v2456, 2
    %v2458 = vmax.f32 %v2456, %v2457
    %v2459 = vrot.slane %v2458, 1
    %v2460 = vmax.f32 %v2458, %v2459
    %v2461 = vsel %vm2383, %v1741, -inf
    %v2462 = vrot.slane %v2461, 4
    %v2463 = vmax.f32 %v2461, %v2462
    %v2464 = vrot.slane %v2463, 2
    %v2465 = vmax.f32 %v2463, %v2464
    %v2466 = vrot.slane %v2465, 1
    %v2467 = vmax.f32 %v2465, %v2466
    %v2468 = vsel %vm2383, %v1765, -inf
    %v2469 = vrot.slane %v2468, 4
    %v2470 = vmax.f32 %v2468, %v2469
    %v2471 = vrot.slane %v2470, 2
    %v2472 = vmax.f32 %v2470, %v2471
    %v2473 = vrot.slane %v2472, 1
    %v2474 = vmax.f32 %v2472, %v2473
    %v2475 = vsel %vm2383, %v1772, -inf
    %v2476 = vrot.slane %v2475, 4
    %v2477 = vmax.f32 %v2475, %v2476
    %v2478 = vrot.slane %v2477, 2
    %v2479 = vmax.f32 %v2477, %v2478
    %v2480 = vrot.slane %v2479, 1
    %v2481 = vmax.f32 %v2479, %v2480
    %v2482 = vsel %vm2383, %v1773, -inf
    %v2483 = vrot.slane %v2482, 4
    %v2484 = vmax.f32 %v2482, %v2483
    %v2485 = vrot.slane %v2484, 2
    %v2486 = vmax.f32 %v2484, %v2485
    %v2487 = vrot.slane %v2486, 1
    %v2488 = vmax.f32 %v2486, %v2487
    %v2489 = vsel %vm2383, %v1774, -inf
    %v2490 = vrot.slane %v2489, 4
    %v2491 = vmax.f32 %v2489, %v2490
    %v2492 = vrot.slane %v2491, 2
    %v2493 = vmax.f32 %v2491, %v2492
    %v2494 = vrot.slane %v2493, 1
    %v2495 = vmax.f32 %v2493, %v2494
    %v2496 = vsel %vm2383, %v1798, -inf
    %v2497 = vrot.slane %v2496, 4
    %v2498 = vmax.f32 %v2496, %v2497
    %v2499 = vrot.slane %v2498, 2
    %v2500 = vmax.f32 %v2498, %v2499
    %v2501 = vrot.slane %v2500, 1
    %v2502 = vmax.f32 %v2500, %v2501
    %v2503 = vsel %vm2383, %v1805, -inf
    %v2504 = vrot.slane %v2503, 4
    %v2505 = vmax.f32 %v2503, %v2504
    %v2506 = vrot.slane %v2505, 2
    %v2507 = vmax.f32 %v2505, %v2506
    %v2508 = vrot.slane %v2507, 1
    %v2509 = vmax.f32 %v2507, %v2508
    %v2510 = vsel %vm2383, %v1806, -inf
    %v2511 = vrot.slane %v2510, 4
    %v2512 = vmax.f32 %v2510, %v2511
    %v2513 = vrot.slane %v2512, 2
    %v2514 = vmax.f32 %v2512, %v2513
    %v2515 = vrot.slane %v2514, 1
    %v2516 = vmax.f32 %v2514, %v2515
    %v2517 = vsel %vm2383, %v1807, -inf
    %v2518 = vrot.slane %v2517, 4
    %v2519 = vmax.f32 %v2517, %v2518
    %v2520 = vrot.slane %v2519, 2
    %v2521 = vmax.f32 %v2519, %v2520
    %v2522 = vrot.slane %v2521, 1
    %v2523 = vmax.f32 %v2521, %v2522
    %v2524 = vsel %vm2383, %v1831, -inf
    %v2525 = vrot.slane %v2524, 4
    %v2526 = vmax.f32 %v2524, %v2525
    %v2527 = vrot.slane %v2526, 2
    %v2528 = vmax.f32 %v2526, %v2527
    %v2529 = vrot.slane %v2528, 1
    %v2530 = vmax.f32 %v2528, %v2529
    %v2531 = vsel %vm2383, %v1838, -inf
    %v2532 = vrot.slane %v2531, 4
    %v2533 = vmax.f32 %v2531, %v2532
    %v2534 = vrot.slane %v2533, 2
    %v2535 = vmax.f32 %v2533, %v2534
    %v2536 = vrot.slane %v2535, 1
    %v2537 = vmax.f32 %v2535, %v2536
    %v2538 = vsel %vm2383, %v1839, -inf
    %v2539 = vrot.slane %v2538, 4
    %v2540 = vmax.f32 %v2538, %v2539
    %v2541 = vrot.slane %v2540, 2
    %v2542 = vmax.f32 %v2540, %v2541
    %v2543 = vrot.slane %v2542, 1
    %v2544 = vmax.f32 %v2542, %v2543
    %v2545 = vsel %vm2383, %v1840, -inf
    %v2546 = vrot.slane %v2545, 4
    %v2547 = vmax.f32 %v2545, %v2546
    %v2548 = vrot.slane %v2547, 2
    %v2549 = vmax.f32 %v2547, %v2548
    %v2550 = vrot.slane %v2549, 1
    %v2551 = vmax.f32 %v2549, %v2550
    %v2552 = vsel %vm2383, %v1864, -inf
    %v2553 = vrot.slane %v2552, 4
    %v2554 = vmax.f32 %v2552, %v2553
    %v2555 = vrot.slane %v2554, 2
    %v2556 = vmax.f32 %v2554, %v2555
    %v2557 = vrot.slane %v2556, 1
    %v2558 = vmax.f32 %v2556, %v2557
    %v2559 = vsel %vm2383, %v1871, -inf
    %v2560 = vrot.slane %v2559, 4
    %v2561 = vmax.f32 %v2559, %v2560
    %v2562 = vrot.slane %v2561, 2
    %v2563 = vmax.f32 %v2561, %v2562
    %v2564 = vrot.slane %v2563, 1
    %v2565 = vmax.f32 %v2563, %v2564
    %v2566 = vsel %vm2383, %v1872, -inf
    %v2567 = vrot.slane %v2566, 4
    %v2568 = vmax.f32 %v2566, %v2567
    %v2569 = vrot.slane %v2568, 2
    %v2570 = vmax.f32 %v2568, %v2569
    %v2571 = vrot.slane %v2570, 1
    %v2572 = vmax.f32 %v2570, %v2571
    %v2573 = vsel %vm2383, %v1873, -inf
    %v2574 = vrot.slane %v2573, 4
    %v2575 = vmax.f32 %v2573, %v2574
    %v2576 = vrot.slane %v2575, 2
    %v2577 = vmax.f32 %v2575, %v2576
    %v2578 = vrot.slane %v2577, 1
    %v2579 = vmax.f32 %v2577, %v2578
    %v2580 = vsel %vm2383, %v1897, -inf
    %v2581 = vrot.slane %v2580, 4
    %v2582 = vmax.f32 %v2580, %v2581
    %v2583 = vrot.slane %v2582, 2
    %v2584 = vmax.f32 %v2582, %v2583
    %v2585 = vrot.slane %v2584, 1
    %v2586 = vmax.f32 %v2584, %v2585
    %v2587 = vsel %vm2383, %v1904, -inf
    %v2588 = vrot.slane %v2587, 4
    %v2589 = vmax.f32 %v2587, %v2588
    %v2590 = vrot.slane %v2589, 2
    %v2591 = vmax.f32 %v2589, %v2590
    %v2592 = vrot.slane %v2591, 1
    %v2593 = vmax.f32 %v2591, %v2592
    %v2594 = vsel %vm2383, %v1905, -inf
    %v2595 = vrot.slane %v2594, 4
    %v2596 = vmax.f32 %v2594, %v2595
    %v2597 = vrot.slane %v2596, 2
    %v2598 = vmax.f32 %v2596, %v2597
    %v2599 = vrot.slane %v2598, 1
    %v2600 = vmax.f32 %v2598, %v2599
    %v2601 = vsel %vm2383, %v1906, -inf
    %v2602 = vrot.slane %v2601, 4
    %v2603 = vmax.f32 %v2601, %v2602
    %v2604 = vrot.slane %v2603, 2
    %v2605 = vmax.f32 %v2603, %v2604
    %v2606 = vrot.slane %v2605, 1
    %v2607 = vmax.f32 %v2605, %v2606
    %v2608 = vsel %vm2383, %v1930, -inf
    %v2609 = vrot.slane %v2608, 4
    %v2610 = vmax.f32 %v2608, %v2609
    %v2611 = vrot.slane %v2610, 2
    %v2612 = vmax.f32 %v2610, %v2611
    %v2613 = vrot.slane %v2612, 1
    %v2614 = vmax.f32 %v2612, %v2613
    %v2615 = vsel %vm2383, %v1937, -inf
    %v2616 = vrot.slane %v2615, 4
    %v2617 = vmax.f32 %v2615, %v2616
    %v2618 = vrot.slane %v2617, 2
    %v2619 = vmax.f32 %v2617, %v2618
    %v2620 = vrot.slane %v2619, 1
    %v2621 = vmax.f32 %v2619, %v2620
    %v2622 = vsel %vm2383, %v1938, -inf
    %v2623 = vrot.slane %v2622, 4
    %v2624 = vmax.f32 %v2622, %v2623
    %v2625 = vrot.slane %v2624, 2
    %v2626 = vmax.f32 %v2624, %v2625
    %v2627 = vrot.slane %v2626, 1
    %v2628 = vmax.f32 %v2626, %v2627
    %v2629 = vsel %vm2383, %v1939, -inf
    %v2630 = vrot.slane %v2629, 4
    %v2631 = vmax.f32 %v2629, %v2630
    %v2632 = vrot.slane %v2631, 2
    %v2633 = vmax.f32 %v2631, %v2632
    %v2634 = vrot.slane %v2633, 1
    %v2635 = vmax.f32 %v2633, %v2634
    %v2636 = vsel %vm2383, %v1963, -inf
    %v2637 = vrot.slane %v2636, 4
    %v2638 = vmax.f32 %v2636, %v2637
    %v2639 = vrot.slane %v2638, 2
    %v2640 = vmax.f32 %v2638, %v2639
    %v2641 = vrot.slane %v2640, 1
    %v2642 = vmax.f32 %v2640, %v2641
    %v2643 = vsel %vm2383, %v1970, -inf
    %v2644 = vrot.slane %v2643, 4
    %v2645 = vmax.f32 %v2643, %v2644
    %v2646 = vrot.slane %v2645, 2
    %v2647 = vmax.f32 %v2645, %v2646
    %v2648 = vrot.slane %v2647, 1
    %v2649 = vmax.f32 %v2647, %v2648
    %v2650 = vsel %vm2383, %v1971, -inf
    %v2651 = vrot.slane %v2650, 4
    %v2652 = vmax.f32 %v2650, %v2651
    %v2653 = vrot.slane %v2652, 2
    %v2654 = vmax.f32 %v2652, %v2653
    %v2655 = vrot.slane %v2654, 1
    %v2656 = vmax.f32 %v2654, %v2655
    %v2657 = vsel %vm2383, %v1972, -inf
    %v2658 = vrot.slane %v2657, 4
    %v2659 = vmax.f32 %v2657, %v2658
    %v2660 = vrot.slane %v2659, 2
    %v2661 = vmax.f32 %v2659, %v2660
    %v2662 = vrot.slane %v2661, 1
    %v2663 = vmax.f32 %v2661, %v2662
    %v2664 = vsel %vm2383, %v1996, -inf
    %v2665 = vrot.slane %v2664, 4
    %v2666 = vmax.f32 %v2664, %v2665
    %v2667 = vrot.slane %v2666, 2
    %v2668 = vmax.f32 %v2666, %v2667
    %v2669 = vrot.slane %v2668, 1
    %v2670 = vmax.f32 %v2668, %v2669
    %v2671 = vsel %vm2383, %v2003, -inf
    %v2672 = vrot.slane %v2671, 4
    %v2673 = vmax.f32 %v2671, %v2672
    %v2674 = vrot.slane %v2673, 2
    %v2675 = vmax.f32 %v2673, %v2674
    %v2676 = vrot.slane %v2675, 1
    %v2677 = vmax.f32 %v2675, %v2676
    %v2678 = vsel %vm2383, %v2004, -inf
    %v2679 = vrot.slane %v2678, 4
    %v2680 = vmax.f32 %v2678, %v2679
    %v2681 = vrot.slane %v2680, 2
    %v2682 = vmax.f32 %v2680, %v2681
    %v2683 = vrot.slane %v2682, 1
    %v2684 = vmax.f32 %v2682, %v2683
    %v2685 = vsel %vm2383, %v2005, -inf
    %v2686 = vrot.slane %v2685, 4
    %v2687 = vmax.f32 %v2685, %v2686
    %v2688 = vrot.slane %v2687, 2
    %v2689 = vmax.f32 %v2687, %v2688
    %v2690 = vrot.slane %v2689, 1
    %v2691 = vmax.f32 %v2689, %v2690
    %v2692 = vsel %vm2383, %v2029, -inf
    %v2693 = vrot.slane %v2692, 4
    %v2694 = vmax.f32 %v2692, %v2693
    %v2695 = vrot.slane %v2694, 2
    %v2696 = vmax.f32 %v2694, %v2695
    %v2697 = vrot.slane %v2696, 1
    %v2698 = vmax.f32 %v2696, %v2697
    %v2699 = vsel %vm2383, %v2036, -inf
    %v2700 = vrot.slane %v2699, 4
    %v2701 = vmax.f32 %v2699, %v2700
    %v2702 = vrot.slane %v2701, 2
    %v2703 = vmax.f32 %v2701, %v2702
    %v2704 = vrot.slane %v2703, 1
    %v2705 = vmax.f32 %v2703, %v2704
    %v2706 = vsel %vm2383, %v2037, -inf
    %v2707 = vrot.slane %v2706, 4
    %v2708 = vmax.f32 %v2706, %v2707
    %v2709 = vrot.slane %v2708, 2
    %v2710 = vmax.f32 %v2708, %v2709
    %v2711 = vrot.slane %v2710, 1
    %v2712 = vmax.f32 %v2710, %v2711
    %v2713 = vsel %vm2383, %v2038, -inf
    %v2714 = vrot.slane %v2713, 4
    %v2715 = vmax.f32 %v2713, %v2714
    %v2716 = vrot.slane %v2715, 2
    %v2717 = vmax.f32 %v2715, %v2716
    %v2718 = vrot.slane %v2717, 1
    %v2719 = vmax.f32 %v2717, %v2718
    %v2720 = vsel %vm2383, %v2062, -inf
    %v2721 = vrot.slane %v2720, 4
    %v2722 = vmax.f32 %v2720, %v2721
    %v2723 = vrot.slane %v2722, 2
    %v2724 = vmax.f32 %v2722, %v2723
    %v2725 = vrot.slane %v2724, 1
    %v2726 = vmax.f32 %v2724, %v2725
    %v2727 = vsel %vm2383, %v2069, -inf
    %v2728 = vrot.slane %v2727, 4
    %v2729 = vmax.f32 %v2727, %v2728
    %v2730 = vrot.slane %v2729, 2
    %v2731 = vmax.f32 %v2729, %v2730
    %v2732 = vrot.slane %v2731, 1
    %v2733 = vmax.f32 %v2731, %v2732
    %v2734 = vsel %vm2383, %v2070, -inf
    %v2735 = vrot.slane %v2734, 4
    %v2736 = vmax.f32 %v2734, %v2735
    %v2737 = vrot.slane %v2736, 2
    %v2738 = vmax.f32 %v2736, %v2737
    %v2739 = vrot.slane %v2738, 1
    %v2740 = vmax.f32 %v2738, %v2739
    %v2741 = vsel %vm2383, %v2071, -inf
    %v2742 = vrot.slane %v2741, 4
    %v2743 = vmax.f32 %v2741, %v2742
    %v2744 = vrot.slane %v2743, 2
    %v2745 = vmax.f32 %v2743, %v2744
    %v2746 = vrot.slane %v2745, 1
    %v2747 = vmax.f32 %v2745, %v2746
    %v2748 = vsel %vm2383, %v2095, -inf
    %v2749 = vrot.slane %v2748, 4
    %v2750 = vmax.f32 %v2748, %v2749
    %v2751 = vrot.slane %v2750, 2
    %v2752 = vmax.f32 %v2750, %v2751
    %v2753 = vrot.slane %v2752, 1
    %v2754 = vmax.f32 %v2752, %v2753
    %v2755 = vsel %vm2383, %v2102, -inf
    %v2756 = vrot.slane %v2755, 4
    %v2757 = vmax.f32 %v2755, %v2756
    %v2758 = vrot.slane %v2757, 2
    %v2759 = vmax.f32 %v2757, %v2758
    %v2760 = vrot.slane %v2759, 1
    %v2761 = vmax.f32 %v2759, %v2760
    %v2762 = vsel %vm2383, %v2103, -inf
    %v2763 = vrot.slane %v2762, 4
    %v2764 = vmax.f32 %v2762, %v2763
    %v2765 = vrot.slane %v2764, 2
    %v2766 = vmax.f32 %v2764, %v2765
    %v2767 = vrot.slane %v2766, 1
    %v2768 = vmax.f32 %v2766, %v2767
    %v2769 = vsel %vm2383, %v2104, -inf
    %v2770 = vrot.slane %v2769, 4
    %v2771 = vmax.f32 %v2769, %v2770
    %v2772 = vrot.slane %v2771, 2
    %v2773 = vmax.f32 %v2771, %v2772
    %v2774 = vrot.slane %v2773, 1
    %v2775 = vmax.f32 %v2773, %v2774
    %v2776 = vsel %vm2383, %v2128, -inf
    %v2777 = vrot.slane %v2776, 4
    %v2778 = vmax.f32 %v2776, %v2777
    %v2779 = vrot.slane %v2778, 2
    %v2780 = vmax.f32 %v2778, %v2779
    %v2781 = vrot.slane %v2780, 1
    %v2782 = vmax.f32 %v2780, %v2781
    %v2783 = vsel %vm2383, %v2135, -inf
    %v2784 = vrot.slane %v2783, 4
    %v2785 = vmax.f32 %v2783, %v2784
    %v2786 = vrot.slane %v2785, 2
    %v2787 = vmax.f32 %v2785, %v2786
    %v2788 = vrot.slane %v2787, 1
    %v2789 = vmax.f32 %v2787, %v2788
    %v2790 = vsel %vm2383, %v2136, -inf
    %v2791 = vrot.slane %v2790, 4
    %v2792 = vmax.f32 %v2790, %v2791
    %v2793 = vrot.slane %v2792, 2
    %v2794 = vmax.f32 %v2792, %v2793
    %v2795 = vrot.slane %v2794, 1
    %v2796 = vmax.f32 %v2794, %v2795
    %v2797 = vsel %vm2383, %v2137, -inf
    %v2798 = vrot.slane %v2797, 4
    %v2799 = vmax.f32 %v2797, %v2798
    %v2800 = vrot.slane %v2799, 2
    %v2801 = vmax.f32 %v2799, %v2800
    %v2802 = vrot.slane %v2801, 1
    %v2803 = vmax.f32 %v2801, %v2802
    %v2804 = vsel %vm2383, %v2161, -inf
    %v2805 = vrot.slane %v2804, 4
    %v2806 = vmax.f32 %v2804, %v2805
    %v2807 = vrot.slane %v2806, 2
    %v2808 = vmax.f32 %v2806, %v2807
    %v2809 = vrot.slane %v2808, 1
    %v2810 = vmax.f32 %v2808, %v2809
    %v2811 = vsel %vm2383, %v2168, -inf
    %v2812 = vrot.slane %v2811, 4
    %v2813 = vmax.f32 %v2811, %v2812
    %v2814 = vrot.slane %v2813, 2
    %v2815 = vmax.f32 %v2813, %v2814
    %v2816 = vrot.slane %v2815, 1
    %v2817 = vmax.f32 %v2815, %v2816
    %v2818 = vsel %vm2383, %v2169, -inf
    %v2819 = vrot.slane %v2818, 4
    %v2820 = vmax.f32 %v2818, %v2819
    %v2821 = vrot.slane %v2820, 2
    %v2822 = vmax.f32 %v2820, %v2821
    %v2823 = vrot.slane %v2822, 1
    %v2824 = vmax.f32 %v2822, %v2823
    %v2825 = vsel %vm2383, %v2170, -inf
    %v2826 = vrot.slane %v2825, 4
    %v2827 = vmax.f32 %v2825, %v2826
    %v2828 = vrot.slane %v2827, 2
    %v2829 = vmax.f32 %v2827, %v2828
    %v2830 = vrot.slane %v2829, 1
    %v2831 = vmax.f32 %v2829, %v2830
    %v2832 = vsel %vm2383, %v2194, -inf
    %v2833 = vrot.slane %v2832, 4
    %v2834 = vmax.f32 %v2832, %v2833
    %v2835 = vrot.slane %v2834, 2
    %v2836 = vmax.f32 %v2834, %v2835
    %v2837 = vrot.slane %v2836, 1
    %v2838 = vmax.f32 %v2836, %v2837
    %v2839 = vsel %vm2383, %v2201, -inf
    %v2840 = vrot.slane %v2839, 4
    %v2841 = vmax.f32 %v2839, %v2840
    %v2842 = vrot.slane %v2841, 2
    %v2843 = vmax.f32 %v2841, %v2842
    %v2844 = vrot.slane %v2843, 1
    %v2845 = vmax.f32 %v2843, %v2844
    %v2846 = vsel %vm2383, %v2202, -inf
    %v2847 = vrot.slane %v2846, 4
    %v2848 = vmax.f32 %v2846, %v2847
    %v2849 = vrot.slane %v2848, 2
    %v2850 = vmax.f32 %v2848, %v2849
    %v2851 = vrot.slane %v2850, 1
    %v2852 = vmax.f32 %v2850, %v2851
    %v2853 = vsel %vm2383, %v2203, -inf
    %v2854 = vrot.slane %v2853, 4
    %v2855 = vmax.f32 %v2853, %v2854
    %v2856 = vrot.slane %v2855, 2
    %v2857 = vmax.f32 %v2855, %v2856
    %v2858 = vrot.slane %v2857, 1
    %v2859 = vmax.f32 %v2857, %v2858
    %v2860 = vsel %vm2383, %v2227, -inf
    %v2861 = vrot.slane %v2860, 4
    %v2862 = vmax.f32 %v2860, %v2861
    %v2863 = vrot.slane %v2862, 2
    %v2864 = vmax.f32 %v2862, %v2863
    %v2865 = vrot.slane %v2864, 1
    %v2866 = vmax.f32 %v2864, %v2865
    %v2867 = vsel %vm2383, %v2234, -inf
    %v2868 = vrot.slane %v2867, 4
    %v2869 = vmax.f32 %v2867, %v2868
    %v2870 = vrot.slane %v2869, 2
    %v2871 = vmax.f32 %v2869, %v2870
    %v2872 = vrot.slane %v2871, 1
    %v2873 = vmax.f32 %v2871, %v2872
    %v2874 = vsel %vm2383, %v2235, -inf
    %v2875 = vrot.slane %v2874, 4
    %v2876 = vmax.f32 %v2874, %v2875
    %v2877 = vrot.slane %v2876, 2
    %v2878 = vmax.f32 %v2876, %v2877
    %v2879 = vrot.slane %v2878, 1
    %v2880 = vmax.f32 %v2878, %v2879
    %v2881 = vsel %vm2383, %v2236, -inf
    %v2882 = vrot.slane %v2881, 4
    %v2883 = vmax.f32 %v2881, %v2882
    %v2884 = vrot.slane %v2883, 2
    %v2885 = vmax.f32 %v2883, %v2884
    %v2886 = vrot.slane %v2885, 1
    %v2887 = vmax.f32 %v2885, %v2886
    %v2888 = vsel %vm2383, %v2260, -inf
    %v2889 = vrot.slane %v2888, 4
    %v2890 = vmax.f32 %v2888, %v2889
    %v2891 = vrot.slane %v2890, 2
    %v2892 = vmax.f32 %v2890, %v2891
    %v2893 = vrot.slane %v2892, 1
    %v2894 = vmax.f32 %v2892, %v2893
    %v2895 = vsel %vm2383, %v2267, -inf
    %v2896 = vrot.slane %v2895, 4
    %v2897 = vmax.f32 %v2895, %v2896
    %v2898 = vrot.slane %v2897, 2
    %v2899 = vmax.f32 %v2897, %v2898
    %v2900 = vrot.slane %v2899, 1
    %v2901 = vmax.f32 %v2899, %v2900
    %v2902 = vsel %vm2383, %v2268, -inf
    %v2903 = vrot.slane %v2902, 4
    %v2904 = vmax.f32 %v2902, %v2903
    %v2905 = vrot.slane %v2904, 2
    %v2906 = vmax.f32 %v2904, %v2905
    %v2907 = vrot.slane %v2906, 1
    %v2908 = vmax.f32 %v2906, %v2907
    %v2909 = vsel %vm2383, %v2269, -inf
    %v2910 = vrot.slane %v2909, 4
    %v2911 = vmax.f32 %v2909, %v2910
    %v2912 = vrot.slane %v2911, 2
    %v2913 = vmax.f32 %v2911, %v2912
    %v2914 = vrot.slane %v2913, 1
    %v2915 = vmax.f32 %v2913, %v2914
    %v2916 = vsel %vm2383, %v2293, -inf
    %v2917 = vrot.slane %v2916, 4
    %v2918 = vmax.f32 %v2916, %v2917
    %v2919 = vrot.slane %v2918, 2
    %v2920 = vmax.f32 %v2918, %v2919
    %v2921 = vrot.slane %v2920, 1
    %v2922 = vmax.f32 %v2920, %v2921
    %v2923 = vsel %vm2383, %v2300, -inf
    %v2924 = vrot.slane %v2923, 4
    %v2925 = vmax.f32 %v2923, %v2924
    %v2926 = vrot.slane %v2925, 2
    %v2927 = vmax.f32 %v2925, %v2926
    %v2928 = vrot.slane %v2927, 1
    %v2929 = vmax.f32 %v2927, %v2928
    %v2930 = vsel %vm2383, %v2301, -inf
    %v2931 = vrot.slane %v2930, 4
    %v2932 = vmax.f32 %v2930, %v2931
    %v2933 = vrot.slane %v2932, 2
    %v2934 = vmax.f32 %v2932, %v2933
    %v2935 = vrot.slane %v2934, 1
    %v2936 = vmax.f32 %v2934, %v2935
    %v2937 = vsel %vm2383, %v2302, -inf
    %v2938 = vrot.slane %v2937, 4
    %v2939 = vmax.f32 %v2937, %v2938
    %v2940 = vrot.slane %v2939, 2
    %v2941 = vmax.f32 %v2939, %v2940
    %v2942 = vrot.slane %v2941, 1
    %v2943 = vmax.f32 %v2941, %v2942
    %v2944 = vpack.c.bf16 %v2390, %v2390
    %v2945 = vpack.c.bf16 %v2397, %v2397
    %v2946 = vpack.c.bf16 %v2404, %v2404
    %v2947 = vpack.c.bf16 %v2411, %v2411
    %v2948 = vpack.c.bf16 %v2418, %v2418
    %v2949 = vpack.c.bf16 %v2425, %v2425
    %v2950 = vpack.c.bf16 %v2432, %v2432
    %v2951 = vpack.c.bf16 %v2439, %v2439
    %v2952 = vpack.c.bf16 %v2446, %v2446
    %v2953 = vpack.c.bf16 %v2453, %v2453
    %v2954 = vpack.c.bf16 %v2460, %v2460
    %v2955 = vpack.c.bf16 %v2467, %v2467
    %v2956 = vpack.c.bf16 %v2474, %v2474
    %v2957 = vpack.c.bf16 %v2481, %v2481
    %v2958 = vpack.c.bf16 %v2488, %v2488
    %v2959 = vpack.c.bf16 %v2495, %v2495
    %v2960 = vpack.c.bf16 %v2502, %v2502
    %v2961 = vpack.c.bf16 %v2509, %v2509
    %v2962 = vpack.c.bf16 %v2516, %v2516
    %v2963 = vpack.c.bf16 %v2523, %v2523
    %v2964 = vpack.c.bf16 %v2530, %v2530
    %v2965 = vpack.c.bf16 %v2537, %v2537
    %v2966 = vpack.c.bf16 %v2544, %v2544
    %v2967 = vpack.c.bf16 %v2551, %v2551
    %v2968 = vpack.c.bf16 %v2558, %v2558
    %v2969 = vpack.c.bf16 %v2565, %v2565
    %v2970 = vpack.c.bf16 %v2572, %v2572
    %v2971 = vpack.c.bf16 %v2579, %v2579
    %v2972 = vpack.c.bf16 %v2586, %v2586
    %v2973 = vpack.c.bf16 %v2593, %v2593
    %v2974 = vpack.c.bf16 %v2600, %v2600
    %v2975 = vpack.c.bf16 %v2607, %v2607
    %v2976 = vpack.c.bf16 %v2614, %v2614
    %v2977 = vpack.c.bf16 %v2621, %v2621
    %v2978 = vpack.c.bf16 %v2628, %v2628
    %v2979 = vpack.c.bf16 %v2635, %v2635
    %v2980 = vpack.c.bf16 %v2642, %v2642
    %v2981 = vpack.c.bf16 %v2649, %v2649
    %v2982 = vpack.c.bf16 %v2656, %v2656
    %v2983 = vpack.c.bf16 %v2663, %v2663
    %v2984 = vpack.c.bf16 %v2670, %v2670
    %v2985 = vpack.c.bf16 %v2677, %v2677
    %v2986 = vpack.c.bf16 %v2684, %v2684
    %v2987 = vpack.c.bf16 %v2691, %v2691
    %v2988 = vpack.c.bf16 %v2698, %v2698
    %v2989 = vpack.c.bf16 %v2705, %v2705
    %v2990 = vpack.c.bf16 %v2712, %v2712
    %v2991 = vpack.c.bf16 %v2719, %v2719
    %v2992 = vpack.c.bf16 %v2726, %v2726
    %v2993 = vpack.c.bf16 %v2733, %v2733
    %v2994 = vpack.c.bf16 %v2740, %v2740
    %v2995 = vpack.c.bf16 %v2747, %v2747
    %v2996 = vpack.c.bf16 %v2754, %v2754
    %v2997 = vpack.c.bf16 %v2761, %v2761
    %v2998 = vpack.c.bf16 %v2768, %v2768
    %v2999 = vpack.c.bf16 %v2775, %v2775
    %v3000 = vpack.c.bf16 %v2782, %v2782
    %v3001 = vpack.c.bf16 %v2789, %v2789
    %v3002 = vpack.c.bf16 %v2796, %v2796
    %v3003 = vpack.c.bf16 %v2803, %v2803
    %v3004 = vpack.c.bf16 %v2810, %v2810
    %v3005 = vpack.c.bf16 %v2817, %v2817
    %v3006 = vpack.c.bf16 %v2824, %v2824
    %v3007 = vpack.c.bf16 %v2831, %v2831
    %v3008 = vpack.c.bf16 %v2838, %v2838
    %v3009 = vpack.c.bf16 %v2845, %v2845
    %v3010 = vpack.c.bf16 %v2852, %v2852
    %v3011 = vpack.c.bf16 %v2859, %v2859
    %v3012 = vpack.c.bf16 %v2866, %v2866
    %v3013 = vpack.c.bf16 %v2873, %v2873
    %v3014 = vpack.c.bf16 %v2880, %v2880
    %v3015 = vpack.c.bf16 %v2887, %v2887
    %v3016 = vpack.c.bf16 %v2894, %v2894
    %v3017 = vpack.c.bf16 %v2901, %v2901
    %v3018 = vpack.c.bf16 %v2908, %v2908
    %v3019 = vpack.c.bf16 %v2915, %v2915
    %v3020 = vpack.c.bf16 %v2922, %v2922
    %v3021 = vpack.c.bf16 %v2929, %v2929
    %v3022 = vpack.c.bf16 %v2936, %v2936
    %v3023 = vpack.c.bf16 %v2943, %v2943
    %s3024 = smul.u32 4, 192
    %s3025 = smul.u32 %s3024, 2
    %s3026 = sshll.u32 %s3025, 4
    %3027 = dma.done [#allocation4], %s3026
    %v3028 = vld [vmem:[#allocation2] sm:$0xff]
    %v3029 = vld [vmem:[#allocation2 + $0x8] sm:$0xff]
    %v3030 = vld [vmem:[#allocation2 + $0x10] sm:$0xff]
    %v3031 = vld [vmem:[#allocation2 + $0x18] sm:$0xff]
    %v3032 = vld [vmem:[#allocation2 + $0x20] sm:$0xff]
    %v3033 = vld [vmem:[#allocation2 + $0x28] sm:$0xff]
    %v3034 = vld [vmem:[#allocation2 + $0x30] sm:$0xff]
    %v3035 = vld [vmem:[#allocation2 + $0x38] sm:$0xff]
    %v3036 = vld [vmem:[#allocation2 + $0x40] sm:$0xff]
    %v3037 = vld [vmem:[#allocation2 + $0x48] sm:$0xff]
    %v3038 = vld [vmem:[#allocation2 + $0x50] sm:$0xff]
    %v3039 = vld [vmem:[#allocation2 + $0x58] sm:$0xff]
    %v3040 = vld [vmem:[#allocation2 + $0x60] sm:$0xff]
    %v3041 = vld [vmem:[#allocation2 + $0x68] sm:$0xff]
    %v3042 = vld [vmem:[#allocation2 + $0x70] sm:$0xff]
    %v3043 = vld [vmem:[#allocation2 + $0x78] sm:$0xff]
    %v3044 = vld [vmem:[#allocation2 + $0x80] sm:$0xff]
    %v3045 = vld [vmem:[#allocation2 + $0x88] sm:$0xff]
    %v3046 = vld [vmem:[#allocation2 + $0x90] sm:$0xff]
    %v3047 = vld [vmem:[#allocation2 + $0x98] sm:$0xff]
    %v3048 = vld [vmem:[#allocation2 + $0xa0] sm:$0xff]
    %v3049 = vld [vmem:[#allocation2 + $0xa8] sm:$0xff]
    %v3050 = vld [vmem:[#allocation2 + $0xb0] sm:$0xff]
    %v3051 = vld [vmem:[#allocation2 + $0xb8] sm:$0xff]
    %v3052 = vld [vmem:[#allocation2 + $0xc0] sm:$0xff]
    %v3053 = vld [vmem:[#allocation2 + $0xc8] sm:$0xff]
    %v3054 = vld [vmem:[#allocation2 + $0xd0] sm:$0xff]
    %v3055 = vld [vmem:[#allocation2 + $0xd8] sm:$0xff]
    %v3056 = vld [vmem:[#allocation2 + $0xe0] sm:$0xff]
    %v3057 = vld [vmem:[#allocation2 + $0xe8] sm:$0xff]
    %v3058 = vld [vmem:[#allocation2 + $0xf0] sm:$0xff]
    %v3059 = vld [vmem:[#allocation2 + $0xf8] sm:$0xff]
    %v3060 = vld [vmem:[#allocation2 + $0x100] sm:$0xff]
    %v3061 = vld [vmem:[#allocation2 + $0x108] sm:$0xff]
    %v3062 = vld [vmem:[#allocation2 + $0x110] sm:$0xff]
    %v3063 = vld [vmem:[#allocation2 + $0x118] sm:$0xff]
    %v3064 = vld [vmem:[#allocation2 + $0x120] sm:$0xff]
    %v3065 = vld [vmem:[#allocation2 + $0x128] sm:$0xff]
    %v3066 = vld [vmem:[#allocation2 + $0x130] sm:$0xff]
    %v3067 = vld [vmem:[#allocation2 + $0x138] sm:$0xff]
    %v3068 = vld [vmem:[#allocation2 + $0x140] sm:$0xff]
    %v3069 = vld [vmem:[#allocation2 + $0x148] sm:$0xff]
    %v3070 = vld [vmem:[#allocation2 + $0x150] sm:$0xff]
    %v3071 = vld [vmem:[#allocation2 + $0x158] sm:$0xff]
    %v3072 = vld [vmem:[#allocation2 + $0x160] sm:$0xff]
    %v3073 = vld [vmem:[#allocation2 + $0x168] sm:$0xff]
    %v3074 = vld [vmem:[#allocation2 + $0x170] sm:$0xff]
    %v3075 = vld [vmem:[#allocation2 + $0x178] sm:$0xff]
    %v3076 = vld [vmem:[#allocation2 + $0x180] sm:$0xff]
    %v3077 = vld [vmem:[#allocation2 + $0x188] sm:$0xff]
    %v3078 = vld [vmem:[#allocation2 + $0x190] sm:$0xff]
    %v3079 = vld [vmem:[#allocation2 + $0x198] sm:$0xff]
    %v3080 = vld [vmem:[#allocation2 + $0x1a0] sm:$0xff]
    %v3081 = vld [vmem:[#allocation2 + $0x1a8] sm:$0xff]
    %v3082 = vld [vmem:[#allocation2 + $0x1b0] sm:$0xff]
    %v3083 = vld [vmem:[#allocation2 + $0x1b8] sm:$0xff]
    %v3084 = vld [vmem:[#allocation2 + $0x1c0] sm:$0xff]
    %v3085 = vld [vmem:[#allocation2 + $0x1c8] sm:$0xff]
    %v3086 = vld [vmem:[#allocation2 + $0x1d0] sm:$0xff]
    %v3087 = vld [vmem:[#allocation2 + $0x1d8] sm:$0xff]
    %v3088 = vld [vmem:[#allocation2 + $0x1e0] sm:$0xff]
    %v3089 = vld [vmem:[#allocation2 + $0x1e8] sm:$0xff]
    %v3090 = vld [vmem:[#allocation2 + $0x1f0] sm:$0xff]
    %v3091 = vld [vmem:[#allocation2 + $0x1f8] sm:$0xff]
    %v3092 = vld [vmem:[#allocation2 + $0x200] sm:$0xff]
    %v3093 = vld [vmem:[#allocation2 + $0x208] sm:$0xff]
    %v3094 = vld [vmem:[#allocation2 + $0x210] sm:$0xff]
    %v3095 = vld [vmem:[#allocation2 + $0x218] sm:$0xff]
    %v3096 = vld [vmem:[#allocation2 + $0x220] sm:$0xff]
    %v3097 = vld [vmem:[#allocation2 + $0x228] sm:$0xff]
    %v3098 = vld [vmem:[#allocation2 + $0x230] sm:$0xff]
    %v3099 = vld [vmem:[#allocation2 + $0x238] sm:$0xff]
    %v3100 = vld [vmem:[#allocation2 + $0x240] sm:$0xff]
    %v3101 = vld [vmem:[#allocation2 + $0x248] sm:$0xff]
    %v3102 = vld [vmem:[#allocation2 + $0x250] sm:$0xff]
    %v3103 = vld [vmem:[#allocation2 + $0x258] sm:$0xff]
    %v3104 = vld [vmem:[#allocation2 + $0x260] sm:$0xff]
    %v3105 = vld [vmem:[#allocation2 + $0x268] sm:$0xff]
    %v3106 = vld [vmem:[#allocation2 + $0x270] sm:$0xff]
    %v3107 = vld [vmem:[#allocation2 + $0x278] sm:$0xff]
    %v3108 = vld [vmem:[#allocation2 + $0x280] sm:$0xff]
    %v3109 = vld [vmem:[#allocation2 + $0x288] sm:$0xff]
    %v3110 = vld [vmem:[#allocation2 + $0x290] sm:$0xff]
    %v3111 = vld [vmem:[#allocation2 + $0x298] sm:$0xff]
    %v3112 = vld [vmem:[#allocation2 + $0x2a0] sm:$0xff]
    %v3113 = vld [vmem:[#allocation2 + $0x2a8] sm:$0xff]
    %v3114 = vld [vmem:[#allocation2 + $0x2b0] sm:$0xff]
    %v3115 = vld [vmem:[#allocation2 + $0x2b8] sm:$0xff]
    %v3116 = vld [vmem:[#allocation2 + $0x2c0] sm:$0xff]
    %v3117 = vld [vmem:[#allocation2 + $0x2c8] sm:$0xff]
    %v3118 = vld [vmem:[#allocation2 + $0x2d0] sm:$0xff]
    %v3119 = vld [vmem:[#allocation2 + $0x2d8] sm:$0xff]
    %v3120 = vld [vmem:[#allocation2 + $0x2e0] sm:$0xff]
    %v3121 = vld [vmem:[#allocation2 + $0x2e8] sm:$0xff]
    %v3122 = vld [vmem:[#allocation2 + $0x2f0] sm:$0xff]
    %v3123 = vld [vmem:[#allocation2 + $0x2f8] sm:$0xff]
    %v3124 = vld [vmem:[#allocation2 + $0x300] sm:$0xff]
    %v3125 = vld [vmem:[#allocation2 + $0x308] sm:$0xff]
    %v3126 = vld [vmem:[#allocation2 + $0x310] sm:$0xff]
    %v3127 = vld [vmem:[#allocation2 + $0x318] sm:$0xff]
    %v3128 = vld [vmem:[#allocation2 + $0x320] sm:$0xff]
    %v3129 = vld [vmem:[#allocation2 + $0x328] sm:$0xff]
    %v3130 = vld [vmem:[#allocation2 + $0x330] sm:$0xff]
    %v3131 = vld [vmem:[#allocation2 + $0x338] sm:$0xff]
    %v3132 = vld [vmem:[#allocation2 + $0x340] sm:$0xff]
    %v3133 = vld [vmem:[#allocation2 + $0x348] sm:$0xff]
    %v3134 = vld [vmem:[#allocation2 + $0x350] sm:$0xff]
    %v3135 = vld [vmem:[#allocation2 + $0x358] sm:$0xff]
    %v3136 = vld [vmem:[#allocation2 + $0x360] sm:$0xff]
    %v3137 = vld [vmem:[#allocation2 + $0x368] sm:$0xff]
    %v3138 = vld [vmem:[#allocation2 + $0x370] sm:$0xff]
    %v3139 = vld [vmem:[#allocation2 + $0x378] sm:$0xff]
    %v3140 = vld [vmem:[#allocation2 + $0x380] sm:$0xff]
    %v3141 = vld [vmem:[#allocation2 + $0x388] sm:$0xff]
    %v3142 = vld [vmem:[#allocation2 + $0x390] sm:$0xff]
    %v3143 = vld [vmem:[#allocation2 + $0x398] sm:$0xff]
    %v3144 = vld [vmem:[#allocation2 + $0x3a0] sm:$0xff]
    %v3145 = vld [vmem:[#allocation2 + $0x3a8] sm:$0xff]
    %v3146 = vld [vmem:[#allocation2 + $0x3b0] sm:$0xff]
    %v3147 = vld [vmem:[#allocation2 + $0x3b8] sm:$0xff]
    %v3148 = vld [vmem:[#allocation2 + $0x3c0] sm:$0xff]
    %v3149 = vld [vmem:[#allocation2 + $0x3c8] sm:$0xff]
    %v3150 = vld [vmem:[#allocation2 + $0x3d0] sm:$0xff]
    %v3151 = vld [vmem:[#allocation2 + $0x3d8] sm:$0xff]
    %v3152 = vld [vmem:[#allocation2 + $0x3e0] sm:$0xff]
    %v3153 = vld [vmem:[#allocation2 + $0x3e8] sm:$0xff]
    %v3154 = vld [vmem:[#allocation2 + $0x3f0] sm:$0xff]
    %v3155 = vld [vmem:[#allocation2 + $0x3f8] sm:$0xff]
    %v3220 = vunpack.c.l.b16 %v2948
    %v3221 = vunpack.c.l.b16 %v2949
    %v3222 = vunpack.c.l.b16 %v2950
    %v3223 = vunpack.c.l.b16 %v2951
    %v3224 = vunpack.c.l.b16 %v2952
    %v3225 = vunpack.c.l.b16 %v2953
    %v3226 = vunpack.c.l.b16 %v2954
    %v3227 = vunpack.c.l.b16 %v2955
    %v3228 = vunpack.c.l.b16 %v2956
    %v3229 = vunpack.c.l.b16 %v2957
    %v3230 = vunpack.c.l.b16 %v2958
    %v3231 = vunpack.c.l.b16 %v2959
    %v3232 = vunpack.c.l.b16 %v2960
    %v3233 = vunpack.c.l.b16 %v2961
    %v3234 = vunpack.c.l.b16 %v2962
    %v3235 = vunpack.c.l.b16 %v2963
    %v3236 = vunpack.c.l.b16 %v2964
    %v3237 = vunpack.c.l.b16 %v2965
    %v3238 = vunpack.c.l.b16 %v2966
    %v3239 = vunpack.c.l.b16 %v2967
    %v3240 = vunpack.c.l.b16 %v2968
    %v3241 = vunpack.c.l.b16 %v2969
    %v3242 = vunpack.c.l.b16 %v2970
    %v3243 = vunpack.c.l.b16 %v2971
    %v3244 = vunpack.c.l.b16 %v2972
    %v3245 = vunpack.c.l.b16 %v2973
    %v3246 = vunpack.c.l.b16 %v2974
    %v3247 = vunpack.c.l.b16 %v2975
    %v3248 = vunpack.c.l.b16 %v2976
    %v3249 = vunpack.c.l.b16 %v2977
    %v3250 = vunpack.c.l.b16 %v2978
    %v3251 = vunpack.c.l.b16 %v2979
    %v3252 = vunpack.c.l.b16 %v2988
    %v3253 = vunpack.c.l.b16 %v2989
    %v3254 = vunpack.c.l.b16 %v2990
    %v3255 = vunpack.c.l.b16 %v2991
    %v3256 = vunpack.c.l.b16 %v2992
    %v3257 = vunpack.c.l.b16 %v2993
    %v3258 = vunpack.c.l.b16 %v2994
    %v3259 = vunpack.c.l.b16 %v2995
    %v3260 = vunpack.c.l.b16 %v2996
    %v3261 = vunpack.c.l.b16 %v2997
    %v3262 = vunpack.c.l.b16 %v2998
    %v3263 = vunpack.c.l.b16 %v2999
    %v3264 = vunpack.c.l.b16 %v3000
    %v3265 = vunpack.c.l.b16 %v3001
    %v3266 = vunpack.c.l.b16 %v3002
    %v3267 = vunpack.c.l.b16 %v3003
    %v3268 = vunpack.c.l.b16 %v3004
    %v3269 = vunpack.c.l.b16 %v3005
    %v3270 = vunpack.c.l.b16 %v3006
    %v3271 = vunpack.c.l.b16 %v3007
    %v3272 = vunpack.c.l.b16 %v3008
    %v3273 = vunpack.c.l.b16 %v3009
    %v3274 = vunpack.c.l.b16 %v3010
    %v3275 = vunpack.c.l.b16 %v3011
    %v3276 = vunpack.c.l.b16 %v3012
    %v3277 = vunpack.c.l.b16 %v3013
    %v3278 = vunpack.c.l.b16 %v3014
    %v3279 = vunpack.c.l.b16 %v3015
    %v3280 = vunpack.c.l.b16 %v3016
    %v3281 = vunpack.c.l.b16 %v3017
    %v3282 = vunpack.c.l.b16 %v3018
    %v3283 = vunpack.c.l.b16 %v3019
    %vm3284 = vcmask 1041409
    %v3285 = vsel %vm3284, %v3224, %v3220
    %vm3286 = vcmask 1042434
    %v3287 = vsel %vm3286, %v3228, %v3285
    %vm3288 = vcmask 1043459
    %v3289 = vsel %vm3288, %v3232, %v3287
    %vm3290 = vcmask 1044484
    %v3291 = vsel %vm3290, %v3236, %v3289
    %vm3292 = vcmask 1045509
    %v3293 = vsel %vm3292, %v3240, %v3291
    %vm3294 = vcmask 1046534
    %v3295 = vsel %vm3294, %v3244, %v3293
    %vm3296 = vcmask 1047559
    %v3297 = vsel %vm3296, %v3248, %v3295
    %v3298 = vsel %vm3284, %v3225, %v3221
    %v3299 = vsel %vm3286, %v3229, %v3298
    %v3300 = vsel %vm3288, %v3233, %v3299
    %v3301 = vsel %vm3290, %v3237, %v3300
    %v3302 = vsel %vm3292, %v3241, %v3301
    %v3303 = vsel %vm3294, %v3245, %v3302
    %v3304 = vsel %vm3296, %v3249, %v3303
    %v3305 = vsel %vm3284, %v3226, %v3222
    %v3306 = vsel %vm3286, %v3230, %v3305
    %v3307 = vsel %vm3288, %v3234, %v3306
    %v3308 = vsel %vm3290, %v3238, %v3307
    %v3309 = vsel %vm3292, %v3242, %v3308
    %v3310 = vsel %vm3294, %v3246, %v3309
    %v3311 = vsel %vm3296, %v3250, %v3310
    %v3312 = vsel %vm3284, %v3227, %v3223
    %v3313 = vsel %vm3286, %v3231, %v3312
    %v3314 = vsel %vm3288, %v3235, %v3313
    %v3315 = vsel %vm3290, %v3239, %v3314
    %v3316 = vsel %vm3292, %v3243, %v3315
    %v3317 = vsel %vm3294, %v3247, %v3316
    %v3318 = vsel %vm3296, %v3251, %v3317
    %v3319 = vsel %vm3284, %v3256, %v3252
    %v3320 = vsel %vm3286, %v3260, %v3319
    %v3321 = vsel %vm3288, %v3264, %v3320
    %v3322 = vsel %vm3290, %v3268, %v3321
    %v3323 = vsel %vm3292, %v3272, %v3322
    %v3324 = vsel %vm3294, %v3276, %v3323
    %v3325 = vsel %vm3296, %v3280, %v3324
    %v3326 = vsel %vm3284, %v3257, %v3253
    %v3327 = vsel %vm3286, %v3261, %v3326
    %v3328 = vsel %vm3288, %v3265, %v3327
    %v3329 = vsel %vm3290, %v3269, %v3328
    %v3330 = vsel %vm3292, %v3273, %v3329
    %v3331 = vsel %vm3294, %v3277, %v3330
    %v3332 = vsel %vm3296, %v3281, %v3331
    %v3333 = vsel %vm3284, %v3258, %v3254
    %v3334 = vsel %vm3286, %v3262, %v3333
    %v3335 = vsel %vm3288, %v3266, %v3334
    %v3336 = vsel %vm3290, %v3270, %v3335
    %v3337 = vsel %vm3292, %v3274, %v3336
    %v3338 = vsel %vm3294, %v3278, %v3337
    %v3339 = vsel %vm3296, %v3282, %v3338
    %v3340 = vsel %vm3284, %v3259, %v3255
    %v3341 = vsel %vm3286, %v3263, %v3340
    %v3342 = vsel %vm3288, %v3267, %v3341
    %v3343 = vsel %vm3290, %v3271, %v3342
    %v3344 = vsel %vm3292, %v3275, %v3343
    %v3345 = vsel %vm3294, %v3279, %v3344
    %v3346 = vsel %vm3296, %v3283, %v3345
    %v3347 = vpack.c.b16 %v3325, %v3297
    %v3348 = vpack.c.b16 %v3332, %v3304
    %v3349 = vpack.c.b16 %v3339, %v3311
    %v3350 = vpack.c.b16 %v3346, %v3318
    %v3419 = vunpack.c.l.b16 %v3092
    %v3420 = vunpack.c.h.b16 %v3092
    %v3421 = vunpack.c.l.b16 %v3093
    %v3422 = vunpack.c.h.b16 %v3093
    %v3423 = vunpack.c.l.b16 %v3094
    %v3424 = vunpack.c.h.b16 %v3094
    %v3425 = vunpack.c.l.b16 %v3095
    %v3426 = vunpack.c.h.b16 %v3095
    %v3427 = vunpack.c.l.b16 %v3096
    %v3428 = vunpack.c.h.b16 %v3096
    %v3429 = vunpack.c.l.b16 %v3097
    %v3430 = vunpack.c.h.b16 %v3097
    %v3431 = vunpack.c.l.b16 %v3098
    %v3432 = vunpack.c.h.b16 %v3098
    %v3433 = vunpack.c.l.b16 %v3099
    %v3434 = vunpack.c.h.b16 %v3099
    %v3435 = vunpack.c.l.b16 %v3100
    %v3436 = vunpack.c.h.b16 %v3100
    %v3437 = vunpack.c.l.b16 %v3101
    %v3438 = vunpack.c.h.b16 %v3101
    %v3439 = vunpack.c.l.b16 %v3102
    %v3440 = vunpack.c.h.b16 %v3102
    %v3441 = vunpack.c.l.b16 %v3103
    %v3442 = vunpack.c.h.b16 %v3103
    %v3443 = vunpack.c.l.b16 %v3104
    %v3444 = vunpack.c.h.b16 %v3104
    %v3445 = vunpack.c.l.b16 %v3105
    %v3446 = vunpack.c.h.b16 %v3105
    %v3447 = vunpack.c.l.b16 %v3106
    %v3448 = vunpack.c.h.b16 %v3106
    %v3449 = vunpack.c.l.b16 %v3107
    %v3450 = vunpack.c.h.b16 %v3107
    %v3451 = vunpack.c.l.b16 %v3108
    %v3452 = vunpack.c.h.b16 %v3108
    %v3453 = vunpack.c.l.b16 %v3109
    %v3454 = vunpack.c.h.b16 %v3109
    %v3455 = vunpack.c.l.b16 %v3110
    %v3456 = vunpack.c.h.b16 %v3110
    %v3457 = vunpack.c.l.b16 %v3111
    %v3458 = vunpack.c.h.b16 %v3111
    %v3459 = vunpack.c.l.b16 %v3112
    %v3460 = vunpack.c.h.b16 %v3112
    %v3461 = vunpack.c.l.b16 %v3113
    %v3462 = vunpack.c.h.b16 %v3113
    %v3463 = vunpack.c.l.b16 %v3114
    %v3464 = vunpack.c.h.b16 %v3114
    %v3465 = vunpack.c.l.b16 %v3115
    %v3466 = vunpack.c.h.b16 %v3115
    %v3467 = vunpack.c.l.b16 %v3116
    %v3468 = vunpack.c.h.b16 %v3116
    %v3469 = vunpack.c.l.b16 %v3117
    %v3470 = vunpack.c.h.b16 %v3117
    %v3471 = vunpack.c.l.b16 %v3118
    %v3472 = vunpack.c.h.b16 %v3118
    %v3473 = vunpack.c.l.b16 %v3119
    %v3474 = vunpack.c.h.b16 %v3119
    %v3475 = vunpack.c.l.b16 %v3120
    %v3476 = vunpack.c.h.b16 %v3120
    %v3477 = vunpack.c.l.b16 %v3121
    %v3478 = vunpack.c.h.b16 %v3121
    %v3479 = vunpack.c.l.b16 %v3122
    %v3480 = vunpack.c.h.b16 %v3122
    %v3481 = vunpack.c.l.b16 %v3123
    %v3482 = vunpack.c.h.b16 %v3123
    %v3483 = vunpack.c.l.b16 %v3124
    %v3484 = vunpack.c.h.b16 %v3124
    %v3485 = vunpack.c.l.b16 %v3125
    %v3486 = vunpack.c.h.b16 %v3125
    %v3487 = vunpack.c.l.b16 %v3126
    %v3488 = vunpack.c.h.b16 %v3126
    %v3489 = vunpack.c.l.b16 %v3127
    %v3490 = vunpack.c.h.b16 %v3127
    %v3491 = vunpack.c.l.b16 %v3128
    %v3492 = vunpack.c.h.b16 %v3128
    %v3493 = vunpack.c.l.b16 %v3129
    %v3494 = vunpack.c.h.b16 %v3129
    %v3495 = vunpack.c.l.b16 %v3130
    %v3496 = vunpack.c.h.b16 %v3130
    %v3497 = vunpack.c.l.b16 %v3131
    %v3498 = vunpack.c.h.b16 %v3131
    %v3499 = vunpack.c.l.b16 %v3132
    %v3500 = vunpack.c.h.b16 %v3132
    %v3501 = vunpack.c.l.b16 %v3133
    %v3502 = vunpack.c.h.b16 %v3133
    %v3503 = vunpack.c.l.b16 %v3134
    %v3504 = vunpack.c.h.b16 %v3134
    %v3505 = vunpack.c.l.b16 %v3135
    %v3506 = vunpack.c.h.b16 %v3135
    %v3507 = vunpack.c.l.b16 %v3136
    %v3508 = vunpack.c.h.b16 %v3136
    %v3509 = vunpack.c.l.b16 %v3137
    %v3510 = vunpack.c.h.b16 %v3137
    %v3511 = vunpack.c.l.b16 %v3138
    %v3512 = vunpack.c.h.b16 %v3138
    %v3513 = vunpack.c.l.b16 %v3139
    %v3514 = vunpack.c.h.b16 %v3139
    %v3515 = vunpack.c.l.b16 %v3140
    %v3516 = vunpack.c.h.b16 %v3140
    %v3517 = vunpack.c.l.b16 %v3141
    %v3518 = vunpack.c.h.b16 %v3141
    %v3519 = vunpack.c.l.b16 %v3142
    %v3520 = vunpack.c.h.b16 %v3142
    %v3521 = vunpack.c.l.b16 %v3143
    %v3522 = vunpack.c.h.b16 %v3143
    %v3523 = vunpack.c.l.b16 %v3144
    %v3524 = vunpack.c.h.b16 %v3144
    %v3525 = vunpack.c.l.b16 %v3145
    %v3526 = vunpack.c.h.b16 %v3145
    %v3527 = vunpack.c.l.b16 %v3146
    %v3528 = vunpack.c.h.b16 %v3146
    %v3529 = vunpack.c.l.b16 %v3147
    %v3530 = vunpack.c.h.b16 %v3147
    %v3531 = vunpack.c.l.b16 %v3148
    %v3532 = vunpack.c.h.b16 %v3148
    %v3533 = vunpack.c.l.b16 %v3149
    %v3534 = vunpack.c.h.b16 %v3149
    %v3535 = vunpack.c.l.b16 %v3150
    %v3536 = vunpack.c.h.b16 %v3150
    %v3537 = vunpack.c.l.b16 %v3151
    %v3538 = vunpack.c.h.b16 %v3151
    %v3539 = vunpack.c.l.b16 %v3152
    %v3540 = vunpack.c.h.b16 %v3152
    %v3541 = vunpack.c.l.b16 %v3153
    %v3542 = vunpack.c.h.b16 %v3153
    %v3543 = vunpack.c.l.b16 %v3154
    %v3544 = vunpack.c.h.b16 %v3154
    %v3545 = vunpack.c.l.b16 %v3155
    %v3546 = vunpack.c.h.b16 %v3155
    %v3547 = vpack.c.b16 %v3421, %v3419
    %v3548 = vpack.c.b16 %v3422, %v3420
    %v3549 = vpack.c.b16 %v3425, %v3423
    %v3550 = vpack.c.b16 %v3426, %v3424
    %v3551 = vpack.c.b16 %v3429, %v3427
    %v3552 = vpack.c.b16 %v3430, %v3428
    %v3553 = vpack.c.b16 %v3433, %v3431
    %v3554 = vpack.c.b16 %v3434, %v3432
    %v3555 = vpack.c.b16 %v3437, %v3435
    %v3556 = vpack.c.b16 %v3438, %v3436
    %v3557 = vpack.c.b16 %v3441, %v3439
    %v3558 = vpack.c.b16 %v3442, %v3440
    %v3559 = vpack.c.b16 %v3445, %v3443
    %v3560 = vpack.c.b16 %v3446, %v3444
    %v3561 = vpack.c.b16 %v3449, %v3447
    %v3562 = vpack.c.b16 %v3450, %v3448
    %v3563 = vpack.c.b16 %v3453, %v3451
    %v3564 = vpack.c.b16 %v3454, %v3452
    %v3565 = vpack.c.b16 %v3457, %v3455
    %v3566 = vpack.c.b16 %v3458, %v3456
    %v3567 = vpack.c.b16 %v3461, %v3459
    %v3568 = vpack.c.b16 %v3462, %v3460
    %v3569 = vpack.c.b16 %v3465, %v3463
    %v3570 = vpack.c.b16 %v3466, %v3464
    %v3571 = vpack.c.b16 %v3469, %v3467
    %v3572 = vpack.c.b16 %v3470, %v3468
    %v3573 = vpack.c.b16 %v3473, %v3471
    %v3574 = vpack.c.b16 %v3474, %v3472
    %v3575 = vpack.c.b16 %v3477, %v3475
    %v3576 = vpack.c.b16 %v3478, %v3476
    %v3577 = vpack.c.b16 %v3481, %v3479
    %v3578 = vpack.c.b16 %v3482, %v3480
    %v3579 = vpack.c.b16 %v3485, %v3483
    %v3580 = vpack.c.b16 %v3486, %v3484
    %v3581 = vpack.c.b16 %v3489, %v3487
    %v3582 = vpack.c.b16 %v3490, %v3488
    %v3583 = vpack.c.b16 %v3493, %v3491
    %v3584 = vpack.c.b16 %v3494, %v3492
    %v3585 = vpack.c.b16 %v3497, %v3495
    %v3586 = vpack.c.b16 %v3498, %v3496
    %v3587 = vpack.c.b16 %v3501, %v3499
    %v3588 = vpack.c.b16 %v3502, %v3500
    %v3589 = vpack.c.b16 %v3505, %v3503
    %v3590 = vpack.c.b16 %v3506, %v3504
    %v3591 = vpack.c.b16 %v3509, %v3507
    %v3592 = vpack.c.b16 %v3510, %v3508
    %v3593 = vpack.c.b16 %v3513, %v3511
    %v3594 = vpack.c.b16 %v3514, %v3512
    %v3595 = vpack.c.b16 %v3517, %v3515
    %v3596 = vpack.c.b16 %v3518, %v3516
    %v3597 = vpack.c.b16 %v3521, %v3519
    %v3598 = vpack.c.b16 %v3522, %v3520
    %v3599 = vpack.c.b16 %v3525, %v3523
    %v3600 = vpack.c.b16 %v3526, %v3524
    %v3601 = vpack.c.b16 %v3529, %v3527
    %v3602 = vpack.c.b16 %v3530, %v3528
    %v3603 = vpack.c.b16 %v3533, %v3531
    %v3604 = vpack.c.b16 %v3534, %v3532
    %v3605 = vpack.c.b16 %v3537, %v3535
    %v3606 = vpack.c.b16 %v3538, %v3536
    %v3607 = vpack.c.b16 %v3541, %v3539
    %v3608 = vpack.c.b16 %v3542, %v3540
    %v3609 = vpack.c.b16 %v3545, %v3543
    %v3610 = vpack.c.b16 %v3546, %v3544
    %3675 = vmatprep.subr.bf16.mxu0 %v3562
    %3676 = vmatpush1.bf16.msra.mxu0 %v3561
    %3677 = vmatprep.subr.bf16.mxu0 %v3560
    %3678 = vmatpush1.bf16.msra.mxu0 %v3559
    %3679 = vmatprep.subr.bf16.mxu0 %v3558
    %3680 = vmatpush1.bf16.msra.mxu0 %v3557
    %3681 = vmatprep.subr.bf16.mxu0 %v3556
    %3682 = vmatpush1.bf16.msra.mxu0 %v3555
    %3683 = vmatprep.subr.bf16.mxu0 %v3554
    %3684 = vmatpush1.bf16.msra.mxu0 %v3553
    %3685 = vmatprep.subr.bf16.mxu0 %v3552
    %3686 = vmatpush1.bf16.msra.mxu0 %v3551
    %3687 = vmatprep.subr.bf16.mxu0 %v3550
    %3688 = vmatpush1.bf16.msra.mxu0 %v3549
    %3689 = vmatprep.subr.bf16.mxu0 %v3548
    %3690 = vmatpush1.bf16.msra.mxu0 %v3547
    %3691 = vmatprep.subr.bf16.mxu0 %v3578
    %3692 = vmatpush2.bf16.msra.mxu0 %v3577
    %3693 = vmatprep.subr.bf16.mxu0 %v3576
    %3694 = vmatpush2.bf16.msra.mxu0 %v3575
    %3695 = vmatprep.subr.bf16.mxu0 %v3574
    %3696 = vmatpush2.bf16.msra.mxu0 %v3573
    %3697 = vmatprep.subr.bf16.mxu0 %v3572
    %3698 = vmatpush2.bf16.msra.mxu0 %v3571
    %3699 = vmatprep.subr.bf16.mxu0 %v3570
    %3700 = vmatpush2.bf16.msra.mxu0 %v3569
    %3701 = vmatprep.subr.bf16.mxu0 %v3568
    %3702 = vmatpush2.bf16.msra.mxu0 %v3567
    %3703 = vmatprep.subr.bf16.mxu0 %v3566
    %3704 = vmatpush2.bf16.msra.mxu0 %v3565
    %3705 = vmatprep.subr.bf16.mxu0 %v3564
    %3706 = vmatpush2.bf16.msra.mxu0 %v3563
    %3707 = vmatprep.mubr.bf16.mxu0 %v3348
    %3708 = vmatmul.mubr.bf16.gmra.mxu0 %v3347
    %v3709 = vpop.f32.mrf.mxu0
    %v3710 = vadd.f32 0.0, %v3709
    %v3711 = vpop.f32.mrf.mxu0
    %v3712 = vadd.f32 0.0, %v3711
    %v3713 = vpop.f32.mrf.mxu0
    %v3714 = vadd.f32 0.0, %v3713
    %v3715 = vpop.f32.mrf.mxu0
    %v3716 = vadd.f32 0.0, %v3715
    %3717 = vdwg.mxu0
    %3718 = vmatprep.subr.bf16.mxu0 %v3594
    %3719 = vmatpush1.bf16.msra.mxu0 %v3593
    %3720 = vmatprep.subr.bf16.mxu0 %v3592
    %3721 = vmatpush1.bf16.msra.mxu0 %v3591
    %3722 = vmatprep.subr.bf16.mxu0 %v3590
    %3723 = vmatpush1.bf16.msra.mxu0 %v3589
    %3724 = vmatprep.subr.bf16.mxu0 %v3588
    %3725 = vmatpush1.bf16.msra.mxu0 %v3587
    %3726 = vmatprep.subr.bf16.mxu0 %v3586
    %3727 = vmatpush1.bf16.msra.mxu0 %v3585
    %3728 = vmatprep.subr.bf16.mxu0 %v3584
    %3729 = vmatpush1.bf16.msra.mxu0 %v3583
    %3730 = vmatprep.subr.bf16.mxu0 %v3582
    %3731 = vmatpush1.bf16.msra.mxu0 %v3581
    %3732 = vmatprep.subr.bf16.mxu0 %v3580
    %3733 = vmatpush1.bf16.msra.mxu0 %v3579
    %3734 = vmatprep.subr.bf16.mxu0 %v3610
    %3735 = vmatpush2.bf16.msra.mxu0 %v3609
    %3736 = vmatprep.subr.bf16.mxu0 %v3608
    %3737 = vmatpush2.bf16.msra.mxu0 %v3607
    %3738 = vmatprep.subr.bf16.mxu0 %v3606
    %3739 = vmatpush2.bf16.msra.mxu0 %v3605
    %3740 = vmatprep.subr.bf16.mxu0 %v3604
    %3741 = vmatpush2.bf16.msra.mxu0 %v3603
    %3742 = vmatprep.subr.bf16.mxu0 %v3602
    %3743 = vmatpush2.bf16.msra.mxu0 %v3601
    %3744 = vmatprep.subr.bf16.mxu0 %v3600
    %3745 = vmatpush2.bf16.msra.mxu0 %v3599
    %3746 = vmatprep.subr.bf16.mxu0 %v3598
    %3747 = vmatpush2.bf16.msra.mxu0 %v3597
    %3748 = vmatprep.subr.bf16.mxu0 %v3596
    %3749 = vmatpush2.bf16.msra.mxu0 %v3595
    %3750 = vmatprep.mubr.bf16.mxu0 %v3350
    %3751 = vmatmul.mubr.bf16.gmra.mxu0 %v3349
    %v3752 = vpop.f32.mrf.mxu0
    %v3753 = vadd.f32 %v3710, %v3752
    %v3754 = vpop.f32.mrf.mxu0
    %v3755 = vadd.f32 %v3712, %v3754
    %v3756 = vpop.f32.mrf.mxu0
    %v3757 = vadd.f32 %v3714, %v3756
    %v3758 = vpop.f32.mrf.mxu0
    %v3759 = vadd.f32 %v3716, %v3758
    %3760 = vdwg.mxu0
    %v3769 = vunpack.c.l.b16 %v2944
    %v3770 = vunpack.c.l.b16 %v2945
    %v3771 = vunpack.c.l.b16 %v2946
    %v3772 = vunpack.c.l.b16 %v2947
    %v3773 = vunpack.c.l.b16 %v2984
    %v3774 = vunpack.c.l.b16 %v2985
    %v3775 = vunpack.c.l.b16 %v2986
    %v3776 = vunpack.c.l.b16 %v2987
    %v3777 = vsel %vm3284, %v3220, %v3769
    %v3778 = vsel %vm3286, %v3224, %v3777
    %v3779 = vsel %vm3288, %v3228, %v3778
    %v3780 = vsel %vm3290, %v3232, %v3779
    %v3781 = vsel %vm3292, %v3236, %v3780
    %v3782 = vsel %vm3294, %v3240, %v3781
    %v3783 = vsel %vm3296, %v3244, %v3782
    %v3784 = vsel %vm3284, %v3221, %v3770
    %v3785 = vsel %vm3286, %v3225, %v3784
    %v3786 = vsel %vm3288, %v3229, %v3785
    %v3787 = vsel %vm3290, %v3233, %v3786
    %v3788 = vsel %vm3292, %v3237, %v3787
    %v3789 = vsel %vm3294, %v3241, %v3788
    %v3790 = vsel %vm3296, %v3245, %v3789
    %v3791 = vsel %vm3284, %v3222, %v3771
    %v3792 = vsel %vm3286, %v3226, %v3791
    %v3793 = vsel %vm3288, %v3230, %v3792
    %v3794 = vsel %vm3290, %v3234, %v3793
    %v3795 = vsel %vm3292, %v3238, %v3794
    %v3796 = vsel %vm3294, %v3242, %v3795
    %v3797 = vsel %vm3296, %v3246, %v3796
    %v3798 = vsel %vm3284, %v3223, %v3772
    %v3799 = vsel %vm3286, %v3227, %v3798
    %v3800 = vsel %vm3288, %v3231, %v3799
    %v3801 = vsel %vm3290, %v3235, %v3800
    %v3802 = vsel %vm3292, %v3239, %v3801
    %v3803 = vsel %vm3294, %v3243, %v3802
    %v3804 = vsel %vm3296, %v3247, %v3803
    %v3805 = vsel %vm3284, %v3252, %v3773
    %v3806 = vsel %vm3286, %v3256, %v3805
    %v3807 = vsel %vm3288, %v3260, %v3806
    %v3808 = vsel %vm3290, %v3264, %v3807
    %v3809 = vsel %vm3292, %v3268, %v3808
    %v3810 = vsel %vm3294, %v3272, %v3809
    %v3811 = vsel %vm3296, %v3276, %v3810
    %v3812 = vsel %vm3284, %v3253, %v3774
    %v3813 = vsel %vm3286, %v3257, %v3812
    %v3814 = vsel %vm3288, %v3261, %v3813
    %v3815 = vsel %vm3290, %v3265, %v3814
    %v3816 = vsel %vm3292, %v3269, %v3815
    %v3817 = vsel %vm3294, %v3273, %v3816
    %v3818 = vsel %vm3296, %v3277, %v3817
    %v3819 = vsel %vm3284, %v3254, %v3775
    %v3820 = vsel %vm3286, %v3258, %v3819
    %v3821 = vsel %vm3288, %v3262, %v3820
    %v3822 = vsel %vm3290, %v3266, %v3821
    %v3823 = vsel %vm3292, %v3270, %v3822
    %v3824 = vsel %vm3294, %v3274, %v3823
    %v3825 = vsel %vm3296, %v3278, %v3824
    %v3826 = vsel %vm3284, %v3255, %v3776
    %v3827 = vsel %vm3286, %v3259, %v3826
    %v3828 = vsel %vm3288, %v3263, %v3827
    %v3829 = vsel %vm3290, %v3267, %v3828
    %v3830 = vsel %vm3292, %v3271, %v3829
    %v3831 = vsel %vm3294, %v3275, %v3830
    %v3832 = vsel %vm3296, %v3279, %v3831
    %v3833 = vpack.c.b16 %v3811, %v3783
    %v3834 = vpack.c.b16 %v3818, %v3790
    %v3835 = vpack.c.b16 %v3825, %v3797
    %v3836 = vpack.c.b16 %v3832, %v3804
    %v3905 = vunpack.c.l.b16 %v3028
    %v3906 = vunpack.c.h.b16 %v3028
    %v3907 = vunpack.c.l.b16 %v3029
    %v3908 = vunpack.c.h.b16 %v3029
    %v3909 = vunpack.c.l.b16 %v3030
    %v3910 = vunpack.c.h.b16 %v3030
    %v3911 = vunpack.c.l.b16 %v3031
    %v3912 = vunpack.c.h.b16 %v3031
    %v3913 = vunpack.c.l.b16 %v3032
    %v3914 = vunpack.c.h.b16 %v3032
    %v3915 = vunpack.c.l.b16 %v3033
    %v3916 = vunpack.c.h.b16 %v3033
    %v3917 = vunpack.c.l.b16 %v3034
    %v3918 = vunpack.c.h.b16 %v3034
    %v3919 = vunpack.c.l.b16 %v3035
    %v3920 = vunpack.c.h.b16 %v3035
    %v3921 = vunpack.c.l.b16 %v3036
    %v3922 = vunpack.c.h.b16 %v3036
    %v3923 = vunpack.c.l.b16 %v3037
    %v3924 = vunpack.c.h.b16 %v3037
    %v3925 = vunpack.c.l.b16 %v3038
    %v3926 = vunpack.c.h.b16 %v3038
    %v3927 = vunpack.c.l.b16 %v3039
    %v3928 = vunpack.c.h.b16 %v3039
    %v3929 = vunpack.c.l.b16 %v3040
    %v3930 = vunpack.c.h.b16 %v3040
    %v3931 = vunpack.c.l.b16 %v3041
    %v3932 = vunpack.c.h.b16 %v3041
    %v3933 = vunpack.c.l.b16 %v3042
    %v3934 = vunpack.c.h.b16 %v3042
    %v3935 = vunpack.c.l.b16 %v3043
    %v3936 = vunpack.c.h.b16 %v3043
    %v3937 = vunpack.c.l.b16 %v3044
    %v3938 = vunpack.c.h.b16 %v3044
    %v3939 = vunpack.c.l.b16 %v3045
    %v3940 = vunpack.c.h.b16 %v3045
    %v3941 = vunpack.c.l.b16 %v3046
    %v3942 = vunpack.c.h.b16 %v3046
    %v3943 = vunpack.c.l.b16 %v3047
    %v3944 = vunpack.c.h.b16 %v3047
    %v3945 = vunpack.c.l.b16 %v3048
    %v3946 = vunpack.c.h.b16 %v3048
    %v3947 = vunpack.c.l.b16 %v3049
    %v3948 = vunpack.c.h.b16 %v3049
    %v3949 = vunpack.c.l.b16 %v3050
    %v3950 = vunpack.c.h.b16 %v3050
    %v3951 = vunpack.c.l.b16 %v3051
    %v3952 = vunpack.c.h.b16 %v3051
    %v3953 = vunpack.c.l.b16 %v3052
    %v3954 = vunpack.c.h.b16 %v3052
    %v3955 = vunpack.c.l.b16 %v3053
    %v3956 = vunpack.c.h.b16 %v3053
    %v3957 = vunpack.c.l.b16 %v3054
    %v3958 = vunpack.c.h.b16 %v3054
    %v3959 = vunpack.c.l.b16 %v3055
    %v3960 = vunpack.c.h.b16 %v3055
    %v3961 = vunpack.c.l.b16 %v3056
    %v3962 = vunpack.c.h.b16 %v3056
    %v3963 = vunpack.c.l.b16 %v3057
    %v3964 = vunpack.c.h.b16 %v3057
    %v3965 = vunpack.c.l.b16 %v3058
    %v3966 = vunpack.c.h.b16 %v3058
    %v3967 = vunpack.c.l.b16 %v3059
    %v3968 = vunpack.c.h.b16 %v3059
    %v3969 = vunpack.c.l.b16 %v3060
    %v3970 = vunpack.c.h.b16 %v3060
    %v3971 = vunpack.c.l.b16 %v3061
    %v3972 = vunpack.c.h.b16 %v3061
    %v3973 = vunpack.c.l.b16 %v3062
    %v3974 = vunpack.c.h.b16 %v3062
    %v3975 = vunpack.c.l.b16 %v3063
    %v3976 = vunpack.c.h.b16 %v3063
    %v3977 = vunpack.c.l.b16 %v3064
    %v3978 = vunpack.c.h.b16 %v3064
    %v3979 = vunpack.c.l.b16 %v3065
    %v3980 = vunpack.c.h.b16 %v3065
    %v3981 = vunpack.c.l.b16 %v3066
    %v3982 = vunpack.c.h.b16 %v3066
    %v3983 = vunpack.c.l.b16 %v3067
    %v3984 = vunpack.c.h.b16 %v3067
    %v3985 = vunpack.c.l.b16 %v3068
    %v3986 = vunpack.c.h.b16 %v3068
    %v3987 = vunpack.c.l.b16 %v3069
    %v3988 = vunpack.c.h.b16 %v3069
    %v3989 = vunpack.c.l.b16 %v3070
    %v3990 = vunpack.c.h.b16 %v3070
    %v3991 = vunpack.c.l.b16 %v3071
    %v3992 = vunpack.c.h.b16 %v3071
    %v3993 = vunpack.c.l.b16 %v3072
    %v3994 = vunpack.c.h.b16 %v3072
    %v3995 = vunpack.c.l.b16 %v3073
    %v3996 = vunpack.c.h.b16 %v3073
    %v3997 = vunpack.c.l.b16 %v3074
    %v3998 = vunpack.c.h.b16 %v3074
    %v3999 = vunpack.c.l.b16 %v3075
    %v4000 = vunpack.c.h.b16 %v3075
    %v4001 = vunpack.c.l.b16 %v3076
    %v4002 = vunpack.c.h.b16 %v3076
    %v4003 = vunpack.c.l.b16 %v3077
    %v4004 = vunpack.c.h.b16 %v3077
    %v4005 = vunpack.c.l.b16 %v3078
    %v4006 = vunpack.c.h.b16 %v3078
    %v4007 = vunpack.c.l.b16 %v3079
    %v4008 = vunpack.c.h.b16 %v3079
    %v4009 = vunpack.c.l.b16 %v3080
    %v4010 = vunpack.c.h.b16 %v3080
    %v4011 = vunpack.c.l.b16 %v3081
    %v4012 = vunpack.c.h.b16 %v3081
    %v4013 = vunpack.c.l.b16 %v3082
    %v4014 = vunpack.c.h.b16 %v3082
    %v4015 = vunpack.c.l.b16 %v3083
    %v4016 = vunpack.c.h.b16 %v3083
    %v4017 = vunpack.c.l.b16 %v3084
    %v4018 = vunpack.c.h.b16 %v3084
    %v4019 = vunpack.c.l.b16 %v3085
    %v4020 = vunpack.c.h.b16 %v3085
    %v4021 = vunpack.c.l.b16 %v3086
    %v4022 = vunpack.c.h.b16 %v3086
    %v4023 = vunpack.c.l.b16 %v3087
    %v4024 = vunpack.c.h.b16 %v3087
    %v4025 = vunpack.c.l.b16 %v3088
    %v4026 = vunpack.c.h.b16 %v3088
    %v4027 = vunpack.c.l.b16 %v3089
    %v4028 = vunpack.c.h.b16 %v3089
    %v4029 = vunpack.c.l.b16 %v3090
    %v4030 = vunpack.c.h.b16 %v3090
    %v4031 = vunpack.c.l.b16 %v3091
    %v4032 = vunpack.c.h.b16 %v3091
    %v4033 = vpack.c.b16 %v3907, %v3905
    %v4034 = vpack.c.b16 %v3908, %v3906
    %v4035 = vpack.c.b16 %v3911, %v3909
    %v4036 = vpack.c.b16 %v3912, %v3910
    %v4037 = vpack.c.b16 %v3915, %v3913
    %v4038 = vpack.c.b16 %v3916, %v3914
    %v4039 = vpack.c.b16 %v3919, %v3917
    %v4040 = vpack.c.b16 %v3920, %v3918
    %v4041 = vpack.c.b16 %v3923, %v3921
    %v4042 = vpack.c.b16 %v3924, %v3922
    %v4043 = vpack.c.b16 %v3927, %v3925
    %v4044 = vpack.c.b16 %v3928, %v3926
    %v4045 = vpack.c.b16 %v3931, %v3929
    %v4046 = vpack.c.b16 %v3932, %v3930
    %v4047 = vpack.c.b16 %v3935, %v3933
    %v4048 = vpack.c.b16 %v3936, %v3934
    %v4049 = vpack.c.b16 %v3939, %v3937
    %v4050 = vpack.c.b16 %v3940, %v3938
    %v4051 = vpack.c.b16 %v3943, %v3941
    %v4052 = vpack.c.b16 %v3944, %v3942
    %v4053 = vpack.c.b16 %v3947, %v3945
    %v4054 = vpack.c.b16 %v3948, %v3946
    %v4055 = vpack.c.b16 %v3951, %v3949
    %v4056 = vpack.c.b16 %v3952, %v3950
    %v4057 = vpack.c.b16 %v3955, %v3953
    %v4058 = vpack.c.b16 %v3956, %v3954
    %v4059 = vpack.c.b16 %v3959, %v3957
    %v4060 = vpack.c.b16 %v3960, %v3958
    %v4061 = vpack.c.b16 %v3963, %v3961
    %v4062 = vpack.c.b16 %v3964, %v3962
    %v4063 = vpack.c.b16 %v3967, %v3965
    %v4064 = vpack.c.b16 %v3968, %v3966
    %v4065 = vpack.c.b16 %v3971, %v3969
    %v4066 = vpack.c.b16 %v3972, %v3970
    %v4067 = vpack.c.b16 %v3975, %v3973
    %v4068 = vpack.c.b16 %v3976, %v3974
    %v4069 = vpack.c.b16 %v3979, %v3977
    %v4070 = vpack.c.b16 %v3980, %v3978
    %v4071 = vpack.c.b16 %v3983, %v3981
    %v4072 = vpack.c.b16 %v3984, %v3982
    %v4073 = vpack.c.b16 %v3987, %v3985
    %v4074 = vpack.c.b16 %v3988, %v3986
    %v4075 = vpack.c.b16 %v3991, %v3989
    %v4076 = vpack.c.b16 %v3992, %v3990
    %v4077 = vpack.c.b16 %v3995, %v3993
    %v4078 = vpack.c.b16 %v3996, %v3994
    %v4079 = vpack.c.b16 %v3999, %v3997
    %v4080 = vpack.c.b16 %v4000, %v3998
    %v4081 = vpack.c.b16 %v4003, %v4001
    %v4082 = vpack.c.b16 %v4004, %v4002
    %v4083 = vpack.c.b16 %v4007, %v4005
    %v4084 = vpack.c.b16 %v4008, %v4006
    %v4085 = vpack.c.b16 %v4011, %v4009
    %v4086 = vpack.c.b16 %v4012, %v4010
    %v4087 = vpack.c.b16 %v4015, %v4013
    %v4088 = vpack.c.b16 %v4016, %v4014
    %v4089 = vpack.c.b16 %v4019, %v4017
    %v4090 = vpack.c.b16 %v4020, %v4018
    %v4091 = vpack.c.b16 %v4023, %v4021
    %v4092 = vpack.c.b16 %v4024, %v4022
    %v4093 = vpack.c.b16 %v4027, %v4025
    %v4094 = vpack.c.b16 %v4028, %v4026
    %v4095 = vpack.c.b16 %v4031, %v4029
    %v4096 = vpack.c.b16 %v4032, %v4030
    %4161 = vmatprep.subr.bf16.mxu0 %v4048
    %4162 = vmatpush1.bf16.msra.mxu0 %v4047
    %4163 = vmatprep.subr.bf16.mxu0 %v4046
    %4164 = vmatpush1.bf16.msra.mxu0 %v4045
    %4165 = vmatprep.subr.bf16.mxu0 %v4044
    %4166 = vmatpush1.bf16.msra.mxu0 %v4043
    %4167 = vmatprep.subr.bf16.mxu0 %v4042
    %4168 = vmatpush1.bf16.msra.mxu0 %v4041
    %4169 = vmatprep.subr.bf16.mxu0 %v4040
    %4170 = vmatpush1.bf16.msra.mxu0 %v4039
    %4171 = vmatprep.subr.bf16.mxu0 %v4038
    %4172 = vmatpush1.bf16.msra.mxu0 %v4037
    %4173 = vmatprep.subr.bf16.mxu0 %v4036
    %4174 = vmatpush1.bf16.msra.mxu0 %v4035
    %4175 = vmatprep.subr.bf16.mxu0 %v4034
    %4176 = vmatpush1.bf16.msra.mxu0 %v4033
    %4177 = vmatprep.subr.bf16.mxu0 %v4064
    %4178 = vmatpush2.bf16.msra.mxu0 %v4063
    %4179 = vmatprep.subr.bf16.mxu0 %v4062
    %4180 = vmatpush2.bf16.msra.mxu0 %v4061
    %4181 = vmatprep.subr.bf16.mxu0 %v4060
    %4182 = vmatpush2.bf16.msra.mxu0 %v4059
    %4183 = vmatprep.subr.bf16.mxu0 %v4058
    %4184 = vmatpush2.bf16.msra.mxu0 %v4057
    %4185 = vmatprep.subr.bf16.mxu0 %v4056
    %4186 = vmatpush2.bf16.msra.mxu0 %v4055
    %4187 = vmatprep.subr.bf16.mxu0 %v4054
    %4188 = vmatpush2.bf16.msra.mxu0 %v4053
    %4189 = vmatprep.subr.bf16.mxu0 %v4052
    %4190 = vmatpush2.bf16.msra.mxu0 %v4051
    %4191 = vmatprep.subr.bf16.mxu0 %v4050
    %4192 = vmatpush2.bf16.msra.mxu0 %v4049
    %4193 = vmatprep.mubr.bf16.mxu0 %v3834
    %4194 = vmatmul.mubr.bf16.gmra.mxu0 %v3833
    %v4195 = vpop.f32.mrf.mxu0
    %v4196 = vadd.f32 %v3753, %v4195
    %v4197 = vpop.f32.mrf.mxu0
    %v4198 = vadd.f32 %v3755, %v4197
    %v4199 = vpop.f32.mrf.mxu0
    %v4200 = vadd.f32 %v3757, %v4199
    %v4201 = vpop.f32.mrf.mxu0
    %v4202 = vadd.f32 %v3759, %v4201
    %4203 = vdwg.mxu0
    %4204 = vmatprep.subr.bf16.mxu0 %v4080
    %4205 = vmatpush1.bf16.msra.mxu0 %v4079
    %4206 = vmatprep.subr.bf16.mxu0 %v4078
    %4207 = vmatpush1.bf16.msra.mxu0 %v4077
    %4208 = vmatprep.subr.bf16.mxu0 %v4076
    %4209 = vmatpush1.bf16.msra.mxu0 %v4075
    %4210 = vmatprep.subr.bf16.mxu0 %v4074
    %4211 = vmatpush1.bf16.msra.mxu0 %v4073
    %4212 = vmatprep.subr.bf16.mxu0 %v4072
    %4213 = vmatpush1.bf16.msra.mxu0 %v4071
    %4214 = vmatprep.subr.bf16.mxu0 %v4070
    %4215 = vmatpush1.bf16.msra.mxu0 %v4069
    %4216 = vmatprep.subr.bf16.mxu0 %v4068
    %4217 = vmatpush1.bf16.msra.mxu0 %v4067
    %4218 = vmatprep.subr.bf16.mxu0 %v4066
    %4219 = vmatpush1.bf16.msra.mxu0 %v4065
    %4220 = vmatprep.subr.bf16.mxu0 %v4096
    %4221 = vmatpush2.bf16.msra.mxu0 %v4095
    %4222 = vmatprep.subr.bf16.mxu0 %v4094
    %4223 = vmatpush2.bf16.msra.mxu0 %v4093
    %4224 = vmatprep.subr.bf16.mxu0 %v4092
    %4225 = vmatpush2.bf16.msra.mxu0 %v4091
    %4226 = vmatprep.subr.bf16.mxu0 %v4090
    %4227 = vmatpush2.bf16.msra.mxu0 %v4089
    %4228 = vmatprep.subr.bf16.mxu0 %v4088
    %4229 = vmatpush2.bf16.msra.mxu0 %v4087
    %4230 = vmatprep.subr.bf16.mxu0 %v4086
    %4231 = vmatpush2.bf16.msra.mxu0 %v4085
    %4232 = vmatprep.subr.bf16.mxu0 %v4084
    %4233 = vmatpush2.bf16.msra.mxu0 %v4083
    %4234 = vmatprep.subr.bf16.mxu0 %v4082
    %4235 = vmatpush2.bf16.msra.mxu0 %v4081
    %4236 = vmatprep.mubr.bf16.mxu0 %v3836
    %4237 = vmatmul.mubr.bf16.gmra.mxu0 %v3835
    %v4238 = vpop.f32.mrf.mxu0
    %v4239 = vadd.f32 %v4196, %v4238
    %v4240 = vpop.f32.mrf.mxu0
    %v4241 = vadd.f32 %v4198, %v4240
    %v4242 = vpop.f32.mrf.mxu0
    %v4243 = vadd.f32 %v4200, %v4242
    %v4244 = vpop.f32.mrf.mxu0
    %v4245 = vadd.f32 %v4202, %v4244
    %4246 = vdwg.mxu0
    %v4247 = vld [vmem:[#allocation2 + $0x400] sm:$0xff]
    %v4248 = vld [vmem:[#allocation2 + $0x408] sm:$0xff]
    %v4249 = vld [vmem:[#allocation2 + $0x410] sm:$0xff]
    %v4250 = vld [vmem:[#allocation2 + $0x418] sm:$0xff]
    %v4251 = vld [vmem:[#allocation2 + $0x420] sm:$0xff]
    %v4252 = vld [vmem:[#allocation2 + $0x428] sm:$0xff]
    %v4253 = vld [vmem:[#allocation2 + $0x430] sm:$0xff]
    %v4254 = vld [vmem:[#allocation2 + $0x438] sm:$0xff]
    %v4255 = vld [vmem:[#allocation2 + $0x440] sm:$0xff]
    %v4256 = vld [vmem:[#allocation2 + $0x448] sm:$0xff]
    %v4257 = vld [vmem:[#allocation2 + $0x450] sm:$0xff]
    %v4258 = vld [vmem:[#allocation2 + $0x458] sm:$0xff]
    %v4259 = vld [vmem:[#allocation2 + $0x460] sm:$0xff]
    %v4260 = vld [vmem:[#allocation2 + $0x468] sm:$0xff]
    %v4261 = vld [vmem:[#allocation2 + $0x470] sm:$0xff]
    %v4262 = vld [vmem:[#allocation2 + $0x478] sm:$0xff]
    %v4263 = vld [vmem:[#allocation2 + $0x480] sm:$0xff]
    %v4264 = vld [vmem:[#allocation2 + $0x488] sm:$0xff]
    %v4265 = vld [vmem:[#allocation2 + $0x490] sm:$0xff]
    %v4266 = vld [vmem:[#allocation2 + $0x498] sm:$0xff]
    %v4267 = vld [vmem:[#allocation2 + $0x4a0] sm:$0xff]
    %v4268 = vld [vmem:[#allocation2 + $0x4a8] sm:$0xff]
    %v4269 = vld [vmem:[#allocation2 + $0x4b0] sm:$0xff]
    %v4270 = vld [vmem:[#allocation2 + $0x4b8] sm:$0xff]
    %v4271 = vld [vmem:[#allocation2 + $0x4c0] sm:$0xff]
    %v4272 = vld [vmem:[#allocation2 + $0x4c8] sm:$0xff]
    %v4273 = vld [vmem:[#allocation2 + $0x4d0] sm:$0xff]
    %v4274 = vld [vmem:[#allocation2 + $0x4d8] sm:$0xff]
    %v4275 = vld [vmem:[#allocation2 + $0x4e0] sm:$0xff]
    %v4276 = vld [vmem:[#allocation2 + $0x4e8] sm:$0xff]
    %v4277 = vld [vmem:[#allocation2 + $0x4f0] sm:$0xff]
    %v4278 = vld [vmem:[#allocation2 + $0x4f8] sm:$0xff]
    %v4279 = vld [vmem:[#allocation2 + $0x500] sm:$0xff]
    %v4280 = vld [vmem:[#allocation2 + $0x508] sm:$0xff]
    %v4281 = vld [vmem:[#allocation2 + $0x510] sm:$0xff]
    %v4282 = vld [vmem:[#allocation2 + $0x518] sm:$0xff]
    %v4283 = vld [vmem:[#allocation2 + $0x520] sm:$0xff]
    %v4284 = vld [vmem:[#allocation2 + $0x528] sm:$0xff]
    %v4285 = vld [vmem:[#allocation2 + $0x530] sm:$0xff]
    %v4286 = vld [vmem:[#allocation2 + $0x538] sm:$0xff]
    %v4287 = vld [vmem:[#allocation2 + $0x540] sm:$0xff]
    %v4288 = vld [vmem:[#allocation2 + $0x548] sm:$0xff]
    %v4289 = vld [vmem:[#allocation2 + $0x550] sm:$0xff]
    %v4290 = vld [vmem:[#allocation2 + $0x558] sm:$0xff]
    %v4291 = vld [vmem:[#allocation2 + $0x560] sm:$0xff]
    %v4292 = vld [vmem:[#allocation2 + $0x568] sm:$0xff]
    %v4293 = vld [vmem:[#allocation2 + $0x570] sm:$0xff]
    %v4294 = vld [vmem:[#allocation2 + $0x578] sm:$0xff]
    %v4295 = vld [vmem:[#allocation2 + $0x580] sm:$0xff]
    %v4296 = vld [vmem:[#allocation2 + $0x588] sm:$0xff]
    %v4297 = vld [vmem:[#allocation2 + $0x590] sm:$0xff]
    %v4298 = vld [vmem:[#allocation2 + $0x598] sm:$0xff]
    %v4299 = vld [vmem:[#allocation2 + $0x5a0] sm:$0xff]
    %v4300 = vld [vmem:[#allocation2 + $0x5a8] sm:$0xff]
    %v4301 = vld [vmem:[#allocation2 + $0x5b0] sm:$0xff]
    %v4302 = vld [vmem:[#allocation2 + $0x5b8] sm:$0xff]
    %v4303 = vld [vmem:[#allocation2 + $0x5c0] sm:$0xff]
    %v4304 = vld [vmem:[#allocation2 + $0x5c8] sm:$0xff]
    %v4305 = vld [vmem:[#allocation2 + $0x5d0] sm:$0xff]
    %v4306 = vld [vmem:[#allocation2 + $0x5d8] sm:$0xff]
    %v4307 = vld [vmem:[#allocation2 + $0x5e0] sm:$0xff]
    %v4308 = vld [vmem:[#allocation2 + $0x5e8] sm:$0xff]
    %v4309 = vld [vmem:[#allocation2 + $0x5f0] sm:$0xff]
    %v4310 = vld [vmem:[#allocation2 + $0x5f8] sm:$0xff]
    %v4319 = vunpack.c.l.b16 %v2980
    %v4320 = vunpack.c.l.b16 %v2981
    %v4321 = vunpack.c.l.b16 %v2982
    %v4322 = vunpack.c.l.b16 %v2983
    %v4323 = vunpack.c.l.b16 %v3020
    %v4324 = vunpack.c.l.b16 %v3021
    %v4325 = vunpack.c.l.b16 %v3022
    %v4326 = vunpack.c.l.b16 %v3023
    %v4327 = vsel %vm3284, %v3228, %v3224
    %v4328 = vsel %vm3286, %v3232, %v4327
    %v4329 = vsel %vm3288, %v3236, %v4328
    %v4330 = vsel %vm3290, %v3240, %v4329
    %v4331 = vsel %vm3292, %v3244, %v4330
    %v4332 = vsel %vm3294, %v3248, %v4331
    %v4333 = vsel %vm3296, %v4319, %v4332
    %v4334 = vsel %vm3284, %v3229, %v3225
    %v4335 = vsel %vm3286, %v3233, %v4334
    %v4336 = vsel %vm3288, %v3237, %v4335
    %v4337 = vsel %vm3290, %v3241, %v4336
    %v4338 = vsel %vm3292, %v3245, %v4337
    %v4339 = vsel %vm3294, %v3249, %v4338
    %v4340 = vsel %vm3296, %v4320, %v4339
    %v4341 = vsel %vm3284, %v3230, %v3226
    %v4342 = vsel %vm3286, %v3234, %v4341
    %v4343 = vsel %vm3288, %v3238, %v4342
    %v4344 = vsel %vm3290, %v3242, %v4343
    %v4345 = vsel %vm3292, %v3246, %v4344
    %v4346 = vsel %vm3294, %v3250, %v4345
    %v4347 = vsel %vm3296, %v4321, %v4346
    %v4348 = vsel %vm3284, %v3231, %v3227
    %v4349 = vsel %vm3286, %v3235, %v4348
    %v4350 = vsel %vm3288, %v3239, %v4349
    %v4351 = vsel %vm3290, %v3243, %v4350
    %v4352 = vsel %vm3292, %v3247, %v4351
    %v4353 = vsel %vm3294, %v3251, %v4352
    %v4354 = vsel %vm3296, %v4322, %v4353
    %v4355 = vsel %vm3284, %v3260, %v3256
    %v4356 = vsel %vm3286, %v3264, %v4355
    %v4357 = vsel %vm3288, %v3268, %v4356
    %v4358 = vsel %vm3290, %v3272, %v4357
    %v4359 = vsel %vm3292, %v3276, %v4358
    %v4360 = vsel %vm3294, %v3280, %v4359
    %v4361 = vsel %vm3296, %v4323, %v4360
    %v4362 = vsel %vm3284, %v3261, %v3257
    %v4363 = vsel %vm3286, %v3265, %v4362
    %v4364 = vsel %vm3288, %v3269, %v4363
    %v4365 = vsel %vm3290, %v3273, %v4364
    %v4366 = vsel %vm3292, %v3277, %v4365
    %v4367 = vsel %vm3294, %v3281, %v4366
    %v4368 = vsel %vm3296, %v4324, %v4367
    %v4369 = vsel %vm3284, %v3262, %v3258
    %v4370 = vsel %vm3286, %v3266, %v4369
    %v4371 = vsel %vm3288, %v3270, %v4370
    %v4372 = vsel %vm3290, %v3274, %v4371
    %v4373 = vsel %vm3292, %v3278, %v4372
    %v4374 = vsel %vm3294, %v3282, %v4373
    %v4375 = vsel %vm3296, %v4325, %v4374
    %v4376 = vsel %vm3284, %v3263, %v3259
    %v4377 = vsel %vm3286, %v3267, %v4376
    %v4378 = vsel %vm3288, %v3271, %v4377
    %v4379 = vsel %vm3290, %v3275, %v4378
    %v4380 = vsel %vm3292, %v3279, %v4379
    %v4381 = vsel %vm3294, %v3283, %v4380
    %v4382 = vsel %vm3296, %v4326, %v4381
    %v4383 = vpack.c.b16 %v4361, %v4333
    %v4384 = vpack.c.b16 %v4368, %v4340
    %v4385 = vpack.c.b16 %v4375, %v4347
    %v4386 = vpack.c.b16 %v4382, %v4354
    %v4455 = vunpack.c.l.b16 %v4247
    %v4456 = vunpack.c.h.b16 %v4247
    %v4457 = vunpack.c.l.b16 %v4248
    %v4458 = vunpack.c.h.b16 %v4248
    %v4459 = vunpack.c.l.b16 %v4249
    %v4460 = vunpack.c.h.b16 %v4249
    %v4461 = vunpack.c.l.b16 %v4250
    %v4462 = vunpack.c.h.b16 %v4250
    %v4463 = vunpack.c.l.b16 %v4251
    %v4464 = vunpack.c.h.b16 %v4251
    %v4465 = vunpack.c.l.b16 %v4252
    %v4466 = vunpack.c.h.b16 %v4252
    %v4467 = vunpack.c.l.b16 %v4253
    %v4468 = vunpack.c.h.b16 %v4253
    %v4469 = vunpack.c.l.b16 %v4254
    %v4470 = vunpack.c.h.b16 %v4254
    %v4471 = vunpack.c.l.b16 %v4255
    %v4472 = vunpack.c.h.b16 %v4255
    %v4473 = vunpack.c.l.b16 %v4256
    %v4474 = vunpack.c.h.b16 %v4256
    %v4475 = vunpack.c.l.b16 %v4257
    %v4476 = vunpack.c.h.b16 %v4257
    %v4477 = vunpack.c.l.b16 %v4258
    %v4478 = vunpack.c.h.b16 %v4258
    %v4479 = vunpack.c.l.b16 %v4259
    %v4480 = vunpack.c.h.b16 %v4259
    %v4481 = vunpack.c.l.b16 %v4260
    %v4482 = vunpack.c.h.b16 %v4260
    %v4483 = vunpack.c.l.b16 %v4261
    %v4484 = vunpack.c.h.b16 %v4261
    %v4485 = vunpack.c.l.b16 %v4262
    %v4486 = vunpack.c.h.b16 %v4262
    %v4487 = vunpack.c.l.b16 %v4263
    %v4488 = vunpack.c.h.b16 %v4263
    %v4489 = vunpack.c.l.b16 %v4264
    %v4490 = vunpack.c.h.b16 %v4264
    %v4491 = vunpack.c.l.b16 %v4265
    %v4492 = vunpack.c.h.b16 %v4265
    %v4493 = vunpack.c.l.b16 %v4266
    %v4494 = vunpack.c.h.b16 %v4266
    %v4495 = vunpack.c.l.b16 %v4267
    %v4496 = vunpack.c.h.b16 %v4267
    %v4497 = vunpack.c.l.b16 %v4268
    %v4498 = vunpack.c.h.b16 %v4268
    %v4499 = vunpack.c.l.b16 %v4269
    %v4500 = vunpack.c.h.b16 %v4269
    %v4501 = vunpack.c.l.b16 %v4270
    %v4502 = vunpack.c.h.b16 %v4270
    %v4503 = vunpack.c.l.b16 %v4271
    %v4504 = vunpack.c.h.b16 %v4271
    %v4505 = vunpack.c.l.b16 %v4272
    %v4506 = vunpack.c.h.b16 %v4272
    %v4507 = vunpack.c.l.b16 %v4273
    %v4508 = vunpack.c.h.b16 %v4273
    %v4509 = vunpack.c.l.b16 %v4274
    %v4510 = vunpack.c.h.b16 %v4274
    %v4511 = vunpack.c.l.b16 %v4275
    %v4512 = vunpack.c.h.b16 %v4275
    %v4513 = vunpack.c.l.b16 %v4276
    %v4514 = vunpack.c.h.b16 %v4276
    %v4515 = vunpack.c.l.b16 %v4277
    %v4516 = vunpack.c.h.b16 %v4277
    %v4517 = vunpack.c.l.b16 %v4278
    %v4518 = vunpack.c.h.b16 %v4278
    %v4519 = vunpack.c.l.b16 %v4279
    %v4520 = vunpack.c.h.b16 %v4279
    %v4521 = vunpack.c.l.b16 %v4280
    %v4522 = vunpack.c.h.b16 %v4280
    %v4523 = vunpack.c.l.b16 %v4281
    %v4524 = vunpack.c.h.b16 %v4281
    %v4525 = vunpack.c.l.b16 %v4282
    %v4526 = vunpack.c.h.b16 %v4282
    %v4527 = vunpack.c.l.b16 %v4283
    %v4528 = vunpack.c.h.b16 %v4283
    %v4529 = vunpack.c.l.b16 %v4284
    %v4530 = vunpack.c.h.b16 %v4284
    %v4531 = vunpack.c.l.b16 %v4285
    %v4532 = vunpack.c.h.b16 %v4285
    %v4533 = vunpack.c.l.b16 %v4286
    %v4534 = vunpack.c.h.b16 %v4286
    %v4535 = vunpack.c.l.b16 %v4287
    %v4536 = vunpack.c.h.b16 %v4287
    %v4537 = vunpack.c.l.b16 %v4288
    %v4538 = vunpack.c.h.b16 %v4288
    %v4539 = vunpack.c.l.b16 %v4289
    %v4540 = vunpack.c.h.b16 %v4289
    %v4541 = vunpack.c.l.b16 %v4290
    %v4542 = vunpack.c.h.b16 %v4290
    %v4543 = vunpack.c.l.b16 %v4291
    %v4544 = vunpack.c.h.b16 %v4291
    %v4545 = vunpack.c.l.b16 %v4292
    %v4546 = vunpack.c.h.b16 %v4292
    %v4547 = vunpack.c.l.b16 %v4293
    %v4548 = vunpack.c.h.b16 %v4293
    %v4549 = vunpack.c.l.b16 %v4294
    %v4550 = vunpack.c.h.b16 %v4294
    %v4551 = vunpack.c.l.b16 %v4295
    %v4552 = vunpack.c.h.b16 %v4295
    %v4553 = vunpack.c.l.b16 %v4296
    %v4554 = vunpack.c.h.b16 %v4296
    %v4555 = vunpack.c.l.b16 %v4297
    %v4556 = vunpack.c.h.b16 %v4297
    %v4557 = vunpack.c.l.b16 %v4298
    %v4558 = vunpack.c.h.b16 %v4298
    %v4559 = vunpack.c.l.b16 %v4299
    %v4560 = vunpack.c.h.b16 %v4299
    %v4561 = vunpack.c.l.b16 %v4300
    %v4562 = vunpack.c.h.b16 %v4300
    %v4563 = vunpack.c.l.b16 %v4301
    %v4564 = vunpack.c.h.b16 %v4301
    %v4565 = vunpack.c.l.b16 %v4302
    %v4566 = vunpack.c.h.b16 %v4302
    %v4567 = vunpack.c.l.b16 %v4303
    %v4568 = vunpack.c.h.b16 %v4303
    %v4569 = vunpack.c.l.b16 %v4304
    %v4570 = vunpack.c.h.b16 %v4304
    %v4571 = vunpack.c.l.b16 %v4305
    %v4572 = vunpack.c.h.b16 %v4305
    %v4573 = vunpack.c.l.b16 %v4306
    %v4574 = vunpack.c.h.b16 %v4306
    %v4575 = vunpack.c.l.b16 %v4307
    %v4576 = vunpack.c.h.b16 %v4307
    %v4577 = vunpack.c.l.b16 %v4308
    %v4578 = vunpack.c.h.b16 %v4308
    %v4579 = vunpack.c.l.b16 %v4309
    %v4580 = vunpack.c.h.b16 %v4309
    %v4581 = vunpack.c.l.b16 %v4310
    %v4582 = vunpack.c.h.b16 %v4310
    %v4583 = vpack.c.b16 %v4457, %v4455
    %v4584 = vpack.c.b16 %v4458, %v4456
    %v4585 = vpack.c.b16 %v4461, %v4459
    %v4586 = vpack.c.b16 %v4462, %v4460
    %v4587 = vpack.c.b16 %v4465, %v4463
    %v4588 = vpack.c.b16 %v4466, %v4464
    %v4589 = vpack.c.b16 %v4469, %v4467
    %v4590 = vpack.c.b16 %v4470, %v4468
    %v4591 = vpack.c.b16 %v4473, %v4471
    %v4592 = vpack.c.b16 %v4474, %v4472
    %v4593 = vpack.c.b16 %v4477, %v4475
    %v4594 = vpack.c.b16 %v4478, %v4476
    %v4595 = vpack.c.b16 %v4481, %v4479
    %v4596 = vpack.c.b16 %v4482, %v4480
    %v4597 = vpack.c.b16 %v4485, %v4483
    %v4598 = vpack.c.b16 %v4486, %v4484
    %v4599 = vpack.c.b16 %v4489, %v4487
    %v4600 = vpack.c.b16 %v4490, %v4488
    %v4601 = vpack.c.b16 %v4493, %v4491
    %v4602 = vpack.c.b16 %v4494, %v4492
    %v4603 = vpack.c.b16 %v4497, %v4495
    %v4604 = vpack.c.b16 %v4498, %v4496
    %v4605 = vpack.c.b16 %v4501, %v4499
    %v4606 = vpack.c.b16 %v4502, %v4500
    %v4607 = vpack.c.b16 %v4505, %v4503
    %v4608 = vpack.c.b16 %v4506, %v4504
    %v4609 = vpack.c.b16 %v4509, %v4507
    %v4610 = vpack.c.b16 %v4510, %v4508
    %v4611 = vpack.c.b16 %v4513, %v4511
    %v4612 = vpack.c.b16 %v4514, %v4512
    %v4613 = vpack.c.b16 %v4517, %v4515
    %v4614 = vpack.c.b16 %v4518, %v4516
    %v4615 = vpack.c.b16 %v4521, %v4519
    %v4616 = vpack.c.b16 %v4522, %v4520
    %v4617 = vpack.c.b16 %v4525, %v4523
    %v4618 = vpack.c.b16 %v4526, %v4524
    %v4619 = vpack.c.b16 %v4529, %v4527
    %v4620 = vpack.c.b16 %v4530, %v4528
    %v4621 = vpack.c.b16 %v4533, %v4531
    %v4622 = vpack.c.b16 %v4534, %v4532
    %v4623 = vpack.c.b16 %v4537, %v4535
    %v4624 = vpack.c.b16 %v4538, %v4536
    %v4625 = vpack.c.b16 %v4541, %v4539
    %v4626 = vpack.c.b16 %v4542, %v4540
    %v4627 = vpack.c.b16 %v4545, %v4543
    %v4628 = vpack.c.b16 %v4546, %v4544
    %v4629 = vpack.c.b16 %v4549, %v4547
    %v4630 = vpack.c.b16 %v4550, %v4548
    %v4631 = vpack.c.b16 %v4553, %v4551
    %v4632 = vpack.c.b16 %v4554, %v4552
    %v4633 = vpack.c.b16 %v4557, %v4555
    %v4634 = vpack.c.b16 %v4558, %v4556
    %v4635 = vpack.c.b16 %v4561, %v4559
    %v4636 = vpack.c.b16 %v4562, %v4560
    %v4637 = vpack.c.b16 %v4565, %v4563
    %v4638 = vpack.c.b16 %v4566, %v4564
    %v4639 = vpack.c.b16 %v4569, %v4567
    %v4640 = vpack.c.b16 %v4570, %v4568
    %v4641 = vpack.c.b16 %v4573, %v4571
    %v4642 = vpack.c.b16 %v4574, %v4572
    %v4643 = vpack.c.b16 %v4577, %v4575
    %v4644 = vpack.c.b16 %v4578, %v4576
    %v4645 = vpack.c.b16 %v4581, %v4579
    %v4646 = vpack.c.b16 %v4582, %v4580
    %4711 = vmatprep.subr.bf16.mxu0 %v4598
    %4712 = vmatpush1.bf16.msra.mxu0 %v4597
    %4713 = vmatprep.subr.bf16.mxu0 %v4596
    %4714 = vmatpush1.bf16.msra.mxu0 %v4595
    %4715 = vmatprep.subr.bf16.mxu0 %v4594
    %4716 = vmatpush1.bf16.msra.mxu0 %v4593
    %4717 = vmatprep.subr.bf16.mxu0 %v4592
    %4718 = vmatpush1.bf16.msra.mxu0 %v4591
    %4719 = vmatprep.subr.bf16.mxu0 %v4590
    %4720 = vmatpush1.bf16.msra.mxu0 %v4589
    %4721 = vmatprep.subr.bf16.mxu0 %v4588
    %4722 = vmatpush1.bf16.msra.mxu0 %v4587
    %4723 = vmatprep.subr.bf16.mxu0 %v4586
    %4724 = vmatpush1.bf16.msra.mxu0 %v4585
    %4725 = vmatprep.subr.bf16.mxu0 %v4584
    %4726 = vmatpush1.bf16.msra.mxu0 %v4583
    %4727 = vmatprep.subr.bf16.mxu0 %v4614
    %4728 = vmatpush2.bf16.msra.mxu0 %v4613
    %4729 = vmatprep.subr.bf16.mxu0 %v4612
    %4730 = vmatpush2.bf16.msra.mxu0 %v4611
    %4731 = vmatprep.subr.bf16.mxu0 %v4610
    %4732 = vmatpush2.bf16.msra.mxu0 %v4609
    %4733 = vmatprep.subr.bf16.mxu0 %v4608
    %4734 = vmatpush2.bf16.msra.mxu0 %v4607
    %4735 = vmatprep.subr.bf16.mxu0 %v4606
    %4736 = vmatpush2.bf16.msra.mxu0 %v4605
    %4737 = vmatprep.subr.bf16.mxu0 %v4604
    %4738 = vmatpush2.bf16.msra.mxu0 %v4603
    %4739 = vmatprep.subr.bf16.mxu0 %v4602
    %4740 = vmatpush2.bf16.msra.mxu0 %v4601
    %4741 = vmatprep.subr.bf16.mxu0 %v4600
    %4742 = vmatpush2.bf16.msra.mxu0 %v4599
    %4743 = vmatprep.mubr.bf16.mxu0 %v4384
    %4744 = vmatmul.mubr.bf16.gmra.mxu0 %v4383
    %v4745 = vpop.f32.mrf.mxu0
    %v4746 = vadd.f32 0.0, %v4745
    %v4747 = vpop.f32.mrf.mxu0
    %v4748 = vadd.f32 0.0, %v4747
    %v4749 = vpop.f32.mrf.mxu0
    %v4750 = vadd.f32 0.0, %v4749
    %v4751 = vpop.f32.mrf.mxu0
    %v4752 = vadd.f32 0.0, %v4751
    %4753 = vdwg.mxu0
    %4754 = vmatprep.subr.bf16.mxu0 %v4630
    %4755 = vmatpush1.bf16.msra.mxu0 %v4629
    %4756 = vmatprep.subr.bf16.mxu0 %v4628
    %4757 = vmatpush1.bf16.msra.mxu0 %v4627
    %4758 = vmatprep.subr.bf16.mxu0 %v4626
    %4759 = vmatpush1.bf16.msra.mxu0 %v4625
    %4760 = vmatprep.subr.bf16.mxu0 %v4624
    %4761 = vmatpush1.bf16.msra.mxu0 %v4623
    %4762 = vmatprep.subr.bf16.mxu0 %v4622
    %4763 = vmatpush1.bf16.msra.mxu0 %v4621
    %4764 = vmatprep.subr.bf16.mxu0 %v4620
    %4765 = vmatpush1.bf16.msra.mxu0 %v4619
    %4766 = vmatprep.subr.bf16.mxu0 %v4618
    %4767 = vmatpush1.bf16.msra.mxu0 %v4617
    %4768 = vmatprep.subr.bf16.mxu0 %v4616
    %4769 = vmatpush1.bf16.msra.mxu0 %v4615
    %4770 = vmatprep.subr.bf16.mxu0 %v4646
    %4771 = vmatpush2.bf16.msra.mxu0 %v4645
    %4772 = vmatprep.subr.bf16.mxu0 %v4644
    %4773 = vmatpush2.bf16.msra.mxu0 %v4643
    %4774 = vmatprep.subr.bf16.mxu0 %v4642
    %4775 = vmatpush2.bf16.msra.mxu0 %v4641
    %4776 = vmatprep.subr.bf16.mxu0 %v4640
    %4777 = vmatpush2.bf16.msra.mxu0 %v4639
    %4778 = vmatprep.subr.bf16.mxu0 %v4638
    %4779 = vmatpush2.bf16.msra.mxu0 %v4637
    %4780 = vmatprep.subr.bf16.mxu0 %v4636
    %4781 = vmatpush2.bf16.msra.mxu0 %v4635
    %4782 = vmatprep.subr.bf16.mxu0 %v4634
    %4783 = vmatpush2.bf16.msra.mxu0 %v4633
    %4784 = vmatprep.subr.bf16.mxu0 %v4632
    %4785 = vmatpush2.bf16.msra.mxu0 %v4631
    %4786 = vmatprep.mubr.bf16.mxu0 %v4386
    %4787 = vmatmul.mubr.bf16.gmra.mxu0 %v4385
    %v4788 = vpop.f32.mrf.mxu0
    %v4789 = vadd.f32 %v4746, %v4788
    %v4790 = vpop.f32.mrf.mxu0
    %v4791 = vadd.f32 %v4748, %v4790
    %v4792 = vpop.f32.mrf.mxu0
    %v4793 = vadd.f32 %v4750, %v4792
    %v4794 = vpop.f32.mrf.mxu0
    %v4795 = vadd.f32 %v4752, %v4794
    %4796 = vdwg.mxu0
    %v4797 = vadd.f32 %v4239, %v4789
    %v4798 = vadd.f32 %v4241, %v4791
    %v4799 = vadd.f32 %v4243, %v4793
    %v4800 = vadd.f32 %v4245, %v4795
    %v4802 = vlaneseq
    %v4803 = vshrl.u32 %v4802, 7
    %v4804 = vsub.s32 0, %v4803
    %v4805 = vrot.slane %v270, %v4804
    %v4806 = vlaneseq
    %v4807 = vshrl.u32 %v4806, 7
    %v4808 = vsub.s32 1, %v4807
    %v4809 = vrot.slane %v270, %v4808
    %v4812 = vadd.f32 %v4797, %v4805
    %v4813 = vadd.f32 %v4798, %v4809
    %v4814 = vadd.f32 %v4799, %v4805
    %v4815 = vadd.f32 %v4800, %v4809
    %v4816 = vmax.f32 %v4812, 0.0
    %v4817 = vmax.f32 %v4813, 0.0
    %v4818 = vmax.f32 %v4814, 0.0
    %v4819 = vmax.f32 %v4815, 0.0
    %v4820 = vrot.slane %v4816, 4
    %v4821 = vmax.f32 %v4816, %v4820
    %v4822 = vrot.slane %v4821, 2
    %v4823 = vmax.f32 %v4821, %v4822
    %v4824 = vrot.slane %v4823, 1
    %v4825 = vmax.f32 %v4823, %v4824
    %v4826 = vrot.slane %v4817, 4
    %v4827 = vmax.f32 %v4817, %v4826
    %v4828 = vrot.slane %v4827, 2
    %v4829 = vmax.f32 %v4827, %v4828
    %v4830 = vrot.slane %v4829, 1
    %v4831 = vmax.f32 %v4829, %v4830
    %v4832 = vrot.slane %v4818, 4
    %v4833 = vmax.f32 %v4818, %v4832
    %v4834 = vrot.slane %v4833, 2
    %v4835 = vmax.f32 %v4833, %v4834
    %v4836 = vrot.slane %v4835, 1
    %v4837 = vmax.f32 %v4835, %v4836
    %v4838 = vrot.slane %v4819, 4
    %v4839 = vmax.f32 %v4819, %v4838
    %v4840 = vrot.slane %v4839, 2
    %v4841 = vmax.f32 %v4839, %v4840
    %v4842 = vrot.slane %v4841, 1
    %v4843 = vmax.f32 %v4841, %v4842
    %v4844 = vld [vmem:[#allocation13] sm:$0xff]
    %v4845 = vld [vmem:[#allocation13 + $0x8] sm:$0xff]
    %v4846 = vld [vmem:[#allocation13 + $0x10] sm:$0xff]
    %v4847 = vld [vmem:[#allocation13 + $0x18] sm:$0xff]
    %v4848 = vld [vmem:[#allocation13 + $0x20] sm:$0xff]
    %v4849 = vld [vmem:[#allocation13 + $0x28] sm:$0xff]
    %v4850 = vld [vmem:[#allocation13 + $0x30] sm:$0xff]
    %v4851 = vld [vmem:[#allocation13 + $0x38] sm:$0xff]
    %v4852 = vld [vmem:[#allocation13 + $0x40] sm:$0xff]
    %v4853 = vld [vmem:[#allocation13 + $0x48] sm:$0xff]
    %v4854 = vld [vmem:[#allocation13 + $0x50] sm:$0xff]
    %v4855 = vld [vmem:[#allocation13 + $0x58] sm:$0xff]
    %v4856 = vld [vmem:[#allocation13 + $0x60] sm:$0xff]
    %v4857 = vld [vmem:[#allocation13 + $0x68] sm:$0xff]
    %v4858 = vld [vmem:[#allocation13 + $0x70] sm:$0xff]
    %v4859 = vld [vmem:[#allocation13 + $0x78] sm:$0xff]
    %v4860 = vld [vmem:[#allocation13 + $0x80] sm:$0xff]
    %v4861 = vld [vmem:[#allocation13 + $0x88] sm:$0xff]
    %v4862 = vld [vmem:[#allocation13 + $0x90] sm:$0xff]
    %v4863 = vld [vmem:[#allocation13 + $0x98] sm:$0xff]
    %v4864 = vld [vmem:[#allocation13 + $0xa0] sm:$0xff]
    %v4865 = vld [vmem:[#allocation13 + $0xa8] sm:$0xff]
    %v4866 = vld [vmem:[#allocation13 + $0xb0] sm:$0xff]
    %v4867 = vld [vmem:[#allocation13 + $0xb8] sm:$0xff]
    %v4868 = vld [vmem:[#allocation13 + $0xc0] sm:$0xff]
    %v4869 = vld [vmem:[#allocation13 + $0xc8] sm:$0xff]
    %v4870 = vld [vmem:[#allocation13 + $0xd0] sm:$0xff]
    %v4871 = vld [vmem:[#allocation13 + $0xd8] sm:$0xff]
    %v4872 = vld [vmem:[#allocation13 + $0xe0] sm:$0xff]
    %v4873 = vld [vmem:[#allocation13 + $0xe8] sm:$0xff]
    %v4874 = vld [vmem:[#allocation13 + $0xf0] sm:$0xff]
    %v4875 = vld [vmem:[#allocation13 + $0xf8] sm:$0xff]
    %v4876 = vld [vmem:[#allocation13 + $0x100] sm:$0xff]
    %v4877 = vld [vmem:[#allocation13 + $0x108] sm:$0xff]
    %v4878 = vld [vmem:[#allocation13 + $0x110] sm:$0xff]
    %v4879 = vld [vmem:[#allocation13 + $0x118] sm:$0xff]
    %v4880 = vld [vmem:[#allocation13 + $0x120] sm:$0xff]
    %v4881 = vld [vmem:[#allocation13 + $0x128] sm:$0xff]
    %v4882 = vld [vmem:[#allocation13 + $0x130] sm:$0xff]
    %v4883 = vld [vmem:[#allocation13 + $0x138] sm:$0xff]
    %v4884 = vld [vmem:[#allocation13 + $0x140] sm:$0xff]
    %v4885 = vld [vmem:[#allocation13 + $0x148] sm:$0xff]
    %v4886 = vld [vmem:[#allocation13 + $0x150] sm:$0xff]
    %v4887 = vld [vmem:[#allocation13 + $0x158] sm:$0xff]
    %v4888 = vld [vmem:[#allocation13 + $0x160] sm:$0xff]
    %v4889 = vld [vmem:[#allocation13 + $0x168] sm:$0xff]
    %v4890 = vld [vmem:[#allocation13 + $0x170] sm:$0xff]
    %v4891 = vld [vmem:[#allocation13 + $0x178] sm:$0xff]
    %v4892 = vld [vmem:[#allocation13 + $0x180] sm:$0xff]
    %v4893 = vld [vmem:[#allocation13 + $0x188] sm:$0xff]
    %v4894 = vld [vmem:[#allocation13 + $0x190] sm:$0xff]
    %v4895 = vld [vmem:[#allocation13 + $0x198] sm:$0xff]
    %v4896 = vld [vmem:[#allocation13 + $0x1a0] sm:$0xff]
    %v4897 = vld [vmem:[#allocation13 + $0x1a8] sm:$0xff]
    %v4898 = vld [vmem:[#allocation13 + $0x1b0] sm:$0xff]
    %v4899 = vld [vmem:[#allocation13 + $0x1b8] sm:$0xff]
    %v4900 = vld [vmem:[#allocation13 + $0x1c0] sm:$0xff]
    %v4901 = vld [vmem:[#allocation13 + $0x1c8] sm:$0xff]
    %v4902 = vld [vmem:[#allocation13 + $0x1d0] sm:$0xff]
    %v4903 = vld [vmem:[#allocation13 + $0x1d8] sm:$0xff]
    %v4904 = vld [vmem:[#allocation13 + $0x1e0] sm:$0xff]
    %v4905 = vld [vmem:[#allocation13 + $0x1e8] sm:$0xff]
    %v4906 = vld [vmem:[#allocation13 + $0x1f0] sm:$0xff]
    %v4907 = vld [vmem:[#allocation13 + $0x1f8] sm:$0xff]
    %v4908 = vld [vmem:[#allocation14] sm:$0xf]
    %v4909 = vld [vmem:[#allocation16] sm:$0x3]
    %vm4910 = vsmask.f32 6400
    %v4911 = vrot.slane %v273, 1
    %v4912 = vrot.slane %v275, 2
    %v4913 = vor.u32 %v4911, %v4912
    %v4914 = vrot.slane %v284, 1
    %v4915 = vrot.slane %v280, 2
    %v4916 = vor.u32 %v4914, %v4915
    %v4917 = vsel %vm4910, %v4913, %v4916
    %v4918 = vrot.slane %v288, 1
    %v4919 = vrot.slane %v290, 2
    %v4920 = vor.u32 %v4918, %v4919
    %v4921 = vrot.slane %v299, 1
    %v4922 = vrot.slane %v295, 2
    %v4923 = vor.u32 %v4921, %v4922
    %v4924 = vsel %vm4910, %v4920, %v4923
    %4925 = vrot.lane.b32.xlu0 %v4917, 96
    %v4926 = vpop.permute.xlu0 %4925
    %4927 = vrot.lane.b32.xlu0 %v4916, 96
    %v4928 = vpop.permute.xlu0 %4927
    %4929 = vrot.lane.b32.xlu0 %v4924, 96
    %v4930 = vpop.permute.xlu0 %4929
    %4931 = vrot.lane.b32.xlu0 %v4923, 96
    %v4932 = vpop.permute.xlu0 %4931
    %vm4933 = vcmask 1045504
    %v4934 = vrot.slane %v233, 2
    %v4935 = vrot.slane %v234, 2
    %v4936 = vsel %vm4933, %v4934, %v4935
    %v4937 = vrot.slane %v235, 2
    %v4938 = vrot.slane %v236, 2
    %v4939 = vsel %vm4933, %v4937, %v4938
    %v4941 = vsel %vm347, %v340, %v4926
    %v4943 = vsel %vm347, %v342, %v4928
    %v4945 = vsel %vm347, %v344, %v4930
    %v4947 = vsel %vm347, %v346, %v4932
    %v4949 = vsel %vm329, %v4936, 0
    %v4951 = vsel %vm329, %v4935, 0
    %v4953 = vsel %vm329, %v4939, 0
    %v4955 = vsel %vm329, %v4938, 0
    %v4964 = vcombine.low %v4941, %v4949
    %v4965 = vcombine.high %v4941, %v4949
    %v4967 = vunpack.c.l.s4 1983009808
    %v4968 = vunpack.c.0.s8 %v4967
    %v4969 = vlaneseq
    %v4970 = vshrl.u32 %v4969, 7
    %v4971 = vsub.s32 %v4968, %v4970
    %v4972 = vrot.slane %v4964, %v4971
    %v4974 = vunpack.c.l.s4 1983009808
    %v4975 = vunpack.c.0.s8 %v4974
    %v4976 = vlaneseq
    %v4977 = vshrl.u32 %v4976, 7
    %v4978 = vsub.s32 %v4975, %v4977
    %v4979 = vrot.slane %v4965, %v4978
    %v4980 = vcombine.high %v4972, %v4972
    %v4981 = vcombine.high %v4979, %v4979
    %v4982 = vcombine.low %v4943, %v4951
    %v4983 = vcombine.high %v4943, %v4951
    %v4985 = vunpack.c.l.s4 1983009808
    %v4986 = vunpack.c.0.s8 %v4985
    %v4987 = vlaneseq
    %v4988 = vshrl.u32 %v4987, 7
    %v4989 = vsub.s32 %v4986, %v4988
    %v4990 = vrot.slane %v4982, %v4989
    %v4992 = vunpack.c.l.s4 1983009808
    %v4993 = vunpack.c.0.s8 %v4992
    %v4994 = vlaneseq
    %v4995 = vshrl.u32 %v4994, 7
    %v4996 = vsub.s32 %v4993, %v4995
    %v4997 = vrot.slane %v4983, %v4996
    %v4998 = vcombine.high %v4990, %v4990
    %v4999 = vcombine.low %v4945, %v4953
    %v5000 = vcombine.high %v4945, %v4953
    %v5002 = vunpack.c.l.s4 1983009808
    %v5003 = vunpack.c.0.s8 %v5002
    %v5004 = vlaneseq
    %v5005 = vshrl.u32 %v5004, 7
    %v5006 = vsub.s32 %v5003, %v5005
    %v5007 = vrot.slane %v4999, %v5006
    %v5009 = vunpack.c.l.s4 1983009808
    %v5010 = vunpack.c.0.s8 %v5009
    %v5011 = vlaneseq
    %v5012 = vshrl.u32 %v5011, 7
    %v5013 = vsub.s32 %v5010, %v5012
    %v5014 = vrot.slane %v5000, %v5013
    %v5015 = vcombine.high %v5007, %v5007
    %v5016 = vcombine.high %v5014, %v5014
    %v5017 = vcombine.low %v4947, %v4955
    %v5018 = vcombine.high %v4947, %v4955
    %v5020 = vunpack.c.l.s4 1983009808
    %v5021 = vunpack.c.0.s8 %v5020
    %v5022 = vlaneseq
    %v5023 = vshrl.u32 %v5022, 7
    %v5024 = vsub.s32 %v5021, %v5023
    %v5025 = vrot.slane %v5017, %v5024
    %v5027 = vunpack.c.l.s4 1983009808
    %v5028 = vunpack.c.0.s8 %v5027
    %v5029 = vlaneseq
    %v5030 = vshrl.u32 %v5029, 7
    %v5031 = vsub.s32 %v5028, %v5030
    %v5032 = vrot.slane %v5018, %v5031
    %v5033 = vcombine.high %v5025, %v5025
    %v5035 = vlaneseq
    %v5036 = vshrl.u32 %v5035, 7
    %v5037 = vsub.s32 0, %v5036
    %v5038 = vrot.slane %v4908, %v5037
    %v5039 = vlaneseq
    %v5040 = vshrl.u32 %v5039, 7
    %v5041 = vsub.s32 1, %v5040
    %v5042 = vrot.slane %v4908, %v5041
    %v5043 = vlaneseq
    %v5044 = vshrl.u32 %v5043, 7
    %v5045 = vsub.s32 2, %v5044
    %v5046 = vrot.slane %v4908, %v5045
    %v5047 = vlaneseq
    %v5048 = vshrl.u32 %v5047, 7
    %v5049 = vsub.s32 3, %v5048
    %v5050 = vrot.slane %v4908, %v5049
    %v5055 = vcombine.low %v4972, %v4980
    %v5056 = vcombine.low %v4979, %v4981
    %v5058 = vunpack.c.l.s4 1983009808
    %v5059 = vunpack.c.0.s8 %v5058
    %v5060 = vlaneseq
    %v5061 = vshrl.u32 %v5060, 7
    %v5062 = vsub.s32 %v5059, %v5061
    %v5063 = vrot.slane %v5055, %v5062
    %v5065 = vunpack.c.l.s4 1983009808
    %v5066 = vunpack.c.0.s8 %v5065
    %v5067 = vlaneseq
    %v5068 = vshrl.u32 %v5067, 7
    %v5069 = vsub.s32 %v5066, %v5068
    %v5070 = vrot.slane %v5056, %v5069
    %v5071 = vcombine.low %v5063, %v5070
    %v5072 = vcombine.high %v5063, %v5070
    %v5073 = vcombine.low %v4990, %v4998
    %v5074 = vcombine.low %v4997, %v5007
    %v5076 = vunpack.c.l.s4 1983009808
    %v5077 = vunpack.c.0.s8 %v5076
    %v5078 = vlaneseq
    %v5079 = vshrl.u32 %v5078, 7
    %v5080 = vsub.s32 %v5077, %v5079
    %v5081 = vrot.slane %v5073, %v5080
    %v5083 = vunpack.c.l.s4 1983009808
    %v5084 = vunpack.c.0.s8 %v5083
    %v5085 = vlaneseq
    %v5086 = vshrl.u32 %v5085, 7
    %v5087 = vsub.s32 %v5084, %v5086
    %v5088 = vrot.slane %v5074, %v5087
    %v5089 = vcombine.low %v5081, %v5088
    %v5090 = vcombine.high %v5081, %v5088
    %v5091 = vcombine.low %v5015, %v5014
    %v5092 = vcombine.low %v5016, %v5025
    %v5094 = vunpack.c.l.s4 1983009808
    %v5095 = vunpack.c.0.s8 %v5094
    %v5096 = vlaneseq
    %v5097 = vshrl.u32 %v5096, 7
    %v5098 = vsub.s32 %v5095, %v5097
    %v5099 = vrot.slane %v5091, %v5098
    %v5101 = vunpack.c.l.s4 1983009808
    %v5102 = vunpack.c.0.s8 %v5101
    %v5103 = vlaneseq
    %v5104 = vshrl.u32 %v5103, 7
    %v5105 = vsub.s32 %v5102, %v5104
    %v5106 = vrot.slane %v5092, %v5105
    %v5107 = vcombine.low %v5099, %v5106
    %v5108 = vcombine.high %v5099, %v5106
    %v5109 = vcombine.low %v5033, %v5032
    %v5111 = vunpack.c.l.s4 1983009808
    %v5112 = vunpack.c.0.s8 %v5111
    %v5113 = vlaneseq
    %v5114 = vshrl.u32 %v5113, 7
    %v5115 = vsub.s32 %v5112, %v5114
    %v5116 = vrot.slane %v5109, %v5115
    %v5117 = vcombine.high %v5116, %v5116
    %v5190 = vunpack.c.l.b16 %v4844
    %v5191 = vunpack.c.h.b16 %v4844
    %v5192 = vunpack.c.l.b16 %v4845
    %v5193 = vunpack.c.h.b16 %v4845
    %v5194 = vunpack.c.l.b16 %v4846
    %v5195 = vunpack.c.h.b16 %v4846
    %v5196 = vunpack.c.l.b16 %v4847
    %v5197 = vunpack.c.h.b16 %v4847
    %v5198 = vunpack.c.l.b16 %v4848
    %v5199 = vunpack.c.h.b16 %v4848
    %v5200 = vunpack.c.l.b16 %v4849
    %v5201 = vunpack.c.h.b16 %v4849
    %v5202 = vunpack.c.l.b16 %v4850
    %v5203 = vunpack.c.h.b16 %v4850
    %v5204 = vunpack.c.l.b16 %v4851
    %v5205 = vunpack.c.h.b16 %v4851
    %v5206 = vunpack.c.l.b16 %v4852
    %v5207 = vunpack.c.h.b16 %v4852
    %v5208 = vunpack.c.l.b16 %v4853
    %v5209 = vunpack.c.h.b16 %v4853
    %v5210 = vunpack.c.l.b16 %v4854
    %v5211 = vunpack.c.h.b16 %v4854
    %v5212 = vunpack.c.l.b16 %v4855
    %v5213 = vunpack.c.h.b16 %v4855
    %v5214 = vunpack.c.l.b16 %v4856
    %v5215 = vunpack.c.h.b16 %v4856
    %v5216 = vunpack.c.l.b16 %v4857
    %v5217 = vunpack.c.h.b16 %v4857
    %v5218 = vunpack.c.l.b16 %v4858
    %v5219 = vunpack.c.h.b16 %v4858
    %v5220 = vunpack.c.l.b16 %v4859
    %v5221 = vunpack.c.h.b16 %v4859
    %v5222 = vunpack.c.l.b16 %v4860
    %v5223 = vunpack.c.h.b16 %v4860
    %v5224 = vunpack.c.l.b16 %v4861
    %v5225 = vunpack.c.h.b16 %v4861
    %v5226 = vunpack.c.l.b16 %v4862
    %v5227 = vunpack.c.h.b16 %v4862
    %v5228 = vunpack.c.l.b16 %v4863
    %v5229 = vunpack.c.h.b16 %v4863
    %v5230 = vunpack.c.l.b16 %v4864
    %v5231 = vunpack.c.h.b16 %v4864
    %v5232 = vunpack.c.l.b16 %v4865
    %v5233 = vunpack.c.h.b16 %v4865
    %v5234 = vunpack.c.l.b16 %v4866
    %v5235 = vunpack.c.h.b16 %v4866
    %v5236 = vunpack.c.l.b16 %v4867
    %v5237 = vunpack.c.h.b16 %v4867
    %v5238 = vunpack.c.l.b16 %v4868
    %v5239 = vunpack.c.h.b16 %v4868
    %v5240 = vunpack.c.l.b16 %v4869
    %v5241 = vunpack.c.h.b16 %v4869
    %v5242 = vunpack.c.l.b16 %v4870
    %v5243 = vunpack.c.h.b16 %v4870
    %v5244 = vunpack.c.l.b16 %v4871
    %v5245 = vunpack.c.h.b16 %v4871
    %v5246 = vunpack.c.l.b16 %v4872
    %v5247 = vunpack.c.h.b16 %v4872
    %v5248 = vunpack.c.l.b16 %v4873
    %v5249 = vunpack.c.h.b16 %v4873
    %v5250 = vunpack.c.l.b16 %v4874
    %v5251 = vunpack.c.h.b16 %v4874
    %v5252 = vunpack.c.l.b16 %v4875
    %v5253 = vunpack.c.h.b16 %v4875
    %v5254 = vunpack.c.l.b16 %v4876
    %v5255 = vunpack.c.h.b16 %v4876
    %v5256 = vunpack.c.l.b16 %v4877
    %v5257 = vunpack.c.h.b16 %v4877
    %v5258 = vunpack.c.l.b16 %v4878
    %v5259 = vunpack.c.h.b16 %v4878
    %v5260 = vunpack.c.l.b16 %v4879
    %v5261 = vunpack.c.h.b16 %v4879
    %v5262 = vunpack.c.l.b16 %v4880
    %v5263 = vunpack.c.h.b16 %v4880
    %v5264 = vunpack.c.l.b16 %v4881
    %v5265 = vunpack.c.h.b16 %v4881
    %v5266 = vunpack.c.l.b16 %v4882
    %v5267 = vunpack.c.h.b16 %v4882
    %v5268 = vunpack.c.l.b16 %v4883
    %v5269 = vunpack.c.h.b16 %v4883
    %v5270 = vunpack.c.l.b16 %v4884
    %v5271 = vunpack.c.h.b16 %v4884
    %v5272 = vunpack.c.l.b16 %v4885
    %v5273 = vunpack.c.h.b16 %v4885
    %v5274 = vunpack.c.l.b16 %v4886
    %v5275 = vunpack.c.h.b16 %v4886
    %v5276 = vunpack.c.l.b16 %v4887
    %v5277 = vunpack.c.h.b16 %v4887
    %v5278 = vunpack.c.l.b16 %v4888
    %v5279 = vunpack.c.h.b16 %v4888
    %v5280 = vunpack.c.l.b16 %v4889
    %v5281 = vunpack.c.h.b16 %v4889
    %v5282 = vunpack.c.l.b16 %v4890
    %v5283 = vunpack.c.h.b16 %v4890
    %v5284 = vunpack.c.l.b16 %v4891
    %v5285 = vunpack.c.h.b16 %v4891
    %v5286 = vunpack.c.l.b16 %v4892
    %v5287 = vunpack.c.h.b16 %v4892
    %v5288 = vunpack.c.l.b16 %v4893
    %v5289 = vunpack.c.h.b16 %v4893
    %v5290 = vunpack.c.l.b16 %v4894
    %v5291 = vunpack.c.h.b16 %v4894
    %v5292 = vunpack.c.l.b16 %v4895
    %v5293 = vunpack.c.h.b16 %v4895
    %v5294 = vunpack.c.l.b16 %v4896
    %v5295 = vunpack.c.h.b16 %v4896
    %v5296 = vunpack.c.l.b16 %v4897
    %v5297 = vunpack.c.h.b16 %v4897
    %v5298 = vunpack.c.l.b16 %v4898
    %v5299 = vunpack.c.h.b16 %v4898
    %v5300 = vunpack.c.l.b16 %v4899
    %v5301 = vunpack.c.h.b16 %v4899
    %v5302 = vunpack.c.l.b16 %v4900
    %v5303 = vunpack.c.h.b16 %v4900
    %v5304 = vunpack.c.l.b16 %v4901
    %v5305 = vunpack.c.h.b16 %v4901
    %v5306 = vunpack.c.l.b16 %v4902
    %v5307 = vunpack.c.h.b16 %v4902
    %v5308 = vunpack.c.l.b16 %v4903
    %v5309 = vunpack.c.h.b16 %v4903
    %v5310 = vunpack.c.l.b16 %v4904
    %v5311 = vunpack.c.h.b16 %v4904
    %v5312 = vunpack.c.l.b16 %v4905
    %v5313 = vunpack.c.h.b16 %v4905
    %v5314 = vunpack.c.l.b16 %v4906
    %v5315 = vunpack.c.h.b16 %v4906
    %v5316 = vunpack.c.l.b16 %v4907
    %v5317 = vunpack.c.h.b16 %v4907
    %v5318 = vpack.c.b16 %v5194, %v5190
    %v5319 = vpack.c.b16 %v5195, %v5191
    %v5320 = vpack.c.b16 %v5196, %v5192
    %v5321 = vpack.c.b16 %v5197, %v5193
    %v5322 = vpack.c.b16 %v5202, %v5198
    %v5323 = vpack.c.b16 %v5203, %v5199
    %v5324 = vpack.c.b16 %v5204, %v5200
    %v5325 = vpack.c.b16 %v5205, %v5201
    %v5326 = vpack.c.b16 %v5210, %v5206
    %v5327 = vpack.c.b16 %v5211, %v5207
    %v5328 = vpack.c.b16 %v5212, %v5208
    %v5329 = vpack.c.b16 %v5213, %v5209
    %v5330 = vpack.c.b16 %v5218, %v5214
    %v5331 = vpack.c.b16 %v5219, %v5215
    %v5332 = vpack.c.b16 %v5220, %v5216
    %v5333 = vpack.c.b16 %v5221, %v5217
    %v5334 = vpack.c.b16 %v5226, %v5222
    %v5335 = vpack.c.b16 %v5227, %v5223
    %v5336 = vpack.c.b16 %v5228, %v5224
    %v5337 = vpack.c.b16 %v5229, %v5225
    %v5338 = vpack.c.b16 %v5234, %v5230
    %v5339 = vpack.c.b16 %v5235, %v5231
    %v5340 = vpack.c.b16 %v5236, %v5232
    %v5341 = vpack.c.b16 %v5237, %v5233
    %v5342 = vpack.c.b16 %v5242, %v5238
    %v5343 = vpack.c.b16 %v5243, %v5239
    %v5344 = vpack.c.b16 %v5244, %v5240
    %v5345 = vpack.c.b16 %v5245, %v5241
    %v5346 = vpack.c.b16 %v5250, %v5246
    %v5347 = vpack.c.b16 %v5251, %v5247
    %v5348 = vpack.c.b16 %v5252, %v5248
    %v5349 = vpack.c.b16 %v5253, %v5249
    %v5350 = vpack.c.b16 %v5258, %v5254
    %v5351 = vpack.c.b16 %v5259, %v5255
    %v5352 = vpack.c.b16 %v5260, %v5256
    %v5353 = vpack.c.b16 %v5261, %v5257
    %v5354 = vpack.c.b16 %v5266, %v5262
    %v5355 = vpack.c.b16 %v5267, %v5263
    %v5356 = vpack.c.b16 %v5268, %v5264
    %v5357 = vpack.c.b16 %v5269, %v5265
    %v5358 = vpack.c.b16 %v5274, %v5270
    %v5359 = vpack.c.b16 %v5275, %v5271
    %v5360 = vpack.c.b16 %v5276, %v5272
    %v5361 = vpack.c.b16 %v5277, %v5273
    %v5362 = vpack.c.b16 %v5282, %v5278
    %v5363 = vpack.c.b16 %v5283, %v5279
    %v5364 = vpack.c.b16 %v5284, %v5280
    %v5365 = vpack.c.b16 %v5285, %v5281
    %v5366 = vpack.c.b16 %v5290, %v5286
    %v5367 = vpack.c.b16 %v5291, %v5287
    %v5368 = vpack.c.b16 %v5292, %v5288
    %v5369 = vpack.c.b16 %v5293, %v5289
    %v5370 = vpack.c.b16 %v5298, %v5294
    %v5371 = vpack.c.b16 %v5299, %v5295
    %v5372 = vpack.c.b16 %v5300, %v5296
    %v5373 = vpack.c.b16 %v5301, %v5297
    %v5374 = vpack.c.b16 %v5306, %v5302
    %v5375 = vpack.c.b16 %v5307, %v5303
    %v5376 = vpack.c.b16 %v5308, %v5304
    %v5377 = vpack.c.b16 %v5309, %v5305
    %v5378 = vpack.c.b16 %v5314, %v5310
    %v5379 = vpack.c.b16 %v5315, %v5311
    %v5380 = vpack.c.b16 %v5316, %v5312
    %v5381 = vpack.c.b16 %v5317, %v5313
    %5446 = vmatprep.subr.bf16.mxu0 %v5347
    %5447 = vmatpush1.bf16.msra.mxu0 %v5346
    %5448 = vmatprep.subr.bf16.mxu0 %v5343
    %5449 = vmatpush1.bf16.msra.mxu0 %v5342
    %5450 = vmatprep.subr.bf16.mxu0 %v5339
    %5451 = vmatpush1.bf16.msra.mxu0 %v5338
    %5452 = vmatprep.subr.bf16.mxu0 %v5335
    %5453 = vmatpush1.bf16.msra.mxu0 %v5334
    %5454 = vmatprep.subr.bf16.mxu0 %v5331
    %5455 = vmatpush1.bf16.msra.mxu0 %v5330
    %5456 = vmatprep.subr.bf16.mxu0 %v5327
    %5457 = vmatpush1.bf16.msra.mxu0 %v5326
    %5458 = vmatprep.subr.bf16.mxu0 %v5323
    %5459 = vmatpush1.bf16.msra.mxu0 %v5322
    %5460 = vmatprep.subr.bf16.mxu0 %v5319
    %5461 = vmatpush1.bf16.msra.mxu0 %v5318
    %5462 = vmatprep.subr.bf16.mxu0 %v5379
    %5463 = vmatpush2.bf16.msra.mxu0 %v5378
    %5464 = vmatprep.subr.bf16.mxu0 %v5375
    %5465 = vmatpush2.bf16.msra.mxu0 %v5374
    %5466 = vmatprep.subr.bf16.mxu0 %v5371
    %5467 = vmatpush2.bf16.msra.mxu0 %v5370
    %5468 = vmatprep.subr.bf16.mxu0 %v5367
    %5469 = vmatpush2.bf16.msra.mxu0 %v5366
    %5470 = vmatprep.subr.bf16.mxu0 %v5363
    %5471 = vmatpush2.bf16.msra.mxu0 %v5362
    %5472 = vmatprep.subr.bf16.mxu0 %v5359
    %5473 = vmatpush2.bf16.msra.mxu0 %v5358
    %5474 = vmatprep.subr.bf16.mxu0 %v5355
    %5475 = vmatpush2.bf16.msra.mxu0 %v5354
    %5476 = vmatprep.subr.bf16.mxu0 %v5351
    %5477 = vmatpush2.bf16.msra.mxu0 %v5350
    %5478 = vmatprep.mubr.bf16.mxu0 %v5072
    %5479 = vmatmul.mubr.bf16.gmra.mxu0 %v5071
    %v5480 = vpop.f32.mrf.mxu0
    %v5481 = vadd.f32 %v5038, %v5480
    %v5482 = vpop.f32.mrf.mxu0
    %v5483 = vadd.f32 %v5042, %v5482
    %v5484 = vpop.f32.mrf.mxu0
    %v5485 = vadd.f32 %v5038, %v5484
    %v5486 = vpop.f32.mrf.mxu0
    %v5487 = vadd.f32 %v5042, %v5486
    %5488 = vmatprep.mubr.bf16.mxu0 %v5090
    %5489 = vmatmul.mubr.bf16.gmra.mxu0 %v5089
    %v5490 = vpop.f32.mrf.mxu0
    %v5491 = vadd.f32 %v5038, %v5490
    %v5492 = vpop.f32.mrf.mxu0
    %v5493 = vadd.f32 %v5042, %v5492
    %v5494 = vpop.f32.mrf.mxu0
    %v5495 = vadd.f32 %v5038, %v5494
    %v5496 = vpop.f32.mrf.mxu0
    %v5497 = vadd.f32 %v5042, %v5496
    %5498 = vmatprep.mubr.bf16.mxu0 %v5108
    %5499 = vmatmul.mubr.bf16.gmra.mxu0 %v5107
    %v5500 = vpop.f32.mrf.mxu0
    %v5501 = vadd.f32 %v5038, %v5500
    %v5502 = vpop.f32.mrf.mxu0
    %v5503 = vadd.f32 %v5042, %v5502
    %v5504 = vpop.f32.mrf.mxu0
    %v5505 = vadd.f32 %v5038, %v5504
    %v5506 = vpop.f32.mrf.mxu0
    %v5507 = vadd.f32 %v5042, %v5506
    %5508 = vmatprep.mubr.bf16.mxu0 %v5117
    %5509 = vmatmul.mubr.bf16.gmra.mxu0 %v5116
    %v5510 = vpop.f32.mrf.mxu0
    %v5511 = vadd.f32 %v5038, %v5510
    %v5512 = vpop.f32.mrf.mxu0
    %v5513 = vadd.f32 %v5042, %v5512
    %v5514 = vpop.f32.mrf.mxu0
    %v5515 = vpop.f32.mrf.mxu0
    %5516 = vdwg.mxu0
    %5517 = vmatprep.subr.bf16.mxu0 %v5349
    %5518 = vmatpush1.bf16.msra.mxu0 %v5348
    %5519 = vmatprep.subr.bf16.mxu0 %v5345
    %5520 = vmatpush1.bf16.msra.mxu0 %v5344
    %5521 = vmatprep.subr.bf16.mxu0 %v5341
    %5522 = vmatpush1.bf16.msra.mxu0 %v5340
    %5523 = vmatprep.subr.bf16.mxu0 %v5337
    %5524 = vmatpush1.bf16.msra.mxu0 %v5336
    %5525 = vmatprep.subr.bf16.mxu0 %v5333
    %5526 = vmatpush1.bf16.msra.mxu0 %v5332
    %5527 = vmatprep.subr.bf16.mxu0 %v5329
    %5528 = vmatpush1.bf16.msra.mxu0 %v5328
    %5529 = vmatprep.subr.bf16.mxu0 %v5325
    %5530 = vmatpush1.bf16.msra.mxu0 %v5324
    %5531 = vmatprep.subr.bf16.mxu0 %v5321
    %5532 = vmatpush1.bf16.msra.mxu0 %v5320
    %5533 = vmatprep.subr.bf16.mxu0 %v5381
    %5534 = vmatpush2.bf16.msra.mxu0 %v5380
    %5535 = vmatprep.subr.bf16.mxu0 %v5377
    %5536 = vmatpush2.bf16.msra.mxu0 %v5376
    %5537 = vmatprep.subr.bf16.mxu0 %v5373
    %5538 = vmatpush2.bf16.msra.mxu0 %v5372
    %5539 = vmatprep.subr.bf16.mxu0 %v5369
    %5540 = vmatpush2.bf16.msra.mxu0 %v5368
    %5541 = vmatprep.subr.bf16.mxu0 %v5365
    %5542 = vmatpush2.bf16.msra.mxu0 %v5364
    %5543 = vmatprep.subr.bf16.mxu0 %v5361
    %5544 = vmatpush2.bf16.msra.mxu0 %v5360
    %5545 = vmatprep.subr.bf16.mxu0 %v5357
    %5546 = vmatpush2.bf16.msra.mxu0 %v5356
    %5547 = vmatprep.subr.bf16.mxu0 %v5353
    %5548 = vmatpush2.bf16.msra.mxu0 %v5352
    %5549 = vmatprep.mubr.bf16.mxu0 %v5072
    %5550 = vmatmul.mubr.bf16.gmra.mxu0 %v5071
    %v5551 = vpop.f32.mrf.mxu0
    %v5552 = vadd.f32 %v5046, %v5551
    %v5553 = vpop.f32.mrf.mxu0
    %v5554 = vadd.f32 %v5050, %v5553
    %v5555 = vpop.f32.mrf.mxu0
    %v5556 = vadd.f32 %v5046, %v5555
    %v5557 = vpop.f32.mrf.mxu0
    %v5558 = vadd.f32 %v5050, %v5557
    %5559 = vmatprep.mubr.bf16.mxu0 %v5090
    %5560 = vmatmul.mubr.bf16.gmra.mxu0 %v5089
    %v5561 = vpop.f32.mrf.mxu0
    %v5562 = vadd.f32 %v5046, %v5561
    %v5563 = vpop.f32.mrf.mxu0
    %v5564 = vadd.f32 %v5050, %v5563
    %v5565 = vpop.f32.mrf.mxu0
    %v5566 = vadd.f32 %v5046, %v5565
    %v5567 = vpop.f32.mrf.mxu0
    %v5568 = vadd.f32 %v5050, %v5567
    %5569 = vmatprep.mubr.bf16.mxu0 %v5108
    %5570 = vmatmul.mubr.bf16.gmra.mxu0 %v5107
    %v5571 = vpop.f32.mrf.mxu0
    %v5572 = vadd.f32 %v5046, %v5571
    %v5573 = vpop.f32.mrf.mxu0
    %v5574 = vadd.f32 %v5050, %v5573
    %v5575 = vpop.f32.mrf.mxu0
    %v5576 = vadd.f32 %v5046, %v5575
    %v5577 = vpop.f32.mrf.mxu0
    %v5578 = vadd.f32 %v5050, %v5577
    %5579 = vmatprep.mubr.bf16.mxu0 %v5117
    %5580 = vmatmul.mubr.bf16.gmra.mxu0 %v5116
    %v5581 = vpop.f32.mrf.mxu0
    %v5582 = vadd.f32 %v5046, %v5581
    %v5583 = vpop.f32.mrf.mxu0
    %v5584 = vadd.f32 %v5050, %v5583
    %v5585 = vpop.f32.mrf.mxu0
    %v5586 = vpop.f32.mrf.mxu0
    %5587 = vdwg.mxu0
    %v5588 = vmax.f32 %v5481, 0.0
    %v5589 = vmax.f32 %v5483, 0.0
    %v5590 = vmax.f32 %v5552, 0.0
    %v5591 = vmax.f32 %v5554, 0.0
    %v5592 = vmax.f32 %v5485, 0.0
    %v5593 = vmax.f32 %v5487, 0.0
    %v5594 = vmax.f32 %v5556, 0.0
    %v5595 = vmax.f32 %v5558, 0.0
    %v5596 = vmax.f32 %v5491, 0.0
    %v5597 = vmax.f32 %v5493, 0.0
    %v5598 = vmax.f32 %v5562, 0.0
    %v5599 = vmax.f32 %v5564, 0.0
    %v5600 = vmax.f32 %v5495, 0.0
    %v5601 = vmax.f32 %v5497, 0.0
    %v5602 = vmax.f32 %v5566, 0.0
    %v5603 = vmax.f32 %v5568, 0.0
    %v5604 = vmax.f32 %v5501, 0.0
    %v5605 = vmax.f32 %v5503, 0.0
    %v5606 = vmax.f32 %v5572, 0.0
    %v5607 = vmax.f32 %v5574, 0.0
    %v5608 = vmax.f32 %v5505, 0.0
    %v5609 = vmax.f32 %v5507, 0.0
    %v5610 = vmax.f32 %v5576, 0.0
    %v5611 = vmax.f32 %v5578, 0.0
    %v5612 = vmax.f32 %v5511, 0.0
    %v5613 = vmax.f32 %v5513, 0.0
    %v5614 = vmax.f32 %v5582, 0.0
    %v5615 = vmax.f32 %v5584, 0.0
    %v5644 = vcombine.low %v5588, %v5589
    %v5645 = vcombine.high %v5588, %v5589
    %v5646 = vcombine.low %v5590, %v5591
    %v5647 = vcombine.high %v5590, %v5591
    %v5648 = vcombine.low %v5592, %v5593
    %v5649 = vcombine.high %v5592, %v5593
    %v5650 = vcombine.low %v5594, %v5595
    %v5651 = vcombine.high %v5594, %v5595
    %v5652 = vcombine.low %v5596, %v5597
    %v5653 = vcombine.high %v5596, %v5597
    %v5654 = vcombine.low %v5598, %v5599
    %v5655 = vcombine.high %v5598, %v5599
    %v5656 = vcombine.low %v5600, %v5601
    %v5657 = vcombine.high %v5600, %v5601
    %v5658 = vcombine.low %v5602, %v5603
    %v5659 = vcombine.high %v5602, %v5603
    %v5660 = vcombine.low %v5604, %v5605
    %v5661 = vcombine.high %v5604, %v5605
    %v5662 = vcombine.low %v5606, %v5607
    %v5663 = vcombine.high %v5606, %v5607
    %v5664 = vcombine.low %v5608, %v5609
    %v5665 = vcombine.high %v5608, %v5609
    %v5666 = vcombine.low %v5610, %v5611
    %v5667 = vcombine.high %v5610, %v5611
    %v5668 = vcombine.low %v5612, %v5613
    %v5669 = vcombine.high %v5612, %v5613
    %v5670 = vcombine.low %v5614, %v5615
    %v5671 = vcombine.high %v5614, %v5615
    %v5673 = vunpack.c.l.s4 1966171168
    %v5674 = vunpack.c.0.s8 %v5673
    %v5675 = vlaneseq
    %v5676 = vshrl.u32 %v5675, 7
    %v5677 = vsub.s32 %v5674, %v5676
    %v5678 = vrot.slane %v5644, %v5677
    %v5680 = vunpack.c.l.s4 1966171168
    %v5681 = vunpack.c.0.s8 %v5680
    %v5682 = vlaneseq
    %v5683 = vshrl.u32 %v5682, 7
    %v5684 = vsub.s32 %v5681, %v5683
    %v5685 = vrot.slane %v5646, %v5684
    %v5686 = vcombine.low %v5678, %v5685
    %v5687 = vcombine.high %v5678, %v5685
    %v5689 = vunpack.c.l.s4 1966171168
    %v5690 = vunpack.c.0.s8 %v5689
    %v5691 = vlaneseq
    %v5692 = vshrl.u32 %v5691, 7
    %v5693 = vsub.s32 %v5690, %v5692
    %v5694 = vrot.slane %v5686, %v5693
    %v5696 = vunpack.c.l.s4 1966171168
    %v5697 = vunpack.c.0.s8 %v5696
    %v5698 = vlaneseq
    %v5699 = vshrl.u32 %v5698, 7
    %v5700 = vsub.s32 %v5697, %v5699
    %v5701 = vrot.slane %v5687, %v5700
    %v5702 = vcombine.high %v5694, %v5694
    %v5703 = vcombine.high %v5701, %v5701
    %v5705 = vunpack.c.l.s4 1966171168
    %v5706 = vunpack.c.0.s8 %v5705
    %v5707 = vlaneseq
    %v5708 = vshrl.u32 %v5707, 7
    %v5709 = vsub.s32 %v5706, %v5708
    %v5710 = vrot.slane %v5645, %v5709
    %v5712 = vunpack.c.l.s4 1966171168
    %v5713 = vunpack.c.0.s8 %v5712
    %v5714 = vlaneseq
    %v5715 = vshrl.u32 %v5714, 7
    %v5716 = vsub.s32 %v5713, %v5715
    %v5717 = vrot.slane %v5647, %v5716
    %v5718 = vcombine.low %v5710, %v5717
    %v5719 = vcombine.high %v5710, %v5717
    %v5721 = vunpack.c.l.s4 1966171168
    %v5722 = vunpack.c.0.s8 %v5721
    %v5723 = vlaneseq
    %v5724 = vshrl.u32 %v5723, 7
    %v5725 = vsub.s32 %v5722, %v5724
    %v5726 = vrot.slane %v5718, %v5725
    %v5728 = vunpack.c.l.s4 1966171168
    %v5729 = vunpack.c.0.s8 %v5728
    %v5730 = vlaneseq
    %v5731 = vshrl.u32 %v5730, 7
    %v5732 = vsub.s32 %v5729, %v5731
    %v5733 = vrot.slane %v5719, %v5732
    %v5734 = vcombine.high %v5726, %v5726
    %v5735 = vcombine.high %v5733, %v5733
    %v5737 = vunpack.c.l.s4 1966171168
    %v5738 = vunpack.c.0.s8 %v5737
    %v5739 = vlaneseq
    %v5740 = vshrl.u32 %v5739, 7
    %v5741 = vsub.s32 %v5738, %v5740
    %v5742 = vrot.slane %v5648, %v5741
    %v5744 = vunpack.c.l.s4 1966171168
    %v5745 = vunpack.c.0.s8 %v5744
    %v5746 = vlaneseq
    %v5747 = vshrl.u32 %v5746, 7
    %v5748 = vsub.s32 %v5745, %v5747
    %v5749 = vrot.slane %v5650, %v5748
    %v5750 = vcombine.low %v5742, %v5749
    %v5751 = vcombine.high %v5742, %v5749
    %v5753 = vunpack.c.l.s4 1966171168
    %v5754 = vunpack.c.0.s8 %v5753
    %v5755 = vlaneseq
    %v5756 = vshrl.u32 %v5755, 7
    %v5757 = vsub.s32 %v5754, %v5756
    %v5758 = vrot.slane %v5750, %v5757
    %v5760 = vunpack.c.l.s4 1966171168
    %v5761 = vunpack.c.0.s8 %v5760
    %v5762 = vlaneseq
    %v5763 = vshrl.u32 %v5762, 7
    %v5764 = vsub.s32 %v5761, %v5763
    %v5765 = vrot.slane %v5751, %v5764
    %v5766 = vcombine.high %v5758, %v5758
    %v5767 = vcombine.high %v5765, %v5765
    %v5769 = vunpack.c.l.s4 1966171168
    %v5770 = vunpack.c.0.s8 %v5769
    %v5771 = vlaneseq
    %v5772 = vshrl.u32 %v5771, 7
    %v5773 = vsub.s32 %v5770, %v5772
    %v5774 = vrot.slane %v5649, %v5773
    %v5776 = vunpack.c.l.s4 1966171168
    %v5777 = vunpack.c.0.s8 %v5776
    %v5778 = vlaneseq
    %v5779 = vshrl.u32 %v5778, 7
    %v5780 = vsub.s32 %v5777, %v5779
    %v5781 = vrot.slane %v5651, %v5780
    %v5782 = vcombine.low %v5774, %v5781
    %v5783 = vcombine.high %v5774, %v5781
    %v5785 = vunpack.c.l.s4 1966171168
    %v5786 = vunpack.c.0.s8 %v5785
    %v5787 = vlaneseq
    %v5788 = vshrl.u32 %v5787, 7
    %v5789 = vsub.s32 %v5786, %v5788
    %v5790 = vrot.slane %v5782, %v5789
    %v5792 = vunpack.c.l.s4 1966171168
    %v5793 = vunpack.c.0.s8 %v5792
    %v5794 = vlaneseq
    %v5795 = vshrl.u32 %v5794, 7
    %v5796 = vsub.s32 %v5793, %v5795
    %v5797 = vrot.slane %v5783, %v5796
    %v5798 = vcombine.high %v5790, %v5790
    %v5799 = vcombine.high %v5797, %v5797
    %v5801 = vunpack.c.l.s4 1966171168
    %v5802 = vunpack.c.0.s8 %v5801
    %v5803 = vlaneseq
    %v5804 = vshrl.u32 %v5803, 7
    %v5805 = vsub.s32 %v5802, %v5804
    %v5806 = vrot.slane %v5652, %v5805
    %v5808 = vunpack.c.l.s4 1966171168
    %v5809 = vunpack.c.0.s8 %v5808
    %v5810 = vlaneseq
    %v5811 = vshrl.u32 %v5810, 7
    %v5812 = vsub.s32 %v5809, %v5811
    %v5813 = vrot.slane %v5654, %v5812
    %v5814 = vcombine.low %v5806, %v5813
    %v5815 = vcombine.high %v5806, %v5813
    %v5817 = vunpack.c.l.s4 1966171168
    %v5818 = vunpack.c.0.s8 %v5817
    %v5819 = vlaneseq
    %v5820 = vshrl.u32 %v5819, 7
    %v5821 = vsub.s32 %v5818, %v5820
    %v5822 = vrot.slane %v5814, %v5821
    %v5824 = vunpack.c.l.s4 1966171168
    %v5825 = vunpack.c.0.s8 %v5824
    %v5826 = vlaneseq
    %v5827 = vshrl.u32 %v5826, 7
    %v5828 = vsub.s32 %v5825, %v5827
    %v5829 = vrot.slane %v5815, %v5828
    %v5830 = vcombine.high %v5822, %v5822
    %v5831 = vcombine.high %v5829, %v5829
    %v5833 = vunpack.c.l.s4 1966171168
    %v5834 = vunpack.c.0.s8 %v5833
    %v5835 = vlaneseq
    %v5836 = vshrl.u32 %v5835, 7
    %v5837 = vsub.s32 %v5834, %v5836
    %v5838 = vrot.slane %v5653, %v5837
    %v5840 = vunpack.c.l.s4 1966171168
    %v5841 = vunpack.c.0.s8 %v5840
    %v5842 = vlaneseq
    %v5843 = vshrl.u32 %v5842, 7
    %v5844 = vsub.s32 %v5841, %v5843
    %v5845 = vrot.slane %v5655, %v5844
    %v5846 = vcombine.low %v5838, %v5845
    %v5847 = vcombine.high %v5838, %v5845
    %v5849 = vunpack.c.l.s4 1966171168
    %v5850 = vunpack.c.0.s8 %v5849
    %v5851 = vlaneseq
    %v5852 = vshrl.u32 %v5851, 7
    %v5853 = vsub.s32 %v5850, %v5852
    %v5854 = vrot.slane %v5846, %v5853
    %v5856 = vunpack.c.l.s4 1966171168
    %v5857 = vunpack.c.0.s8 %v5856
    %v5858 = vlaneseq
    %v5859 = vshrl.u32 %v5858, 7
    %v5860 = vsub.s32 %v5857, %v5859
    %v5861 = vrot.slane %v5847, %v5860
    %v5862 = vcombine.high %v5854, %v5854
    %v5863 = vcombine.high %v5861, %v5861
    %v5865 = vunpack.c.l.s4 1966171168
    %v5866 = vunpack.c.0.s8 %v5865
    %v5867 = vlaneseq
    %v5868 = vshrl.u32 %v5867, 7
    %v5869 = vsub.s32 %v5866, %v5868
    %v5870 = vrot.slane %v5656, %v5869
    %v5872 = vunpack.c.l.s4 1966171168
    %v5873 = vunpack.c.0.s8 %v5872
    %v5874 = vlaneseq
    %v5875 = vshrl.u32 %v5874, 7
    %v5876 = vsub.s32 %v5873, %v5875
    %v5877 = vrot.slane %v5658, %v5876
    %v5878 = vcombine.low %v5870, %v5877
    %v5879 = vcombine.high %v5870, %v5877
    %v5881 = vunpack.c.l.s4 1966171168
    %v5882 = vunpack.c.0.s8 %v5881
    %v5883 = vlaneseq
    %v5884 = vshrl.u32 %v5883, 7
    %v5885 = vsub.s32 %v5882, %v5884
    %v5886 = vrot.slane %v5878, %v5885
    %v5888 = vunpack.c.l.s4 1966171168
    %v5889 = vunpack.c.0.s8 %v5888
    %v5890 = vlaneseq
    %v5891 = vshrl.u32 %v5890, 7
    %v5892 = vsub.s32 %v5889, %v5891
    %v5893 = vrot.slane %v5879, %v5892
    %v5894 = vcombine.high %v5886, %v5886
    %v5896 = vunpack.c.l.s4 1966171168
    %v5897 = vunpack.c.0.s8 %v5896
    %v5898 = vlaneseq
    %v5899 = vshrl.u32 %v5898, 7
    %v5900 = vsub.s32 %v5897, %v5899
    %v5901 = vrot.slane %v5657, %v5900
    %v5903 = vunpack.c.l.s4 1966171168
    %v5904 = vunpack.c.0.s8 %v5903
    %v5905 = vlaneseq
    %v5906 = vshrl.u32 %v5905, 7
    %v5907 = vsub.s32 %v5904, %v5906
    %v5908 = vrot.slane %v5659, %v5907
    %v5909 = vcombine.low %v5901, %v5908
    %v5910 = vcombine.high %v5901, %v5908
    %v5912 = vunpack.c.l.s4 1966171168
    %v5913 = vunpack.c.0.s8 %v5912
    %v5914 = vlaneseq
    %v5915 = vshrl.u32 %v5914, 7
    %v5916 = vsub.s32 %v5913, %v5915
    %v5917 = vrot.slane %v5909, %v5916
    %v5919 = vunpack.c.l.s4 1966171168
    %v5920 = vunpack.c.0.s8 %v5919
    %v5921 = vlaneseq
    %v5922 = vshrl.u32 %v5921, 7
    %v5923 = vsub.s32 %v5920, %v5922
    %v5924 = vrot.slane %v5910, %v5923
    %v5925 = vcombine.high %v5917, %v5917
    %v5926 = vcombine.high %v5924, %v5924
    %v5928 = vunpack.c.l.s4 1966171168
    %v5929 = vunpack.c.0.s8 %v5928
    %v5930 = vlaneseq
    %v5931 = vshrl.u32 %v5930, 7
    %v5932 = vsub.s32 %v5929, %v5931
    %v5933 = vrot.slane %v5660, %v5932
    %v5935 = vunpack.c.l.s4 1966171168
    %v5936 = vunpack.c.0.s8 %v5935
    %v5937 = vlaneseq
    %v5938 = vshrl.u32 %v5937, 7
    %v5939 = vsub.s32 %v5936, %v5938
    %v5940 = vrot.slane %v5662, %v5939
    %v5941 = vcombine.low %v5933, %v5940
    %v5942 = vcombine.high %v5933, %v5940
    %v5944 = vunpack.c.l.s4 1966171168
    %v5945 = vunpack.c.0.s8 %v5944
    %v5946 = vlaneseq
    %v5947 = vshrl.u32 %v5946, 7
    %v5948 = vsub.s32 %v5945, %v5947
    %v5949 = vrot.slane %v5941, %v5948
    %v5951 = vunpack.c.l.s4 1966171168
    %v5952 = vunpack.c.0.s8 %v5951
    %v5953 = vlaneseq
    %v5954 = vshrl.u32 %v5953, 7
    %v5955 = vsub.s32 %v5952, %v5954
    %v5956 = vrot.slane %v5942, %v5955
    %v5957 = vcombine.high %v5949, %v5949
    %v5958 = vcombine.high %v5956, %v5956
    %v5960 = vunpack.c.l.s4 1966171168
    %v5961 = vunpack.c.0.s8 %v5960
    %v5962 = vlaneseq
    %v5963 = vshrl.u32 %v5962, 7
    %v5964 = vsub.s32 %v5961, %v5963
    %v5965 = vrot.slane %v5661, %v5964
    %v5967 = vunpack.c.l.s4 1966171168
    %v5968 = vunpack.c.0.s8 %v5967
    %v5969 = vlaneseq
    %v5970 = vshrl.u32 %v5969, 7
    %v5971 = vsub.s32 %v5968, %v5970
    %v5972 = vrot.slane %v5663, %v5971
    %v5973 = vcombine.low %v5965, %v5972
    %v5974 = vcombine.high %v5965, %v5972
    %v5976 = vunpack.c.l.s4 1966171168
    %v5977 = vunpack.c.0.s8 %v5976
    %v5978 = vlaneseq
    %v5979 = vshrl.u32 %v5978, 7
    %v5980 = vsub.s32 %v5977, %v5979
    %v5981 = vrot.slane %v5973, %v5980
    %v5983 = vunpack.c.l.s4 1966171168
    %v5984 = vunpack.c.0.s8 %v5983
    %v5985 = vlaneseq
    %v5986 = vshrl.u32 %v5985, 7
    %v5987 = vsub.s32 %v5984, %v5986
    %v5988 = vrot.slane %v5974, %v5987
    %v5989 = vcombine.high %v5981, %v5981
    %v5990 = vcombine.high %v5988, %v5988
    %v5992 = vunpack.c.l.s4 1966171168
    %v5993 = vunpack.c.0.s8 %v5992
    %v5994 = vlaneseq
    %v5995 = vshrl.u32 %v5994, 7
    %v5996 = vsub.s32 %v5993, %v5995
    %v5997 = vrot.slane %v5664, %v5996
    %v5999 = vunpack.c.l.s4 1966171168
    %v6000 = vunpack.c.0.s8 %v5999
    %v6001 = vlaneseq
    %v6002 = vshrl.u32 %v6001, 7
    %v6003 = vsub.s32 %v6000, %v6002
    %v6004 = vrot.slane %v5666, %v6003
    %v6005 = vcombine.low %v5997, %v6004
    %v6006 = vcombine.high %v5997, %v6004
    %v6008 = vunpack.c.l.s4 1966171168
    %v6009 = vunpack.c.0.s8 %v6008
    %v6010 = vlaneseq
    %v6011 = vshrl.u32 %v6010, 7
    %v6012 = vsub.s32 %v6009, %v6011
    %v6013 = vrot.slane %v6005, %v6012
    %v6015 = vunpack.c.l.s4 1966171168
    %v6016 = vunpack.c.0.s8 %v6015
    %v6017 = vlaneseq
    %v6018 = vshrl.u32 %v6017, 7
    %v6019 = vsub.s32 %v6016, %v6018
    %v6020 = vrot.slane %v6006, %v6019
    %v6021 = vcombine.high %v6013, %v6013
    %v6022 = vcombine.high %v6020, %v6020
    %v6024 = vunpack.c.l.s4 1966171168
    %v6025 = vunpack.c.0.s8 %v6024
    %v6026 = vlaneseq
    %v6027 = vshrl.u32 %v6026, 7
    %v6028 = vsub.s32 %v6025, %v6027
    %v6029 = vrot.slane %v5665, %v6028
    %v6031 = vunpack.c.l.s4 1966171168
    %v6032 = vunpack.c.0.s8 %v6031
    %v6033 = vlaneseq
    %v6034 = vshrl.u32 %v6033, 7
    %v6035 = vsub.s32 %v6032, %v6034
    %v6036 = vrot.slane %v5667, %v6035
    %v6037 = vcombine.low %v6029, %v6036
    %v6038 = vcombine.high %v6029, %v6036
    %v6040 = vunpack.c.l.s4 1966171168
    %v6041 = vunpack.c.0.s8 %v6040
    %v6042 = vlaneseq
    %v6043 = vshrl.u32 %v6042, 7
    %v6044 = vsub.s32 %v6041, %v6043
    %v6045 = vrot.slane %v6037, %v6044
    %v6047 = vunpack.c.l.s4 1966171168
    %v6048 = vunpack.c.0.s8 %v6047
    %v6049 = vlaneseq
    %v6050 = vshrl.u32 %v6049, 7
    %v6051 = vsub.s32 %v6048, %v6050
    %v6052 = vrot.slane %v6038, %v6051
    %v6053 = vcombine.high %v6045, %v6045
    %v6054 = vcombine.high %v6052, %v6052
    %v6056 = vunpack.c.l.s4 1966171168
    %v6057 = vunpack.c.0.s8 %v6056
    %v6058 = vlaneseq
    %v6059 = vshrl.u32 %v6058, 7
    %v6060 = vsub.s32 %v6057, %v6059
    %v6061 = vrot.slane %v5668, %v6060
    %v6063 = vunpack.c.l.s4 1966171168
    %v6064 = vunpack.c.0.s8 %v6063
    %v6065 = vlaneseq
    %v6066 = vshrl.u32 %v6065, 7
    %v6067 = vsub.s32 %v6064, %v6066
    %v6068 = vrot.slane %v5670, %v6067
    %v6069 = vcombine.low %v6061, %v6068
    %v6070 = vcombine.high %v6061, %v6068
    %v6072 = vunpack.c.l.s4 1966171168
    %v6073 = vunpack.c.0.s8 %v6072
    %v6074 = vlaneseq
    %v6075 = vshrl.u32 %v6074, 7
    %v6076 = vsub.s32 %v6073, %v6075
    %v6077 = vrot.slane %v6069, %v6076
    %v6079 = vunpack.c.l.s4 1966171168
    %v6080 = vunpack.c.0.s8 %v6079
    %v6081 = vlaneseq
    %v6082 = vshrl.u32 %v6081, 7
    %v6083 = vsub.s32 %v6080, %v6082
    %v6084 = vrot.slane %v6070, %v6083
    %v6085 = vcombine.high %v6077, %v6077
    %v6086 = vcombine.high %v6084, %v6084
    %v6088 = vunpack.c.l.s4 1966171168
    %v6089 = vunpack.c.0.s8 %v6088
    %v6090 = vlaneseq
    %v6091 = vshrl.u32 %v6090, 7
    %v6092 = vsub.s32 %v6089, %v6091
    %v6093 = vrot.slane %v5669, %v6092
    %v6095 = vunpack.c.l.s4 1966171168
    %v6096 = vunpack.c.0.s8 %v6095
    %v6097 = vlaneseq
    %v6098 = vshrl.u32 %v6097, 7
    %v6099 = vsub.s32 %v6096, %v6098
    %v6100 = vrot.slane %v5671, %v6099
    %v6101 = vcombine.low %v6093, %v6100
    %v6102 = vcombine.high %v6093, %v6100
    %v6104 = vunpack.c.l.s4 1966171168
    %v6105 = vunpack.c.0.s8 %v6104
    %v6106 = vlaneseq
    %v6107 = vshrl.u32 %v6106, 7
    %v6108 = vsub.s32 %v6105, %v6107
    %v6109 = vrot.slane %v6101, %v6108
    %v6111 = vunpack.c.l.s4 1966171168
    %v6112 = vunpack.c.0.s8 %v6111
    %v6113 = vlaneseq
    %v6114 = vshrl.u32 %v6113, 7
    %v6115 = vsub.s32 %v6112, %v6114
    %v6116 = vrot.slane %v6102, %v6115
    %v6117 = vcombine.high %v6109, %v6109
    %v6118 = vcombine.low %v5694, %v5701
    %v6120 = vunpack.c.l.s4 1966171168
    %v6121 = vunpack.c.0.s8 %v6120
    %v6122 = vlaneseq
    %v6123 = vshrl.u32 %v6122, 7
    %v6124 = vsub.s32 %v6121, %v6123
    %v6125 = vrot.slane %v6118, %v6124
    %v6127 = vunpack.c.l.s4 1966171168
    %v6128 = vunpack.c.0.s8 %v6127
    %v6129 = vlaneseq
    %v6130 = vshrl.u32 %v6129, 7
    %v6131 = vsub.s32 %v6128, %v6130
    %v6132 = vrot.slane %v5702, %v6131
    %v6133 = vcombine.low %v6125, %v6132
    %v6134 = vcombine.high %v6125, %v6132
    %v6136 = vunpack.c.l.s4 1966171168
    %v6137 = vunpack.c.0.s8 %v6136
    %v6138 = vlaneseq
    %v6139 = vshrl.u32 %v6138, 7
    %v6140 = vsub.s32 %v6137, %v6139
    %v6141 = vrot.slane %v6133, %v6140
    %v6143 = vunpack.c.l.s4 1966171168
    %v6144 = vunpack.c.0.s8 %v6143
    %v6145 = vlaneseq
    %v6146 = vshrl.u32 %v6145, 7
    %v6147 = vsub.s32 %v6144, %v6146
    %v6148 = vrot.slane %v6134, %v6147
    %v6149 = vcombine.high %v6141, %v6141
    %v6150 = vcombine.high %v6148, %v6148
    %v6151 = vcombine.low %v5703, %v5726
    %v6153 = vunpack.c.l.s4 1966171168
    %v6154 = vunpack.c.0.s8 %v6153
    %v6155 = vlaneseq
    %v6156 = vshrl.u32 %v6155, 7
    %v6157 = vsub.s32 %v6154, %v6156
    %v6158 = vrot.slane %v6151, %v6157
    %v6160 = vunpack.c.l.s4 1966171168
    %v6161 = vunpack.c.0.s8 %v6160
    %v6162 = vlaneseq
    %v6163 = vshrl.u32 %v6162, 7
    %v6164 = vsub.s32 %v6161, %v6163
    %v6165 = vrot.slane %v5733, %v6164
    %v6166 = vcombine.low %v6158, %v6165
    %v6167 = vcombine.high %v6158, %v6165
    %v6169 = vunpack.c.l.s4 1966171168
    %v6170 = vunpack.c.0.s8 %v6169
    %v6171 = vlaneseq
    %v6172 = vshrl.u32 %v6171, 7
    %v6173 = vsub.s32 %v6170, %v6172
    %v6174 = vrot.slane %v6166, %v6173
    %v6176 = vunpack.c.l.s4 1966171168
    %v6177 = vunpack.c.0.s8 %v6176
    %v6178 = vlaneseq
    %v6179 = vshrl.u32 %v6178, 7
    %v6180 = vsub.s32 %v6177, %v6179
    %v6181 = vrot.slane %v6167, %v6180
    %v6182 = vcombine.high %v6174, %v6174
    %v6183 = vcombine.high %v6181, %v6181
    %v6184 = vcombine.low %v5734, %v5735
    %v6186 = vunpack.c.l.s4 1966171168
    %v6187 = vunpack.c.0.s8 %v6186
    %v6188 = vlaneseq
    %v6189 = vshrl.u32 %v6188, 7
    %v6190 = vsub.s32 %v6187, %v6189
    %v6191 = vrot.slane %v6184, %v6190
    %v6193 = vunpack.c.l.s4 1966171168
    %v6194 = vunpack.c.0.s8 %v6193
    %v6195 = vlaneseq
    %v6196 = vshrl.u32 %v6195, 7
    %v6197 = vsub.s32 %v6194, %v6196
    %v6198 = vrot.slane %v5758, %v6197
    %v6199 = vcombine.low %v6191, %v6198
    %v6200 = vcombine.high %v6191, %v6198
    %v6202 = vunpack.c.l.s4 1966171168
    %v6203 = vunpack.c.0.s8 %v6202
    %v6204 = vlaneseq
    %v6205 = vshrl.u32 %v6204, 7
    %v6206 = vsub.s32 %v6203, %v6205
    %v6207 = vrot.slane %v6199, %v6206
    %v6209 = vunpack.c.l.s4 1966171168
    %v6210 = vunpack.c.0.s8 %v6209
    %v6211 = vlaneseq
    %v6212 = vshrl.u32 %v6211, 7
    %v6213 = vsub.s32 %v6210, %v6212
    %v6214 = vrot.slane %v6200, %v6213
    %v6215 = vcombine.high %v6207, %v6207
    %v6216 = vcombine.high %v6214, %v6214
    %v6217 = vcombine.low %v5765, %v5766
    %v6219 = vunpack.c.l.s4 1966171168
    %v6220 = vunpack.c.0.s8 %v6219
    %v6221 = vlaneseq
    %v6222 = vshrl.u32 %v6221, 7
    %v6223 = vsub.s32 %v6220, %v6222
    %v6224 = vrot.slane %v6217, %v6223
    %v6226 = vunpack.c.l.s4 1966171168
    %v6227 = vunpack.c.0.s8 %v6226
    %v6228 = vlaneseq
    %v6229 = vshrl.u32 %v6228, 7
    %v6230 = vsub.s32 %v6227, %v6229
    %v6231 = vrot.slane %v5767, %v6230
    %v6232 = vcombine.low %v6224, %v6231
    %v6233 = vcombine.high %v6224, %v6231
    %v6235 = vunpack.c.l.s4 1966171168
    %v6236 = vunpack.c.0.s8 %v6235
    %v6237 = vlaneseq
    %v6238 = vshrl.u32 %v6237, 7
    %v6239 = vsub.s32 %v6236, %v6238
    %v6240 = vrot.slane %v6232, %v6239
    %v6242 = vunpack.c.l.s4 1966171168
    %v6243 = vunpack.c.0.s8 %v6242
    %v6244 = vlaneseq
    %v6245 = vshrl.u32 %v6244, 7
    %v6246 = vsub.s32 %v6243, %v6245
    %v6247 = vrot.slane %v6233, %v6246
    %v6248 = vcombine.high %v6240, %v6240
    %v6249 = vcombine.high %v6247, %v6247
    %v6250 = vcombine.low %v5790, %v5797
    %v6252 = vunpack.c.l.s4 1966171168
    %v6253 = vunpack.c.0.s8 %v6252
    %v6254 = vlaneseq
    %v6255 = vshrl.u32 %v6254, 7
    %v6256 = vsub.s32 %v6253, %v6255
    %v6257 = vrot.slane %v6250, %v6256
    %v6259 = vunpack.c.l.s4 1966171168
    %v6260 = vunpack.c.0.s8 %v6259
    %v6261 = vlaneseq
    %v6262 = vshrl.u32 %v6261, 7
    %v6263 = vsub.s32 %v6260, %v6262
    %v6264 = vrot.slane %v5798, %v6263
    %v6265 = vcombine.low %v6257, %v6264
    %v6266 = vcombine.high %v6257, %v6264
    %v6268 = vunpack.c.l.s4 1966171168
    %v6269 = vunpack.c.0.s8 %v6268
    %v6270 = vlaneseq
    %v6271 = vshrl.u32 %v6270, 7
    %v6272 = vsub.s32 %v6269, %v6271
    %v6273 = vrot.slane %v6265, %v6272
    %v6275 = vunpack.c.l.s4 1966171168
    %v6276 = vunpack.c.0.s8 %v6275
    %v6277 = vlaneseq
    %v6278 = vshrl.u32 %v6277, 7
    %v6279 = vsub.s32 %v6276, %v6278
    %v6280 = vrot.slane %v6266, %v6279
    %v6281 = vcombine.high %v6273, %v6273
    %v6282 = vcombine.high %v6280, %v6280
    %v6283 = vcombine.low %v5799, %v5822
    %v6285 = vunpack.c.l.s4 1966171168
    %v6286 = vunpack.c.0.s8 %v6285
    %v6287 = vlaneseq
    %v6288 = vshrl.u32 %v6287, 7
    %v6289 = vsub.s32 %v6286, %v6288
    %v6290 = vrot.slane %v6283, %v6289
    %v6292 = vunpack.c.l.s4 1966171168
    %v6293 = vunpack.c.0.s8 %v6292
    %v6294 = vlaneseq
    %v6295 = vshrl.u32 %v6294, 7
    %v6296 = vsub.s32 %v6293, %v6295
    %v6297 = vrot.slane %v5829, %v6296
    %v6298 = vcombine.low %v6290, %v6297
    %v6299 = vcombine.high %v6290, %v6297
    %v6301 = vunpack.c.l.s4 1966171168
    %v6302 = vunpack.c.0.s8 %v6301
    %v6303 = vlaneseq
    %v6304 = vshrl.u32 %v6303, 7
    %v6305 = vsub.s32 %v6302, %v6304
    %v6306 = vrot.slane %v6298, %v6305
    %v6308 = vunpack.c.l.s4 1966171168
    %v6309 = vunpack.c.0.s8 %v6308
    %v6310 = vlaneseq
    %v6311 = vshrl.u32 %v6310, 7
    %v6312 = vsub.s32 %v6309, %v6311
    %v6313 = vrot.slane %v6299, %v6312
    %v6314 = vcombine.high %v6306, %v6306
    %v6315 = vcombine.high %v6313, %v6313
    %v6316 = vcombine.low %v5830, %v5831
    %v6318 = vunpack.c.l.s4 1966171168
    %v6319 = vunpack.c.0.s8 %v6318
    %v6320 = vlaneseq
    %v6321 = vshrl.u32 %v6320, 7
    %v6322 = vsub.s32 %v6319, %v6321
    %v6323 = vrot.slane %v6316, %v6322
    %v6325 = vunpack.c.l.s4 1966171168
    %v6326 = vunpack.c.0.s8 %v6325
    %v6327 = vlaneseq
    %v6328 = vshrl.u32 %v6327, 7
    %v6329 = vsub.s32 %v6326, %v6328
    %v6330 = vrot.slane %v5854, %v6329
    %v6331 = vcombine.low %v6323, %v6330
    %v6332 = vcombine.high %v6323, %v6330
    %v6334 = vunpack.c.l.s4 1966171168
    %v6335 = vunpack.c.0.s8 %v6334
    %v6336 = vlaneseq
    %v6337 = vshrl.u32 %v6336, 7
    %v6338 = vsub.s32 %v6335, %v6337
    %v6339 = vrot.slane %v6331, %v6338
    %v6341 = vunpack.c.l.s4 1966171168
    %v6342 = vunpack.c.0.s8 %v6341
    %v6343 = vlaneseq
    %v6344 = vshrl.u32 %v6343, 7
    %v6345 = vsub.s32 %v6342, %v6344
    %v6346 = vrot.slane %v6332, %v6345
    %v6347 = vcombine.high %v6339, %v6339
    %v6348 = vcombine.high %v6346, %v6346
    %v6349 = vcombine.low %v5861, %v5862
    %v6351 = vunpack.c.l.s4 1966171168
    %v6352 = vunpack.c.0.s8 %v6351
    %v6353 = vlaneseq
    %v6354 = vshrl.u32 %v6353, 7
    %v6355 = vsub.s32 %v6352, %v6354
    %v6356 = vrot.slane %v6349, %v6355
    %v6358 = vunpack.c.l.s4 1966171168
    %v6359 = vunpack.c.0.s8 %v6358
    %v6360 = vlaneseq
    %v6361 = vshrl.u32 %v6360, 7
    %v6362 = vsub.s32 %v6359, %v6361
    %v6363 = vrot.slane %v5863, %v6362
    %v6364 = vcombine.low %v6356, %v6363
    %v6365 = vcombine.high %v6356, %v6363
    %v6367 = vunpack.c.l.s4 1966171168
    %v6368 = vunpack.c.0.s8 %v6367
    %v6369 = vlaneseq
    %v6370 = vshrl.u32 %v6369, 7
    %v6371 = vsub.s32 %v6368, %v6370
    %v6372 = vrot.slane %v6364, %v6371
    %v6374 = vunpack.c.l.s4 1966171168
    %v6375 = vunpack.c.0.s8 %v6374
    %v6376 = vlaneseq
    %v6377 = vshrl.u32 %v6376, 7
    %v6378 = vsub.s32 %v6375, %v6377
    %v6379 = vrot.slane %v6365, %v6378
    %v6380 = vcombine.high %v6372, %v6372
    %v6381 = vcombine.high %v6379, %v6379
    %v6382 = vcombine.low %v5886, %v5893
    %v6384 = vunpack.c.l.s4 1966171168
    %v6385 = vunpack.c.0.s8 %v6384
    %v6386 = vlaneseq
    %v6387 = vshrl.u32 %v6386, 7
    %v6388 = vsub.s32 %v6385, %v6387
    %v6389 = vrot.slane %v6382, %v6388
    %v6391 = vunpack.c.l.s4 1966171168
    %v6392 = vunpack.c.0.s8 %v6391
    %v6393 = vlaneseq
    %v6394 = vshrl.u32 %v6393, 7
    %v6395 = vsub.s32 %v6392, %v6394
    %v6396 = vrot.slane %v5894, %v6395
    %v6397 = vcombine.low %v6389, %v6396
    %v6398 = vcombine.high %v6389, %v6396
    %v6400 = vunpack.c.l.s4 1966171168
    %v6401 = vunpack.c.0.s8 %v6400
    %v6402 = vlaneseq
    %v6403 = vshrl.u32 %v6402, 7
    %v6404 = vsub.s32 %v6401, %v6403
    %v6405 = vrot.slane %v6397, %v6404
    %v6407 = vunpack.c.l.s4 1966171168
    %v6408 = vunpack.c.0.s8 %v6407
    %v6409 = vlaneseq
    %v6410 = vshrl.u32 %v6409, 7
    %v6411 = vsub.s32 %v6408, %v6410
    %v6412 = vrot.slane %v6398, %v6411
    %v6413 = vcombine.high %v6405, %v6405
    %v6414 = vcombine.high %v6412, %v6412
    %v6415 = vcombine.low %v5917, %v5924
    %v6417 = vunpack.c.l.s4 1966171168
    %v6418 = vunpack.c.0.s8 %v6417
    %v6419 = vlaneseq
    %v6420 = vshrl.u32 %v6419, 7
    %v6421 = vsub.s32 %v6418, %v6420
    %v6422 = vrot.slane %v6415, %v6421
    %v6424 = vunpack.c.l.s4 1966171168
    %v6425 = vunpack.c.0.s8 %v6424
    %v6426 = vlaneseq
    %v6427 = vshrl.u32 %v6426, 7
    %v6428 = vsub.s32 %v6425, %v6427
    %v6429 = vrot.slane %v5925, %v6428
    %v6430 = vcombine.low %v6422, %v6429
    %v6431 = vcombine.high %v6422, %v6429
    %v6433 = vunpack.c.l.s4 1966171168
    %v6434 = vunpack.c.0.s8 %v6433
    %v6435 = vlaneseq
    %v6436 = vshrl.u32 %v6435, 7
    %v6437 = vsub.s32 %v6434, %v6436
    %v6438 = vrot.slane %v6430, %v6437
    %v6440 = vunpack.c.l.s4 1966171168
    %v6441 = vunpack.c.0.s8 %v6440
    %v6442 = vlaneseq
    %v6443 = vshrl.u32 %v6442, 7
    %v6444 = vsub.s32 %v6441, %v6443
    %v6445 = vrot.slane %v6431, %v6444
    %v6446 = vcombine.high %v6438, %v6438
    %v6447 = vcombine.high %v6445, %v6445
    %v6448 = vcombine.low %v5926, %v5949
    %v6450 = vunpack.c.l.s4 1966171168
    %v6451 = vunpack.c.0.s8 %v6450
    %v6452 = vlaneseq
    %v6453 = vshrl.u32 %v6452, 7
    %v6454 = vsub.s32 %v6451, %v6453
    %v6455 = vrot.slane %v6448, %v6454
    %v6457 = vunpack.c.l.s4 1966171168
    %v6458 = vunpack.c.0.s8 %v6457
    %v6459 = vlaneseq
    %v6460 = vshrl.u32 %v6459, 7
    %v6461 = vsub.s32 %v6458, %v6460
    %v6462 = vrot.slane %v5956, %v6461
    %v6463 = vcombine.low %v6455, %v6462
    %v6464 = vcombine.high %v6455, %v6462
    %v6466 = vunpack.c.l.s4 1966171168
    %v6467 = vunpack.c.0.s8 %v6466
    %v6468 = vlaneseq
    %v6469 = vshrl.u32 %v6468, 7
    %v6470 = vsub.s32 %v6467, %v6469
    %v6471 = vrot.slane %v6463, %v6470
    %v6473 = vunpack.c.l.s4 1966171168
    %v6474 = vunpack.c.0.s8 %v6473
    %v6475 = vlaneseq
    %v6476 = vshrl.u32 %v6475, 7
    %v6477 = vsub.s32 %v6474, %v6476
    %v6478 = vrot.slane %v6464, %v6477
    %v6479 = vcombine.high %v6471, %v6471
    %v6480 = vcombine.high %v6478, %v6478
    %v6481 = vcombine.low %v5957, %v5958
    %v6483 = vunpack.c.l.s4 1966171168
    %v6484 = vunpack.c.0.s8 %v6483
    %v6485 = vlaneseq
    %v6486 = vshrl.u32 %v6485, 7
    %v6487 = vsub.s32 %v6484, %v6486
    %v6488 = vrot.slane %v6481, %v6487
    %v6490 = vunpack.c.l.s4 1966171168
    %v6491 = vunpack.c.0.s8 %v6490
    %v6492 = vlaneseq
    %v6493 = vshrl.u32 %v6492, 7
    %v6494 = vsub.s32 %v6491, %v6493
    %v6495 = vrot.slane %v5981, %v6494
    %v6496 = vcombine.low %v6488, %v6495
    %v6497 = vcombine.high %v6488, %v6495
    %v6499 = vunpack.c.l.s4 1966171168
    %v6500 = vunpack.c.0.s8 %v6499
    %v6501 = vlaneseq
    %v6502 = vshrl.u32 %v6501, 7
    %v6503 = vsub.s32 %v6500, %v6502
    %v6504 = vrot.slane %v6496, %v6503
    %v6506 = vunpack.c.l.s4 1966171168
    %v6507 = vunpack.c.0.s8 %v6506
    %v6508 = vlaneseq
    %v6509 = vshrl.u32 %v6508, 7
    %v6510 = vsub.s32 %v6507, %v6509
    %v6511 = vrot.slane %v6497, %v6510
    %v6512 = vcombine.high %v6504, %v6504
    %v6513 = vcombine.high %v6511, %v6511
    %v6514 = vcombine.low %v5988, %v5989
    %v6516 = vunpack.c.l.s4 1966171168
    %v6517 = vunpack.c.0.s8 %v6516
    %v6518 = vlaneseq
    %v6519 = vshrl.u32 %v6518, 7
    %v6520 = vsub.s32 %v6517, %v6519
    %v6521 = vrot.slane %v6514, %v6520
    %v6523 = vunpack.c.l.s4 1966171168
    %v6524 = vunpack.c.0.s8 %v6523
    %v6525 = vlaneseq
    %v6526 = vshrl.u32 %v6525, 7
    %v6527 = vsub.s32 %v6524, %v6526
    %v6528 = vrot.slane %v5990, %v6527
    %v6529 = vcombine.low %v6521, %v6528
    %v6530 = vcombine.high %v6521, %v6528
    %v6532 = vunpack.c.l.s4 1966171168
    %v6533 = vunpack.c.0.s8 %v6532
    %v6534 = vlaneseq
    %v6535 = vshrl.u32 %v6534, 7
    %v6536 = vsub.s32 %v6533, %v6535
    %v6537 = vrot.slane %v6529, %v6536
    %v6539 = vunpack.c.l.s4 1966171168
    %v6540 = vunpack.c.0.s8 %v6539
    %v6541 = vlaneseq
    %v6542 = vshrl.u32 %v6541, 7
    %v6543 = vsub.s32 %v6540, %v6542
    %v6544 = vrot.slane %v6530, %v6543
    %v6545 = vcombine.high %v6537, %v6537
    %v6546 = vcombine.high %v6544, %v6544
    %v6547 = vcombine.low %v6013, %v6020
    %v6549 = vunpack.c.l.s4 1966171168
    %v6550 = vunpack.c.0.s8 %v6549
    %v6551 = vlaneseq
    %v6552 = vshrl.u32 %v6551, 7
    %v6553 = vsub.s32 %v6550, %v6552
    %v6554 = vrot.slane %v6547, %v6553
    %v6556 = vunpack.c.l.s4 1966171168
    %v6557 = vunpack.c.0.s8 %v6556
    %v6558 = vlaneseq
    %v6559 = vshrl.u32 %v6558, 7
    %v6560 = vsub.s32 %v6557, %v6559
    %v6561 = vrot.slane %v6021, %v6560
    %v6562 = vcombine.low %v6554, %v6561
    %v6563 = vcombine.high %v6554, %v6561
    %v6565 = vunpack.c.l.s4 1966171168
    %v6566 = vunpack.c.0.s8 %v6565
    %v6567 = vlaneseq
    %v6568 = vshrl.u32 %v6567, 7
    %v6569 = vsub.s32 %v6566, %v6568
    %v6570 = vrot.slane %v6562, %v6569
    %v6572 = vunpack.c.l.s4 1966171168
    %v6573 = vunpack.c.0.s8 %v6572
    %v6574 = vlaneseq
    %v6575 = vshrl.u32 %v6574, 7
    %v6576 = vsub.s32 %v6573, %v6575
    %v6577 = vrot.slane %v6563, %v6576
    %v6578 = vcombine.high %v6570, %v6570
    %v6579 = vcombine.high %v6577, %v6577
    %v6580 = vcombine.low %v6022, %v6045
    %v6582 = vunpack.c.l.s4 1966171168
    %v6583 = vunpack.c.0.s8 %v6582
    %v6584 = vlaneseq
    %v6585 = vshrl.u32 %v6584, 7
    %v6586 = vsub.s32 %v6583, %v6585
    %v6587 = vrot.slane %v6580, %v6586
    %v6589 = vunpack.c.l.s4 1966171168
    %v6590 = vunpack.c.0.s8 %v6589
    %v6591 = vlaneseq
    %v6592 = vshrl.u32 %v6591, 7
    %v6593 = vsub.s32 %v6590, %v6592
    %v6594 = vrot.slane %v6052, %v6593
    %v6595 = vcombine.low %v6587, %v6594
    %v6596 = vcombine.high %v6587, %v6594
    %v6598 = vunpack.c.l.s4 1966171168
    %v6599 = vunpack.c.0.s8 %v6598
    %v6600 = vlaneseq
    %v6601 = vshrl.u32 %v6600, 7
    %v6602 = vsub.s32 %v6599, %v6601
    %v6603 = vrot.slane %v6595, %v6602
    %v6605 = vunpack.c.l.s4 1966171168
    %v6606 = vunpack.c.0.s8 %v6605
    %v6607 = vlaneseq
    %v6608 = vshrl.u32 %v6607, 7
    %v6609 = vsub.s32 %v6606, %v6608
    %v6610 = vrot.slane %v6596, %v6609
    %v6611 = vcombine.high %v6603, %v6603
    %v6612 = vcombine.high %v6610, %v6610
    %v6613 = vcombine.low %v6053, %v6054
    %v6615 = vunpack.c.l.s4 1966171168
    %v6616 = vunpack.c.0.s8 %v6615
    %v6617 = vlaneseq
    %v6618 = vshrl.u32 %v6617, 7
    %v6619 = vsub.s32 %v6616, %v6618
    %v6620 = vrot.slane %v6613, %v6619
    %v6622 = vunpack.c.l.s4 1966171168
    %v6623 = vunpack.c.0.s8 %v6622
    %v6624 = vlaneseq
    %v6625 = vshrl.u32 %v6624, 7
    %v6626 = vsub.s32 %v6623, %v6625
    %v6627 = vrot.slane %v6077, %v6626
    %v6628 = vcombine.low %v6620, %v6627
    %v6629 = vcombine.high %v6620, %v6627
    %v6631 = vunpack.c.l.s4 1966171168
    %v6632 = vunpack.c.0.s8 %v6631
    %v6633 = vlaneseq
    %v6634 = vshrl.u32 %v6633, 7
    %v6635 = vsub.s32 %v6632, %v6634
    %v6636 = vrot.slane %v6628, %v6635
    %v6638 = vunpack.c.l.s4 1966171168
    %v6639 = vunpack.c.0.s8 %v6638
    %v6640 = vlaneseq
    %v6641 = vshrl.u32 %v6640, 7
    %v6642 = vsub.s32 %v6639, %v6641
    %v6643 = vrot.slane %v6629, %v6642
    %v6644 = vcombine.high %v6636, %v6636
    %v6645 = vcombine.high %v6643, %v6643
    %v6646 = vcombine.low %v6084, %v6085
    %v6648 = vunpack.c.l.s4 1966171168
    %v6649 = vunpack.c.0.s8 %v6648
    %v6650 = vlaneseq
    %v6651 = vshrl.u32 %v6650, 7
    %v6652 = vsub.s32 %v6649, %v6651
    %v6653 = vrot.slane %v6646, %v6652
    %v6655 = vunpack.c.l.s4 1966171168
    %v6656 = vunpack.c.0.s8 %v6655
    %v6657 = vlaneseq
    %v6658 = vshrl.u32 %v6657, 7
    %v6659 = vsub.s32 %v6656, %v6658
    %v6660 = vrot.slane %v6086, %v6659
    %v6661 = vcombine.low %v6653, %v6660
    %v6662 = vcombine.high %v6653, %v6660
    %v6664 = vunpack.c.l.s4 1966171168
    %v6665 = vunpack.c.0.s8 %v6664
    %v6666 = vlaneseq
    %v6667 = vshrl.u32 %v6666, 7
    %v6668 = vsub.s32 %v6665, %v6667
    %v6669 = vrot.slane %v6661, %v6668
    %v6671 = vunpack.c.l.s4 1966171168
    %v6672 = vunpack.c.0.s8 %v6671
    %v6673 = vlaneseq
    %v6674 = vshrl.u32 %v6673, 7
    %v6675 = vsub.s32 %v6672, %v6674
    %v6676 = vrot.slane %v6662, %v6675
    %v6677 = vcombine.high %v6669, %v6669
    %v6678 = vcombine.high %v6676, %v6676
    %v6679 = vcombine.low %v6109, %v6116
    %v6681 = vunpack.c.l.s4 1966171168
    %v6682 = vunpack.c.0.s8 %v6681
    %v6683 = vlaneseq
    %v6684 = vshrl.u32 %v6683, 7
    %v6685 = vsub.s32 %v6682, %v6684
    %v6686 = vrot.slane %v6679, %v6685
    %v6688 = vunpack.c.l.s4 1966171168
    %v6689 = vunpack.c.0.s8 %v6688
    %v6690 = vlaneseq
    %v6691 = vshrl.u32 %v6690, 7
    %v6692 = vsub.s32 %v6689, %v6691
    %v6693 = vrot.slane %v6117, %v6692
    %v6694 = vcombine.low %v6686, %v6693
    %v6695 = vcombine.high %v6686, %v6693
    %v6697 = vunpack.c.l.s4 1966171168
    %v6698 = vunpack.c.0.s8 %v6697
    %v6699 = vlaneseq
    %v6700 = vshrl.u32 %v6699, 7
    %v6701 = vsub.s32 %v6698, %v6700
    %v6702 = vrot.slane %v6694, %v6701
    %v6704 = vunpack.c.l.s4 1966171168
    %v6705 = vunpack.c.0.s8 %v6704
    %v6706 = vlaneseq
    %v6707 = vshrl.u32 %v6706, 7
    %v6708 = vsub.s32 %v6705, %v6707
    %v6709 = vrot.slane %v6695, %v6708
    %v6710 = vcombine.high %v6702, %v6702
    %v6711 = vcombine.high %v6709, %v6709
    %v6784 = vsel %vm2383, %v6141, -inf
    %v6785 = vrot.slane %v6784, 4
    %v6786 = vmax.f32 %v6784, %v6785
    %v6787 = vrot.slane %v6786, 2
    %v6788 = vmax.f32 %v6786, %v6787
    %v6789 = vrot.slane %v6788, 1
    %v6790 = vmax.f32 %v6788, %v6789
    %v6791 = vsel %vm2383, %v6148, -inf
    %v6792 = vrot.slane %v6791, 4
    %v6793 = vmax.f32 %v6791, %v6792
    %v6794 = vrot.slane %v6793, 2
    %v6795 = vmax.f32 %v6793, %v6794
    %v6796 = vrot.slane %v6795, 1
    %v6797 = vmax.f32 %v6795, %v6796
    %v6798 = vsel %vm2383, %v6149, -inf
    %v6799 = vrot.slane %v6798, 4
    %v6800 = vmax.f32 %v6798, %v6799
    %v6801 = vrot.slane %v6800, 2
    %v6802 = vmax.f32 %v6800, %v6801
    %v6803 = vrot.slane %v6802, 1
    %v6804 = vmax.f32 %v6802, %v6803
    %v6805 = vsel %vm2383, %v6150, -inf
    %v6806 = vrot.slane %v6805, 4
    %v6807 = vmax.f32 %v6805, %v6806
    %v6808 = vrot.slane %v6807, 2
    %v6809 = vmax.f32 %v6807, %v6808
    %v6810 = vrot.slane %v6809, 1
    %v6811 = vmax.f32 %v6809, %v6810
    %v6812 = vsel %vm2383, %v6174, -inf
    %v6813 = vrot.slane %v6812, 4
    %v6814 = vmax.f32 %v6812, %v6813
    %v6815 = vrot.slane %v6814, 2
    %v6816 = vmax.f32 %v6814, %v6815
    %v6817 = vrot.slane %v6816, 1
    %v6818 = vmax.f32 %v6816, %v6817
    %v6819 = vsel %vm2383, %v6181, -inf
    %v6820 = vrot.slane %v6819, 4
    %v6821 = vmax.f32 %v6819, %v6820
    %v6822 = vrot.slane %v6821, 2
    %v6823 = vmax.f32 %v6821, %v6822
    %v6824 = vrot.slane %v6823, 1
    %v6825 = vmax.f32 %v6823, %v6824
    %v6826 = vsel %vm2383, %v6182, -inf
    %v6827 = vrot.slane %v6826, 4
    %v6828 = vmax.f32 %v6826, %v6827
    %v6829 = vrot.slane %v6828, 2
    %v6830 = vmax.f32 %v6828, %v6829
    %v6831 = vrot.slane %v6830, 1
    %v6832 = vmax.f32 %v6830, %v6831
    %v6833 = vsel %vm2383, %v6183, -inf
    %v6834 = vrot.slane %v6833, 4
    %v6835 = vmax.f32 %v6833, %v6834
    %v6836 = vrot.slane %v6835, 2
    %v6837 = vmax.f32 %v6835, %v6836
    %v6838 = vrot.slane %v6837, 1
    %v6839 = vmax.f32 %v6837, %v6838
    %v6840 = vsel %vm2383, %v6207, -inf
    %v6841 = vrot.slane %v6840, 4
    %v6842 = vmax.f32 %v6840, %v6841
    %v6843 = vrot.slane %v6842, 2
    %v6844 = vmax.f32 %v6842, %v6843
    %v6845 = vrot.slane %v6844, 1
    %v6846 = vmax.f32 %v6844, %v6845
    %v6847 = vsel %vm2383, %v6214, -inf
    %v6848 = vrot.slane %v6847, 4
    %v6849 = vmax.f32 %v6847, %v6848
    %v6850 = vrot.slane %v6849, 2
    %v6851 = vmax.f32 %v6849, %v6850
    %v6852 = vrot.slane %v6851, 1
    %v6853 = vmax.f32 %v6851, %v6852
    %v6854 = vsel %vm2383, %v6215, -inf
    %v6855 = vrot.slane %v6854, 4
    %v6856 = vmax.f32 %v6854, %v6855
    %v6857 = vrot.slane %v6856, 2
    %v6858 = vmax.f32 %v6856, %v6857
    %v6859 = vrot.slane %v6858, 1
    %v6860 = vmax.f32 %v6858, %v6859
    %v6861 = vsel %vm2383, %v6216, -inf
    %v6862 = vrot.slane %v6861, 4
    %v6863 = vmax.f32 %v6861, %v6862
    %v6864 = vrot.slane %v6863, 2
    %v6865 = vmax.f32 %v6863, %v6864
    %v6866 = vrot.slane %v6865, 1
    %v6867 = vmax.f32 %v6865, %v6866
    %v6868 = vsel %vm2383, %v6240, -inf
    %v6869 = vrot.slane %v6868, 4
    %v6870 = vmax.f32 %v6868, %v6869
    %v6871 = vrot.slane %v6870, 2
    %v6872 = vmax.f32 %v6870, %v6871
    %v6873 = vrot.slane %v6872, 1
    %v6874 = vmax.f32 %v6872, %v6873
    %v6875 = vsel %vm2383, %v6247, -inf
    %v6876 = vrot.slane %v6875, 4
    %v6877 = vmax.f32 %v6875, %v6876
    %v6878 = vrot.slane %v6877, 2
    %v6879 = vmax.f32 %v6877, %v6878
    %v6880 = vrot.slane %v6879, 1
    %v6881 = vmax.f32 %v6879, %v6880
    %v6882 = vsel %vm2383, %v6248, -inf
    %v6883 = vrot.slane %v6882, 4
    %v6884 = vmax.f32 %v6882, %v6883
    %v6885 = vrot.slane %v6884, 2
    %v6886 = vmax.f32 %v6884, %v6885
    %v6887 = vrot.slane %v6886, 1
    %v6888 = vmax.f32 %v6886, %v6887
    %v6889 = vsel %vm2383, %v6249, -inf
    %v6890 = vrot.slane %v6889, 4
    %v6891 = vmax.f32 %v6889, %v6890
    %v6892 = vrot.slane %v6891, 2
    %v6893 = vmax.f32 %v6891, %v6892
    %v6894 = vrot.slane %v6893, 1
    %v6895 = vmax.f32 %v6893, %v6894
    %v6896 = vsel %vm2383, %v6273, -inf
    %v6897 = vrot.slane %v6896, 4
    %v6898 = vmax.f32 %v6896, %v6897
    %v6899 = vrot.slane %v6898, 2
    %v6900 = vmax.f32 %v6898, %v6899
    %v6901 = vrot.slane %v6900, 1
    %v6902 = vmax.f32 %v6900, %v6901
    %v6903 = vsel %vm2383, %v6280, -inf
    %v6904 = vrot.slane %v6903, 4
    %v6905 = vmax.f32 %v6903, %v6904
    %v6906 = vrot.slane %v6905, 2
    %v6907 = vmax.f32 %v6905, %v6906
    %v6908 = vrot.slane %v6907, 1
    %v6909 = vmax.f32 %v6907, %v6908
    %v6910 = vsel %vm2383, %v6281, -inf
    %v6911 = vrot.slane %v6910, 4
    %v6912 = vmax.f32 %v6910, %v6911
    %v6913 = vrot.slane %v6912, 2
    %v6914 = vmax.f32 %v6912, %v6913
    %v6915 = vrot.slane %v6914, 1
    %v6916 = vmax.f32 %v6914, %v6915
    %v6917 = vsel %vm2383, %v6282, -inf
    %v6918 = vrot.slane %v6917, 4
    %v6919 = vmax.f32 %v6917, %v6918
    %v6920 = vrot.slane %v6919, 2
    %v6921 = vmax.f32 %v6919, %v6920
    %v6922 = vrot.slane %v6921, 1
    %v6923 = vmax.f32 %v6921, %v6922
    %v6924 = vsel %vm2383, %v6306, -inf
    %v6925 = vrot.slane %v6924, 4
    %v6926 = vmax.f32 %v6924, %v6925
    %v6927 = vrot.slane %v6926, 2
    %v6928 = vmax.f32 %v6926, %v6927
    %v6929 = vrot.slane %v6928, 1
    %v6930 = vmax.f32 %v6928, %v6929
    %v6931 = vsel %vm2383, %v6313, -inf
    %v6932 = vrot.slane %v6931, 4
    %v6933 = vmax.f32 %v6931, %v6932
    %v6934 = vrot.slane %v6933, 2
    %v6935 = vmax.f32 %v6933, %v6934
    %v6936 = vrot.slane %v6935, 1
    %v6937 = vmax.f32 %v6935, %v6936
    %v6938 = vsel %vm2383, %v6314, -inf
    %v6939 = vrot.slane %v6938, 4
    %v6940 = vmax.f32 %v6938, %v6939
    %v6941 = vrot.slane %v6940, 2
    %v6942 = vmax.f32 %v6940, %v6941
    %v6943 = vrot.slane %v6942, 1
    %v6944 = vmax.f32 %v6942, %v6943
    %v6945 = vsel %vm2383, %v6315, -inf
    %v6946 = vrot.slane %v6945, 4
    %v6947 = vmax.f32 %v6945, %v6946
    %v6948 = vrot.slane %v6947, 2
    %v6949 = vmax.f32 %v6947, %v6948
    %v6950 = vrot.slane %v6949, 1
    %v6951 = vmax.f32 %v6949, %v6950
    %v6952 = vsel %vm2383, %v6339, -inf
    %v6953 = vrot.slane %v6952, 4
    %v6954 = vmax.f32 %v6952, %v6953
    %v6955 = vrot.slane %v6954, 2
    %v6956 = vmax.f32 %v6954, %v6955
    %v6957 = vrot.slane %v6956, 1
    %v6958 = vmax.f32 %v6956, %v6957
    %v6959 = vsel %vm2383, %v6346, -inf
    %v6960 = vrot.slane %v6959, 4
    %v6961 = vmax.f32 %v6959, %v6960
    %v6962 = vrot.slane %v6961, 2
    %v6963 = vmax.f32 %v6961, %v6962
    %v6964 = vrot.slane %v6963, 1
    %v6965 = vmax.f32 %v6963, %v6964
    %v6966 = vsel %vm2383, %v6347, -inf
    %v6967 = vrot.slane %v6966, 4
    %v6968 = vmax.f32 %v6966, %v6967
    %v6969 = vrot.slane %v6968, 2
    %v6970 = vmax.f32 %v6968, %v6969
    %v6971 = vrot.slane %v6970, 1
    %v6972 = vmax.f32 %v6970, %v6971
    %v6973 = vsel %vm2383, %v6348, -inf
    %v6974 = vrot.slane %v6973, 4
    %v6975 = vmax.f32 %v6973, %v6974
    %v6976 = vrot.slane %v6975, 2
    %v6977 = vmax.f32 %v6975, %v6976
    %v6978 = vrot.slane %v6977, 1
    %v6979 = vmax.f32 %v6977, %v6978
    %v6980 = vsel %vm2383, %v6372, -inf
    %v6981 = vrot.slane %v6980, 4
    %v6982 = vmax.f32 %v6980, %v6981
    %v6983 = vrot.slane %v6982, 2
    %v6984 = vmax.f32 %v6982, %v6983
    %v6985 = vrot.slane %v6984, 1
    %v6986 = vmax.f32 %v6984, %v6985
    %v6987 = vsel %vm2383, %v6379, -inf
    %v6988 = vrot.slane %v6987, 4
    %v6989 = vmax.f32 %v6987, %v6988
    %v6990 = vrot.slane %v6989, 2
    %v6991 = vmax.f32 %v6989, %v6990
    %v6992 = vrot.slane %v6991, 1
    %v6993 = vmax.f32 %v6991, %v6992
    %v6994 = vsel %vm2383, %v6380, -inf
    %v6995 = vrot.slane %v6994, 4
    %v6996 = vmax.f32 %v6994, %v6995
    %v6997 = vrot.slane %v6996, 2
    %v6998 = vmax.f32 %v6996, %v6997
    %v6999 = vrot.slane %v6998, 1
    %v7000 = vmax.f32 %v6998, %v6999
    %v7001 = vsel %vm2383, %v6381, -inf
    %v7002 = vrot.slane %v7001, 4
    %v7003 = vmax.f32 %v7001, %v7002
    %v7004 = vrot.slane %v7003, 2
    %v7005 = vmax.f32 %v7003, %v7004
    %v7006 = vrot.slane %v7005, 1
    %v7007 = vmax.f32 %v7005, %v7006
    %v7008 = vsel %vm2383, %v6405, -inf
    %v7009 = vrot.slane %v7008, 4
    %v7010 = vmax.f32 %v7008, %v7009
    %v7011 = vrot.slane %v7010, 2
    %v7012 = vmax.f32 %v7010, %v7011
    %v7013 = vrot.slane %v7012, 1
    %v7014 = vmax.f32 %v7012, %v7013
    %v7015 = vsel %vm2383, %v6412, -inf
    %v7016 = vrot.slane %v7015, 4
    %v7017 = vmax.f32 %v7015, %v7016
    %v7018 = vrot.slane %v7017, 2
    %v7019 = vmax.f32 %v7017, %v7018
    %v7020 = vrot.slane %v7019, 1
    %v7021 = vmax.f32 %v7019, %v7020
    %v7022 = vsel %vm2383, %v6413, -inf
    %v7023 = vrot.slane %v7022, 4
    %v7024 = vmax.f32 %v7022, %v7023
    %v7025 = vrot.slane %v7024, 2
    %v7026 = vmax.f32 %v7024, %v7025
    %v7027 = vrot.slane %v7026, 1
    %v7028 = vmax.f32 %v7026, %v7027
    %v7029 = vsel %vm2383, %v6414, -inf
    %v7030 = vrot.slane %v7029, 4
    %v7031 = vmax.f32 %v7029, %v7030
    %v7032 = vrot.slane %v7031, 2
    %v7033 = vmax.f32 %v7031, %v7032
    %v7034 = vrot.slane %v7033, 1
    %v7035 = vmax.f32 %v7033, %v7034
    %v7036 = vsel %vm2383, %v6438, -inf
    %v7037 = vrot.slane %v7036, 4
    %v7038 = vmax.f32 %v7036, %v7037
    %v7039 = vrot.slane %v7038, 2
    %v7040 = vmax.f32 %v7038, %v7039
    %v7041 = vrot.slane %v7040, 1
    %v7042 = vmax.f32 %v7040, %v7041
    %v7043 = vsel %vm2383, %v6445, -inf
    %v7044 = vrot.slane %v7043, 4
    %v7045 = vmax.f32 %v7043, %v7044
    %v7046 = vrot.slane %v7045, 2
    %v7047 = vmax.f32 %v7045, %v7046
    %v7048 = vrot.slane %v7047, 1
    %v7049 = vmax.f32 %v7047, %v7048
    %v7050 = vsel %vm2383, %v6446, -inf
    %v7051 = vrot.slane %v7050, 4
    %v7052 = vmax.f32 %v7050, %v7051
    %v7053 = vrot.slane %v7052, 2
    %v7054 = vmax.f32 %v7052, %v7053
    %v7055 = vrot.slane %v7054, 1
    %v7056 = vmax.f32 %v7054, %v7055
    %v7057 = vsel %vm2383, %v6447, -inf
    %v7058 = vrot.slane %v7057, 4
    %v7059 = vmax.f32 %v7057, %v7058
    %v7060 = vrot.slane %v7059, 2
    %v7061 = vmax.f32 %v7059, %v7060
    %v7062 = vrot.slane %v7061, 1
    %v7063 = vmax.f32 %v7061, %v7062
    %v7064 = vsel %vm2383, %v6471, -inf
    %v7065 = vrot.slane %v7064, 4
    %v7066 = vmax.f32 %v7064, %v7065
    %v7067 = vrot.slane %v7066, 2
    %v7068 = vmax.f32 %v7066, %v7067
    %v7069 = vrot.slane %v7068, 1
    %v7070 = vmax.f32 %v7068, %v7069
    %v7071 = vsel %vm2383, %v6478, -inf
    %v7072 = vrot.slane %v7071, 4
    %v7073 = vmax.f32 %v7071, %v7072
    %v7074 = vrot.slane %v7073, 2
    %v7075 = vmax.f32 %v7073, %v7074
    %v7076 = vrot.slane %v7075, 1
    %v7077 = vmax.f32 %v7075, %v7076
    %v7078 = vsel %vm2383, %v6479, -inf
    %v7079 = vrot.slane %v7078, 4
    %v7080 = vmax.f32 %v7078, %v7079
    %v7081 = vrot.slane %v7080, 2
    %v7082 = vmax.f32 %v7080, %v7081
    %v7083 = vrot.slane %v7082, 1
    %v7084 = vmax.f32 %v7082, %v7083
    %v7085 = vsel %vm2383, %v6480, -inf
    %v7086 = vrot.slane %v7085, 4
    %v7087 = vmax.f32 %v7085, %v7086
    %v7088 = vrot.slane %v7087, 2
    %v7089 = vmax.f32 %v7087, %v7088
    %v7090 = vrot.slane %v7089, 1
    %v7091 = vmax.f32 %v7089, %v7090
    %v7092 = vsel %vm2383, %v6504, -inf
    %v7093 = vrot.slane %v7092, 4
    %v7094 = vmax.f32 %v7092, %v7093
    %v7095 = vrot.slane %v7094, 2
    %v7096 = vmax.f32 %v7094, %v7095
    %v7097 = vrot.slane %v7096, 1
    %v7098 = vmax.f32 %v7096, %v7097
    %v7099 = vsel %vm2383, %v6511, -inf
    %v7100 = vrot.slane %v7099, 4
    %v7101 = vmax.f32 %v7099, %v7100
    %v7102 = vrot.slane %v7101, 2
    %v7103 = vmax.f32 %v7101, %v7102
    %v7104 = vrot.slane %v7103, 1
    %v7105 = vmax.f32 %v7103, %v7104
    %v7106 = vsel %vm2383, %v6512, -inf
    %v7107 = vrot.slane %v7106, 4
    %v7108 = vmax.f32 %v7106, %v7107
    %v7109 = vrot.slane %v7108, 2
    %v7110 = vmax.f32 %v7108, %v7109
    %v7111 = vrot.slane %v7110, 1
    %v7112 = vmax.f32 %v7110, %v7111
    %v7113 = vsel %vm2383, %v6513, -inf
    %v7114 = vrot.slane %v7113, 4
    %v7115 = vmax.f32 %v7113, %v7114
    %v7116 = vrot.slane %v7115, 2
    %v7117 = vmax.f32 %v7115, %v7116
    %v7118 = vrot.slane %v7117, 1
    %v7119 = vmax.f32 %v7117, %v7118
    %v7120 = vsel %vm2383, %v6537, -inf
    %v7121 = vrot.slane %v7120, 4
    %v7122 = vmax.f32 %v7120, %v7121
    %v7123 = vrot.slane %v7122, 2
    %v7124 = vmax.f32 %v7122, %v7123
    %v7125 = vrot.slane %v7124, 1
    %v7126 = vmax.f32 %v7124, %v7125
    %v7127 = vsel %vm2383, %v6544, -inf
    %v7128 = vrot.slane %v7127, 4
    %v7129 = vmax.f32 %v7127, %v7128
    %v7130 = vrot.slane %v7129, 2
    %v7131 = vmax.f32 %v7129, %v7130
    %v7132 = vrot.slane %v7131, 1
    %v7133 = vmax.f32 %v7131, %v7132
    %v7134 = vsel %vm2383, %v6545, -inf
    %v7135 = vrot.slane %v7134, 4
    %v7136 = vmax.f32 %v7134, %v7135
    %v7137 = vrot.slane %v7136, 2
    %v7138 = vmax.f32 %v7136, %v7137
    %v7139 = vrot.slane %v7138, 1
    %v7140 = vmax.f32 %v7138, %v7139
    %v7141 = vsel %vm2383, %v6546, -inf
    %v7142 = vrot.slane %v7141, 4
    %v7143 = vmax.f32 %v7141, %v7142
    %v7144 = vrot.slane %v7143, 2
    %v7145 = vmax.f32 %v7143, %v7144
    %v7146 = vrot.slane %v7145, 1
    %v7147 = vmax.f32 %v7145, %v7146
    %v7148 = vsel %vm2383, %v6570, -inf
    %v7149 = vrot.slane %v7148, 4
    %v7150 = vmax.f32 %v7148, %v7149
    %v7151 = vrot.slane %v7150, 2
    %v7152 = vmax.f32 %v7150, %v7151
    %v7153 = vrot.slane %v7152, 1
    %v7154 = vmax.f32 %v7152, %v7153
    %v7155 = vsel %vm2383, %v6577, -inf
    %v7156 = vrot.slane %v7155, 4
    %v7157 = vmax.f32 %v7155, %v7156
    %v7158 = vrot.slane %v7157, 2
    %v7159 = vmax.f32 %v7157, %v7158
    %v7160 = vrot.slane %v7159, 1
    %v7161 = vmax.f32 %v7159, %v7160
    %v7162 = vsel %vm2383, %v6578, -inf
    %v7163 = vrot.slane %v7162, 4
    %v7164 = vmax.f32 %v7162, %v7163
    %v7165 = vrot.slane %v7164, 2
    %v7166 = vmax.f32 %v7164, %v7165
    %v7167 = vrot.slane %v7166, 1
    %v7168 = vmax.f32 %v7166, %v7167
    %v7169 = vsel %vm2383, %v6579, -inf
    %v7170 = vrot.slane %v7169, 4
    %v7171 = vmax.f32 %v7169, %v7170
    %v7172 = vrot.slane %v7171, 2
    %v7173 = vmax.f32 %v7171, %v7172
    %v7174 = vrot.slane %v7173, 1
    %v7175 = vmax.f32 %v7173, %v7174
    %v7176 = vsel %vm2383, %v6603, -inf
    %v7177 = vrot.slane %v7176, 4
    %v7178 = vmax.f32 %v7176, %v7177
    %v7179 = vrot.slane %v7178, 2
    %v7180 = vmax.f32 %v7178, %v7179
    %v7181 = vrot.slane %v7180, 1
    %v7182 = vmax.f32 %v7180, %v7181
    %v7183 = vsel %vm2383, %v6610, -inf
    %v7184 = vrot.slane %v7183, 4
    %v7185 = vmax.f32 %v7183, %v7184
    %v7186 = vrot.slane %v7185, 2
    %v7187 = vmax.f32 %v7185, %v7186
    %v7188 = vrot.slane %v7187, 1
    %v7189 = vmax.f32 %v7187, %v7188
    %v7190 = vsel %vm2383, %v6611, -inf
    %v7191 = vrot.slane %v7190, 4
    %v7192 = vmax.f32 %v7190, %v7191
    %v7193 = vrot.slane %v7192, 2
    %v7194 = vmax.f32 %v7192, %v7193
    %v7195 = vrot.slane %v7194, 1
    %v7196 = vmax.f32 %v7194, %v7195
    %v7197 = vsel %vm2383, %v6612, -inf
    %v7198 = vrot.slane %v7197, 4
    %v7199 = vmax.f32 %v7197, %v7198
    %v7200 = vrot.slane %v7199, 2
    %v7201 = vmax.f32 %v7199, %v7200
    %v7202 = vrot.slane %v7201, 1
    %v7203 = vmax.f32 %v7201, %v7202
    %v7204 = vsel %vm2383, %v6636, -inf
    %v7205 = vrot.slane %v7204, 4
    %v7206 = vmax.f32 %v7204, %v7205
    %v7207 = vrot.slane %v7206, 2
    %v7208 = vmax.f32 %v7206, %v7207
    %v7209 = vrot.slane %v7208, 1
    %v7210 = vmax.f32 %v7208, %v7209
    %v7211 = vsel %vm2383, %v6643, -inf
    %v7212 = vrot.slane %v7211, 4
    %v7213 = vmax.f32 %v7211, %v7212
    %v7214 = vrot.slane %v7213, 2
    %v7215 = vmax.f32 %v7213, %v7214
    %v7216 = vrot.slane %v7215, 1
    %v7217 = vmax.f32 %v7215, %v7216
    %v7218 = vsel %vm2383, %v6644, -inf
    %v7219 = vrot.slane %v7218, 4
    %v7220 = vmax.f32 %v7218, %v7219
    %v7221 = vrot.slane %v7220, 2
    %v7222 = vmax.f32 %v7220, %v7221
    %v7223 = vrot.slane %v7222, 1
    %v7224 = vmax.f32 %v7222, %v7223
    %v7225 = vsel %vm2383, %v6645, -inf
    %v7226 = vrot.slane %v7225, 4
    %v7227 = vmax.f32 %v7225, %v7226
    %v7228 = vrot.slane %v7227, 2
    %v7229 = vmax.f32 %v7227, %v7228
    %v7230 = vrot.slane %v7229, 1
    %v7231 = vmax.f32 %v7229, %v7230
    %v7232 = vsel %vm2383, %v6669, -inf
    %v7233 = vrot.slane %v7232, 4
    %v7234 = vmax.f32 %v7232, %v7233
    %v7235 = vrot.slane %v7234, 2
    %v7236 = vmax.f32 %v7234, %v7235
    %v7237 = vrot.slane %v7236, 1
    %v7238 = vmax.f32 %v7236, %v7237
    %v7239 = vsel %vm2383, %v6676, -inf
    %v7240 = vrot.slane %v7239, 4
    %v7241 = vmax.f32 %v7239, %v7240
    %v7242 = vrot.slane %v7241, 2
    %v7243 = vmax.f32 %v7241, %v7242
    %v7244 = vrot.slane %v7243, 1
    %v7245 = vmax.f32 %v7243, %v7244
    %v7246 = vsel %vm2383, %v6677, -inf
    %v7247 = vrot.slane %v7246, 4
    %v7248 = vmax.f32 %v7246, %v7247
    %v7249 = vrot.slane %v7248, 2
    %v7250 = vmax.f32 %v7248, %v7249
    %v7251 = vrot.slane %v7250, 1
    %v7252 = vmax.f32 %v7250, %v7251
    %v7253 = vsel %vm2383, %v6678, -inf
    %v7254 = vrot.slane %v7253, 4
    %v7255 = vmax.f32 %v7253, %v7254
    %v7256 = vrot.slane %v7255, 2
    %v7257 = vmax.f32 %v7255, %v7256
    %v7258 = vrot.slane %v7257, 1
    %v7259 = vmax.f32 %v7257, %v7258
    %v7260 = vsel %vm2383, %v6702, -inf
    %v7261 = vrot.slane %v7260, 4
    %v7262 = vmax.f32 %v7260, %v7261
    %v7263 = vrot.slane %v7262, 2
    %v7264 = vmax.f32 %v7262, %v7263
    %v7265 = vrot.slane %v7264, 1
    %v7266 = vmax.f32 %v7264, %v7265
    %v7267 = vsel %vm2383, %v6709, -inf
    %v7268 = vrot.slane %v7267, 4
    %v7269 = vmax.f32 %v7267, %v7268
    %v7270 = vrot.slane %v7269, 2
    %v7271 = vmax.f32 %v7269, %v7270
    %v7272 = vrot.slane %v7271, 1
    %v7273 = vmax.f32 %v7271, %v7272
    %v7274 = vsel %vm2383, %v6710, -inf
    %v7275 = vrot.slane %v7274, 4
    %v7276 = vmax.f32 %v7274, %v7275
    %v7277 = vrot.slane %v7276, 2
    %v7278 = vmax.f32 %v7276, %v7277
    %v7279 = vrot.slane %v7278, 1
    %v7280 = vmax.f32 %v7278, %v7279
    %v7281 = vsel %vm2383, %v6711, -inf
    %v7282 = vrot.slane %v7281, 4
    %v7283 = vmax.f32 %v7281, %v7282
    %v7284 = vrot.slane %v7283, 2
    %v7285 = vmax.f32 %v7283, %v7284
    %v7286 = vrot.slane %v7285, 1
    %v7287 = vmax.f32 %v7285, %v7286
    %v7288 = vpack.c.bf16 %v6790, %v6790
    %v7289 = vpack.c.bf16 %v6797, %v6797
    %v7290 = vpack.c.bf16 %v6804, %v6804
    %v7291 = vpack.c.bf16 %v6811, %v6811
    %v7292 = vpack.c.bf16 %v6818, %v6818
    %v7293 = vpack.c.bf16 %v6825, %v6825
    %v7294 = vpack.c.bf16 %v6832, %v6832
    %v7295 = vpack.c.bf16 %v6839, %v6839
    %v7296 = vpack.c.bf16 %v6846, %v6846
    %v7297 = vpack.c.bf16 %v6853, %v6853
    %v7298 = vpack.c.bf16 %v6860, %v6860
    %v7299 = vpack.c.bf16 %v6867, %v6867
    %v7300 = vpack.c.bf16 %v6874, %v6874
    %v7301 = vpack.c.bf16 %v6881, %v6881
    %v7302 = vpack.c.bf16 %v6888, %v6888
    %v7303 = vpack.c.bf16 %v6895, %v6895
    %v7304 = vpack.c.bf16 %v6902, %v6902
    %v7305 = vpack.c.bf16 %v6909, %v6909
    %v7306 = vpack.c.bf16 %v6916, %v6916
    %v7307 = vpack.c.bf16 %v6923, %v6923
    %v7308 = vpack.c.bf16 %v6930, %v6930
    %v7309 = vpack.c.bf16 %v6937, %v6937
    %v7310 = vpack.c.bf16 %v6944, %v6944
    %v7311 = vpack.c.bf16 %v6951, %v6951
    %v7312 = vpack.c.bf16 %v6958, %v6958
    %v7313 = vpack.c.bf16 %v6965, %v6965
    %v7314 = vpack.c.bf16 %v6972, %v6972
    %v7315 = vpack.c.bf16 %v6979, %v6979
    %v7316 = vpack.c.bf16 %v6986, %v6986
    %v7317 = vpack.c.bf16 %v6993, %v6993
    %v7318 = vpack.c.bf16 %v7000, %v7000
    %v7319 = vpack.c.bf16 %v7007, %v7007
    %v7320 = vpack.c.bf16 %v7014, %v7014
    %v7321 = vpack.c.bf16 %v7021, %v7021
    %v7322 = vpack.c.bf16 %v7028, %v7028
    %v7323 = vpack.c.bf16 %v7035, %v7035
    %v7324 = vpack.c.bf16 %v7042, %v7042
    %v7325 = vpack.c.bf16 %v7049, %v7049
    %v7326 = vpack.c.bf16 %v7056, %v7056
    %v7327 = vpack.c.bf16 %v7063, %v7063
    %v7328 = vpack.c.bf16 %v7070, %v7070
    %v7329 = vpack.c.bf16 %v7077, %v7077
    %v7330 = vpack.c.bf16 %v7084, %v7084
    %v7331 = vpack.c.bf16 %v7091, %v7091
    %v7332 = vpack.c.bf16 %v7098, %v7098
    %v7333 = vpack.c.bf16 %v7105, %v7105
    %v7334 = vpack.c.bf16 %v7112, %v7112
    %v7335 = vpack.c.bf16 %v7119, %v7119
    %v7336 = vpack.c.bf16 %v7126, %v7126
    %v7337 = vpack.c.bf16 %v7133, %v7133
    %v7338 = vpack.c.bf16 %v7140, %v7140
    %v7339 = vpack.c.bf16 %v7147, %v7147
    %v7340 = vpack.c.bf16 %v7154, %v7154
    %v7341 = vpack.c.bf16 %v7161, %v7161
    %v7342 = vpack.c.bf16 %v7168, %v7168
    %v7343 = vpack.c.bf16 %v7175, %v7175
    %v7344 = vpack.c.bf16 %v7182, %v7182
    %v7345 = vpack.c.bf16 %v7189, %v7189
    %v7346 = vpack.c.bf16 %v7196, %v7196
    %v7347 = vpack.c.bf16 %v7203, %v7203
    %v7348 = vpack.c.bf16 %v7210, %v7210
    %v7349 = vpack.c.bf16 %v7217, %v7217
    %v7350 = vpack.c.bf16 %v7224, %v7224
    %v7351 = vpack.c.bf16 %v7231, %v7231
    %v7352 = vpack.c.bf16 %v7238, %v7238
    %v7353 = vpack.c.bf16 %v7245, %v7245
    %v7354 = vpack.c.bf16 %v7252, %v7252
    %v7355 = vpack.c.bf16 %v7259, %v7259
    %v7356 = vpack.c.bf16 %v7266, %v7266
    %v7357 = vpack.c.bf16 %v7273, %v7273
    %v7358 = vpack.c.bf16 %v7280, %v7280
    %v7359 = vpack.c.bf16 %v7287, %v7287
    %s7360 = smul.u32 4, 320
    %s7361 = smul.u32 %s7360, 2
    %s7362 = sshll.u32 %s7361, 4
    %7363 = dma.done %s213, %s7362
    %v7364 = vld [vmem:[#allocation3] sm:$0xff]
    %v7365 = vld [vmem:[#allocation3 + $0x8] sm:$0xff]
    %v7366 = vld [vmem:[#allocation3 + $0x10] sm:$0xff]
    %v7367 = vld [vmem:[#allocation3 + $0x18] sm:$0xff]
    %v7368 = vld [vmem:[#allocation3 + $0x20] sm:$0xff]
    %v7369 = vld [vmem:[#allocation3 + $0x28] sm:$0xff]
    %v7370 = vld [vmem:[#allocation3 + $0x30] sm:$0xff]
    %v7371 = vld [vmem:[#allocation3 + $0x38] sm:$0xff]
    %v7372 = vld [vmem:[#allocation3 + $0x40] sm:$0xff]
    %v7373 = vld [vmem:[#allocation3 + $0x48] sm:$0xff]
    %v7374 = vld [vmem:[#allocation3 + $0x50] sm:$0xff]
    %v7375 = vld [vmem:[#allocation3 + $0x58] sm:$0xff]
    %v7376 = vld [vmem:[#allocation3 + $0x60] sm:$0xff]
    %v7377 = vld [vmem:[#allocation3 + $0x68] sm:$0xff]
    %v7378 = vld [vmem:[#allocation3 + $0x70] sm:$0xff]
    %v7379 = vld [vmem:[#allocation3 + $0x78] sm:$0xff]
    %v7380 = vld [vmem:[#allocation3 + $0x80] sm:$0xff]
    %v7381 = vld [vmem:[#allocation3 + $0x88] sm:$0xff]
    %v7382 = vld [vmem:[#allocation3 + $0x90] sm:$0xff]
    %v7383 = vld [vmem:[#allocation3 + $0x98] sm:$0xff]
    %v7384 = vld [vmem:[#allocation3 + $0xa0] sm:$0xff]
    %v7385 = vld [vmem:[#allocation3 + $0xa8] sm:$0xff]
    %v7386 = vld [vmem:[#allocation3 + $0xb0] sm:$0xff]
    %v7387 = vld [vmem:[#allocation3 + $0xb8] sm:$0xff]
    %v7388 = vld [vmem:[#allocation3 + $0xc0] sm:$0xff]
    %v7389 = vld [vmem:[#allocation3 + $0xc8] sm:$0xff]
    %v7390 = vld [vmem:[#allocation3 + $0xd0] sm:$0xff]
    %v7391 = vld [vmem:[#allocation3 + $0xd8] sm:$0xff]
    %v7392 = vld [vmem:[#allocation3 + $0xe0] sm:$0xff]
    %v7393 = vld [vmem:[#allocation3 + $0xe8] sm:$0xff]
    %v7394 = vld [vmem:[#allocation3 + $0xf0] sm:$0xff]
    %v7395 = vld [vmem:[#allocation3 + $0xf8] sm:$0xff]
    %v7396 = vld [vmem:[#allocation3 + $0x100] sm:$0xff]
    %v7397 = vld [vmem:[#allocation3 + $0x108] sm:$0xff]
    %v7398 = vld [vmem:[#allocation3 + $0x110] sm:$0xff]
    %v7399 = vld [vmem:[#allocation3 + $0x118] sm:$0xff]
    %v7400 = vld [vmem:[#allocation3 + $0x120] sm:$0xff]
    %v7401 = vld [vmem:[#allocation3 + $0x128] sm:$0xff]
    %v7402 = vld [vmem:[#allocation3 + $0x130] sm:$0xff]
    %v7403 = vld [vmem:[#allocation3 + $0x138] sm:$0xff]
    %v7404 = vld [vmem:[#allocation3 + $0x140] sm:$0xff]
    %v7405 = vld [vmem:[#allocation3 + $0x148] sm:$0xff]
    %v7406 = vld [vmem:[#allocation3 + $0x150] sm:$0xff]
    %v7407 = vld [vmem:[#allocation3 + $0x158] sm:$0xff]
    %v7408 = vld [vmem:[#allocation3 + $0x160] sm:$0xff]
    %v7409 = vld [vmem:[#allocation3 + $0x168] sm:$0xff]
    %v7410 = vld [vmem:[#allocation3 + $0x170] sm:$0xff]
    %v7411 = vld [vmem:[#allocation3 + $0x178] sm:$0xff]
    %v7412 = vld [vmem:[#allocation3 + $0x180] sm:$0xff]
    %v7413 = vld [vmem:[#allocation3 + $0x188] sm:$0xff]
    %v7414 = vld [vmem:[#allocation3 + $0x190] sm:$0xff]
    %v7415 = vld [vmem:[#allocation3 + $0x198] sm:$0xff]
    %v7416 = vld [vmem:[#allocation3 + $0x1a0] sm:$0xff]
    %v7417 = vld [vmem:[#allocation3 + $0x1a8] sm:$0xff]
    %v7418 = vld [vmem:[#allocation3 + $0x1b0] sm:$0xff]
    %v7419 = vld [vmem:[#allocation3 + $0x1b8] sm:$0xff]
    %v7420 = vld [vmem:[#allocation3 + $0x1c0] sm:$0xff]
    %v7421 = vld [vmem:[#allocation3 + $0x1c8] sm:$0xff]
    %v7422 = vld [vmem:[#allocation3 + $0x1d0] sm:$0xff]
    %v7423 = vld [vmem:[#allocation3 + $0x1d8] sm:$0xff]
    %v7424 = vld [vmem:[#allocation3 + $0x1e0] sm:$0xff]
    %v7425 = vld [vmem:[#allocation3 + $0x1e8] sm:$0xff]
    %v7426 = vld [vmem:[#allocation3 + $0x1f0] sm:$0xff]
    %v7427 = vld [vmem:[#allocation3 + $0x1f8] sm:$0xff]
    %v7428 = vld [vmem:[#allocation3 + $0x200] sm:$0xff]
    %v7429 = vld [vmem:[#allocation3 + $0x208] sm:$0xff]
    %v7430 = vld [vmem:[#allocation3 + $0x210] sm:$0xff]
    %v7431 = vld [vmem:[#allocation3 + $0x218] sm:$0xff]
    %v7432 = vld [vmem:[#allocation3 + $0x220] sm:$0xff]
    %v7433 = vld [vmem:[#allocation3 + $0x228] sm:$0xff]
    %v7434 = vld [vmem:[#allocation3 + $0x230] sm:$0xff]
    %v7435 = vld [vmem:[#allocation3 + $0x238] sm:$0xff]
    %v7436 = vld [vmem:[#allocation3 + $0x240] sm:$0xff]
    %v7437 = vld [vmem:[#allocation3 + $0x248] sm:$0xff]
    %v7438 = vld [vmem:[#allocation3 + $0x250] sm:$0xff]
    %v7439 = vld [vmem:[#allocation3 + $0x258] sm:$0xff]
    %v7440 = vld [vmem:[#allocation3 + $0x260] sm:$0xff]
    %v7441 = vld [vmem:[#allocation3 + $0x268] sm:$0xff]
    %v7442 = vld [vmem:[#allocation3 + $0x270] sm:$0xff]
    %v7443 = vld [vmem:[#allocation3 + $0x278] sm:$0xff]
    %v7444 = vld [vmem:[#allocation3 + $0x280] sm:$0xff]
    %v7445 = vld [vmem:[#allocation3 + $0x288] sm:$0xff]
    %v7446 = vld [vmem:[#allocation3 + $0x290] sm:$0xff]
    %v7447 = vld [vmem:[#allocation3 + $0x298] sm:$0xff]
    %v7448 = vld [vmem:[#allocation3 + $0x2a0] sm:$0xff]
    %v7449 = vld [vmem:[#allocation3 + $0x2a8] sm:$0xff]
    %v7450 = vld [vmem:[#allocation3 + $0x2b0] sm:$0xff]
    %v7451 = vld [vmem:[#allocation3 + $0x2b8] sm:$0xff]
    %v7452 = vld [vmem:[#allocation3 + $0x2c0] sm:$0xff]
    %v7453 = vld [vmem:[#allocation3 + $0x2c8] sm:$0xff]
    %v7454 = vld [vmem:[#allocation3 + $0x2d0] sm:$0xff]
    %v7455 = vld [vmem:[#allocation3 + $0x2d8] sm:$0xff]
    %v7456 = vld [vmem:[#allocation3 + $0x2e0] sm:$0xff]
    %v7457 = vld [vmem:[#allocation3 + $0x2e8] sm:$0xff]
    %v7458 = vld [vmem:[#allocation3 + $0x2f0] sm:$0xff]
    %v7459 = vld [vmem:[#allocation3 + $0x2f8] sm:$0xff]
    %v7460 = vld [vmem:[#allocation3 + $0x300] sm:$0xff]
    %v7461 = vld [vmem:[#allocation3 + $0x308] sm:$0xff]
    %v7462 = vld [vmem:[#allocation3 + $0x310] sm:$0xff]
    %v7463 = vld [vmem:[#allocation3 + $0x318] sm:$0xff]
    %v7464 = vld [vmem:[#allocation3 + $0x320] sm:$0xff]
    %v7465 = vld [vmem:[#allocation3 + $0x328] sm:$0xff]
    %v7466 = vld [vmem:[#allocation3 + $0x330] sm:$0xff]
    %v7467 = vld [vmem:[#allocation3 + $0x338] sm:$0xff]
    %v7468 = vld [vmem:[#allocation3 + $0x340] sm:$0xff]
    %v7469 = vld [vmem:[#allocation3 + $0x348] sm:$0xff]
    %v7470 = vld [vmem:[#allocation3 + $0x350] sm:$0xff]
    %v7471 = vld [vmem:[#allocation3 + $0x358] sm:$0xff]
    %v7472 = vld [vmem:[#allocation3 + $0x360] sm:$0xff]
    %v7473 = vld [vmem:[#allocation3 + $0x368] sm:$0xff]
    %v7474 = vld [vmem:[#allocation3 + $0x370] sm:$0xff]
    %v7475 = vld [vmem:[#allocation3 + $0x378] sm:$0xff]
    %v7476 = vld [vmem:[#allocation3 + $0x380] sm:$0xff]
    %v7477 = vld [vmem:[#allocation3 + $0x388] sm:$0xff]
    %v7478 = vld [vmem:[#allocation3 + $0x390] sm:$0xff]
    %v7479 = vld [vmem:[#allocation3 + $0x398] sm:$0xff]
    %v7480 = vld [vmem:[#allocation3 + $0x3a0] sm:$0xff]
    %v7481 = vld [vmem:[#allocation3 + $0x3a8] sm:$0xff]
    %v7482 = vld [vmem:[#allocation3 + $0x3b0] sm:$0xff]
    %v7483 = vld [vmem:[#allocation3 + $0x3b8] sm:$0xff]
    %v7484 = vld [vmem:[#allocation3 + $0x3c0] sm:$0xff]
    %v7485 = vld [vmem:[#allocation3 + $0x3c8] sm:$0xff]
    %v7486 = vld [vmem:[#allocation3 + $0x3d0] sm:$0xff]
    %v7487 = vld [vmem:[#allocation3 + $0x3d8] sm:$0xff]
    %v7488 = vld [vmem:[#allocation3 + $0x3e0] sm:$0xff]
    %v7489 = vld [vmem:[#allocation3 + $0x3e8] sm:$0xff]
    %v7490 = vld [vmem:[#allocation3 + $0x3f0] sm:$0xff]
    %v7491 = vld [vmem:[#allocation3 + $0x3f8] sm:$0xff]
    %v7532 = vunpack.c.l.b16 %v7292
    %v7533 = vunpack.c.l.b16 %v7293
    %v7534 = vunpack.c.l.b16 %v7294
    %v7535 = vunpack.c.l.b16 %v7295
    %v7536 = vunpack.c.l.b16 %v7296
    %v7537 = vunpack.c.l.b16 %v7297
    %v7538 = vunpack.c.l.b16 %v7298
    %v7539 = vunpack.c.l.b16 %v7299
    %v7540 = vunpack.c.l.b16 %v7300
    %v7541 = vunpack.c.l.b16 %v7301
    %v7542 = vunpack.c.l.b16 %v7302
    %v7543 = vunpack.c.l.b16 %v7303
    %v7544 = vunpack.c.l.b16 %v7304
    %v7545 = vunpack.c.l.b16 %v7305
    %v7546 = vunpack.c.l.b16 %v7306
    %v7547 = vunpack.c.l.b16 %v7307
    %v7548 = vunpack.c.l.b16 %v7308
    %v7549 = vunpack.c.l.b16 %v7309
    %v7550 = vunpack.c.l.b16 %v7310
    %v7551 = vunpack.c.l.b16 %v7311
    %v7552 = vunpack.c.l.b16 %v7328
    %v7553 = vunpack.c.l.b16 %v7329
    %v7554 = vunpack.c.l.b16 %v7330
    %v7555 = vunpack.c.l.b16 %v7331
    %v7556 = vunpack.c.l.b16 %v7332
    %v7557 = vunpack.c.l.b16 %v7333
    %v7558 = vunpack.c.l.b16 %v7334
    %v7559 = vunpack.c.l.b16 %v7335
    %v7560 = vunpack.c.l.b16 %v7336
    %v7561 = vunpack.c.l.b16 %v7337
    %v7562 = vunpack.c.l.b16 %v7338
    %v7563 = vunpack.c.l.b16 %v7339
    %v7564 = vunpack.c.l.b16 %v7340
    %v7565 = vunpack.c.l.b16 %v7341
    %v7566 = vunpack.c.l.b16 %v7342
    %v7567 = vunpack.c.l.b16 %v7343
    %v7568 = vunpack.c.l.b16 %v7344
    %v7569 = vunpack.c.l.b16 %v7345
    %v7570 = vunpack.c.l.b16 %v7346
    %v7571 = vunpack.c.l.b16 %v7347
    %v7572 = vsel %vm3284, %v7536, %v7532
    %v7573 = vsel %vm3286, %v7540, %v7572
    %v7574 = vsel %vm3288, %v7544, %v7573
    %v7575 = vsel %vm3290, %v7548, %v7574
    %v7576 = vsel %vm3292, %v7552, %v7575
    %v7577 = vsel %vm3294, %v7556, %v7576
    %v7578 = vsel %vm3296, %v7560, %v7577
    %v7579 = vsel %vm3284, %v7537, %v7533
    %v7580 = vsel %vm3286, %v7541, %v7579
    %v7581 = vsel %vm3288, %v7545, %v7580
    %v7582 = vsel %vm3290, %v7549, %v7581
    %v7583 = vsel %vm3292, %v7553, %v7582
    %v7584 = vsel %vm3294, %v7557, %v7583
    %v7585 = vsel %vm3296, %v7561, %v7584
    %v7586 = vsel %vm3284, %v7538, %v7534
    %v7587 = vsel %vm3286, %v7542, %v7586
    %v7588 = vsel %vm3288, %v7546, %v7587
    %v7589 = vsel %vm3290, %v7550, %v7588
    %v7590 = vsel %vm3292, %v7554, %v7589
    %v7591 = vsel %vm3294, %v7558, %v7590
    %v7592 = vsel %vm3296, %v7562, %v7591
    %v7593 = vsel %vm3284, %v7539, %v7535
    %v7594 = vsel %vm3286, %v7543, %v7593
    %v7595 = vsel %vm3288, %v7547, %v7594
    %v7596 = vsel %vm3290, %v7551, %v7595
    %v7597 = vsel %vm3292, %v7555, %v7596
    %v7598 = vsel %vm3294, %v7559, %v7597
    %v7599 = vsel %vm3296, %v7563, %v7598
    %v7600 = vsel %vm3284, %v7568, %v7564
    %v7601 = vsel %vm3284, %v7569, %v7565
    %v7602 = vsel %vm3284, %v7570, %v7566
    %v7603 = vsel %vm3284, %v7571, %v7567
    %v7604 = vpack.c.b16 %v7600, %v7578
    %v7605 = vpack.c.b16 %v7601, %v7585
    %v7606 = vpack.c.b16 %v7602, %v7592
    %v7607 = vpack.c.b16 %v7603, %v7599
    %v7676 = vunpack.c.l.b16 %v7428
    %v7677 = vunpack.c.h.b16 %v7428
    %v7678 = vunpack.c.l.b16 %v7429
    %v7679 = vunpack.c.h.b16 %v7429
    %v7680 = vunpack.c.l.b16 %v7430
    %v7681 = vunpack.c.h.b16 %v7430
    %v7682 = vunpack.c.l.b16 %v7431
    %v7683 = vunpack.c.h.b16 %v7431
    %v7684 = vunpack.c.l.b16 %v7432
    %v7685 = vunpack.c.h.b16 %v7432
    %v7686 = vunpack.c.l.b16 %v7433
    %v7687 = vunpack.c.h.b16 %v7433
    %v7688 = vunpack.c.l.b16 %v7434
    %v7689 = vunpack.c.h.b16 %v7434
    %v7690 = vunpack.c.l.b16 %v7435
    %v7691 = vunpack.c.h.b16 %v7435
    %v7692 = vunpack.c.l.b16 %v7436
    %v7693 = vunpack.c.h.b16 %v7436
    %v7694 = vunpack.c.l.b16 %v7437
    %v7695 = vunpack.c.h.b16 %v7437
    %v7696 = vunpack.c.l.b16 %v7438
    %v7697 = vunpack.c.h.b16 %v7438
    %v7698 = vunpack.c.l.b16 %v7439
    %v7699 = vunpack.c.h.b16 %v7439
    %v7700 = vunpack.c.l.b16 %v7440
    %v7701 = vunpack.c.h.b16 %v7440
    %v7702 = vunpack.c.l.b16 %v7441
    %v7703 = vunpack.c.h.b16 %v7441
    %v7704 = vunpack.c.l.b16 %v7442
    %v7705 = vunpack.c.h.b16 %v7442
    %v7706 = vunpack.c.l.b16 %v7443
    %v7707 = vunpack.c.h.b16 %v7443
    %v7708 = vunpack.c.l.b16 %v7444
    %v7709 = vunpack.c.h.b16 %v7444
    %v7710 = vunpack.c.l.b16 %v7445
    %v7711 = vunpack.c.h.b16 %v7445
    %v7712 = vunpack.c.l.b16 %v7446
    %v7713 = vunpack.c.h.b16 %v7446
    %v7714 = vunpack.c.l.b16 %v7447
    %v7715 = vunpack.c.h.b16 %v7447
    %v7716 = vunpack.c.l.b16 %v7448
    %v7717 = vunpack.c.h.b16 %v7448
    %v7718 = vunpack.c.l.b16 %v7449
    %v7719 = vunpack.c.h.b16 %v7449
    %v7720 = vunpack.c.l.b16 %v7450
    %v7721 = vunpack.c.h.b16 %v7450
    %v7722 = vunpack.c.l.b16 %v7451
    %v7723 = vunpack.c.h.b16 %v7451
    %v7724 = vunpack.c.l.b16 %v7452
    %v7725 = vunpack.c.h.b16 %v7452
    %v7726 = vunpack.c.l.b16 %v7453
    %v7727 = vunpack.c.h.b16 %v7453
    %v7728 = vunpack.c.l.b16 %v7454
    %v7729 = vunpack.c.h.b16 %v7454
    %v7730 = vunpack.c.l.b16 %v7455
    %v7731 = vunpack.c.h.b16 %v7455
    %v7732 = vunpack.c.l.b16 %v7456
    %v7733 = vunpack.c.h.b16 %v7456
    %v7734 = vunpack.c.l.b16 %v7457
    %v7735 = vunpack.c.h.b16 %v7457
    %v7736 = vunpack.c.l.b16 %v7458
    %v7737 = vunpack.c.h.b16 %v7458
    %v7738 = vunpack.c.l.b16 %v7459
    %v7739 = vunpack.c.h.b16 %v7459
    %v7740 = vunpack.c.l.b16 %v7460
    %v7741 = vunpack.c.h.b16 %v7460
    %v7742 = vunpack.c.l.b16 %v7461
    %v7743 = vunpack.c.h.b16 %v7461
    %v7744 = vunpack.c.l.b16 %v7462
    %v7745 = vunpack.c.h.b16 %v7462
    %v7746 = vunpack.c.l.b16 %v7463
    %v7747 = vunpack.c.h.b16 %v7463
    %v7748 = vunpack.c.l.b16 %v7464
    %v7749 = vunpack.c.h.b16 %v7464
    %v7750 = vunpack.c.l.b16 %v7465
    %v7751 = vunpack.c.h.b16 %v7465
    %v7752 = vunpack.c.l.b16 %v7466
    %v7753 = vunpack.c.h.b16 %v7466
    %v7754 = vunpack.c.l.b16 %v7467
    %v7755 = vunpack.c.h.b16 %v7467
    %v7756 = vunpack.c.l.b16 %v7468
    %v7757 = vunpack.c.h.b16 %v7468
    %v7758 = vunpack.c.l.b16 %v7469
    %v7759 = vunpack.c.h.b16 %v7469
    %v7760 = vunpack.c.l.b16 %v7470
    %v7761 = vunpack.c.h.b16 %v7470
    %v7762 = vunpack.c.l.b16 %v7471
    %v7763 = vunpack.c.h.b16 %v7471
    %v7764 = vunpack.c.l.b16 %v7472
    %v7765 = vunpack.c.h.b16 %v7472
    %v7766 = vunpack.c.l.b16 %v7473
    %v7767 = vunpack.c.h.b16 %v7473
    %v7768 = vunpack.c.l.b16 %v7474
    %v7769 = vunpack.c.h.b16 %v7474
    %v7770 = vunpack.c.l.b16 %v7475
    %v7771 = vunpack.c.h.b16 %v7475
    %v7772 = vunpack.c.l.b16 %v7476
    %v7773 = vunpack.c.h.b16 %v7476
    %v7774 = vunpack.c.l.b16 %v7477
    %v7775 = vunpack.c.h.b16 %v7477
    %v7776 = vunpack.c.l.b16 %v7478
    %v7777 = vunpack.c.h.b16 %v7478
    %v7778 = vunpack.c.l.b16 %v7479
    %v7779 = vunpack.c.h.b16 %v7479
    %v7780 = vunpack.c.l.b16 %v7480
    %v7781 = vunpack.c.h.b16 %v7480
    %v7782 = vunpack.c.l.b16 %v7481
    %v7783 = vunpack.c.h.b16 %v7481
    %v7784 = vunpack.c.l.b16 %v7482
    %v7785 = vunpack.c.h.b16 %v7482
    %v7786 = vunpack.c.l.b16 %v7483
    %v7787 = vunpack.c.h.b16 %v7483
    %v7788 = vunpack.c.l.b16 %v7484
    %v7789 = vunpack.c.h.b16 %v7484
    %v7790 = vunpack.c.l.b16 %v7485
    %v7791 = vunpack.c.h.b16 %v7485
    %v7792 = vunpack.c.l.b16 %v7486
    %v7793 = vunpack.c.h.b16 %v7486
    %v7794 = vunpack.c.l.b16 %v7487
    %v7795 = vunpack.c.h.b16 %v7487
    %v7796 = vunpack.c.l.b16 %v7488
    %v7797 = vunpack.c.h.b16 %v7488
    %v7798 = vunpack.c.l.b16 %v7489
    %v7799 = vunpack.c.h.b16 %v7489
    %v7800 = vunpack.c.l.b16 %v7490
    %v7801 = vunpack.c.h.b16 %v7490
    %v7802 = vunpack.c.l.b16 %v7491
    %v7803 = vunpack.c.h.b16 %v7491
    %v7804 = vpack.c.b16 %v7678, %v7676
    %v7805 = vpack.c.b16 %v7679, %v7677
    %v7806 = vpack.c.b16 %v7682, %v7680
    %v7807 = vpack.c.b16 %v7683, %v7681
    %v7808 = vpack.c.b16 %v7686, %v7684
    %v7809 = vpack.c.b16 %v7687, %v7685
    %v7810 = vpack.c.b16 %v7690, %v7688
    %v7811 = vpack.c.b16 %v7691, %v7689
    %v7812 = vpack.c.b16 %v7694, %v7692
    %v7813 = vpack.c.b16 %v7695, %v7693
    %v7814 = vpack.c.b16 %v7698, %v7696
    %v7815 = vpack.c.b16 %v7699, %v7697
    %v7816 = vpack.c.b16 %v7702, %v7700
    %v7817 = vpack.c.b16 %v7703, %v7701
    %v7818 = vpack.c.b16 %v7706, %v7704
    %v7819 = vpack.c.b16 %v7707, %v7705
    %v7820 = vpack.c.b16 %v7710, %v7708
    %v7821 = vpack.c.b16 %v7711, %v7709
    %v7822 = vpack.c.b16 %v7714, %v7712
    %v7823 = vpack.c.b16 %v7715, %v7713
    %v7824 = vpack.c.b16 %v7718, %v7716
    %v7825 = vpack.c.b16 %v7719, %v7717
    %v7826 = vpack.c.b16 %v7722, %v7720
    %v7827 = vpack.c.b16 %v7723, %v7721
    %v7828 = vpack.c.b16 %v7726, %v7724
    %v7829 = vpack.c.b16 %v7727, %v7725
    %v7830 = vpack.c.b16 %v7730, %v7728
    %v7831 = vpack.c.b16 %v7731, %v7729
    %v7832 = vpack.c.b16 %v7734, %v7732
    %v7833 = vpack.c.b16 %v7735, %v7733
    %v7834 = vpack.c.b16 %v7738, %v7736
    %v7835 = vpack.c.b16 %v7739, %v7737
    %v7836 = vpack.c.b16 %v7742, %v7740
    %v7837 = vpack.c.b16 %v7743, %v7741
    %v7838 = vpack.c.b16 %v7746, %v7744
    %v7839 = vpack.c.b16 %v7747, %v7745
    %v7840 = vpack.c.b16 %v7750, %v7748
    %v7841 = vpack.c.b16 %v7751, %v7749
    %v7842 = vpack.c.b16 %v7754, %v7752
    %v7843 = vpack.c.b16 %v7755, %v7753
    %v7844 = vpack.c.b16 %v7758, %v7756
    %v7845 = vpack.c.b16 %v7759, %v7757
    %v7846 = vpack.c.b16 %v7762, %v7760
    %v7847 = vpack.c.b16 %v7763, %v7761
    %v7848 = vpack.c.b16 %v7766, %v7764
    %v7849 = vpack.c.b16 %v7767, %v7765
    %v7850 = vpack.c.b16 %v7770, %v7768
    %v7851 = vpack.c.b16 %v7771, %v7769
    %v7852 = vpack.c.b16 %v7774, %v7772
    %v7853 = vpack.c.b16 %v7775, %v7773
    %v7854 = vpack.c.b16 %v7778, %v7776
    %v7855 = vpack.c.b16 %v7779, %v7777
    %v7856 = vpack.c.b16 %v7782, %v7780
    %v7857 = vpack.c.b16 %v7783, %v7781
    %v7858 = vpack.c.b16 %v7786, %v7784
    %v7859 = vpack.c.b16 %v7787, %v7785
    %v7860 = vpack.c.b16 %v7790, %v7788
    %v7861 = vpack.c.b16 %v7791, %v7789
    %v7862 = vpack.c.b16 %v7794, %v7792
    %v7863 = vpack.c.b16 %v7795, %v7793
    %v7864 = vpack.c.b16 %v7798, %v7796
    %v7865 = vpack.c.b16 %v7799, %v7797
    %v7866 = vpack.c.b16 %v7802, %v7800
    %v7867 = vpack.c.b16 %v7803, %v7801
    %7932 = vmatprep.subr.bf16.mxu0 %v7819
    %7933 = vmatpush1.bf16.msra.mxu0 %v7818
    %7934 = vmatprep.subr.bf16.mxu0 %v7817
    %7935 = vmatpush1.bf16.msra.mxu0 %v7816
    %7936 = vmatprep.subr.bf16.mxu0 %v7815
    %7937 = vmatpush1.bf16.msra.mxu0 %v7814
    %7938 = vmatprep.subr.bf16.mxu0 %v7813
    %7939 = vmatpush1.bf16.msra.mxu0 %v7812
    %7940 = vmatprep.subr.bf16.mxu0 %v7811
    %7941 = vmatpush1.bf16.msra.mxu0 %v7810
    %7942 = vmatprep.subr.bf16.mxu0 %v7809
    %7943 = vmatpush1.bf16.msra.mxu0 %v7808
    %7944 = vmatprep.subr.bf16.mxu0 %v7807
    %7945 = vmatpush1.bf16.msra.mxu0 %v7806
    %7946 = vmatprep.subr.bf16.mxu0 %v7805
    %7947 = vmatpush1.bf16.msra.mxu0 %v7804
    %7948 = vmatprep.subr.bf16.mxu0 %v7835
    %7949 = vmatpush2.bf16.msra.mxu0 %v7834
    %7950 = vmatprep.subr.bf16.mxu0 %v7833
    %7951 = vmatpush2.bf16.msra.mxu0 %v7832
    %7952 = vmatprep.subr.bf16.mxu0 %v7831
    %7953 = vmatpush2.bf16.msra.mxu0 %v7830
    %7954 = vmatprep.subr.bf16.mxu0 %v7829
    %7955 = vmatpush2.bf16.msra.mxu0 %v7828
    %7956 = vmatprep.subr.bf16.mxu0 %v7827
    %7957 = vmatpush2.bf16.msra.mxu0 %v7826
    %7958 = vmatprep.subr.bf16.mxu0 %v7825
    %7959 = vmatpush2.bf16.msra.mxu0 %v7824
    %7960 = vmatprep.subr.bf16.mxu0 %v7823
    %7961 = vmatpush2.bf16.msra.mxu0 %v7822
    %7962 = vmatprep.subr.bf16.mxu0 %v7821
    %7963 = vmatpush2.bf16.msra.mxu0 %v7820
    %7964 = vmatprep.mubr.bf16.mxu0 %v7605
    %7965 = vmatmul.mubr.bf16.gmra.mxu0 %v7604
    %v7966 = vpop.f32.mrf.mxu0
    %v7967 = vadd.f32 0.0, %v7966
    %v7968 = vpop.f32.mrf.mxu0
    %v7969 = vadd.f32 0.0, %v7968
    %v7970 = vpop.f32.mrf.mxu0
    %v7971 = vadd.f32 0.0, %v7970
    %v7972 = vpop.f32.mrf.mxu0
    %v7973 = vadd.f32 0.0, %v7972
    %7974 = vdwg.mxu0
    %7975 = vmatprep.subr.bf16.mxu0 %v7851
    %7976 = vmatpush1.bf16.msra.mxu0 %v7850
    %7977 = vmatprep.subr.bf16.mxu0 %v7849
    %7978 = vmatpush1.bf16.msra.mxu0 %v7848
    %7979 = vmatprep.subr.bf16.mxu0 %v7847
    %7980 = vmatpush1.bf16.msra.mxu0 %v7846
    %7981 = vmatprep.subr.bf16.mxu0 %v7845
    %7982 = vmatpush1.bf16.msra.mxu0 %v7844
    %7983 = vmatprep.subr.bf16.mxu0 %v7843
    %7984 = vmatpush1.bf16.msra.mxu0 %v7842
    %7985 = vmatprep.subr.bf16.mxu0 %v7841
    %7986 = vmatpush1.bf16.msra.mxu0 %v7840
    %7987 = vmatprep.subr.bf16.mxu0 %v7839
    %7988 = vmatpush1.bf16.msra.mxu0 %v7838
    %7989 = vmatprep.subr.bf16.mxu0 %v7837
    %7990 = vmatpush1.bf16.msra.mxu0 %v7836
    %7991 = vmatprep.subr.bf16.mxu0 %v7867
    %7992 = vmatpush2.bf16.msra.mxu0 %v7866
    %7993 = vmatprep.subr.bf16.mxu0 %v7865
    %7994 = vmatpush2.bf16.msra.mxu0 %v7864
    %7995 = vmatprep.subr.bf16.mxu0 %v7863
    %7996 = vmatpush2.bf16.msra.mxu0 %v7862
    %7997 = vmatprep.subr.bf16.mxu0 %v7861
    %7998 = vmatpush2.bf16.msra.mxu0 %v7860
    %7999 = vmatprep.subr.bf16.mxu0 %v7859
    %8000 = vmatpush2.bf16.msra.mxu0 %v7858
    %8001 = vmatprep.subr.bf16.mxu0 %v7857
    %8002 = vmatpush2.bf16.msra.mxu0 %v7856
    %8003 = vmatprep.subr.bf16.mxu0 %v7855
    %8004 = vmatpush2.bf16.msra.mxu0 %v7854
    %8005 = vmatprep.subr.bf16.mxu0 %v7853
    %8006 = vmatpush2.bf16.msra.mxu0 %v7852
    %8007 = vmatprep.mubr.bf16.mxu0 %v7607
    %8008 = vmatmul.mubr.bf16.gmra.mxu0 %v7606
    %v8009 = vpop.f32.mrf.mxu0
    %v8010 = vadd.f32 %v7967, %v8009
    %v8011 = vpop.f32.mrf.mxu0
    %v8012 = vadd.f32 %v7969, %v8011
    %v8013 = vpop.f32.mrf.mxu0
    %v8014 = vadd.f32 %v7971, %v8013
    %v8015 = vpop.f32.mrf.mxu0
    %v8016 = vadd.f32 %v7973, %v8015
    %8017 = vdwg.mxu0
    %v8026 = vunpack.c.l.b16 %v7288
    %v8027 = vunpack.c.l.b16 %v7289
    %v8028 = vunpack.c.l.b16 %v7290
    %v8029 = vunpack.c.l.b16 %v7291
    %v8030 = vunpack.c.l.b16 %v7324
    %v8031 = vunpack.c.l.b16 %v7325
    %v8032 = vunpack.c.l.b16 %v7326
    %v8033 = vunpack.c.l.b16 %v7327
    %v8034 = vsel %vm3284, %v7532, %v8026
    %v8035 = vsel %vm3286, %v7536, %v8034
    %v8036 = vsel %vm3288, %v7540, %v8035
    %v8037 = vsel %vm3290, %v7544, %v8036
    %v8038 = vsel %vm3292, %v8030, %v8037
    %v8039 = vsel %vm3294, %v7552, %v8038
    %v8040 = vsel %vm3296, %v7556, %v8039
    %v8041 = vsel %vm3284, %v7533, %v8027
    %v8042 = vsel %vm3286, %v7537, %v8041
    %v8043 = vsel %vm3288, %v7541, %v8042
    %v8044 = vsel %vm3290, %v7545, %v8043
    %v8045 = vsel %vm3292, %v8031, %v8044
    %v8046 = vsel %vm3294, %v7553, %v8045
    %v8047 = vsel %vm3296, %v7557, %v8046
    %v8048 = vsel %vm3284, %v7534, %v8028
    %v8049 = vsel %vm3286, %v7538, %v8048
    %v8050 = vsel %vm3288, %v7542, %v8049
    %v8051 = vsel %vm3290, %v7546, %v8050
    %v8052 = vsel %vm3292, %v8032, %v8051
    %v8053 = vsel %vm3294, %v7554, %v8052
    %v8054 = vsel %vm3296, %v7558, %v8053
    %v8055 = vsel %vm3284, %v7535, %v8029
    %v8056 = vsel %vm3286, %v7539, %v8055
    %v8057 = vsel %vm3288, %v7543, %v8056
    %v8058 = vsel %vm3290, %v7547, %v8057
    %v8059 = vsel %vm3292, %v8033, %v8058
    %v8060 = vsel %vm3294, %v7555, %v8059
    %v8061 = vsel %vm3296, %v7559, %v8060
    %v8062 = vsel %vm3284, %v7564, %v7560
    %v8063 = vsel %vm3284, %v7565, %v7561
    %v8064 = vsel %vm3284, %v7566, %v7562
    %v8065 = vsel %vm3284, %v7567, %v7563
    %v8066 = vpack.c.b16 %v8062, %v8040
    %v8067 = vpack.c.b16 %v8063, %v8047
    %v8068 = vpack.c.b16 %v8064, %v8054
    %v8069 = vpack.c.b16 %v8065, %v8061
    %v8138 = vunpack.c.l.b16 %v7364
    %v8139 = vunpack.c.h.b16 %v7364
    %v8140 = vunpack.c.l.b16 %v7365
    %v8141 = vunpack.c.h.b16 %v7365
    %v8142 = vunpack.c.l.b16 %v7366
    %v8143 = vunpack.c.h.b16 %v7366
    %v8144 = vunpack.c.l.b16 %v7367
    %v8145 = vunpack.c.h.b16 %v7367
    %v8146 = vunpack.c.l.b16 %v7368
    %v8147 = vunpack.c.h.b16 %v7368
    %v8148 = vunpack.c.l.b16 %v7369
    %v8149 = vunpack.c.h.b16 %v7369
    %v8150 = vunpack.c.l.b16 %v7370
    %v8151 = vunpack.c.h.b16 %v7370
    %v8152 = vunpack.c.l.b16 %v7371
    %v8153 = vunpack.c.h.b16 %v7371
    %v8154 = vunpack.c.l.b16 %v7372
    %v8155 = vunpack.c.h.b16 %v7372
    %v8156 = vunpack.c.l.b16 %v7373
    %v8157 = vunpack.c.h.b16 %v7373
    %v8158 = vunpack.c.l.b16 %v7374
    %v8159 = vunpack.c.h.b16 %v7374
    %v8160 = vunpack.c.l.b16 %v7375
    %v8161 = vunpack.c.h.b16 %v7375
    %v8162 = vunpack.c.l.b16 %v7376
    %v8163 = vunpack.c.h.b16 %v7376
    %v8164 = vunpack.c.l.b16 %v7377
    %v8165 = vunpack.c.h.b16 %v7377
    %v8166 = vunpack.c.l.b16 %v7378
    %v8167 = vunpack.c.h.b16 %v7378
    %v8168 = vunpack.c.l.b16 %v7379
    %v8169 = vunpack.c.h.b16 %v7379
    %v8170 = vunpack.c.l.b16 %v7380
    %v8171 = vunpack.c.h.b16 %v7380
    %v8172 = vunpack.c.l.b16 %v7381
    %v8173 = vunpack.c.h.b16 %v7381
    %v8174 = vunpack.c.l.b16 %v7382
    %v8175 = vunpack.c.h.b16 %v7382
    %v8176 = vunpack.c.l.b16 %v7383
    %v8177 = vunpack.c.h.b16 %v7383
    %v8178 = vunpack.c.l.b16 %v7384
    %v8179 = vunpack.c.h.b16 %v7384
    %v8180 = vunpack.c.l.b16 %v7385
    %v8181 = vunpack.c.h.b16 %v7385
    %v8182 = vunpack.c.l.b16 %v7386
    %v8183 = vunpack.c.h.b16 %v7386
    %v8184 = vunpack.c.l.b16 %v7387
    %v8185 = vunpack.c.h.b16 %v7387
    %v8186 = vunpack.c.l.b16 %v7388
    %v8187 = vunpack.c.h.b16 %v7388
    %v8188 = vunpack.c.l.b16 %v7389
    %v8189 = vunpack.c.h.b16 %v7389
    %v8190 = vunpack.c.l.b16 %v7390
    %v8191 = vunpack.c.h.b16 %v7390
    %v8192 = vunpack.c.l.b16 %v7391
    %v8193 = vunpack.c.h.b16 %v7391
    %v8194 = vunpack.c.l.b16 %v7392
    %v8195 = vunpack.c.h.b16 %v7392
    %v8196 = vunpack.c.l.b16 %v7393
    %v8197 = vunpack.c.h.b16 %v7393
    %v8198 = vunpack.c.l.b16 %v7394
    %v8199 = vunpack.c.h.b16 %v7394
    %v8200 = vunpack.c.l.b16 %v7395
    %v8201 = vunpack.c.h.b16 %v7395
    %v8202 = vunpack.c.l.b16 %v7396
    %v8203 = vunpack.c.h.b16 %v7396
    %v8204 = vunpack.c.l.b16 %v7397
    %v8205 = vunpack.c.h.b16 %v7397
    %v8206 = vunpack.c.l.b16 %v7398
    %v8207 = vunpack.c.h.b16 %v7398
    %v8208 = vunpack.c.l.b16 %v7399
    %v8209 = vunpack.c.h.b16 %v7399
    %v8210 = vunpack.c.l.b16 %v7400
    %v8211 = vunpack.c.h.b16 %v7400
    %v8212 = vunpack.c.l.b16 %v7401
    %v8213 = vunpack.c.h.b16 %v7401
    %v8214 = vunpack.c.l.b16 %v7402
    %v8215 = vunpack.c.h.b16 %v7402
    %v8216 = vunpack.c.l.b16 %v7403
    %v8217 = vunpack.c.h.b16 %v7403
    %v8218 = vunpack.c.l.b16 %v7404
    %v8219 = vunpack.c.h.b16 %v7404
    %v8220 = vunpack.c.l.b16 %v7405
    %v8221 = vunpack.c.h.b16 %v7405
    %v8222 = vunpack.c.l.b16 %v7406
    %v8223 = vunpack.c.h.b16 %v7406
    %v8224 = vunpack.c.l.b16 %v7407
    %v8225 = vunpack.c.h.b16 %v7407
    %v8226 = vunpack.c.l.b16 %v7408
    %v8227 = vunpack.c.h.b16 %v7408
    %v8228 = vunpack.c.l.b16 %v7409
    %v8229 = vunpack.c.h.b16 %v7409
    %v8230 = vunpack.c.l.b16 %v7410
    %v8231 = vunpack.c.h.b16 %v7410
    %v8232 = vunpack.c.l.b16 %v7411
    %v8233 = vunpack.c.h.b16 %v7411
    %v8234 = vunpack.c.l.b16 %v7412
    %v8235 = vunpack.c.h.b16 %v7412
    %v8236 = vunpack.c.l.b16 %v7413
    %v8237 = vunpack.c.h.b16 %v7413
    %v8238 = vunpack.c.l.b16 %v7414
    %v8239 = vunpack.c.h.b16 %v7414
    %v8240 = vunpack.c.l.b16 %v7415
    %v8241 = vunpack.c.h.b16 %v7415
    %v8242 = vunpack.c.l.b16 %v7416
    %v8243 = vunpack.c.h.b16 %v7416
    %v8244 = vunpack.c.l.b16 %v7417
    %v8245 = vunpack.c.h.b16 %v7417
    %v8246 = vunpack.c.l.b16 %v7418
    %v8247 = vunpack.c.h.b16 %v7418
    %v8248 = vunpack.c.l.b16 %v7419
    %v8249 = vunpack.c.h.b16 %v7419
    %v8250 = vunpack.c.l.b16 %v7420
    %v8251 = vunpack.c.h.b16 %v7420
    %v8252 = vunpack.c.l.b16 %v7421
    %v8253 = vunpack.c.h.b16 %v7421
    %v8254 = vunpack.c.l.b16 %v7422
    %v8255 = vunpack.c.h.b16 %v7422
    %v8256 = vunpack.c.l.b16 %v7423
    %v8257 = vunpack.c.h.b16 %v7423
    %v8258 = vunpack.c.l.b16 %v7424
    %v8259 = vunpack.c.h.b16 %v7424
    %v8260 = vunpack.c.l.b16 %v7425
    %v8261 = vunpack.c.h.b16 %v7425
    %v8262 = vunpack.c.l.b16 %v7426
    %v8263 = vunpack.c.h.b16 %v7426
    %v8264 = vunpack.c.l.b16 %v7427
    %v8265 = vunpack.c.h.b16 %v7427
    %v8266 = vpack.c.b16 %v8140, %v8138
    %v8267 = vpack.c.b16 %v8141, %v8139
    %v8268 = vpack.c.b16 %v8144, %v8142
    %v8269 = vpack.c.b16 %v8145, %v8143
    %v8270 = vpack.c.b16 %v8148, %v8146
    %v8271 = vpack.c.b16 %v8149, %v8147
    %v8272 = vpack.c.b16 %v8152, %v8150
    %v8273 = vpack.c.b16 %v8153, %v8151
    %v8274 = vpack.c.b16 %v8156, %v8154
    %v8275 = vpack.c.b16 %v8157, %v8155
    %v8276 = vpack.c.b16 %v8160, %v8158
    %v8277 = vpack.c.b16 %v8161, %v8159
    %v8278 = vpack.c.b16 %v8164, %v8162
    %v8279 = vpack.c.b16 %v8165, %v8163
    %v8280 = vpack.c.b16 %v8168, %v8166
    %v8281 = vpack.c.b16 %v8169, %v8167
    %v8282 = vpack.c.b16 %v8172, %v8170
    %v8283 = vpack.c.b16 %v8173, %v8171
    %v8284 = vpack.c.b16 %v8176, %v8174
    %v8285 = vpack.c.b16 %v8177, %v8175
    %v8286 = vpack.c.b16 %v8180, %v8178
    %v8287 = vpack.c.b16 %v8181, %v8179
    %v8288 = vpack.c.b16 %v8184, %v8182
    %v8289 = vpack.c.b16 %v8185, %v8183
    %v8290 = vpack.c.b16 %v8188, %v8186
    %v8291 = vpack.c.b16 %v8189, %v8187
    %v8292 = vpack.c.b16 %v8192, %v8190
    %v8293 = vpack.c.b16 %v8193, %v8191
    %v8294 = vpack.c.b16 %v8196, %v8194
    %v8295 = vpack.c.b16 %v8197, %v8195
    %v8296 = vpack.c.b16 %v8200, %v8198
    %v8297 = vpack.c.b16 %v8201, %v8199
    %v8298 = vpack.c.b16 %v8204, %v8202
    %v8299 = vpack.c.b16 %v8205, %v8203
    %v8300 = vpack.c.b16 %v8208, %v8206
    %v8301 = vpack.c.b16 %v8209, %v8207
    %v8302 = vpack.c.b16 %v8212, %v8210
    %v8303 = vpack.c.b16 %v8213, %v8211
    %v8304 = vpack.c.b16 %v8216, %v8214
    %v8305 = vpack.c.b16 %v8217, %v8215
    %v8306 = vpack.c.b16 %v8220, %v8218
    %v8307 = vpack.c.b16 %v8221, %v8219
    %v8308 = vpack.c.b16 %v8224, %v8222
    %v8309 = vpack.c.b16 %v8225, %v8223
    %v8310 = vpack.c.b16 %v8228, %v8226
    %v8311 = vpack.c.b16 %v8229, %v8227
    %v8312 = vpack.c.b16 %v8232, %v8230
    %v8313 = vpack.c.b16 %v8233, %v8231
    %v8314 = vpack.c.b16 %v8236, %v8234
    %v8315 = vpack.c.b16 %v8237, %v8235
    %v8316 = vpack.c.b16 %v8240, %v8238
    %v8317 = vpack.c.b16 %v8241, %v8239
    %v8318 = vpack.c.b16 %v8244, %v8242
    %v8319 = vpack.c.b16 %v8245, %v8243
    %v8320 = vpack.c.b16 %v8248, %v8246
    %v8321 = vpack.c.b16 %v8249, %v8247
    %v8322 = vpack.c.b16 %v8252, %v8250
    %v8323 = vpack.c.b16 %v8253, %v8251
    %v8324 = vpack.c.b16 %v8256, %v8254
    %v8325 = vpack.c.b16 %v8257, %v8255
    %v8326 = vpack.c.b16 %v8260, %v8258
    %v8327 = vpack.c.b16 %v8261, %v8259
    %v8328 = vpack.c.b16 %v8264, %v8262
    %v8329 = vpack.c.b16 %v8265, %v8263
    %8394 = vmatprep.subr.bf16.mxu0 %v8281
    %8395 = vmatpush1.bf16.msra.mxu0 %v8280
    %8396 = vmatprep.subr.bf16.mxu0 %v8279
    %8397 = vmatpush1.bf16.msra.mxu0 %v8278
    %8398 = vmatprep.subr.bf16.mxu0 %v8277
    %8399 = vmatpush1.bf16.msra.mxu0 %v8276
    %8400 = vmatprep.subr.bf16.mxu0 %v8275
    %8401 = vmatpush1.bf16.msra.mxu0 %v8274
    %8402 = vmatprep.subr.bf16.mxu0 %v8273
    %8403 = vmatpush1.bf16.msra.mxu0 %v8272
    %8404 = vmatprep.subr.bf16.mxu0 %v8271
    %8405 = vmatpush1.bf16.msra.mxu0 %v8270
    %8406 = vmatprep.subr.bf16.mxu0 %v8269
    %8407 = vmatpush1.bf16.msra.mxu0 %v8268
    %8408 = vmatprep.subr.bf16.mxu0 %v8267
    %8409 = vmatpush1.bf16.msra.mxu0 %v8266
    %8410 = vmatprep.subr.bf16.mxu0 %v8297
    %8411 = vmatpush2.bf16.msra.mxu0 %v8296
    %8412 = vmatprep.subr.bf16.mxu0 %v8295
    %8413 = vmatpush2.bf16.msra.mxu0 %v8294
    %8414 = vmatprep.subr.bf16.mxu0 %v8293
    %8415 = vmatpush2.bf16.msra.mxu0 %v8292
    %8416 = vmatprep.subr.bf16.mxu0 %v8291
    %8417 = vmatpush2.bf16.msra.mxu0 %v8290
    %8418 = vmatprep.subr.bf16.mxu0 %v8289
    %8419 = vmatpush2.bf16.msra.mxu0 %v8288
    %8420 = vmatprep.subr.bf16.mxu0 %v8287
    %8421 = vmatpush2.bf16.msra.mxu0 %v8286
    %8422 = vmatprep.subr.bf16.mxu0 %v8285
    %8423 = vmatpush2.bf16.msra.mxu0 %v8284
    %8424 = vmatprep.subr.bf16.mxu0 %v8283
    %8425 = vmatpush2.bf16.msra.mxu0 %v8282
    %8426 = vmatprep.mubr.bf16.mxu0 %v8067
    %8427 = vmatmul.mubr.bf16.gmra.mxu0 %v8066
    %v8428 = vpop.f32.mrf.mxu0
    %v8429 = vadd.f32 %v8010, %v8428
    %v8430 = vpop.f32.mrf.mxu0
    %v8431 = vadd.f32 %v8012, %v8430
    %v8432 = vpop.f32.mrf.mxu0
    %v8433 = vadd.f32 %v8014, %v8432
    %v8434 = vpop.f32.mrf.mxu0
    %v8435 = vadd.f32 %v8016, %v8434
    %8436 = vdwg.mxu0
    %8437 = vmatprep.subr.bf16.mxu0 %v8313
    %8438 = vmatpush1.bf16.msra.mxu0 %v8312
    %8439 = vmatprep.subr.bf16.mxu0 %v8311
    %8440 = vmatpush1.bf16.msra.mxu0 %v8310
    %8441 = vmatprep.subr.bf16.mxu0 %v8309
    %8442 = vmatpush1.bf16.msra.mxu0 %v8308
    %8443 = vmatprep.subr.bf16.mxu0 %v8307
    %8444 = vmatpush1.bf16.msra.mxu0 %v8306
    %8445 = vmatprep.subr.bf16.mxu0 %v8305
    %8446 = vmatpush1.bf16.msra.mxu0 %v8304
    %8447 = vmatprep.subr.bf16.mxu0 %v8303
    %8448 = vmatpush1.bf16.msra.mxu0 %v8302
    %8449 = vmatprep.subr.bf16.mxu0 %v8301
    %8450 = vmatpush1.bf16.msra.mxu0 %v8300
    %8451 = vmatprep.subr.bf16.mxu0 %v8299
    %8452 = vmatpush1.bf16.msra.mxu0 %v8298
    %8453 = vmatprep.subr.bf16.mxu0 %v8329
    %8454 = vmatpush2.bf16.msra.mxu0 %v8328
    %8455 = vmatprep.subr.bf16.mxu0 %v8327
    %8456 = vmatpush2.bf16.msra.mxu0 %v8326
    %8457 = vmatprep.subr.bf16.mxu0 %v8325
    %8458 = vmatpush2.bf16.msra.mxu0 %v8324
    %8459 = vmatprep.subr.bf16.mxu0 %v8323
    %8460 = vmatpush2.bf16.msra.mxu0 %v8322
    %8461 = vmatprep.subr.bf16.mxu0 %v8321
    %8462 = vmatpush2.bf16.msra.mxu0 %v8320
    %8463 = vmatprep.subr.bf16.mxu0 %v8319
    %8464 = vmatpush2.bf16.msra.mxu0 %v8318
    %8465 = vmatprep.subr.bf16.mxu0 %v8317
    %8466 = vmatpush2.bf16.msra.mxu0 %v8316
    %8467 = vmatprep.subr.bf16.mxu0 %v8315
    %8468 = vmatpush2.bf16.msra.mxu0 %v8314
    %8469 = vmatprep.mubr.bf16.mxu0 %v8069
    %8470 = vmatmul.mubr.bf16.gmra.mxu0 %v8068
    %v8471 = vpop.f32.mrf.mxu0
    %v8472 = vadd.f32 %v8429, %v8471
    %v8473 = vpop.f32.mrf.mxu0
    %v8474 = vadd.f32 %v8431, %v8473
    %v8475 = vpop.f32.mrf.mxu0
    %v8476 = vadd.f32 %v8433, %v8475
    %v8477 = vpop.f32.mrf.mxu0
    %v8478 = vadd.f32 %v8435, %v8477
    %8479 = vdwg.mxu0
    %v8480 = vld [vmem:[#allocation3 + $0x400] sm:$0xff]
    %v8481 = vld [vmem:[#allocation3 + $0x408] sm:$0xff]
    %v8482 = vld [vmem:[#allocation3 + $0x410] sm:$0xff]
    %v8483 = vld [vmem:[#allocation3 + $0x418] sm:$0xff]
    %v8484 = vld [vmem:[#allocation3 + $0x420] sm:$0xff]
    %v8485 = vld [vmem:[#allocation3 + $0x428] sm:$0xff]
    %v8486 = vld [vmem:[#allocation3 + $0x430] sm:$0xff]
    %v8487 = vld [vmem:[#allocation3 + $0x438] sm:$0xff]
    %v8488 = vld [vmem:[#allocation3 + $0x440] sm:$0xff]
    %v8489 = vld [vmem:[#allocation3 + $0x448] sm:$0xff]
    %v8490 = vld [vmem:[#allocation3 + $0x450] sm:$0xff]
    %v8491 = vld [vmem:[#allocation3 + $0x458] sm:$0xff]
    %v8492 = vld [vmem:[#allocation3 + $0x460] sm:$0xff]
    %v8493 = vld [vmem:[#allocation3 + $0x468] sm:$0xff]
    %v8494 = vld [vmem:[#allocation3 + $0x470] sm:$0xff]
    %v8495 = vld [vmem:[#allocation3 + $0x478] sm:$0xff]
    %v8496 = vld [vmem:[#allocation3 + $0x480] sm:$0xff]
    %v8497 = vld [vmem:[#allocation3 + $0x488] sm:$0xff]
    %v8498 = vld [vmem:[#allocation3 + $0x490] sm:$0xff]
    %v8499 = vld [vmem:[#allocation3 + $0x498] sm:$0xff]
    %v8500 = vld [vmem:[#allocation3 + $0x4a0] sm:$0xff]
    %v8501 = vld [vmem:[#allocation3 + $0x4a8] sm:$0xff]
    %v8502 = vld [vmem:[#allocation3 + $0x4b0] sm:$0xff]
    %v8503 = vld [vmem:[#allocation3 + $0x4b8] sm:$0xff]
    %v8504 = vld [vmem:[#allocation3 + $0x4c0] sm:$0xff]
    %v8505 = vld [vmem:[#allocation3 + $0x4c8] sm:$0xff]
    %v8506 = vld [vmem:[#allocation3 + $0x4d0] sm:$0xff]
    %v8507 = vld [vmem:[#allocation3 + $0x4d8] sm:$0xff]
    %v8508 = vld [vmem:[#allocation3 + $0x4e0] sm:$0xff]
    %v8509 = vld [vmem:[#allocation3 + $0x4e8] sm:$0xff]
    %v8510 = vld [vmem:[#allocation3 + $0x4f0] sm:$0xff]
    %v8511 = vld [vmem:[#allocation3 + $0x4f8] sm:$0xff]
    %v8512 = vld [vmem:[#allocation3 + $0x500] sm:$0xff]
    %v8513 = vld [vmem:[#allocation3 + $0x508] sm:$0xff]
    %v8514 = vld [vmem:[#allocation3 + $0x510] sm:$0xff]
    %v8515 = vld [vmem:[#allocation3 + $0x518] sm:$0xff]
    %v8516 = vld [vmem:[#allocation3 + $0x520] sm:$0xff]
    %v8517 = vld [vmem:[#allocation3 + $0x528] sm:$0xff]
    %v8518 = vld [vmem:[#allocation3 + $0x530] sm:$0xff]
    %v8519 = vld [vmem:[#allocation3 + $0x538] sm:$0xff]
    %v8520 = vld [vmem:[#allocation3 + $0x540] sm:$0xff]
    %v8521 = vld [vmem:[#allocation3 + $0x548] sm:$0xff]
    %v8522 = vld [vmem:[#allocation3 + $0x550] sm:$0xff]
    %v8523 = vld [vmem:[#allocation3 + $0x558] sm:$0xff]
    %v8524 = vld [vmem:[#allocation3 + $0x560] sm:$0xff]
    %v8525 = vld [vmem:[#allocation3 + $0x568] sm:$0xff]
    %v8526 = vld [vmem:[#allocation3 + $0x570] sm:$0xff]
    %v8527 = vld [vmem:[#allocation3 + $0x578] sm:$0xff]
    %v8528 = vld [vmem:[#allocation3 + $0x580] sm:$0xff]
    %v8529 = vld [vmem:[#allocation3 + $0x588] sm:$0xff]
    %v8530 = vld [vmem:[#allocation3 + $0x590] sm:$0xff]
    %v8531 = vld [vmem:[#allocation3 + $0x598] sm:$0xff]
    %v8532 = vld [vmem:[#allocation3 + $0x5a0] sm:$0xff]
    %v8533 = vld [vmem:[#allocation3 + $0x5a8] sm:$0xff]
    %v8534 = vld [vmem:[#allocation3 + $0x5b0] sm:$0xff]
    %v8535 = vld [vmem:[#allocation3 + $0x5b8] sm:$0xff]
    %v8536 = vld [vmem:[#allocation3 + $0x5c0] sm:$0xff]
    %v8537 = vld [vmem:[#allocation3 + $0x5c8] sm:$0xff]
    %v8538 = vld [vmem:[#allocation3 + $0x5d0] sm:$0xff]
    %v8539 = vld [vmem:[#allocation3 + $0x5d8] sm:$0xff]
    %v8540 = vld [vmem:[#allocation3 + $0x5e0] sm:$0xff]
    %v8541 = vld [vmem:[#allocation3 + $0x5e8] sm:$0xff]
    %v8542 = vld [vmem:[#allocation3 + $0x5f0] sm:$0xff]
    %v8543 = vld [vmem:[#allocation3 + $0x5f8] sm:$0xff]
    %v8552 = vunpack.c.l.b16 %v7312
    %v8553 = vunpack.c.l.b16 %v7313
    %v8554 = vunpack.c.l.b16 %v7314
    %v8555 = vunpack.c.l.b16 %v7315
    %v8556 = vunpack.c.l.b16 %v7348
    %v8557 = vunpack.c.l.b16 %v7349
    %v8558 = vunpack.c.l.b16 %v7350
    %v8559 = vunpack.c.l.b16 %v7351
    %v8560 = vsel %vm3284, %v7540, %v7536
    %v8561 = vsel %vm3286, %v7544, %v8560
    %v8562 = vsel %vm3288, %v7548, %v8561
    %v8563 = vsel %vm3290, %v8552, %v8562
    %v8564 = vsel %vm3292, %v7556, %v8563
    %v8565 = vsel %vm3294, %v7560, %v8564
    %v8566 = vsel %vm3296, %v7564, %v8565
    %v8567 = vsel %vm3284, %v7541, %v7537
    %v8568 = vsel %vm3286, %v7545, %v8567
    %v8569 = vsel %vm3288, %v7549, %v8568
    %v8570 = vsel %vm3290, %v8553, %v8569
    %v8571 = vsel %vm3292, %v7557, %v8570
    %v8572 = vsel %vm3294, %v7561, %v8571
    %v8573 = vsel %vm3296, %v7565, %v8572
    %v8574 = vsel %vm3284, %v7542, %v7538
    %v8575 = vsel %vm3286, %v7546, %v8574
    %v8576 = vsel %vm3288, %v7550, %v8575
    %v8577 = vsel %vm3290, %v8554, %v8576
    %v8578 = vsel %vm3292, %v7558, %v8577
    %v8579 = vsel %vm3294, %v7562, %v8578
    %v8580 = vsel %vm3296, %v7566, %v8579
    %v8581 = vsel %vm3284, %v7543, %v7539
    %v8582 = vsel %vm3286, %v7547, %v8581
    %v8583 = vsel %vm3288, %v7551, %v8582
    %v8584 = vsel %vm3290, %v8555, %v8583
    %v8585 = vsel %vm3292, %v7559, %v8584
    %v8586 = vsel %vm3294, %v7563, %v8585
    %v8587 = vsel %vm3296, %v7567, %v8586
    %v8588 = vsel %vm3284, %v8556, %v7568
    %v8589 = vsel %vm3284, %v8557, %v7569
    %v8590 = vsel %vm3284, %v8558, %v7570
    %v8591 = vsel %vm3284, %v8559, %v7571
    %v8592 = vpack.c.b16 %v8588, %v8566
    %v8593 = vpack.c.b16 %v8589, %v8573
    %v8594 = vpack.c.b16 %v8590, %v8580
    %v8595 = vpack.c.b16 %v8591, %v8587
    %v8664 = vunpack.c.l.b16 %v8480
    %v8665 = vunpack.c.h.b16 %v8480
    %v8666 = vunpack.c.l.b16 %v8481
    %v8667 = vunpack.c.h.b16 %v8481
    %v8668 = vunpack.c.l.b16 %v8482
    %v8669 = vunpack.c.h.b16 %v8482
    %v8670 = vunpack.c.l.b16 %v8483
    %v8671 = vunpack.c.h.b16 %v8483
    %v8672 = vunpack.c.l.b16 %v8484
    %v8673 = vunpack.c.h.b16 %v8484
    %v8674 = vunpack.c.l.b16 %v8485
    %v8675 = vunpack.c.h.b16 %v8485
    %v8676 = vunpack.c.l.b16 %v8486
    %v8677 = vunpack.c.h.b16 %v8486
    %v8678 = vunpack.c.l.b16 %v8487
    %v8679 = vunpack.c.h.b16 %v8487
    %v8680 = vunpack.c.l.b16 %v8488
    %v8681 = vunpack.c.h.b16 %v8488
    %v8682 = vunpack.c.l.b16 %v8489
    %v8683 = vunpack.c.h.b16 %v8489
    %v8684 = vunpack.c.l.b16 %v8490
    %v8685 = vunpack.c.h.b16 %v8490
    %v8686 = vunpack.c.l.b16 %v8491
    %v8687 = vunpack.c.h.b16 %v8491
    %v8688 = vunpack.c.l.b16 %v8492
    %v8689 = vunpack.c.h.b16 %v8492
    %v8690 = vunpack.c.l.b16 %v8493
    %v8691 = vunpack.c.h.b16 %v8493
    %v8692 = vunpack.c.l.b16 %v8494
    %v8693 = vunpack.c.h.b16 %v8494
    %v8694 = vunpack.c.l.b16 %v8495
    %v8695 = vunpack.c.h.b16 %v8495
    %v8696 = vunpack.c.l.b16 %v8496
    %v8697 = vunpack.c.h.b16 %v8496
    %v8698 = vunpack.c.l.b16 %v8497
    %v8699 = vunpack.c.h.b16 %v8497
    %v8700 = vunpack.c.l.b16 %v8498
    %v8701 = vunpack.c.h.b16 %v8498
    %v8702 = vunpack.c.l.b16 %v8499
    %v8703 = vunpack.c.h.b16 %v8499
    %v8704 = vunpack.c.l.b16 %v8500
    %v8705 = vunpack.c.h.b16 %v8500
    %v8706 = vunpack.c.l.b16 %v8501
    %v8707 = vunpack.c.h.b16 %v8501
    %v8708 = vunpack.c.l.b16 %v8502
    %v8709 = vunpack.c.h.b16 %v8502
    %v8710 = vunpack.c.l.b16 %v8503
    %v8711 = vunpack.c.h.b16 %v8503
    %v8712 = vunpack.c.l.b16 %v8504
    %v8713 = vunpack.c.h.b16 %v8504
    %v8714 = vunpack.c.l.b16 %v8505
    %v8715 = vunpack.c.h.b16 %v8505
    %v8716 = vunpack.c.l.b16 %v8506
    %v8717 = vunpack.c.h.b16 %v8506
    %v8718 = vunpack.c.l.b16 %v8507
    %v8719 = vunpack.c.h.b16 %v8507
    %v8720 = vunpack.c.l.b16 %v8508
    %v8721 = vunpack.c.h.b16 %v8508
    %v8722 = vunpack.c.l.b16 %v8509
    %v8723 = vunpack.c.h.b16 %v8509
    %v8724 = vunpack.c.l.b16 %v8510
    %v8725 = vunpack.c.h.b16 %v8510
    %v8726 = vunpack.c.l.b16 %v8511
    %v8727 = vunpack.c.h.b16 %v8511
    %v8728 = vunpack.c.l.b16 %v8512
    %v8729 = vunpack.c.h.b16 %v8512
    %v8730 = vunpack.c.l.b16 %v8513
    %v8731 = vunpack.c.h.b16 %v8513
    %v8732 = vunpack.c.l.b16 %v8514
    %v8733 = vunpack.c.h.b16 %v8514
    %v8734 = vunpack.c.l.b16 %v8515
    %v8735 = vunpack.c.h.b16 %v8515
    %v8736 = vunpack.c.l.b16 %v8516
    %v8737 = vunpack.c.h.b16 %v8516
    %v8738 = vunpack.c.l.b16 %v8517
    %v8739 = vunpack.c.h.b16 %v8517
    %v8740 = vunpack.c.l.b16 %v8518
    %v8741 = vunpack.c.h.b16 %v8518
    %v8742 = vunpack.c.l.b16 %v8519
    %v8743 = vunpack.c.h.b16 %v8519
    %v8744 = vunpack.c.l.b16 %v8520
    %v8745 = vunpack.c.h.b16 %v8520
    %v8746 = vunpack.c.l.b16 %v8521
    %v8747 = vunpack.c.h.b16 %v8521
    %v8748 = vunpack.c.l.b16 %v8522
    %v8749 = vunpack.c.h.b16 %v8522
    %v8750 = vunpack.c.l.b16 %v8523
    %v8751 = vunpack.c.h.b16 %v8523
    %v8752 = vunpack.c.l.b16 %v8524
    %v8753 = vunpack.c.h.b16 %v8524
    %v8754 = vunpack.c.l.b16 %v8525
    %v8755 = vunpack.c.h.b16 %v8525
    %v8756 = vunpack.c.l.b16 %v8526
    %v8757 = vunpack.c.h.b16 %v8526
    %v8758 = vunpack.c.l.b16 %v8527
    %v8759 = vunpack.c.h.b16 %v8527
    %v8760 = vunpack.c.l.b16 %v8528
    %v8761 = vunpack.c.h.b16 %v8528
    %v8762 = vunpack.c.l.b16 %v8529
    %v8763 = vunpack.c.h.b16 %v8529
    %v8764 = vunpack.c.l.b16 %v8530
    %v8765 = vunpack.c.h.b16 %v8530
    %v8766 = vunpack.c.l.b16 %v8531
    %v8767 = vunpack.c.h.b16 %v8531
    %v8768 = vunpack.c.l.b16 %v8532
    %v8769 = vunpack.c.h.b16 %v8532
    %v8770 = vunpack.c.l.b16 %v8533
    %v8771 = vunpack.c.h.b16 %v8533
    %v8772 = vunpack.c.l.b16 %v8534
    %v8773 = vunpack.c.h.b16 %v8534
    %v8774 = vunpack.c.l.b16 %v8535
    %v8775 = vunpack.c.h.b16 %v8535
    %v8776 = vunpack.c.l.b16 %v8536
    %v8777 = vunpack.c.h.b16 %v8536
    %v8778 = vunpack.c.l.b16 %v8537
    %v8779 = vunpack.c.h.b16 %v8537
    %v8780 = vunpack.c.l.b16 %v8538
    %v8781 = vunpack.c.h.b16 %v8538
    %v8782 = vunpack.c.l.b16 %v8539
    %v8783 = vunpack.c.h.b16 %v8539
    %v8784 = vunpack.c.l.b16 %v8540
    %v8785 = vunpack.c.h.b16 %v8540
    %v8786 = vunpack.c.l.b16 %v8541
    %v8787 = vunpack.c.h.b16 %v8541
    %v8788 = vunpack.c.l.b16 %v8542
    %v8789 = vunpack.c.h.b16 %v8542
    %v8790 = vunpack.c.l.b16 %v8543
    %v8791 = vunpack.c.h.b16 %v8543
    %v8792 = vpack.c.b16 %v8666, %v8664
    %v8793 = vpack.c.b16 %v8667, %v8665
    %v8794 = vpack.c.b16 %v8670, %v8668
    %v8795 = vpack.c.b16 %v8671, %v8669
    %v8796 = vpack.c.b16 %v8674, %v8672
    %v8797 = vpack.c.b16 %v8675, %v8673
    %v8798 = vpack.c.b16 %v8678, %v8676
    %v8799 = vpack.c.b16 %v8679, %v8677
    %v8800 = vpack.c.b16 %v8682, %v8680
    %v8801 = vpack.c.b16 %v8683, %v8681
    %v8802 = vpack.c.b16 %v8686, %v8684
    %v8803 = vpack.c.b16 %v8687, %v8685
    %v8804 = vpack.c.b16 %v8690, %v8688
    %v8805 = vpack.c.b16 %v8691, %v8689
    %v8806 = vpack.c.b16 %v8694, %v8692
    %v8807 = vpack.c.b16 %v8695, %v8693
    %v8808 = vpack.c.b16 %v8698, %v8696
    %v8809 = vpack.c.b16 %v8699, %v8697
    %v8810 = vpack.c.b16 %v8702, %v8700
    %v8811 = vpack.c.b16 %v8703, %v8701
    %v8812 = vpack.c.b16 %v8706, %v8704
    %v8813 = vpack.c.b16 %v8707, %v8705
    %v8814 = vpack.c.b16 %v8710, %v8708
    %v8815 = vpack.c.b16 %v8711, %v8709
    %v8816 = vpack.c.b16 %v8714, %v8712
    %v8817 = vpack.c.b16 %v8715, %v8713
    %v8818 = vpack.c.b16 %v8718, %v8716
    %v8819 = vpack.c.b16 %v8719, %v8717
    %v8820 = vpack.c.b16 %v8722, %v8720
    %v8821 = vpack.c.b16 %v8723, %v8721
    %v8822 = vpack.c.b16 %v8726, %v8724
    %v8823 = vpack.c.b16 %v8727, %v8725
    %v8824 = vpack.c.b16 %v8730, %v8728
    %v8825 = vpack.c.b16 %v8731, %v8729
    %v8826 = vpack.c.b16 %v8734, %v8732
    %v8827 = vpack.c.b16 %v8735, %v8733
    %v8828 = vpack.c.b16 %v8738, %v8736
    %v8829 = vpack.c.b16 %v8739, %v8737
    %v8830 = vpack.c.b16 %v8742, %v8740
    %v8831 = vpack.c.b16 %v8743, %v8741
    %v8832 = vpack.c.b16 %v8746, %v8744
    %v8833 = vpack.c.b16 %v8747, %v8745
    %v8834 = vpack.c.b16 %v8750, %v8748
    %v8835 = vpack.c.b16 %v8751, %v8749
    %v8836 = vpack.c.b16 %v8754, %v8752
    %v8837 = vpack.c.b16 %v8755, %v8753
    %v8838 = vpack.c.b16 %v8758, %v8756
    %v8839 = vpack.c.b16 %v8759, %v8757
    %v8840 = vpack.c.b16 %v8762, %v8760
    %v8841 = vpack.c.b16 %v8763, %v8761
    %v8842 = vpack.c.b16 %v8766, %v8764
    %v8843 = vpack.c.b16 %v8767, %v8765
    %v8844 = vpack.c.b16 %v8770, %v8768
    %v8845 = vpack.c.b16 %v8771, %v8769
    %v8846 = vpack.c.b16 %v8774, %v8772
    %v8847 = vpack.c.b16 %v8775, %v8773
    %v8848 = vpack.c.b16 %v8778, %v8776
    %v8849 = vpack.c.b16 %v8779, %v8777
    %v8850 = vpack.c.b16 %v8782, %v8780
    %v8851 = vpack.c.b16 %v8783, %v8781
    %v8852 = vpack.c.b16 %v8786, %v8784
    %v8853 = vpack.c.b16 %v8787, %v8785
    %v8854 = vpack.c.b16 %v8790, %v8788
    %v8855 = vpack.c.b16 %v8791, %v8789
    %8920 = vmatprep.subr.bf16.mxu0 %v8807
    %8921 = vmatpush1.bf16.msra.mxu0 %v8806
    %8922 = vmatprep.subr.bf16.mxu0 %v8805
    %8923 = vmatpush1.bf16.msra.mxu0 %v8804
    %8924 = vmatprep.subr.bf16.mxu0 %v8803
    %8925 = vmatpush1.bf16.msra.mxu0 %v8802
    %8926 = vmatprep.subr.bf16.mxu0 %v8801
    %8927 = vmatpush1.bf16.msra.mxu0 %v8800
    %8928 = vmatprep.subr.bf16.mxu0 %v8799
    %8929 = vmatpush1.bf16.msra.mxu0 %v8798
    %8930 = vmatprep.subr.bf16.mxu0 %v8797
    %8931 = vmatpush1.bf16.msra.mxu0 %v8796
    %8932 = vmatprep.subr.bf16.mxu0 %v8795
    %8933 = vmatpush1.bf16.msra.mxu0 %v8794
    %8934 = vmatprep.subr.bf16.mxu0 %v8793
    %8935 = vmatpush1.bf16.msra.mxu0 %v8792
    %8936 = vmatprep.subr.bf16.mxu0 %v8823
    %8937 = vmatpush2.bf16.msra.mxu0 %v8822
    %8938 = vmatprep.subr.bf16.mxu0 %v8821
    %8939 = vmatpush2.bf16.msra.mxu0 %v8820
    %8940 = vmatprep.subr.bf16.mxu0 %v8819
    %8941 = vmatpush2.bf16.msra.mxu0 %v8818
    %8942 = vmatprep.subr.bf16.mxu0 %v8817
    %8943 = vmatpush2.bf16.msra.mxu0 %v8816
    %8944 = vmatprep.subr.bf16.mxu0 %v8815
    %8945 = vmatpush2.bf16.msra.mxu0 %v8814
    %8946 = vmatprep.subr.bf16.mxu0 %v8813
    %8947 = vmatpush2.bf16.msra.mxu0 %v8812
    %8948 = vmatprep.subr.bf16.mxu0 %v8811
    %8949 = vmatpush2.bf16.msra.mxu0 %v8810
    %8950 = vmatprep.subr.bf16.mxu0 %v8809
    %8951 = vmatpush2.bf16.msra.mxu0 %v8808
    %8952 = vmatprep.mubr.bf16.mxu0 %v8593
    %8953 = vmatmul.mubr.bf16.gmra.mxu0 %v8592
    %v8954 = vpop.f32.mrf.mxu0
    %v8955 = vadd.f32 0.0, %v8954
    %v8956 = vpop.f32.mrf.mxu0
    %v8957 = vadd.f32 0.0, %v8956
    %v8958 = vpop.f32.mrf.mxu0
    %v8959 = vadd.f32 0.0, %v8958
    %v8960 = vpop.f32.mrf.mxu0
    %v8961 = vadd.f32 0.0, %v8960
    %8962 = vdwg.mxu0
    %8963 = vmatprep.subr.bf16.mxu0 %v8839
    %8964 = vmatpush1.bf16.msra.mxu0 %v8838
    %8965 = vmatprep.subr.bf16.mxu0 %v8837
    %8966 = vmatpush1.bf16.msra.mxu0 %v8836
    %8967 = vmatprep.subr.bf16.mxu0 %v8835
    %8968 = vmatpush1.bf16.msra.mxu0 %v8834
    %8969 = vmatprep.subr.bf16.mxu0 %v8833
    %8970 = vmatpush1.bf16.msra.mxu0 %v8832
    %8971 = vmatprep.subr.bf16.mxu0 %v8831
    %8972 = vmatpush1.bf16.msra.mxu0 %v8830
    %8973 = vmatprep.subr.bf16.mxu0 %v8829
    %8974 = vmatpush1.bf16.msra.mxu0 %v8828
    %8975 = vmatprep.subr.bf16.mxu0 %v8827
    %8976 = vmatpush1.bf16.msra.mxu0 %v8826
    %8977 = vmatprep.subr.bf16.mxu0 %v8825
    %8978 = vmatpush1.bf16.msra.mxu0 %v8824
    %8979 = vmatprep.subr.bf16.mxu0 %v8855
    %8980 = vmatpush2.bf16.msra.mxu0 %v8854
    %8981 = vmatprep.subr.bf16.mxu0 %v8853
    %8982 = vmatpush2.bf16.msra.mxu0 %v8852
    %8983 = vmatprep.subr.bf16.mxu0 %v8851
    %8984 = vmatpush2.bf16.msra.mxu0 %v8850
    %8985 = vmatprep.subr.bf16.mxu0 %v8849
    %8986 = vmatpush2.bf16.msra.mxu0 %v8848
    %8987 = vmatprep.subr.bf16.mxu0 %v8847
    %8988 = vmatpush2.bf16.msra.mxu0 %v8846
    %8989 = vmatprep.subr.bf16.mxu0 %v8845
    %8990 = vmatpush2.bf16.msra.mxu0 %v8844
    %8991 = vmatprep.subr.bf16.mxu0 %v8843
    %8992 = vmatpush2.bf16.msra.mxu0 %v8842
    %8993 = vmatprep.subr.bf16.mxu0 %v8841
    %8994 = vmatpush2.bf16.msra.mxu0 %v8840
    %8995 = vmatprep.mubr.bf16.mxu0 %v8595
    %8996 = vmatmul.mubr.bf16.gmra.mxu0 %v8594
    %v8997 = vpop.f32.mrf.mxu0
    %v8998 = vadd.f32 %v8955, %v8997
    %v8999 = vpop.f32.mrf.mxu0
    %v9000 = vadd.f32 %v8957, %v8999
    %v9001 = vpop.f32.mrf.mxu0
    %v9002 = vadd.f32 %v8959, %v9001
    %v9003 = vpop.f32.mrf.mxu0
    %v9004 = vadd.f32 %v8961, %v9003
    %9005 = vdwg.mxu0
    %v9006 = vadd.f32 %v8472, %v8998
    %v9007 = vadd.f32 %v8474, %v9000
    %v9008 = vadd.f32 %v8476, %v9002
    %v9009 = vadd.f32 %v8478, %v9004
    %v9010 = vld [vmem:[#allocation3 + $0x600] sm:$0xff]
    %v9011 = vld [vmem:[#allocation3 + $0x608] sm:$0xff]
    %v9012 = vld [vmem:[#allocation3 + $0x610] sm:$0xff]
    %v9013 = vld [vmem:[#allocation3 + $0x618] sm:$0xff]
    %v9014 = vld [vmem:[#allocation3 + $0x620] sm:$0xff]
    %v9015 = vld [vmem:[#allocation3 + $0x628] sm:$0xff]
    %v9016 = vld [vmem:[#allocation3 + $0x630] sm:$0xff]
    %v9017 = vld [vmem:[#allocation3 + $0x638] sm:$0xff]
    %v9018 = vld [vmem:[#allocation3 + $0x640] sm:$0xff]
    %v9019 = vld [vmem:[#allocation3 + $0x648] sm:$0xff]
    %v9020 = vld [vmem:[#allocation3 + $0x650] sm:$0xff]
    %v9021 = vld [vmem:[#allocation3 + $0x658] sm:$0xff]
    %v9022 = vld [vmem:[#allocation3 + $0x660] sm:$0xff]
    %v9023 = vld [vmem:[#allocation3 + $0x668] sm:$0xff]
    %v9024 = vld [vmem:[#allocation3 + $0x670] sm:$0xff]
    %v9025 = vld [vmem:[#allocation3 + $0x678] sm:$0xff]
    %v9026 = vld [vmem:[#allocation3 + $0x680] sm:$0xff]
    %v9027 = vld [vmem:[#allocation3 + $0x688] sm:$0xff]
    %v9028 = vld [vmem:[#allocation3 + $0x690] sm:$0xff]
    %v9029 = vld [vmem:[#allocation3 + $0x698] sm:$0xff]
    %v9030 = vld [vmem:[#allocation3 + $0x6a0] sm:$0xff]
    %v9031 = vld [vmem:[#allocation3 + $0x6a8] sm:$0xff]
    %v9032 = vld [vmem:[#allocation3 + $0x6b0] sm:$0xff]
    %v9033 = vld [vmem:[#allocation3 + $0x6b8] sm:$0xff]
    %v9034 = vld [vmem:[#allocation3 + $0x6c0] sm:$0xff]
    %v9035 = vld [vmem:[#allocation3 + $0x6c8] sm:$0xff]
    %v9036 = vld [vmem:[#allocation3 + $0x6d0] sm:$0xff]
    %v9037 = vld [vmem:[#allocation3 + $0x6d8] sm:$0xff]
    %v9038 = vld [vmem:[#allocation3 + $0x6e0] sm:$0xff]
    %v9039 = vld [vmem:[#allocation3 + $0x6e8] sm:$0xff]
    %v9040 = vld [vmem:[#allocation3 + $0x6f0] sm:$0xff]
    %v9041 = vld [vmem:[#allocation3 + $0x6f8] sm:$0xff]
    %v9042 = vld [vmem:[#allocation3 + $0x700] sm:$0xff]
    %v9043 = vld [vmem:[#allocation3 + $0x708] sm:$0xff]
    %v9044 = vld [vmem:[#allocation3 + $0x710] sm:$0xff]
    %v9045 = vld [vmem:[#allocation3 + $0x718] sm:$0xff]
    %v9046 = vld [vmem:[#allocation3 + $0x720] sm:$0xff]
    %v9047 = vld [vmem:[#allocation3 + $0x728] sm:$0xff]
    %v9048 = vld [vmem:[#allocation3 + $0x730] sm:$0xff]
    %v9049 = vld [vmem:[#allocation3 + $0x738] sm:$0xff]
    %v9050 = vld [vmem:[#allocation3 + $0x740] sm:$0xff]
    %v9051 = vld [vmem:[#allocation3 + $0x748] sm:$0xff]
    %v9052 = vld [vmem:[#allocation3 + $0x750] sm:$0xff]
    %v9053 = vld [vmem:[#allocation3 + $0x758] sm:$0xff]
    %v9054 = vld [vmem:[#allocation3 + $0x760] sm:$0xff]
    %v9055 = vld [vmem:[#allocation3 + $0x768] sm:$0xff]
    %v9056 = vld [vmem:[#allocation3 + $0x770] sm:$0xff]
    %v9057 = vld [vmem:[#allocation3 + $0x778] sm:$0xff]
    %v9058 = vld [vmem:[#allocation3 + $0x780] sm:$0xff]
    %v9059 = vld [vmem:[#allocation3 + $0x788] sm:$0xff]
    %v9060 = vld [vmem:[#allocation3 + $0x790] sm:$0xff]
    %v9061 = vld [vmem:[#allocation3 + $0x798] sm:$0xff]
    %v9062 = vld [vmem:[#allocation3 + $0x7a0] sm:$0xff]
    %v9063 = vld [vmem:[#allocation3 + $0x7a8] sm:$0xff]
    %v9064 = vld [vmem:[#allocation3 + $0x7b0] sm:$0xff]
    %v9065 = vld [vmem:[#allocation3 + $0x7b8] sm:$0xff]
    %v9066 = vld [vmem:[#allocation3 + $0x7c0] sm:$0xff]
    %v9067 = vld [vmem:[#allocation3 + $0x7c8] sm:$0xff]
    %v9068 = vld [vmem:[#allocation3 + $0x7d0] sm:$0xff]
    %v9069 = vld [vmem:[#allocation3 + $0x7d8] sm:$0xff]
    %v9070 = vld [vmem:[#allocation3 + $0x7e0] sm:$0xff]
    %v9071 = vld [vmem:[#allocation3 + $0x7e8] sm:$0xff]
    %v9072 = vld [vmem:[#allocation3 + $0x7f0] sm:$0xff]
    %v9073 = vld [vmem:[#allocation3 + $0x7f8] sm:$0xff]
    %v9082 = vunpack.c.l.b16 %v7316
    %v9083 = vunpack.c.l.b16 %v7317
    %v9084 = vunpack.c.l.b16 %v7318
    %v9085 = vunpack.c.l.b16 %v7319
    %v9086 = vunpack.c.l.b16 %v7352
    %v9087 = vunpack.c.l.b16 %v7353
    %v9088 = vunpack.c.l.b16 %v7354
    %v9089 = vunpack.c.l.b16 %v7355
    %v9090 = vsel %vm3284, %v7544, %v7540
    %v9091 = vsel %vm3286, %v7548, %v9090
    %v9092 = vsel %vm3288, %v8552, %v9091
    %v9093 = vsel %vm3290, %v9082, %v9092
    %v9094 = vsel %vm3292, %v7560, %v9093
    %v9095 = vsel %vm3294, %v7564, %v9094
    %v9096 = vsel %vm3296, %v7568, %v9095
    %v9097 = vsel %vm3284, %v7545, %v7541
    %v9098 = vsel %vm3286, %v7549, %v9097
    %v9099 = vsel %vm3288, %v8553, %v9098
    %v9100 = vsel %vm3290, %v9083, %v9099
    %v9101 = vsel %vm3292, %v7561, %v9100
    %v9102 = vsel %vm3294, %v7565, %v9101
    %v9103 = vsel %vm3296, %v7569, %v9102
    %v9104 = vsel %vm3284, %v7546, %v7542
    %v9105 = vsel %vm3286, %v7550, %v9104
    %v9106 = vsel %vm3288, %v8554, %v9105
    %v9107 = vsel %vm3290, %v9084, %v9106
    %v9108 = vsel %vm3292, %v7562, %v9107
    %v9109 = vsel %vm3294, %v7566, %v9108
    %v9110 = vsel %vm3296, %v7570, %v9109
    %v9111 = vsel %vm3284, %v7547, %v7543
    %v9112 = vsel %vm3286, %v7551, %v9111
    %v9113 = vsel %vm3288, %v8555, %v9112
    %v9114 = vsel %vm3290, %v9085, %v9113
    %v9115 = vsel %vm3292, %v7563, %v9114
    %v9116 = vsel %vm3294, %v7567, %v9115
    %v9117 = vsel %vm3296, %v7571, %v9116
    %v9118 = vsel %vm3284, %v9086, %v8556
    %v9119 = vsel %vm3284, %v9087, %v8557
    %v9120 = vsel %vm3284, %v9088, %v8558
    %v9121 = vsel %vm3284, %v9089, %v8559
    %v9122 = vpack.c.b16 %v9118, %v9096
    %v9123 = vpack.c.b16 %v9119, %v9103
    %v9124 = vpack.c.b16 %v9120, %v9110
    %v9125 = vpack.c.b16 %v9121, %v9117
    %v9194 = vunpack.c.l.b16 %v9010
    %v9195 = vunpack.c.h.b16 %v9010
    %v9196 = vunpack.c.l.b16 %v9011
    %v9197 = vunpack.c.h.b16 %v9011
    %v9198 = vunpack.c.l.b16 %v9012
    %v9199 = vunpack.c.h.b16 %v9012
    %v9200 = vunpack.c.l.b16 %v9013
    %v9201 = vunpack.c.h.b16 %v9013
    %v9202 = vunpack.c.l.b16 %v9014
    %v9203 = vunpack.c.h.b16 %v9014
    %v9204 = vunpack.c.l.b16 %v9015
    %v9205 = vunpack.c.h.b16 %v9015
    %v9206 = vunpack.c.l.b16 %v9016
    %v9207 = vunpack.c.h.b16 %v9016
    %v9208 = vunpack.c.l.b16 %v9017
    %v9209 = vunpack.c.h.b16 %v9017
    %v9210 = vunpack.c.l.b16 %v9018
    %v9211 = vunpack.c.h.b16 %v9018
    %v9212 = vunpack.c.l.b16 %v9019
    %v9213 = vunpack.c.h.b16 %v9019
    %v9214 = vunpack.c.l.b16 %v9020
    %v9215 = vunpack.c.h.b16 %v9020
    %v9216 = vunpack.c.l.b16 %v9021
    %v9217 = vunpack.c.h.b16 %v9021
    %v9218 = vunpack.c.l.b16 %v9022
    %v9219 = vunpack.c.h.b16 %v9022
    %v9220 = vunpack.c.l.b16 %v9023
    %v9221 = vunpack.c.h.b16 %v9023
    %v9222 = vunpack.c.l.b16 %v9024
    %v9223 = vunpack.c.h.b16 %v9024
    %v9224 = vunpack.c.l.b16 %v9025
    %v9225 = vunpack.c.h.b16 %v9025
    %v9226 = vunpack.c.l.b16 %v9026
    %v9227 = vunpack.c.h.b16 %v9026
    %v9228 = vunpack.c.l.b16 %v9027
    %v9229 = vunpack.c.h.b16 %v9027
    %v9230 = vunpack.c.l.b16 %v9028
    %v9231 = vunpack.c.h.b16 %v9028
    %v9232 = vunpack.c.l.b16 %v9029
    %v9233 = vunpack.c.h.b16 %v9029
    %v9234 = vunpack.c.l.b16 %v9030
    %v9235 = vunpack.c.h.b16 %v9030
    %v9236 = vunpack.c.l.b16 %v9031
    %v9237 = vunpack.c.h.b16 %v9031
    %v9238 = vunpack.c.l.b16 %v9032
    %v9239 = vunpack.c.h.b16 %v9032
    %v9240 = vunpack.c.l.b16 %v9033
    %v9241 = vunpack.c.h.b16 %v9033
    %v9242 = vunpack.c.l.b16 %v9034
    %v9243 = vunpack.c.h.b16 %v9034
    %v9244 = vunpack.c.l.b16 %v9035
    %v9245 = vunpack.c.h.b16 %v9035
    %v9246 = vunpack.c.l.b16 %v9036
    %v9247 = vunpack.c.h.b16 %v9036
    %v9248 = vunpack.c.l.b16 %v9037
    %v9249 = vunpack.c.h.b16 %v9037
    %v9250 = vunpack.c.l.b16 %v9038
    %v9251 = vunpack.c.h.b16 %v9038
    %v9252 = vunpack.c.l.b16 %v9039
    %v9253 = vunpack.c.h.b16 %v9039
    %v9254 = vunpack.c.l.b16 %v9040
    %v9255 = vunpack.c.h.b16 %v9040
    %v9256 = vunpack.c.l.b16 %v9041
    %v9257 = vunpack.c.h.b16 %v9041
    %v9258 = vunpack.c.l.b16 %v9042
    %v9259 = vunpack.c.h.b16 %v9042
    %v9260 = vunpack.c.l.b16 %v9043
    %v9261 = vunpack.c.h.b16 %v9043
    %v9262 = vunpack.c.l.b16 %v9044
    %v9263 = vunpack.c.h.b16 %v9044
    %v9264 = vunpack.c.l.b16 %v9045
    %v9265 = vunpack.c.h.b16 %v9045
    %v9266 = vunpack.c.l.b16 %v9046
    %v9267 = vunpack.c.h.b16 %v9046
    %v9268 = vunpack.c.l.b16 %v9047
    %v9269 = vunpack.c.h.b16 %v9047
    %v9270 = vunpack.c.l.b16 %v9048
    %v9271 = vunpack.c.h.b16 %v9048
    %v9272 = vunpack.c.l.b16 %v9049
    %v9273 = vunpack.c.h.b16 %v9049
    %v9274 = vunpack.c.l.b16 %v9050
    %v9275 = vunpack.c.h.b16 %v9050
    %v9276 = vunpack.c.l.b16 %v9051
    %v9277 = vunpack.c.h.b16 %v9051
    %v9278 = vunpack.c.l.b16 %v9052
    %v9279 = vunpack.c.h.b16 %v9052
    %v9280 = vunpack.c.l.b16 %v9053
    %v9281 = vunpack.c.h.b16 %v9053
    %v9282 = vunpack.c.l.b16 %v9054
    %v9283 = vunpack.c.h.b16 %v9054
    %v9284 = vunpack.c.l.b16 %v9055
    %v9285 = vunpack.c.h.b16 %v9055
    %v9286 = vunpack.c.l.b16 %v9056
    %v9287 = vunpack.c.h.b16 %v9056
    %v9288 = vunpack.c.l.b16 %v9057
    %v9289 = vunpack.c.h.b16 %v9057
    %v9290 = vunpack.c.l.b16 %v9058
    %v9291 = vunpack.c.h.b16 %v9058
    %v9292 = vunpack.c.l.b16 %v9059
    %v9293 = vunpack.c.h.b16 %v9059
    %v9294 = vunpack.c.l.b16 %v9060
    %v9295 = vunpack.c.h.b16 %v9060
    %v9296 = vunpack.c.l.b16 %v9061
    %v9297 = vunpack.c.h.b16 %v9061
    %v9298 = vunpack.c.l.b16 %v9062
    %v9299 = vunpack.c.h.b16 %v9062
    %v9300 = vunpack.c.l.b16 %v9063
    %v9301 = vunpack.c.h.b16 %v9063
    %v9302 = vunpack.c.l.b16 %v9064
    %v9303 = vunpack.c.h.b16 %v9064
    %v9304 = vunpack.c.l.b16 %v9065
    %v9305 = vunpack.c.h.b16 %v9065
    %v9306 = vunpack.c.l.b16 %v9066
    %v9307 = vunpack.c.h.b16 %v9066
    %v9308 = vunpack.c.l.b16 %v9067
    %v9309 = vunpack.c.h.b16 %v9067
    %v9310 = vunpack.c.l.b16 %v9068
    %v9311 = vunpack.c.h.b16 %v9068
    %v9312 = vunpack.c.l.b16 %v9069
    %v9313 = vunpack.c.h.b16 %v9069
    %v9314 = vunpack.c.l.b16 %v9070
    %v9315 = vunpack.c.h.b16 %v9070
    %v9316 = vunpack.c.l.b16 %v9071
    %v9317 = vunpack.c.h.b16 %v9071
    %v9318 = vunpack.c.l.b16 %v9072
    %v9319 = vunpack.c.h.b16 %v9072
    %v9320 = vunpack.c.l.b16 %v9073
    %v9321 = vunpack.c.h.b16 %v9073
    %v9322 = vpack.c.b16 %v9196, %v9194
    %v9323 = vpack.c.b16 %v9197, %v9195
    %v9324 = vpack.c.b16 %v9200, %v9198
    %v9325 = vpack.c.b16 %v9201, %v9199
    %v9326 = vpack.c.b16 %v9204, %v9202
    %v9327 = vpack.c.b16 %v9205, %v9203
    %v9328 = vpack.c.b16 %v9208, %v9206
    %v9329 = vpack.c.b16 %v9209, %v9207
    %v9330 = vpack.c.b16 %v9212, %v9210
    %v9331 = vpack.c.b16 %v9213, %v9211
    %v9332 = vpack.c.b16 %v9216, %v9214
    %v9333 = vpack.c.b16 %v9217, %v9215
    %v9334 = vpack.c.b16 %v9220, %v9218
    %v9335 = vpack.c.b16 %v9221, %v9219
    %v9336 = vpack.c.b16 %v9224, %v9222
    %v9337 = vpack.c.b16 %v9225, %v9223
    %v9338 = vpack.c.b16 %v9228, %v9226
    %v9339 = vpack.c.b16 %v9229, %v9227
    %v9340 = vpack.c.b16 %v9232, %v9230
    %v9341 = vpack.c.b16 %v9233, %v9231
    %v9342 = vpack.c.b16 %v9236, %v9234
    %v9343 = vpack.c.b16 %v9237, %v9235
    %v9344 = vpack.c.b16 %v9240, %v9238
    %v9345 = vpack.c.b16 %v9241, %v9239
    %v9346 = vpack.c.b16 %v9244, %v9242
    %v9347 = vpack.c.b16 %v9245, %v9243
    %v9348 = vpack.c.b16 %v9248, %v9246
    %v9349 = vpack.c.b16 %v9249, %v9247
    %v9350 = vpack.c.b16 %v9252, %v9250
    %v9351 = vpack.c.b16 %v9253, %v9251
    %v9352 = vpack.c.b16 %v9256, %v9254
    %v9353 = vpack.c.b16 %v9257, %v9255
    %v9354 = vpack.c.b16 %v9260, %v9258
    %v9355 = vpack.c.b16 %v9261, %v9259
    %v9356 = vpack.c.b16 %v9264, %v9262
    %v9357 = vpack.c.b16 %v9265, %v9263
    %v9358 = vpack.c.b16 %v9268, %v9266
    %v9359 = vpack.c.b16 %v9269, %v9267
    %v9360 = vpack.c.b16 %v9272, %v9270
    %v9361 = vpack.c.b16 %v9273, %v9271
    %v9362 = vpack.c.b16 %v9276, %v9274
    %v9363 = vpack.c.b16 %v9277, %v9275
    %v9364 = vpack.c.b16 %v9280, %v9278
    %v9365 = vpack.c.b16 %v9281, %v9279
    %v9366 = vpack.c.b16 %v9284, %v9282
    %v9367 = vpack.c.b16 %v9285, %v9283
    %v9368 = vpack.c.b16 %v9288, %v9286
    %v9369 = vpack.c.b16 %v9289, %v9287
    %v9370 = vpack.c.b16 %v9292, %v9290
    %v9371 = vpack.c.b16 %v9293, %v9291
    %v9372 = vpack.c.b16 %v9296, %v9294
    %v9373 = vpack.c.b16 %v9297, %v9295
    %v9374 = vpack.c.b16 %v9300, %v9298
    %v9375 = vpack.c.b16 %v9301, %v9299
    %v9376 = vpack.c.b16 %v9304, %v9302
    %v9377 = vpack.c.b16 %v9305, %v9303
    %v9378 = vpack.c.b16 %v9308, %v9306
    %v9379 = vpack.c.b16 %v9309, %v9307
    %v9380 = vpack.c.b16 %v9312, %v9310
    %v9381 = vpack.c.b16 %v9313, %v9311
    %v9382 = vpack.c.b16 %v9316, %v9314
    %v9383 = vpack.c.b16 %v9317, %v9315
    %v9384 = vpack.c.b16 %v9320, %v9318
    %v9385 = vpack.c.b16 %v9321, %v9319
    %9450 = vmatprep.subr.bf16.mxu0 %v9337
    %9451 = vmatpush1.bf16.msra.mxu0 %v9336
    %9452 = vmatprep.subr.bf16.mxu0 %v9335
    %9453 = vmatpush1.bf16.msra.mxu0 %v9334
    %9454 = vmatprep.subr.bf16.mxu0 %v9333
    %9455 = vmatpush1.bf16.msra.mxu0 %v9332
    %9456 = vmatprep.subr.bf16.mxu0 %v9331
    %9457 = vmatpush1.bf16.msra.mxu0 %v9330
    %9458 = vmatprep.subr.bf16.mxu0 %v9329
    %9459 = vmatpush1.bf16.msra.mxu0 %v9328
    %9460 = vmatprep.subr.bf16.mxu0 %v9327
    %9461 = vmatpush1.bf16.msra.mxu0 %v9326
    %9462 = vmatprep.subr.bf16.mxu0 %v9325
    %9463 = vmatpush1.bf16.msra.mxu0 %v9324
    %9464 = vmatprep.subr.bf16.mxu0 %v9323
    %9465 = vmatpush1.bf16.msra.mxu0 %v9322
    %9466 = vmatprep.subr.bf16.mxu0 %v9353
    %9467 = vmatpush2.bf16.msra.mxu0 %v9352
    %9468 = vmatprep.subr.bf16.mxu0 %v9351
    %9469 = vmatpush2.bf16.msra.mxu0 %v9350
    %9470 = vmatprep.subr.bf16.mxu0 %v9349
    %9471 = vmatpush2.bf16.msra.mxu0 %v9348
    %9472 = vmatprep.subr.bf16.mxu0 %v9347
    %9473 = vmatpush2.bf16.msra.mxu0 %v9346
    %9474 = vmatprep.subr.bf16.mxu0 %v9345
    %9475 = vmatpush2.bf16.msra.mxu0 %v9344
    %9476 = vmatprep.subr.bf16.mxu0 %v9343
    %9477 = vmatpush2.bf16.msra.mxu0 %v9342
    %9478 = vmatprep.subr.bf16.mxu0 %v9341
    %9479 = vmatpush2.bf16.msra.mxu0 %v9340
    %9480 = vmatprep.subr.bf16.mxu0 %v9339
    %9481 = vmatpush2.bf16.msra.mxu0 %v9338
    %9482 = vmatprep.mubr.bf16.mxu0 %v9123
    %9483 = vmatmul.mubr.bf16.gmra.mxu0 %v9122
    %v9484 = vpop.f32.mrf.mxu0
    %v9485 = vadd.f32 0.0, %v9484
    %v9486 = vpop.f32.mrf.mxu0
    %v9487 = vadd.f32 0.0, %v9486
    %v9488 = vpop.f32.mrf.mxu0
    %v9489 = vadd.f32 0.0, %v9488
    %v9490 = vpop.f32.mrf.mxu0
    %v9491 = vadd.f32 0.0, %v9490
    %9492 = vdwg.mxu0
    %9493 = vmatprep.subr.bf16.mxu0 %v9369
    %9494 = vmatpush1.bf16.msra.mxu0 %v9368
    %9495 = vmatprep.subr.bf16.mxu0 %v9367
    %9496 = vmatpush1.bf16.msra.mxu0 %v9366
    %9497 = vmatprep.subr.bf16.mxu0 %v9365
    %9498 = vmatpush1.bf16.msra.mxu0 %v9364
    %9499 = vmatprep.subr.bf16.mxu0 %v9363
    %9500 = vmatpush1.bf16.msra.mxu0 %v9362
    %9501 = vmatprep.subr.bf16.mxu0 %v9361
    %9502 = vmatpush1.bf16.msra.mxu0 %v9360
    %9503 = vmatprep.subr.bf16.mxu0 %v9359
    %9504 = vmatpush1.bf16.msra.mxu0 %v9358
    %9505 = vmatprep.subr.bf16.mxu0 %v9357
    %9506 = vmatpush1.bf16.msra.mxu0 %v9356
    %9507 = vmatprep.subr.bf16.mxu0 %v9355
    %9508 = vmatpush1.bf16.msra.mxu0 %v9354
    %9509 = vmatprep.subr.bf16.mxu0 %v9385
    %9510 = vmatpush2.bf16.msra.mxu0 %v9384
    %9511 = vmatprep.subr.bf16.mxu0 %v9383
    %9512 = vmatpush2.bf16.msra.mxu0 %v9382
    %9513 = vmatprep.subr.bf16.mxu0 %v9381
    %9514 = vmatpush2.bf16.msra.mxu0 %v9380
    %9515 = vmatprep.subr.bf16.mxu0 %v9379
    %9516 = vmatpush2.bf16.msra.mxu0 %v9378
    %9517 = vmatprep.subr.bf16.mxu0 %v9377
    %9518 = vmatpush2.bf16.msra.mxu0 %v9376
    %9519 = vmatprep.subr.bf16.mxu0 %v9375
    %9520 = vmatpush2.bf16.msra.mxu0 %v9374
    %9521 = vmatprep.subr.bf16.mxu0 %v9373
    %9522 = vmatpush2.bf16.msra.mxu0 %v9372
    %9523 = vmatprep.subr.bf16.mxu0 %v9371
    %9524 = vmatpush2.bf16.msra.mxu0 %v9370
    %9525 = vmatprep.mubr.bf16.mxu0 %v9125
    %9526 = vmatmul.mubr.bf16.gmra.mxu0 %v9124
    %v9527 = vpop.f32.mrf.mxu0
    %v9528 = vadd.f32 %v9485, %v9527
    %v9529 = vpop.f32.mrf.mxu0
    %v9530 = vadd.f32 %v9487, %v9529
    %v9531 = vpop.f32.mrf.mxu0
    %v9532 = vadd.f32 %v9489, %v9531
    %v9533 = vpop.f32.mrf.mxu0
    %v9534 = vadd.f32 %v9491, %v9533
    %9535 = vdwg.mxu0
    %v9536 = vadd.f32 %v9006, %v9528
    %v9537 = vadd.f32 %v9007, %v9530
    %v9538 = vadd.f32 %v9008, %v9532
    %v9539 = vadd.f32 %v9009, %v9534
    %v9540 = vld [vmem:[#allocation3 + $0x800] sm:$0xff]
    %v9541 = vld [vmem:[#allocation3 + $0x808] sm:$0xff]
    %v9542 = vld [vmem:[#allocation3 + $0x810] sm:$0xff]
    %v9543 = vld [vmem:[#allocation3 + $0x818] sm:$0xff]
    %v9544 = vld [vmem:[#allocation3 + $0x820] sm:$0xff]
    %v9545 = vld [vmem:[#allocation3 + $0x828] sm:$0xff]
    %v9546 = vld [vmem:[#allocation3 + $0x830] sm:$0xff]
    %v9547 = vld [vmem:[#allocation3 + $0x838] sm:$0xff]
    %v9548 = vld [vmem:[#allocation3 + $0x840] sm:$0xff]
    %v9549 = vld [vmem:[#allocation3 + $0x848] sm:$0xff]
    %v9550 = vld [vmem:[#allocation3 + $0x850] sm:$0xff]
    %v9551 = vld [vmem:[#allocation3 + $0x858] sm:$0xff]
    %v9552 = vld [vmem:[#allocation3 + $0x860] sm:$0xff]
    %v9553 = vld [vmem:[#allocation3 + $0x868] sm:$0xff]
    %v9554 = vld [vmem:[#allocation3 + $0x870] sm:$0xff]
    %v9555 = vld [vmem:[#allocation3 + $0x878] sm:$0xff]
    %v9556 = vld [vmem:[#allocation3 + $0x880] sm:$0xff]
    %v9557 = vld [vmem:[#allocation3 + $0x888] sm:$0xff]
    %v9558 = vld [vmem:[#allocation3 + $0x890] sm:$0xff]
    %v9559 = vld [vmem:[#allocation3 + $0x898] sm:$0xff]
    %v9560 = vld [vmem:[#allocation3 + $0x8a0] sm:$0xff]
    %v9561 = vld [vmem:[#allocation3 + $0x8a8] sm:$0xff]
    %v9562 = vld [vmem:[#allocation3 + $0x8b0] sm:$0xff]
    %v9563 = vld [vmem:[#allocation3 + $0x8b8] sm:$0xff]
    %v9564 = vld [vmem:[#allocation3 + $0x8c0] sm:$0xff]
    %v9565 = vld [vmem:[#allocation3 + $0x8c8] sm:$0xff]
    %v9566 = vld [vmem:[#allocation3 + $0x8d0] sm:$0xff]
    %v9567 = vld [vmem:[#allocation3 + $0x8d8] sm:$0xff]
    %v9568 = vld [vmem:[#allocation3 + $0x8e0] sm:$0xff]
    %v9569 = vld [vmem:[#allocation3 + $0x8e8] sm:$0xff]
    %v9570 = vld [vmem:[#allocation3 + $0x8f0] sm:$0xff]
    %v9571 = vld [vmem:[#allocation3 + $0x8f8] sm:$0xff]
    %v9572 = vld [vmem:[#allocation3 + $0x900] sm:$0xff]
    %v9573 = vld [vmem:[#allocation3 + $0x908] sm:$0xff]
    %v9574 = vld [vmem:[#allocation3 + $0x910] sm:$0xff]
    %v9575 = vld [vmem:[#allocation3 + $0x918] sm:$0xff]
    %v9576 = vld [vmem:[#allocation3 + $0x920] sm:$0xff]
    %v9577 = vld [vmem:[#allocation3 + $0x928] sm:$0xff]
    %v9578 = vld [vmem:[#allocation3 + $0x930] sm:$0xff]
    %v9579 = vld [vmem:[#allocation3 + $0x938] sm:$0xff]
    %v9580 = vld [vmem:[#allocation3 + $0x940] sm:$0xff]
    %v9581 = vld [vmem:[#allocation3 + $0x948] sm:$0xff]
    %v9582 = vld [vmem:[#allocation3 + $0x950] sm:$0xff]
    %v9583 = vld [vmem:[#allocation3 + $0x958] sm:$0xff]
    %v9584 = vld [vmem:[#allocation3 + $0x960] sm:$0xff]
    %v9585 = vld [vmem:[#allocation3 + $0x968] sm:$0xff]
    %v9586 = vld [vmem:[#allocation3 + $0x970] sm:$0xff]
    %v9587 = vld [vmem:[#allocation3 + $0x978] sm:$0xff]
    %v9588 = vld [vmem:[#allocation3 + $0x980] sm:$0xff]
    %v9589 = vld [vmem:[#allocation3 + $0x988] sm:$0xff]
    %v9590 = vld [vmem:[#allocation3 + $0x990] sm:$0xff]
    %v9591 = vld [vmem:[#allocation3 + $0x998] sm:$0xff]
    %v9592 = vld [vmem:[#allocation3 + $0x9a0] sm:$0xff]
    %v9593 = vld [vmem:[#allocation3 + $0x9a8] sm:$0xff]
    %v9594 = vld [vmem:[#allocation3 + $0x9b0] sm:$0xff]
    %v9595 = vld [vmem:[#allocation3 + $0x9b8] sm:$0xff]
    %v9596 = vld [vmem:[#allocation3 + $0x9c0] sm:$0xff]
    %v9597 = vld [vmem:[#allocation3 + $0x9c8] sm:$0xff]
    %v9598 = vld [vmem:[#allocation3 + $0x9d0] sm:$0xff]
    %v9599 = vld [vmem:[#allocation3 + $0x9d8] sm:$0xff]
    %v9600 = vld [vmem:[#allocation3 + $0x9e0] sm:$0xff]
    %v9601 = vld [vmem:[#allocation3 + $0x9e8] sm:$0xff]
    %v9602 = vld [vmem:[#allocation3 + $0x9f0] sm:$0xff]
    %v9603 = vld [vmem:[#allocation3 + $0x9f8] sm:$0xff]
    %v9612 = vunpack.c.l.b16 %v7320
    %v9613 = vunpack.c.l.b16 %v7321
    %v9614 = vunpack.c.l.b16 %v7322
    %v9615 = vunpack.c.l.b16 %v7323
    %v9616 = vunpack.c.l.b16 %v7356
    %v9617 = vunpack.c.l.b16 %v7357
    %v9618 = vunpack.c.l.b16 %v7358
    %v9619 = vunpack.c.l.b16 %v7359
    %v9620 = vsel %vm3284, %v7548, %v7544
    %v9621 = vsel %vm3286, %v8552, %v9620
    %v9622 = vsel %vm3288, %v9082, %v9621
    %v9623 = vsel %vm3290, %v9612, %v9622
    %v9624 = vsel %vm3292, %v7564, %v9623
    %v9625 = vsel %vm3294, %v7568, %v9624
    %v9626 = vsel %vm3296, %v8556, %v9625
    %v9627 = vsel %vm3284, %v7549, %v7545
    %v9628 = vsel %vm3286, %v8553, %v9627
    %v9629 = vsel %vm3288, %v9083, %v9628
    %v9630 = vsel %vm3290, %v9613, %v9629
    %v9631 = vsel %vm3292, %v7565, %v9630
    %v9632 = vsel %vm3294, %v7569, %v9631
    %v9633 = vsel %vm3296, %v8557, %v9632
    %v9634 = vsel %vm3284, %v7550, %v7546
    %v9635 = vsel %vm3286, %v8554, %v9634
    %v9636 = vsel %vm3288, %v9084, %v9635
    %v9637 = vsel %vm3290, %v9614, %v9636
    %v9638 = vsel %vm3292, %v7566, %v9637
    %v9639 = vsel %vm3294, %v7570, %v9638
    %v9640 = vsel %vm3296, %v8558, %v9639
    %v9641 = vsel %vm3284, %v7551, %v7547
    %v9642 = vsel %vm3286, %v8555, %v9641
    %v9643 = vsel %vm3288, %v9085, %v9642
    %v9644 = vsel %vm3290, %v9615, %v9643
    %v9645 = vsel %vm3292, %v7567, %v9644
    %v9646 = vsel %vm3294, %v7571, %v9645
    %v9647 = vsel %vm3296, %v8559, %v9646
    %v9648 = vsel %vm3284, %v9616, %v9086
    %v9649 = vsel %vm3284, %v9617, %v9087
    %v9650 = vsel %vm3284, %v9618, %v9088
    %v9651 = vsel %vm3284, %v9619, %v9089
    %v9652 = vpack.c.b16 %v9648, %v9626
    %v9653 = vpack.c.b16 %v9649, %v9633
    %v9654 = vpack.c.b16 %v9650, %v9640
    %v9655 = vpack.c.b16 %v9651, %v9647
    %v9724 = vunpack.c.l.b16 %v9540
    %v9725 = vunpack.c.h.b16 %v9540
    %v9726 = vunpack.c.l.b16 %v9541
    %v9727 = vunpack.c.h.b16 %v9541
    %v9728 = vunpack.c.l.b16 %v9542
    %v9729 = vunpack.c.h.b16 %v9542
    %v9730 = vunpack.c.l.b16 %v9543
    %v9731 = vunpack.c.h.b16 %v9543
    %v9732 = vunpack.c.l.b16 %v9544
    %v9733 = vunpack.c.h.b16 %v9544
    %v9734 = vunpack.c.l.b16 %v9545
    %v9735 = vunpack.c.h.b16 %v9545
    %v9736 = vunpack.c.l.b16 %v9546
    %v9737 = vunpack.c.h.b16 %v9546
    %v9738 = vunpack.c.l.b16 %v9547
    %v9739 = vunpack.c.h.b16 %v9547
    %v9740 = vunpack.c.l.b16 %v9548
    %v9741 = vunpack.c.h.b16 %v9548
    %v9742 = vunpack.c.l.b16 %v9549
    %v9743 = vunpack.c.h.b16 %v9549
    %v9744 = vunpack.c.l.b16 %v9550
    %v9745 = vunpack.c.h.b16 %v9550
    %v9746 = vunpack.c.l.b16 %v9551
    %v9747 = vunpack.c.h.b16 %v9551
    %v9748 = vunpack.c.l.b16 %v9552
    %v9749 = vunpack.c.h.b16 %v9552
    %v9750 = vunpack.c.l.b16 %v9553
    %v9751 = vunpack.c.h.b16 %v9553
    %v9752 = vunpack.c.l.b16 %v9554
    %v9753 = vunpack.c.h.b16 %v9554
    %v9754 = vunpack.c.l.b16 %v9555
    %v9755 = vunpack.c.h.b16 %v9555
    %v9756 = vunpack.c.l.b16 %v9556
    %v9757 = vunpack.c.h.b16 %v9556
    %v9758 = vunpack.c.l.b16 %v9557
    %v9759 = vunpack.c.h.b16 %v9557
    %v9760 = vunpack.c.l.b16 %v9558
    %v9761 = vunpack.c.h.b16 %v9558
    %v9762 = vunpack.c.l.b16 %v9559
    %v9763 = vunpack.c.h.b16 %v9559
    %v9764 = vunpack.c.l.b16 %v9560
    %v9765 = vunpack.c.h.b16 %v9560
    %v9766 = vunpack.c.l.b16 %v9561
    %v9767 = vunpack.c.h.b16 %v9561
    %v9768 = vunpack.c.l.b16 %v9562
    %v9769 = vunpack.c.h.b16 %v9562
    %v9770 = vunpack.c.l.b16 %v9563
    %v9771 = vunpack.c.h.b16 %v9563
    %v9772 = vunpack.c.l.b16 %v9564
    %v9773 = vunpack.c.h.b16 %v9564
    %v9774 = vunpack.c.l.b16 %v9565
    %v9775 = vunpack.c.h.b16 %v9565
    %v9776 = vunpack.c.l.b16 %v9566
    %v9777 = vunpack.c.h.b16 %v9566
    %v9778 = vunpack.c.l.b16 %v9567
    %v9779 = vunpack.c.h.b16 %v9567
    %v9780 = vunpack.c.l.b16 %v9568
    %v9781 = vunpack.c.h.b16 %v9568
    %v9782 = vunpack.c.l.b16 %v9569
    %v9783 = vunpack.c.h.b16 %v9569
    %v9784 = vunpack.c.l.b16 %v9570
    %v9785 = vunpack.c.h.b16 %v9570
    %v9786 = vunpack.c.l.b16 %v9571
    %v9787 = vunpack.c.h.b16 %v9571
    %v9788 = vunpack.c.l.b16 %v9572
    %v9789 = vunpack.c.h.b16 %v9572
    %v9790 = vunpack.c.l.b16 %v9573
    %v9791 = vunpack.c.h.b16 %v9573
    %v9792 = vunpack.c.l.b16 %v9574
    %v9793 = vunpack.c.h.b16 %v9574
    %v9794 = vunpack.c.l.b16 %v9575
    %v9795 = vunpack.c.h.b16 %v9575
    %v9796 = vunpack.c.l.b16 %v9576
    %v9797 = vunpack.c.h.b16 %v9576
    %v9798 = vunpack.c.l.b16 %v9577
    %v9799 = vunpack.c.h.b16 %v9577
    %v9800 = vunpack.c.l.b16 %v9578
    %v9801 = vunpack.c.h.b16 %v9578
    %v9802 = vunpack.c.l.b16 %v9579
    %v9803 = vunpack.c.h.b16 %v9579
    %v9804 = vunpack.c.l.b16 %v9580
    %v9805 = vunpack.c.h.b16 %v9580
    %v9806 = vunpack.c.l.b16 %v9581
    %v9807 = vunpack.c.h.b16 %v9581
    %v9808 = vunpack.c.l.b16 %v9582
    %v9809 = vunpack.c.h.b16 %v9582
    %v9810 = vunpack.c.l.b16 %v9583
    %v9811 = vunpack.c.h.b16 %v9583
    %v9812 = vunpack.c.l.b16 %v9584
    %v9813 = vunpack.c.h.b16 %v9584
    %v9814 = vunpack.c.l.b16 %v9585
    %v9815 = vunpack.c.h.b16 %v9585
    %v9816 = vunpack.c.l.b16 %v9586
    %v9817 = vunpack.c.h.b16 %v9586
    %v9818 = vunpack.c.l.b16 %v9587
    %v9819 = vunpack.c.h.b16 %v9587
    %v9820 = vunpack.c.l.b16 %v9588
    %v9821 = vunpack.c.h.b16 %v9588
    %v9822 = vunpack.c.l.b16 %v9589
    %v9823 = vunpack.c.h.b16 %v9589
    %v9824 = vunpack.c.l.b16 %v9590
    %v9825 = vunpack.c.h.b16 %v9590
    %v9826 = vunpack.c.l.b16 %v9591
    %v9827 = vunpack.c.h.b16 %v9591
    %v9828 = vunpack.c.l.b16 %v9592
    %v9829 = vunpack.c.h.b16 %v9592
    %v9830 = vunpack.c.l.b16 %v9593
    %v9831 = vunpack.c.h.b16 %v9593
    %v9832 = vunpack.c.l.b16 %v9594
    %v9833 = vunpack.c.h.b16 %v9594
    %v9834 = vunpack.c.l.b16 %v9595
    %v9835 = vunpack.c.h.b16 %v9595
    %v9836 = vunpack.c.l.b16 %v9596
    %v9837 = vunpack.c.h.b16 %v9596
    %v9838 = vunpack.c.l.b16 %v9597
    %v9839 = vunpack.c.h.b16 %v9597
    %v9840 = vunpack.c.l.b16 %v9598
    %v9841 = vunpack.c.h.b16 %v9598
    %v9842 = vunpack.c.l.b16 %v9599
    %v9843 = vunpack.c.h.b16 %v9599
    %v9844 = vunpack.c.l.b16 %v9600
    %v9845 = vunpack.c.h.b16 %v9600
    %v9846 = vunpack.c.l.b16 %v9601
    %v9847 = vunpack.c.h.b16 %v9601
    %v9848 = vunpack.c.l.b16 %v9602
    %v9849 = vunpack.c.h.b16 %v9602
    %v9850 = vunpack.c.l.b16 %v9603
    %v9851 = vunpack.c.h.b16 %v9603
    %v9852 = vpack.c.b16 %v9726, %v9724
    %v9853 = vpack.c.b16 %v9727, %v9725
    %v9854 = vpack.c.b16 %v9730, %v9728
    %v9855 = vpack.c.b16 %v9731, %v9729
    %v9856 = vpack.c.b16 %v9734, %v9732
    %v9857 = vpack.c.b16 %v9735, %v9733
    %v9858 = vpack.c.b16 %v9738, %v9736
    %v9859 = vpack.c.b16 %v9739, %v9737
    %v9860 = vpack.c.b16 %v9742, %v9740
    %v9861 = vpack.c.b16 %v9743, %v9741
    %v9862 = vpack.c.b16 %v9746, %v9744
    %v9863 = vpack.c.b16 %v9747, %v9745
    %v9864 = vpack.c.b16 %v9750, %v9748
    %v9865 = vpack.c.b16 %v9751, %v9749
    %v9866 = vpack.c.b16 %v9754, %v9752
    %v9867 = vpack.c.b16 %v9755, %v9753
    %v9868 = vpack.c.b16 %v9758, %v9756
    %v9869 = vpack.c.b16 %v9759, %v9757
    %v9870 = vpack.c.b16 %v9762, %v9760
    %v9871 = vpack.c.b16 %v9763, %v9761
    %v9872 = vpack.c.b16 %v9766, %v9764
    %v9873 = vpack.c.b16 %v9767, %v9765
    %v9874 = vpack.c.b16 %v9770, %v9768
    %v9875 = vpack.c.b16 %v9771, %v9769
    %v9876 = vpack.c.b16 %v9774, %v9772
    %v9877 = vpack.c.b16 %v9775, %v9773
    %v9878 = vpack.c.b16 %v9778, %v9776
    %v9879 = vpack.c.b16 %v9779, %v9777
    %v9880 = vpack.c.b16 %v9782, %v9780
    %v9881 = vpack.c.b16 %v9783, %v9781
    %v9882 = vpack.c.b16 %v9786, %v9784
    %v9883 = vpack.c.b16 %v9787, %v9785
    %v9884 = vpack.c.b16 %v9790, %v9788
    %v9885 = vpack.c.b16 %v9791, %v9789
    %v9886 = vpack.c.b16 %v9794, %v9792
    %v9887 = vpack.c.b16 %v9795, %v9793
    %v9888 = vpack.c.b16 %v9798, %v9796
    %v9889 = vpack.c.b16 %v9799, %v9797
    %v9890 = vpack.c.b16 %v9802, %v9800
    %v9891 = vpack.c.b16 %v9803, %v9801
    %v9892 = vpack.c.b16 %v9806, %v9804
    %v9893 = vpack.c.b16 %v9807, %v9805
    %v9894 = vpack.c.b16 %v9810, %v9808
    %v9895 = vpack.c.b16 %v9811, %v9809
    %v9896 = vpack.c.b16 %v9814, %v9812
    %v9897 = vpack.c.b16 %v9815, %v9813
    %v9898 = vpack.c.b16 %v9818, %v9816
    %v9899 = vpack.c.b16 %v9819, %v9817
    %v9900 = vpack.c.b16 %v9822, %v9820
    %v9901 = vpack.c.b16 %v9823, %v9821
    %v9902 = vpack.c.b16 %v9826, %v9824
    %v9903 = vpack.c.b16 %v9827, %v9825
    %v9904 = vpack.c.b16 %v9830, %v9828
    %v9905 = vpack.c.b16 %v9831, %v9829
    %v9906 = vpack.c.b16 %v9834, %v9832
    %v9907 = vpack.c.b16 %v9835, %v9833
    %v9908 = vpack.c.b16 %v9838, %v9836
    %v9909 = vpack.c.b16 %v9839, %v9837
    %v9910 = vpack.c.b16 %v9842, %v9840
    %v9911 = vpack.c.b16 %v9843, %v9841
    %v9912 = vpack.c.b16 %v9846, %v9844
    %v9913 = vpack.c.b16 %v9847, %v9845
    %v9914 = vpack.c.b16 %v9850, %v9848
    %v9915 = vpack.c.b16 %v9851, %v9849
    %9980 = vmatprep.subr.bf16.mxu0 %v9867
    %9981 = vmatpush1.bf16.msra.mxu0 %v9866
    %9982 = vmatprep.subr.bf16.mxu0 %v9865
    %9983 = vmatpush1.bf16.msra.mxu0 %v9864
    %9984 = vmatprep.subr.bf16.mxu0 %v9863
    %9985 = vmatpush1.bf16.msra.mxu0 %v9862
    %9986 = vmatprep.subr.bf16.mxu0 %v9861
    %9987 = vmatpush1.bf16.msra.mxu0 %v9860
    %9988 = vmatprep.subr.bf16.mxu0 %v9859
    %9989 = vmatpush1.bf16.msra.mxu0 %v9858
    %9990 = vmatprep.subr.bf16.mxu0 %v9857
    %9991 = vmatpush1.bf16.msra.mxu0 %v9856
    %9992 = vmatprep.subr.bf16.mxu0 %v9855
    %9993 = vmatpush1.bf16.msra.mxu0 %v9854
    %9994 = vmatprep.subr.bf16.mxu0 %v9853
    %9995 = vmatpush1.bf16.msra.mxu0 %v9852
    %9996 = vmatprep.subr.bf16.mxu0 %v9883
    %9997 = vmatpush2.bf16.msra.mxu0 %v9882
    %9998 = vmatprep.subr.bf16.mxu0 %v9881
    %9999 = vmatpush2.bf16.msra.mxu0 %v9880
    %10000 = vmatprep.subr.bf16.mxu0 %v9879
    %10001 = vmatpush2.bf16.msra.mxu0 %v9878
    %10002 = vmatprep.subr.bf16.mxu0 %v9877
    %10003 = vmatpush2.bf16.msra.mxu0 %v9876
    %10004 = vmatprep.subr.bf16.mxu0 %v9875
    %10005 = vmatpush2.bf16.msra.mxu0 %v9874
    %10006 = vmatprep.subr.bf16.mxu0 %v9873
    %10007 = vmatpush2.bf16.msra.mxu0 %v9872
    %10008 = vmatprep.subr.bf16.mxu0 %v9871
    %10009 = vmatpush2.bf16.msra.mxu0 %v9870
    %10010 = vmatprep.subr.bf16.mxu0 %v9869
    %10011 = vmatpush2.bf16.msra.mxu0 %v9868
    %10012 = vmatprep.mubr.bf16.mxu0 %v9653
    %10013 = vmatmul.mubr.bf16.gmra.mxu0 %v9652
    %v10014 = vpop.f32.mrf.mxu0
    %v10015 = vadd.f32 0.0, %v10014
    %v10016 = vpop.f32.mrf.mxu0
    %v10017 = vadd.f32 0.0, %v10016
    %v10018 = vpop.f32.mrf.mxu0
    %v10019 = vadd.f32 0.0, %v10018
    %v10020 = vpop.f32.mrf.mxu0
    %v10021 = vadd.f32 0.0, %v10020
    %10022 = vdwg.mxu0
    %10023 = vmatprep.subr.bf16.mxu0 %v9899
    %10024 = vmatpush1.bf16.msra.mxu0 %v9898
    %10025 = vmatprep.subr.bf16.mxu0 %v9897
    %10026 = vmatpush1.bf16.msra.mxu0 %v9896
    %10027 = vmatprep.subr.bf16.mxu0 %v9895
    %10028 = vmatpush1.bf16.msra.mxu0 %v9894
    %10029 = vmatprep.subr.bf16.mxu0 %v9893
    %10030 = vmatpush1.bf16.msra.mxu0 %v9892
    %10031 = vmatprep.subr.bf16.mxu0 %v9891
    %10032 = vmatpush1.bf16.msra.mxu0 %v9890
    %10033 = vmatprep.subr.bf16.mxu0 %v9889
    %10034 = vmatpush1.bf16.msra.mxu0 %v9888
    %10035 = vmatprep.subr.bf16.mxu0 %v9887
    %10036 = vmatpush1.bf16.msra.mxu0 %v9886
    %10037 = vmatprep.subr.bf16.mxu0 %v9885
    %10038 = vmatpush1.bf16.msra.mxu0 %v9884
    %10039 = vmatprep.subr.bf16.mxu0 %v9915
    %10040 = vmatpush2.bf16.msra.mxu0 %v9914
    %10041 = vmatprep.subr.bf16.mxu0 %v9913
    %10042 = vmatpush2.bf16.msra.mxu0 %v9912
    %10043 = vmatprep.subr.bf16.mxu0 %v9911
    %10044 = vmatpush2.bf16.msra.mxu0 %v9910
    %10045 = vmatprep.subr.bf16.mxu0 %v9909
    %10046 = vmatpush2.bf16.msra.mxu0 %v9908
    %10047 = vmatprep.subr.bf16.mxu0 %v9907
    %10048 = vmatpush2.bf16.msra.mxu0 %v9906
    %10049 = vmatprep.subr.bf16.mxu0 %v9905
    %10050 = vmatpush2.bf16.msra.mxu0 %v9904
    %10051 = vmatprep.subr.bf16.mxu0 %v9903
    %10052 = vmatpush2.bf16.msra.mxu0 %v9902
    %10053 = vmatprep.subr.bf16.mxu0 %v9901
    %10054 = vmatpush2.bf16.msra.mxu0 %v9900
    %10055 = vmatprep.mubr.bf16.mxu0 %v9655
    %10056 = vmatmul.mubr.bf16.gmra.mxu0 %v9654
    %v10057 = vpop.f32.mrf.mxu0
    %v10058 = vadd.f32 %v10015, %v10057
    %v10059 = vpop.f32.mrf.mxu0
    %v10060 = vadd.f32 %v10017, %v10059
    %v10061 = vpop.f32.mrf.mxu0
    %v10062 = vadd.f32 %v10019, %v10061
    %v10063 = vpop.f32.mrf.mxu0
    %v10064 = vadd.f32 %v10021, %v10063
    %10065 = vdwg.mxu0
    %v10066 = vadd.f32 %v9536, %v10058
    %v10067 = vadd.f32 %v9537, %v10060
    %v10068 = vadd.f32 %v9538, %v10062
    %v10069 = vadd.f32 %v9539, %v10064
    %v10071 = vlaneseq
    %v10072 = vshrl.u32 %v10071, 7
    %v10073 = vsub.s32 0, %v10072
    %v10074 = vrot.slane %v4909, %v10073
    %v10075 = vlaneseq
    %v10076 = vshrl.u32 %v10075, 7
    %v10077 = vsub.s32 1, %v10076
    %v10078 = vrot.slane %v4909, %v10077
    %v10081 = vadd.f32 %v10066, %v10074
    %v10082 = vadd.f32 %v10067, %v10078
    %v10083 = vadd.f32 %v10068, %v10074
    %v10084 = vadd.f32 %v10069, %v10078
    %v10085 = vmax.f32 %v10081, 0.0
    %v10086 = vmax.f32 %v10082, 0.0
    %v10087 = vmax.f32 %v10083, 0.0
    %v10088 = vmax.f32 %v10084, 0.0
    %v10093 = vcombine.low %v10085, %v10086
    %v10094 = vcombine.high %v10085, %v10086
    %v10096 = vunpack.c.l.s4 1966171168
    %v10097 = vunpack.c.0.s8 %v10096
    %v10098 = vlaneseq
    %v10099 = vshrl.u32 %v10098, 7
    %v10100 = vsub.s32 %v10097, %v10099
    %v10101 = vrot.slane %v10093, %v10100
    %v10103 = vunpack.c.l.s4 1966171168
    %v10104 = vunpack.c.0.s8 %v10103
    %v10105 = vlaneseq
    %v10106 = vshrl.u32 %v10105, 7
    %v10107 = vsub.s32 %v10104, %v10106
    %v10108 = vrot.slane %v10094, %v10107
    %v10109 = vcombine.high %v10101, %v10101
    %v10110 = vcombine.high %v10108, %v10108
    %v10112 = vunpack.c.l.s4 1966171168
    %v10113 = vunpack.c.0.s8 %v10112
    %v10114 = vlaneseq
    %v10115 = vshrl.u32 %v10114, 7
    %v10116 = vsub.s32 %v10113, %v10115
    %v10117 = vrot.slane %v10101, %v10116
    %v10119 = vunpack.c.l.s4 1966171168
    %v10120 = vunpack.c.0.s8 %v10119
    %v10121 = vlaneseq
    %v10122 = vshrl.u32 %v10121, 7
    %v10123 = vsub.s32 %v10120, %v10122
    %v10124 = vrot.slane %v10108, %v10123
    %v10126 = vunpack.c.l.s4 1966171168
    %v10127 = vunpack.c.0.s8 %v10126
    %v10128 = vlaneseq
    %v10129 = vshrl.u32 %v10128, 7
    %v10130 = vsub.s32 %v10127, %v10129
    %v10131 = vrot.slane %v10109, %v10130
    %v10133 = vunpack.c.l.s4 1966171168
    %v10134 = vunpack.c.0.s8 %v10133
    %v10135 = vlaneseq
    %v10136 = vshrl.u32 %v10135, 7
    %v10137 = vsub.s32 %v10134, %v10136
    %v10138 = vrot.slane %v10110, %v10137
    %v10139 = vcombine.high %v10117, %v10117
    %v10140 = vcombine.high %v10124, %v10124
    %v10141 = vcombine.high %v10131, %v10131
    %v10142 = vcombine.high %v10138, %v10138
    %v10143 = vcombine.low %v10087, %v10088
    %v10145 = vunpack.c.l.s4 1966171168
    %v10146 = vunpack.c.0.s8 %v10145
    %v10147 = vlaneseq
    %v10148 = vshrl.u32 %v10147, 7
    %v10149 = vsub.s32 %v10146, %v10148
    %v10150 = vrot.slane %v10143, %v10149
    %v10151 = vcombine.high %v10150, %v10150
    %v10153 = vunpack.c.l.s4 1966171168
    %v10154 = vunpack.c.0.s8 %v10153
    %v10155 = vlaneseq
    %v10156 = vshrl.u32 %v10155, 7
    %v10157 = vsub.s32 %v10154, %v10156
    %v10158 = vrot.slane %v10150, %v10157
    %v10160 = vunpack.c.l.s4 1966171168
    %v10161 = vunpack.c.0.s8 %v10160
    %v10162 = vlaneseq
    %v10163 = vshrl.u32 %v10162, 7
    %v10164 = vsub.s32 %v10161, %v10163
    %v10165 = vrot.slane %v10151, %v10164
    %v10166 = vcombine.low %v10117, %v10131
    %v10167 = vcombine.low %v10139, %v10141
    %v10169 = vunpack.c.l.s4 1966171168
    %v10170 = vunpack.c.0.s8 %v10169
    %v10171 = vlaneseq
    %v10172 = vshrl.u32 %v10171, 7
    %v10173 = vsub.s32 %v10170, %v10172
    %v10174 = vrot.slane %v10166, %v10173
    %v10176 = vunpack.c.l.s4 1966171168
    %v10177 = vunpack.c.0.s8 %v10176
    %v10178 = vlaneseq
    %v10179 = vshrl.u32 %v10178, 7
    %v10180 = vsub.s32 %v10177, %v10179
    %v10181 = vrot.slane %v10167, %v10180
    %v10183 = vunpack.c.l.s4 1966171168
    %v10184 = vunpack.c.0.s8 %v10183
    %v10185 = vlaneseq
    %v10186 = vshrl.u32 %v10185, 7
    %v10187 = vsub.s32 %v10184, %v10186
    %v10188 = vrot.slane %v10124, %v10187
    %v10189 = vcombine.low %v10174, %v10181
    %v10190 = vcombine.high %v10174, %v10181
    %v10191 = vcombine.high %v10188, %v10188
    %v10193 = vunpack.c.l.s4 1966171168
    %v10194 = vunpack.c.0.s8 %v10193
    %v10195 = vlaneseq
    %v10196 = vshrl.u32 %v10195, 7
    %v10197 = vsub.s32 %v10194, %v10196
    %v10198 = vrot.slane %v10189, %v10197
    %v10200 = vunpack.c.l.s4 1966171168
    %v10201 = vunpack.c.0.s8 %v10200
    %v10202 = vlaneseq
    %v10203 = vshrl.u32 %v10202, 7
    %v10204 = vsub.s32 %v10201, %v10203
    %v10205 = vrot.slane %v10190, %v10204
    %v10207 = vunpack.c.l.s4 1966171168
    %v10208 = vunpack.c.0.s8 %v10207
    %v10209 = vlaneseq
    %v10210 = vshrl.u32 %v10209, 7
    %v10211 = vsub.s32 %v10208, %v10210
    %v10212 = vrot.slane %v10188, %v10211
    %v10214 = vunpack.c.l.s4 1966171168
    %v10215 = vunpack.c.0.s8 %v10214
    %v10216 = vlaneseq
    %v10217 = vshrl.u32 %v10216, 7
    %v10218 = vsub.s32 %v10215, %v10217
    %v10219 = vrot.slane %v10191, %v10218
    %v10220 = vcombine.low %v10198, %v10212
    %v10221 = vcombine.low %v10205, %v10219
    %v10222 = vcombine.low %v10138, %v10140
    %v10223 = vcombine.low %v10142, %v10158
    %v10225 = vunpack.c.l.s4 1966171168
    %v10226 = vunpack.c.0.s8 %v10225
    %v10227 = vlaneseq
    %v10228 = vshrl.u32 %v10227, 7
    %v10229 = vsub.s32 %v10226, %v10228
    %v10230 = vrot.slane %v10222, %v10229
    %v10232 = vunpack.c.l.s4 1966171168
    %v10233 = vunpack.c.0.s8 %v10232
    %v10234 = vlaneseq
    %v10235 = vshrl.u32 %v10234, 7
    %v10236 = vsub.s32 %v10233, %v10235
    %v10237 = vrot.slane %v10223, %v10236
    %v10239 = vunpack.c.l.s4 1966171168
    %v10240 = vunpack.c.0.s8 %v10239
    %v10241 = vlaneseq
    %v10242 = vshrl.u32 %v10241, 7
    %v10243 = vsub.s32 %v10240, %v10242
    %v10244 = vrot.slane %v10165, %v10243
    %v10245 = vcombine.low %v10230, %v10237
    %v10246 = vcombine.high %v10230, %v10237
    %v10247 = vcombine.high %v10244, %v10244
    %v10249 = vunpack.c.l.s4 1966171168
    %v10250 = vunpack.c.0.s8 %v10249
    %v10251 = vlaneseq
    %v10252 = vshrl.u32 %v10251, 7
    %v10253 = vsub.s32 %v10250, %v10252
    %v10254 = vrot.slane %v10245, %v10253
    %v10256 = vunpack.c.l.s4 1966171168
    %v10257 = vunpack.c.0.s8 %v10256
    %v10258 = vlaneseq
    %v10259 = vshrl.u32 %v10258, 7
    %v10260 = vsub.s32 %v10257, %v10259
    %v10261 = vrot.slane %v10246, %v10260
    %v10263 = vunpack.c.l.s4 1966171168
    %v10264 = vunpack.c.0.s8 %v10263
    %v10265 = vlaneseq
    %v10266 = vshrl.u32 %v10265, 7
    %v10267 = vsub.s32 %v10264, %v10266
    %v10268 = vrot.slane %v10244, %v10267
    %v10270 = vunpack.c.l.s4 1966171168
    %v10271 = vunpack.c.0.s8 %v10270
    %v10272 = vlaneseq
    %v10273 = vshrl.u32 %v10272, 7
    %v10274 = vsub.s32 %v10271, %v10273
    %v10275 = vrot.slane %v10247, %v10274
    %v10276 = vcombine.low %v10254, %v10268
    %v10277 = vcombine.low %v10261, %v10275
    %vm10282 = vcmask 1044480
    %v10283 = vsel %vm10282, %v10220, -inf
    %v10284 = vrot.slane %v10283, 4
    %v10285 = vmax.f32 %v10283, %v10284
    %v10286 = vrot.slane %v10285, 2
    %v10287 = vmax.f32 %v10285, %v10286
    %v10288 = vrot.slane %v10287, 1
    %v10289 = vmax.f32 %v10287, %v10288
    %v10290 = vsel %vm10282, %v10221, -inf
    %v10291 = vrot.slane %v10290, 4
    %v10292 = vmax.f32 %v10290, %v10291
    %v10293 = vrot.slane %v10292, 2
    %v10294 = vmax.f32 %v10292, %v10293
    %v10295 = vrot.slane %v10294, 1
    %v10296 = vmax.f32 %v10294, %v10295
    %v10297 = vsel %vm10282, %v10276, -inf
    %v10298 = vrot.slane %v10297, 4
    %v10299 = vmax.f32 %v10297, %v10298
    %v10300 = vrot.slane %v10299, 2
    %v10301 = vmax.f32 %v10299, %v10300
    %v10302 = vrot.slane %v10301, 1
    %v10303 = vmax.f32 %v10301, %v10302
    %v10304 = vsel %vm10282, %v10277, -inf
    %v10305 = vrot.slane %v10304, 4
    %v10306 = vmax.f32 %v10304, %v10305
    %v10307 = vrot.slane %v10306, 2
    %v10308 = vmax.f32 %v10306, %v10307
    %v10309 = vrot.slane %v10308, 1
    %v10310 = vmax.f32 %v10308, %v10309
    %v10315 = vsel %vm3284, %v4837, %v4825
    %v10316 = vsel %vm3284, %v4843, %v4831
    %v10323 = vsel %vm3284, %v10303, %v10289
    %v10324 = vsel %vm3284, %v10310, %v10296
    %v10327 = vpack.c.bf16 %v10315, %v10315
    %v10328 = vpack.c.bf16 %v10316, %v10316
    %v10329 = vpack.c.bf16 %v10323, %v10323
    %v10330 = vpack.c.bf16 %v10324, %v10324
    %v10331 = vld [vmem:[%s10] sm:$0xf]
    %v10332 = vld [vmem:[%s10 + $0x4] sm:$0xf]
    %v10333 = vld [vmem:[%s10 + $0x8] sm:$0xf]
    %v10334 = vld [vmem:[%s10 + $0xc] sm:$0xf]
    %v10335 = vld [vmem:[%s10 + $0x10] sm:$0xf]
    %v10336 = vld [vmem:[%s10 + $0x14] sm:$0xf]
    %v10337 = vld [vmem:[%s10 + $0x18] sm:$0xf]
    %v10338 = vld [vmem:[%s10 + $0x1c] sm:$0xf]
    %v10339 = vld [vmem:[%s10 + $0x20] sm:$0xf]
    %v10340 = vld [vmem:[%s10 + $0x24] sm:$0xf]
    %v10341 = vld [vmem:[%s10 + $0x28] sm:$0xf]
    %v10342 = vld [vmem:[%s10 + $0x2c] sm:$0xf]
    %v10343 = vld [vmem:[%s10 + $0x30] sm:$0xf]
    %v10344 = vld [vmem:[%s10 + $0x34] sm:$0xf]
    %v10345 = vld [vmem:[%s10 + $0x38] sm:$0xf]
    %v10346 = vld [vmem:[%s10 + $0x3c] sm:$0xf]
    %v10347 = vld [vmem:[%s10 + $0x40] sm:$0xf]
    %v10348 = vld [vmem:[%s10 + $0x44] sm:$0xf]
    %v10349 = vld [vmem:[%s10 + $0x48] sm:$0xf]
    %v10350 = vld [vmem:[%s10 + $0x4c] sm:$0xf]
    %v10351 = vld [vmem:[%s10 + $0x50] sm:$0xf]
    %v10352 = vld [vmem:[%s10 + $0x54] sm:$0xf]
    %v10353 = vld [vmem:[%s10 + $0x58] sm:$0xf]
    %v10354 = vld [vmem:[%s10 + $0x5c] sm:$0xf]
    %v10355 = vld [vmem:[%s10 + $0x60] sm:$0xf]
    %v10356 = vld [vmem:[%s10 + $0x64] sm:$0xf]
    %v10357 = vld [vmem:[%s10 + $0x68] sm:$0xf]
    %v10358 = vld [vmem:[%s10 + $0x6c] sm:$0xf]
    %v10359 = vld [vmem:[%s10 + $0x70] sm:$0xf]
    %v10360 = vld [vmem:[%s10 + $0x74] sm:$0xf]
    %v10361 = vld [vmem:[%s10 + $0x78] sm:$0xf]
    %v10362 = vld [vmem:[%s10 + $0x7c] sm:$0xf]
    %v10363 = vld [vmem:[%s10 + $0x80] sm:$0xf]
    %v10364 = vld [vmem:[%s10 + $0x84] sm:$0xf]
    %v10365 = vld [vmem:[%s10 + $0x88] sm:$0xf]
    %v10366 = vld [vmem:[%s10 + $0x8c] sm:$0xf]
    %v10367 = vld [vmem:[%s10 + $0x90] sm:$0xf]
    %v10368 = vld [vmem:[%s10 + $0x94] sm:$0xf]
    %v10369 = vld [vmem:[%s10 + $0x98] sm:$0xf]
    %v10370 = vld [vmem:[%s10 + $0x9c] sm:$0xf]
    %v10371 = vld [vmem:[%s10 + $0xa0] sm:$0xf]
    %v10372 = vld [vmem:[%s10 + $0xa4] sm:$0xf]
    %v10373 = vld [vmem:[%s10 + $0xa8] sm:$0xf]
    %v10374 = vld [vmem:[%s10 + $0xac] sm:$0xf]
    %v10375 = vld [vmem:[%s10 + $0xb0] sm:$0xf]
    %v10376 = vld [vmem:[%s10 + $0xb4] sm:$0xf]
    %v10377 = vld [vmem:[%s10 + $0xb8] sm:$0xf]
    %v10378 = vld [vmem:[%s10 + $0xbc] sm:$0xf]
    %v10379 = vld [vmem:[%s10 + $0xc0] sm:$0xf]
    %v10380 = vld [vmem:[%s10 + $0xc4] sm:$0xf]
    %v10381 = vld [vmem:[%s10 + $0xc8] sm:$0xf]
    %v10382 = vld [vmem:[%s10 + $0xcc] sm:$0xf]
    %v10383 = vld [vmem:[%s10 + $0xd0] sm:$0xf]
    %v10384 = vld [vmem:[%s10 + $0xd4] sm:$0xf]
    %v10385 = vld [vmem:[%s10 + $0xd8] sm:$0xf]
    %v10386 = vld [vmem:[%s10 + $0xdc] sm:$0xf]
    %v10387 = vld [vmem:[%s10 + $0xe0] sm:$0xf]
    %v10388 = vld [vmem:[%s10 + $0xe4] sm:$0xf]
    %v10389 = vld [vmem:[%s10 + $0xe8] sm:$0xf]
    %v10390 = vld [vmem:[%s10 + $0xec] sm:$0xf]
    %v10391 = vld [vmem:[%s10 + $0xf0] sm:$0xf]
    %v10392 = vld [vmem:[%s10 + $0xf4] sm:$0xf]
    %v10393 = vld [vmem:[%s10 + $0xf8] sm:$0xf]
    %v10394 = vld [vmem:[%s10 + $0xfc] sm:$0xf]
    %v10395 = vld [vmem:[#allocation17] sm:$0x1]
    %v10397 = vlaneseq
    %v10398 = vshrl.u32 %v10397, 7
    %v10399 = vsub.s32 0, %v10398
    %v10400 = vrot.slane %v10395, %v10399
    %v10466 = vunpack.c.l.b16 %v10331
    %v10467 = vunpack.c.l.b16 %v10332
    %v10468 = vunpack.c.l.b16 %v10333
    %v10469 = vunpack.c.l.b16 %v10334
    %v10470 = vunpack.c.l.b16 %v10335
    %v10471 = vunpack.c.l.b16 %v10336
    %v10472 = vunpack.c.l.b16 %v10337
    %v10473 = vunpack.c.l.b16 %v10338
    %v10474 = vunpack.c.l.b16 %v10339
    %v10475 = vunpack.c.l.b16 %v10340
    %v10476 = vunpack.c.l.b16 %v10341
    %v10477 = vunpack.c.l.b16 %v10342
    %v10478 = vunpack.c.l.b16 %v10343
    %v10479 = vunpack.c.l.b16 %v10344
    %v10480 = vunpack.c.l.b16 %v10345
    %v10481 = vunpack.c.l.b16 %v10346
    %v10482 = vunpack.c.l.b16 %v10347
    %v10483 = vunpack.c.l.b16 %v10348
    %v10484 = vunpack.c.l.b16 %v10349
    %v10485 = vunpack.c.l.b16 %v10350
    %v10486 = vunpack.c.l.b16 %v10351
    %v10487 = vunpack.c.l.b16 %v10352
    %v10488 = vunpack.c.l.b16 %v10353
    %v10489 = vunpack.c.l.b16 %v10354
    %v10490 = vunpack.c.l.b16 %v10355
    %v10491 = vunpack.c.l.b16 %v10356
    %v10492 = vunpack.c.l.b16 %v10357
    %v10493 = vunpack.c.l.b16 %v10358
    %v10494 = vunpack.c.l.b16 %v10359
    %v10495 = vunpack.c.l.b16 %v10360
    %v10496 = vunpack.c.l.b16 %v10361
    %v10497 = vunpack.c.l.b16 %v10362
    %v10498 = vunpack.c.l.b16 %v10363
    %v10499 = vunpack.c.l.b16 %v10364
    %v10500 = vunpack.c.l.b16 %v10365
    %v10501 = vunpack.c.l.b16 %v10366
    %v10502 = vunpack.c.l.b16 %v10367
    %v10503 = vunpack.c.l.b16 %v10368
    %v10504 = vunpack.c.l.b16 %v10369
    %v10505 = vunpack.c.l.b16 %v10370
    %v10506 = vunpack.c.l.b16 %v10371
    %v10507 = vunpack.c.l.b16 %v10372
    %v10508 = vunpack.c.l.b16 %v10373
    %v10509 = vunpack.c.l.b16 %v10374
    %v10510 = vunpack.c.l.b16 %v10375
    %v10511 = vunpack.c.l.b16 %v10376
    %v10512 = vunpack.c.l.b16 %v10377
    %v10513 = vunpack.c.l.b16 %v10378
    %v10514 = vunpack.c.l.b16 %v10379
    %v10515 = vunpack.c.l.b16 %v10380
    %v10516 = vunpack.c.l.b16 %v10381
    %v10517 = vunpack.c.l.b16 %v10382
    %v10518 = vunpack.c.l.b16 %v10383
    %v10519 = vunpack.c.l.b16 %v10384
    %v10520 = vunpack.c.l.b16 %v10385
    %v10521 = vunpack.c.l.b16 %v10386
    %v10522 = vunpack.c.l.b16 %v10387
    %v10523 = vunpack.c.l.b16 %v10388
    %v10524 = vunpack.c.l.b16 %v10389
    %v10525 = vunpack.c.l.b16 %v10390
    %v10526 = vunpack.c.l.b16 %v10391
    %v10527 = vunpack.c.l.b16 %v10392
    %v10528 = vunpack.c.l.b16 %v10393
    %v10529 = vunpack.c.l.b16 %v10394
    %v10530 = vpack.c.b16 %v10467, %v10466
    %v10531 = vpack.c.b16 %v10469, %v10468
    %v10532 = vpack.c.b16 %v10471, %v10470
    %v10533 = vpack.c.b16 %v10473, %v10472
    %v10534 = vpack.c.b16 %v10475, %v10474
    %v10535 = vpack.c.b16 %v10477, %v10476
    %v10536 = vpack.c.b16 %v10479, %v10478
    %v10537 = vpack.c.b16 %v10481, %v10480
    %v10538 = vpack.c.b16 %v10483, %v10482
    %v10539 = vpack.c.b16 %v10485, %v10484
    %v10540 = vpack.c.b16 %v10487, %v10486
    %v10541 = vpack.c.b16 %v10489, %v10488
    %v10542 = vpack.c.b16 %v10491, %v10490
    %v10543 = vpack.c.b16 %v10493, %v10492
    %v10544 = vpack.c.b16 %v10495, %v10494
    %v10545 = vpack.c.b16 %v10497, %v10496
    %v10546 = vpack.c.b16 %v10499, %v10498
    %v10547 = vpack.c.b16 %v10501, %v10500
    %v10548 = vpack.c.b16 %v10503, %v10502
    %v10549 = vpack.c.b16 %v10505, %v10504
    %v10550 = vpack.c.b16 %v10507, %v10506
    %v10551 = vpack.c.b16 %v10509, %v10508
    %v10552 = vpack.c.b16 %v10511, %v10510
    %v10553 = vpack.c.b16 %v10513, %v10512
    %v10554 = vpack.c.b16 %v10515, %v10514
    %v10555 = vpack.c.b16 %v10517, %v10516
    %v10556 = vpack.c.b16 %v10519, %v10518
    %v10557 = vpack.c.b16 %v10521, %v10520
    %v10558 = vpack.c.b16 %v10523, %v10522
    %v10559 = vpack.c.b16 %v10525, %v10524
    %v10560 = vpack.c.b16 %v10527, %v10526
    %v10561 = vpack.c.b16 %v10529, %v10528
    %10594 = vmatprep.subr.bf16.mxu0 0
    %10595 = vmatpush1.bf16.msra.mxu0 %v10537
    %10596 = vmatprep.subr.bf16.mxu0 0
    %10597 = vmatpush1.bf16.msra.mxu0 %v10536
    %10598 = vmatprep.subr.bf16.mxu0 0
    %10599 = vmatpush1.bf16.msra.mxu0 %v10535
    %10600 = vmatprep.subr.bf16.mxu0 0
    %10601 = vmatpush1.bf16.msra.mxu0 %v10534
    %10602 = vmatprep.subr.bf16.mxu0 0
    %10603 = vmatpush1.bf16.msra.mxu0 %v10533
    %10604 = vmatprep.subr.bf16.mxu0 0
    %10605 = vmatpush1.bf16.msra.mxu0 %v10532
    %10606 = vmatprep.subr.bf16.mxu0 0
    %10607 = vmatpush1.bf16.msra.mxu0 %v10531
    %10608 = vmatprep.subr.bf16.mxu0 0
    %10609 = vmatpush1.bf16.msra.mxu0 %v10530
    %10610 = vmatprep.subr.bf16.mxu0 0
    %10611 = vmatpush2.bf16.msra.mxu0 %v10545
    %10612 = vmatprep.subr.bf16.mxu0 0
    %10613 = vmatpush2.bf16.msra.mxu0 %v10544
    %10614 = vmatprep.subr.bf16.mxu0 0
    %10615 = vmatpush2.bf16.msra.mxu0 %v10543
    %10616 = vmatprep.subr.bf16.mxu0 0
    %10617 = vmatpush2.bf16.msra.mxu0 %v10542
    %10618 = vmatprep.subr.bf16.mxu0 0
    %10619 = vmatpush2.bf16.msra.mxu0 %v10541
    %10620 = vmatprep.subr.bf16.mxu0 0
    %10621 = vmatpush2.bf16.msra.mxu0 %v10540
    %10622 = vmatprep.subr.bf16.mxu0 0
    %10623 = vmatpush2.bf16.msra.mxu0 %v10539
    %10624 = vmatprep.subr.bf16.mxu0 0
    %10625 = vmatpush2.bf16.msra.mxu0 %v10538
    %10626 = vmatprep.mubr.bf16.mxu0 %v10328
    %10627 = vmatmul.mubr.bf16.gmra.mxu0 %v10327
    %v10628 = vpop.f32.mrf.mxu0
    %v10629 = vadd.f32 %v10400, %v10628
    %v10630 = vpop.f32.mrf.mxu0
    %v10631 = vpop.f32.mrf.mxu0
    %v10632 = vpop.f32.mrf.mxu0
    %10633 = vdwg.mxu0
    %10634 = vmatprep.subr.bf16.mxu0 0
    %10635 = vmatpush1.bf16.msra.mxu0 %v10553
    %10636 = vmatprep.subr.bf16.mxu0 0
    %10637 = vmatpush1.bf16.msra.mxu0 %v10552
    %10638 = vmatprep.subr.bf16.mxu0 0
    %10639 = vmatpush1.bf16.msra.mxu0 %v10551
    %10640 = vmatprep.subr.bf16.mxu0 0
    %10641 = vmatpush1.bf16.msra.mxu0 %v10550
    %10642 = vmatprep.subr.bf16.mxu0 0
    %10643 = vmatpush1.bf16.msra.mxu0 %v10549
    %10644 = vmatprep.subr.bf16.mxu0 0
    %10645 = vmatpush1.bf16.msra.mxu0 %v10548
    %10646 = vmatprep.subr.bf16.mxu0 0
    %10647 = vmatpush1.bf16.msra.mxu0 %v10547
    %10648 = vmatprep.subr.bf16.mxu0 0
    %10649 = vmatpush1.bf16.msra.mxu0 %v10546
    %10650 = vmatprep.subr.bf16.mxu0 0
    %10651 = vmatpush2.bf16.msra.mxu0 %v10561
    %10652 = vmatprep.subr.bf16.mxu0 0
    %10653 = vmatpush2.bf16.msra.mxu0 %v10560
    %10654 = vmatprep.subr.bf16.mxu0 0
    %10655 = vmatpush2.bf16.msra.mxu0 %v10559
    %10656 = vmatprep.subr.bf16.mxu0 0
    %10657 = vmatpush2.bf16.msra.mxu0 %v10558
    %10658 = vmatprep.subr.bf16.mxu0 0
    %10659 = vmatpush2.bf16.msra.mxu0 %v10557
    %10660 = vmatprep.subr.bf16.mxu0 0
    %10661 = vmatpush2.bf16.msra.mxu0 %v10556
    %10662 = vmatprep.subr.bf16.mxu0 0
    %10663 = vmatpush2.bf16.msra.mxu0 %v10555
    %10664 = vmatprep.subr.bf16.mxu0 0
    %10665 = vmatpush2.bf16.msra.mxu0 %v10554
    %10666 = vmatprep.mubr.bf16.mxu0 %v10330
    %10667 = vmatmul.mubr.bf16.gmra.mxu0 %v10329
    %v10668 = vpop.f32.mrf.mxu0
    %v10669 = vadd.f32 %v10629, %v10668
    %v10670 = vpop.f32.mrf.mxu0
    %v10671 = vpop.f32.mrf.mxu0
    %v10672 = vpop.f32.mrf.mxu0
    %10673 = vdwg.mxu0
    %v10674 = vmax.f32 %v10669, 0.0
    %v10675 = vld [vmem:[#allocation5] sm:$0x3]
    %v10676 = vpack.c.bf16 %v10675, %v10675
    %v10677 = vld [vmem:[#allocation19] sm:$0xf]
    %v10678 = vld [vmem:[#allocation19 + $0x4] sm:$0xf]
    %v10679 = vld [vmem:[#allocation20] sm:$0x1]
    %v10681 = vlaneseq
    %v10682 = vshrl.u32 %v10681, 7
    %v10683 = vsub.s32 0, %v10682
    %v10684 = vrot.slane %v10679, %v10683
    %v10688 = vunpack.c.l.b16 %v10677
    %v10689 = vunpack.c.l.b16 %v10678
    %v10690 = vpack.c.b16 %v10689, %v10688
    %vm10692 = vcmask 130048
    %v10694 = vsel %vm10692, %v10676, 0
    %10696 = vmatprep.subr.bf16.mxu0 0
    %10697 = vmatpush1.bf16.msra.mxu0 0
    %10698 = vmatprep.subr.bf16.mxu0 0
    %10699 = vmatpush1.bf16.msra.mxu0 0
    %10700 = vmatprep.subr.bf16.mxu0 0
    %10701 = vmatpush1.bf16.msra.mxu0 0
    %10702 = vmatprep.subr.bf16.mxu0 0
    %10703 = vmatpush1.bf16.msra.mxu0 0
    %10704 = vmatprep.subr.bf16.mxu0 0
    %10705 = vmatpush1.bf16.msra.mxu0 0
    %10706 = vmatprep.subr.bf16.mxu0 0
    %10707 = vmatpush1.bf16.msra.mxu0 0
    %10708 = vmatprep.subr.bf16.mxu0 0
    %10709 = vmatpush1.bf16.msra.mxu0 0
    %10710 = vmatprep.subr.bf16.mxu0 0
    %10711 = vmatpush1.bf16.msra.mxu0 %v10690
    %10712 = vmatprep.subr.bf16.mxu0 0
    %10713 = vmatpush2.bf16.msra.mxu0 0
    %10714 = vmatprep.subr.bf16.mxu0 0
    %10715 = vmatpush2.bf16.msra.mxu0 0
    %10716 = vmatprep.subr.bf16.mxu0 0
    %10717 = vmatpush2.bf16.msra.mxu0 0
    %10718 = vmatprep.subr.bf16.mxu0 0
    %10719 = vmatpush2.bf16.msra.mxu0 0
    %10720 = vmatprep.subr.bf16.mxu0 0
    %10721 = vmatpush2.bf16.msra.mxu0 0
    %10722 = vmatprep.subr.bf16.mxu0 0
    %10723 = vmatpush2.bf16.msra.mxu0 0
    %10724 = vmatprep.subr.bf16.mxu0 0
    %10725 = vmatpush2.bf16.msra.mxu0 0
    %10726 = vmatprep.subr.bf16.mxu0 0
    %10727 = vmatpush2.bf16.msra.mxu0 0
    %10728 = vmatprep.mubr.bf16.mxu0 0
    %10729 = vmatmul.mubr.bf16.gmra.mxu0 %v10694
    %v10730 = vpop.f32.mrf.mxu0
    %v10731 = vadd.f32 %v10684, %v10730
    %v10732 = vpop.f32.mrf.mxu0
    %v10733 = vpop.f32.mrf.mxu0
    %v10734 = vpop.f32.mrf.mxu0
    %10735 = vdwg.mxu0
    %v10736 = vmax.f32 %v10731, 0.0
    %v10737 = vpack.c.bf16 %v10736, %v10736
    %v10738 = vld [vmem:[%s14] sm:$0xf]
    %v10739 = vld [vmem:[%s14 + $0x4] sm:$0xf]
    %v10740 = vld [vmem:[%s14 + $0x8] sm:$0xf]
    %v10741 = vld [vmem:[%s14 + $0xc] sm:$0xf]
    %v10742 = vld [vmem:[%s14 + $0x10] sm:$0xf]
    %v10743 = vld [vmem:[%s14 + $0x14] sm:$0xf]
    %v10744 = vld [vmem:[%s14 + $0x18] sm:$0xf]
    %v10745 = vld [vmem:[%s14 + $0x1c] sm:$0xf]
    %v10746 = vld [vmem:[%s14 + $0x20] sm:$0xf]
    %v10747 = vld [vmem:[%s14 + $0x24] sm:$0xf]
    %v10748 = vld [vmem:[%s14 + $0x28] sm:$0xf]
    %v10749 = vld [vmem:[%s14 + $0x2c] sm:$0xf]
    %v10750 = vld [vmem:[%s14 + $0x30] sm:$0xf]
    %v10751 = vld [vmem:[%s14 + $0x34] sm:$0xf]
    %v10752 = vld [vmem:[%s14 + $0x38] sm:$0xf]
    %v10753 = vld [vmem:[%s14 + $0x3c] sm:$0xf]
    %v10754 = vld [vmem:[#allocation22] sm:$0x1]
    %v10756 = vlaneseq
    %v10757 = vshrl.u32 %v10756, 7
    %v10758 = vsub.s32 0, %v10757
    %v10759 = vrot.slane %v10754, %v10758
    %v10777 = vunpack.c.l.b16 %v10738
    %v10778 = vunpack.c.l.b16 %v10739
    %v10779 = vunpack.c.l.b16 %v10740
    %v10780 = vunpack.c.l.b16 %v10741
    %v10781 = vunpack.c.l.b16 %v10742
    %v10782 = vunpack.c.l.b16 %v10743
    %v10783 = vunpack.c.l.b16 %v10744
    %v10784 = vunpack.c.l.b16 %v10745
    %v10785 = vunpack.c.l.b16 %v10746
    %v10786 = vunpack.c.l.b16 %v10747
    %v10787 = vunpack.c.l.b16 %v10748
    %v10788 = vunpack.c.l.b16 %v10749
    %v10789 = vunpack.c.l.b16 %v10750
    %v10790 = vunpack.c.l.b16 %v10751
    %v10791 = vunpack.c.l.b16 %v10752
    %v10792 = vunpack.c.l.b16 %v10753
    %v10793 = vpack.c.b16 %v10778, %v10777
    %v10794 = vpack.c.b16 %v10780, %v10779
    %v10795 = vpack.c.b16 %v10782, %v10781
    %v10796 = vpack.c.b16 %v10784, %v10783
    %v10797 = vpack.c.b16 %v10786, %v10785
    %v10798 = vpack.c.b16 %v10788, %v10787
    %v10799 = vpack.c.b16 %v10790, %v10789
    %v10800 = vpack.c.b16 %v10792, %v10791
    %10809 = vmatprep.subr.bf16.mxu0 0
    %10810 = vmatpush1.bf16.msra.mxu0 %v10800
    %10811 = vmatprep.subr.bf16.mxu0 0
    %10812 = vmatpush1.bf16.msra.mxu0 %v10799
    %10813 = vmatprep.subr.bf16.mxu0 0
    %10814 = vmatpush1.bf16.msra.mxu0 %v10798
    %10815 = vmatprep.subr.bf16.mxu0 0
    %10816 = vmatpush1.bf16.msra.mxu0 %v10797
    %10817 = vmatprep.subr.bf16.mxu0 0
    %10818 = vmatpush1.bf16.msra.mxu0 %v10796
    %10819 = vmatprep.subr.bf16.mxu0 0
    %10820 = vmatpush1.bf16.msra.mxu0 %v10795
    %10821 = vmatprep.subr.bf16.mxu0 0
    %10822 = vmatpush1.bf16.msra.mxu0 %v10794
    %10823 = vmatprep.subr.bf16.mxu0 0
    %10824 = vmatpush1.bf16.msra.mxu0 %v10793
    %10825 = vmatprep.subr.bf16.mxu0 0
    %10826 = vmatpush2.bf16.msra.mxu0 0
    %10827 = vmatprep.subr.bf16.mxu0 0
    %10828 = vmatpush2.bf16.msra.mxu0 0
    %10829 = vmatprep.subr.bf16.mxu0 0
    %10830 = vmatpush2.bf16.msra.mxu0 0
    %10831 = vmatprep.subr.bf16.mxu0 0
    %10832 = vmatpush2.bf16.msra.mxu0 0
    %10833 = vmatprep.subr.bf16.mxu0 0
    %10834 = vmatpush2.bf16.msra.mxu0 0
    %10835 = vmatprep.subr.bf16.mxu0 0
    %10836 = vmatpush2.bf16.msra.mxu0 0
    %10837 = vmatprep.subr.bf16.mxu0 0
    %10838 = vmatpush2.bf16.msra.mxu0 0
    %10839 = vmatprep.subr.bf16.mxu0 0
    %10840 = vmatpush2.bf16.msra.mxu0 0
    %10841 = vmatprep.mubr.bf16.mxu0 0
    %10842 = vmatmul.mubr.bf16.gmra.mxu0 %v10737
    %v10843 = vpop.f32.mrf.mxu0
    %v10844 = vadd.f32 %v10759, %v10843
    %v10845 = vpop.f32.mrf.mxu0
    %v10846 = vpop.f32.mrf.mxu0
    %v10847 = vpop.f32.mrf.mxu0
    %10848 = vdwg.mxu0
    %v10849 = vmax.f32 %v10844, 0.0
    %10851 = vrot.lane.b32.xlu0 %v10674, 64
    %v10852 = vpop.permute.xlu0 %10851
    %v10854 = vsel %vm338, %v10849, %v10852
    %v10855 = vpack.c.bf16 %v10854, %v10854
    %v10856 = vld [vmem:[%s16] sm:$0xf]
    %v10857 = vld [vmem:[%s16 + $0x4] sm:$0xf]
    %v10858 = vld [vmem:[%s16 + $0x8] sm:$0xf]
    %v10859 = vld [vmem:[%s16 + $0xc] sm:$0xf]
    %v10860 = vld [vmem:[%s16 + $0x10] sm:$0xf]
    %v10861 = vld [vmem:[%s16 + $0x14] sm:$0xf]
    %v10862 = vld [vmem:[%s16 + $0x18] sm:$0xf]
    %v10863 = vld [vmem:[%s16 + $0x1c] sm:$0xf]
    %v10864 = vld [vmem:[%s16 + $0x20] sm:$0xf]
    %v10865 = vld [vmem:[%s16 + $0x24] sm:$0xf]
    %v10866 = vld [vmem:[%s16 + $0x28] sm:$0xf]
    %v10867 = vld [vmem:[%s16 + $0x2c] sm:$0xf]
    %v10868 = vld [vmem:[%s16 + $0x30] sm:$0xf]
    %v10869 = vld [vmem:[%s16 + $0x34] sm:$0xf]
    %v10870 = vld [vmem:[%s16 + $0x38] sm:$0xf]
    %v10871 = vld [vmem:[%s16 + $0x3c] sm:$0xf]
    %v10872 = vld [vmem:[#allocation23] sm:$0x1]
    %v10874 = vlaneseq
    %v10875 = vshrl.u32 %v10874, 7
    %v10876 = vsub.s32 0, %v10875
    %v10877 = vrot.slane %v10872, %v10876
    %v10895 = vunpack.c.l.b16 %v10856
    %v10896 = vunpack.c.l.b16 %v10857
    %v10897 = vunpack.c.l.b16 %v10858
    %v10898 = vunpack.c.l.b16 %v10859
    %v10899 = vunpack.c.l.b16 %v10860
    %v10900 = vunpack.c.l.b16 %v10861
    %v10901 = vunpack.c.l.b16 %v10862
    %v10902 = vunpack.c.l.b16 %v10863
    %v10903 = vunpack.c.l.b16 %v10864
    %v10904 = vunpack.c.l.b16 %v10865
    %v10905 = vunpack.c.l.b16 %v10866
    %v10906 = vunpack.c.l.b16 %v10867
    %v10907 = vunpack.c.l.b16 %v10868
    %v10908 = vunpack.c.l.b16 %v10869
    %v10909 = vunpack.c.l.b16 %v10870
    %v10910 = vunpack.c.l.b16 %v10871
    %v10911 = vpack.c.b16 %v10896, %v10895
    %v10912 = vpack.c.b16 %v10898, %v10897
    %v10913 = vpack.c.b16 %v10900, %v10899
    %v10914 = vpack.c.b16 %v10902, %v10901
    %v10915 = vpack.c.b16 %v10904, %v10903
    %v10916 = vpack.c.b16 %v10906, %v10905
    %v10917 = vpack.c.b16 %v10908, %v10907
    %v10918 = vpack.c.b16 %v10910, %v10909
    %10927 = vmatprep.subr.bf16.mxu0 0
    %10928 = vmatpush1.bf16.msra.mxu0 %v10918
    %10929 = vmatprep.subr.bf16.mxu0 0
    %10930 = vmatpush1.bf16.msra.mxu0 %v10917
    %10931 = vmatprep.subr.bf16.mxu0 0
    %10932 = vmatpush1.bf16.msra.mxu0 %v10916
    %10933 = vmatprep.subr.bf16.mxu0 0
    %10934 = vmatpush1.bf16.msra.mxu0 %v10915
    %10935 = vmatprep.subr.bf16.mxu0 0
    %10936 = vmatpush1.bf16.msra.mxu0 %v10914
    %10937 = vmatprep.subr.bf16.mxu0 0
    %10938 = vmatpush1.bf16.msra.mxu0 %v10913
    %10939 = vmatprep.subr.bf16.mxu0 0
    %10940 = vmatpush1.bf16.msra.mxu0 %v10912
    %10941 = vmatprep.subr.bf16.mxu0 0
    %10942 = vmatpush1.bf16.msra.mxu0 %v10911
    %10943 = vmatprep.subr.bf16.mxu0 0
    %10944 = vmatpush2.bf16.msra.mxu0 0
    %10945 = vmatprep.subr.bf16.mxu0 0
    %10946 = vmatpush2.bf16.msra.mxu0 0
    %10947 = vmatprep.subr.bf16.mxu0 0
    %10948 = vmatpush2.bf16.msra.mxu0 0
    %10949 = vmatprep.subr.bf16.mxu0 0
    %10950 = vmatpush2.bf16.msra.mxu0 0
    %10951 = vmatprep.subr.bf16.mxu0 0
    %10952 = vmatpush2.bf16.msra.mxu0 0
    %10953 = vmatprep.subr.bf16.mxu0 0
    %10954 = vmatpush2.bf16.msra.mxu0 0
    %10955 = vmatprep.subr.bf16.mxu0 0
    %10956 = vmatpush2.bf16.msra.mxu0 0
    %10957 = vmatprep.subr.bf16.mxu0 0
    %10958 = vmatpush2.bf16.msra.mxu0 0
    %10959 = vmatprep.mubr.bf16.mxu0 0
    %10960 = vmatmul.mubr.bf16.gmra.mxu0 %v10855
    %v10961 = vpop.f32.mrf.mxu0
    %v10962 = vadd.f32 %v10877, %v10961
    %v10963 = vpop.f32.mrf.mxu0
    %v10964 = vpop.f32.mrf.mxu0
    %v10965 = vpop.f32.mrf.mxu0
    %10966 = vdwg.mxu0
    %vm10967 = vcmask 9216
    %10968 = vst.msk [vmem:[#allocation25] sm:$0x3] %vm10967, %v10962
    // Predicated region
    $region122: #{forward.1} parent=1 // pred_check
      _
    $region123: #{forward.1} parent=1 // pred_check_branch
      %10970 = sbr.rel (0) target = $region125
    $region124: #{forward.1} parent=1 // pred_region
      %s10972 = ssub.s32 32, 32
      %10973 = vsyncadd [#allocation7], %s10972
      %s10975 = sshll.u32 [#allocation25], 4
      %s10976 = int_to_ptr.vmem [resolvable:$true] %s10975
      %10978 = dma.vmem_to_hbm [thread:$0]  %s10976, 32, %s18, [#allocation7]
    $region125: #{forward.1} parent=1 // pred_fallthru
      _
    // Predicated region
    $region126: #{forward.1} parent=1 // pred_check
      _
    $region127: #{forward.1} parent=1 // pred_check_branch
      %10980 = sbr.rel (0) target = $region129
    $region128: #{forward.1} parent=1 // pred_region
      %10981 = dma.done [#allocation7], 32
    $region129: #{forward.1} parent=1 // pred_fallthru
      _
    %10982 = vsyncpa [#allocation6], 1
    %10983 = vsyncpa [#allocation9], 1
    %10984 = vsyncpa [#allocation12], 1
    %10985 = vsyncpa [#allocation15], 1
    %10986 = vsyncpa [#allocation18], 1
    %10987 = vsyncpa [#allocation21], 1
    %10988 = vsyncpa [#allocation24], 1
    %10989 = vsyncpa [#allocation7], 1
  %10990 = vsyncmov [#allocation4]
  %s10991 = vpop.sfrf %10990
  %p10992 = scmp.eq.s32.totalorder %s10991, 0
  %p10993 = pneg %p10992
  %10995 = shalt.err (%p10993)
  %s10996 = scalar_lea.sflag [#allocation4], 1
  %10997 = vsyncmov %s10996
  %s10998 = vpop.sfrf %10997
  %p10999 = scmp.eq.s32.totalorder %s10998, 0
  %p11000 = pneg %p10999
  %11002 = shalt.err (%p11000)

</llo_original>
